<compile_context>
chip_gen: v7x
topology: tpu7x:2x2x1
jax: 0.10.0
libtpu: 0.0.40
codegen_flags: <defaults>
</compile_context>

<pallas_src>
import functools

import jax
import jax.numpy as jnp
from jax.experimental import pallas as pl
from jax.experimental.pallas import tpu as pltpu

_BN_EPS = 1e-5


# ------------------------------ small helpers ------------------------------ #

def _round_up(x, m):
    return (x + m - 1) // m * m


def _pick_divisor(total, candidates=(1024, 512, 256, 128)):
    for c in candidates:
        if total % c == 0:
            return c
    return candidates[-1]


def _vmem_budget_bytes():
    """~3/4 of physical VMEM: ~96 MiB on v5e/v6e, 48 MiB on v7x / unknown."""
    cap = 64 * 1024 * 1024                     # conservative fallback (v7x)
    try:
        cap = int(getattr(pltpu.get_tpu_info(), "vmem_capacity_bytes", cap))
    except Exception:
        pass
    return (cap * 3) // 4


def _vmem_limit(estimate_bytes):
    return int(min(_vmem_budget_bytes(),
                   max(2 * estimate_bytes, 32 * 1024 * 1024)))


# --------------------- fc: Linear + BatchNorm1d + ReLU --------------------- #

def _fc_bn_relu_kernel(a_ref, b_ref, gamma_ref, beta_ref, o_ref, *acc_scratch,
                       m_true):
    """o = relu(BatchNorm1d(a @ b)), training-mode (biased) batch statistics.

    The Linear bias is omitted: it shifts the batch mean and the activations
    identically, so it cancels exactly under training-mode BatchNorm.  Rows
    >= m_true are zero padding: they contribute 0 to sum / sum-of-squares
    (the statistics divide by m_true) and are re-zeroed on store so downstream
    layers keep exact zero padding.
    """

    def epilogue(acc):
        s = jnp.sum(acc, axis=0, keepdims=True)
        ss = jnp.sum(acc * acc, axis=0, keepdims=True)
        mean = s / m_true
        var = jnp.maximum(ss / m_true - mean * mean, 0.0)
        inv = jax.lax.rsqrt(var + _BN_EPS)
        y = (acc - mean) * inv * gamma_ref[...] + beta_ref[...]
        y = jnp.maximum(y, 0.0)
        rows = jax.lax.broadcasted_iota(jnp.int32, y.shape, 0)
        o_ref[...] = jnp.where(rows < m_true, y, 0.0).astype(o_ref.dtype)

    if not acc_scratch:
        # K fits in one block: no accumulator scratch, no output revisits.
        epilogue(jnp.dot(a_ref[...], b_ref[...],
                         preferred_element_type=jnp.float32))
    else:
        acc_ref, = acc_scratch
        k = pl.program_id(1)

        @pl.when(k == 0)
        def _():
            acc_ref[...] = jnp.zeros_like(acc_ref)

        acc_ref[...] += jnp.dot(a_ref[...], b_ref[...],
                                preferred_element_type=jnp.float32)

        @pl.when(k == pl.num_programs(1) - 1)
        def _():
            epilogue(acc_ref[...])


def fc_bn_relu(a, b, gamma, beta, *, m_true):
    """a: (Mp, Kp) bf16 zero-padded, b: (Kp, N) bf16, gamma/beta: (1, N) f32.

    Returns relu(BatchNorm1d(a @ b)) as (Mp, N) bf16 (padded rows are zeros).
    """
    mp, kp = a.shape
    kp2, n = b.shape
    assert kp == kp2 and kp % 128 == 0 and n % 128 == 0 and mp % 8 == 0

    tk = kp if kp <= 1024 else _pick_divisor(kp)
    tn = _pick_divisor(n)
    nj, nk = n // tn, kp // tk
    single_k = nk == 1

    est = (2 * mp * tk * 2 + 2 * tk * tn * 2       # a / b tiles (bf16, x2 buf)
           + 2 * 2 * tn * 4                        # gamma / beta tiles
           + 2 * mp * tn * 2                       # bf16 output tile (x2 buf)
           + (0 if single_k else mp * tn * 4))     # f32 accumulator
    cost = pl.CostEstimate(
        flops=2 * mp * n * kp, transcendentals=0,
        bytes_accessed=mp * kp * 2 + kp * n * 2 + 2 * n * 4 + mp * n * 2)
    kernel = functools.partial(_fc_bn_relu_kernel, m_true=m_true)

    if single_k:
        grid = (nj,)
        in_specs = [pl.BlockSpec((mp, tk), lambda j: (0, 0)),
                    pl.BlockSpec((tk, tn), lambda j: (0, j)),
                    pl.BlockSpec((1, tn), lambda j: (0, j)),
                    pl.BlockSpec((1, tn), lambda j: (0, j))]
        out_specs = pl.BlockSpec((mp, tn), lambda j: (0, j))
        scratch = []
        sem = ("parallel",)
    else:
        grid = (nj, nk)
        in_specs = [pl.BlockSpec((mp, tk), lambda j, k: (0, k)),
                    pl.BlockSpec((tk, tn), lambda j, k: (k, j)),
                    pl.BlockSpec((1, tn), lambda j, k: (0, j)),
                    pl.BlockSpec((1, tn), lambda j, k: (0, j))]
        out_specs = pl.BlockSpec((mp, tn), lambda j, k: (0, j))
        scratch = [pltpu.VMEM((mp, tn), jnp.float32)]
        sem = ("parallel", "arbitrary")

    return pl.pallas_call(
        kernel,
        out_shape=jax.ShapeDtypeStruct((mp, n), jnp.bfloat16),
        grid=grid,
        in_specs=in_specs,
        out_specs=out_specs,
        scratch_shapes=scratch,
        compiler_params=pltpu.CompilerParams(
            dimension_semantics=sem, vmem_limit_bytes=_vmem_limit(est)),
        cost_estimate=cost,
    )(a, b, gamma, beta)


# ----------- deconv (ConvTranspose2d k=4 s=2 p=1) as a phase conv ----------- #

def _deconv_tap_kernel(x_ref, w_ref, bias_ref, y_ref, *stat_refs,
                       act, h, w, wp, c):
    """One image: 3x3 stride-1 conv via 9 statically-unrolled row windows.

    x_ref:    (1, rows_in, c)  flattened, spatially zero-padded NHWC image
              (padded row index = y * wp + x; rows_in >= (h+2)*wp + 2).
    w_ref:    (9, c, n)        tap-major weight; n = 4*c_out phase-major cols.
    bias_ref: (1, n) f32.
    y_ref:    (1, h*wp, n)     conv output rows.  Row r = i*wp + j is output
              pixel (i, j) when j < w; rows with j >= w are by-products of the
              flattened-window trick (dropped by the caller, masked from the
              BN statistics here).
    stat_refs (optional): per-image column sum / sum-of-squares (1, 1, n) f32
              -> partial statistics for a two-pass BatchNorm2d.
    """
    rows = h * wp
    acc = None
    for t in range(9):
        dh, dw = t // 3, t % 3
        start = dh * wp + dw                          # static offsets
        win = x_ref[0, start:start + rows, :]         # (rows, c), contiguous
        d = jnp.dot(win, w_ref[t], preferred_element_type=jnp.float32)
        acc = d if acc is None else acc + d
    y = acc + bias_ref[...]
    if stat_refs:
        sum_ref, sq_ref = stat_refs
        col = jax.lax.broadcasted_iota(jnp.int32, (rows, 1), 0) % wp
        yv = jnp.where(col < w, y, 0.0)               # drop junk columns
        sum_ref[0] = jnp.sum(yv, axis=0, keepdims=True)
        sq_ref[0] = jnp.sum(yv * yv, axis=0, keepdims=True)
    if act == "sigmoid":
        y = jax.nn.sigmoid(y)
    y_ref[0] = y.astype(y_ref.dtype)


def deconv_phase_matmul(xp, w_taps, bias, *, act, with_stats, out_dtype):
    """xp: (batch, h+2, w+2, c) spatially zero-padded NHWC activations (bf16).

    Returns (y[, partial_sum, partial_sqsum]); y: (batch, h*(w+2), n).
    """
    bsz, hp, wp, c = xp.shape
    h, w = hp - 2, wp - 2
    rows_out = h * wp
    taps, c2, n = w_taps.shape
    assert taps == 9 and c2 == c and n % 128 == 0

    # Flatten spatial dims to rows; add a few zero rows so the last tap's
    # window (start = 2*wp + 2) stays in bounds.
    rows_in = _round_up(hp * wp + 2, 8)
    xf = jnp.pad(xp.reshape(bsz, hp * wp, c),
                 ((0, 0), (0, rows_in - hp * wp), (0, 0)))

    out_shape = [jax.ShapeDtypeStruct((bsz, rows_out, n), out_dtype)]
    out_specs = [pl.BlockSpec((1, rows_out, n), lambda i: (i, 0, 0))]
    if with_stats:
        out_shape += [jax.ShapeDtypeStruct((bsz, 1, n), jnp.float32)] * 2
        out_specs += [pl.BlockSpec((1, 1, n), lambda i: (i, 0, 0))] * 2

    osz = jnp.dtype(out_dtype).itemsize
    est = (2 * rows_in * c * 2 + 2 * 9 * c * n * 2 + 2 * n * 4
           + 2 * rows_out * n * osz + rows_out * n * 4
           + (2 * 2 * n * 4 if with_stats else 0))
    cost = pl.CostEstimate(
        flops=2 * bsz * rows_out * 9 * c * n,
        transcendentals=bsz * rows_out * n if act == "sigmoid" else 0,
        bytes_accessed=(bsz * rows_in * c * 2 + 9 * c * n * 2 + n * 4
                        + bsz * rows_out * n * osz
                        + (2 * bsz * n * 4 if with_stats else 0)))
    kernel = functools.partial(_deconv_tap_kernel, act=act, h=h, w=w, wp=wp, c=c)

    # TODO(synk): for very large images, add halo-tiled spatial blocking so an
    # image's rows do not have to fit a single output block.
    outs = pl.pallas_call(
        kernel,
        out_shape=tuple(out_shape),
        grid=(bsz,),
        in_specs=[pl.BlockSpec((1, rows_in, c), lambda i: (i, 0, 0)),
                  pl.BlockSpec((9, c, n), lambda i: (0, 0, 0)),
                  pl.BlockSpec((1, n), lambda i: (0, 0))],
        out_specs=tuple(out_specs),
        compiler_params=pltpu.CompilerParams(
            dimension_semantics=("parallel",),
            vmem_limit_bytes=_vmem_limit(est)),
        cost_estimate=cost,
    )(xf, w_taps, bias)
    if not isinstance(outs, (tuple, list)):
        outs = (outs,)
    return tuple(outs)


# --------------------------- weight preparation ----------------------------- #

def _deconv_as_phase_conv_weight(w_t):
    """ConvTranspose2d(Cin,Cout,4,2,1) weight -> (9, Cin, 4*Cout) tap matrices.

    out[2m+a, 2q+b, co] = sum_{dh,dw in {-1,0,1}} x[m+dh, q+dw, :] @ W3[dh, dw]
    with W3[dh, dw][ci, (a*2+b)*Cout + co] = w_t[ci, co, kh(a,dh), kw(b,dw)];
    taps whose transposed-conv kernel index falls outside 0..3 contribute zero.
    """
    c_in, c_out, _, _ = w_t.shape
    kmap = {(0, -1): 3, (0, 0): 1, (1, 0): 2, (1, 1): 0}   # (parity, offset) -> k
    w3 = jnp.zeros((3, 3, c_in, 4, c_out), w_t.dtype)
    for a in range(2):
        for b in range(2):
            for dh in (-1, 0, 1):
                for dw in (-1, 0, 1):
                    if (a, dh) in kmap and (b, dw) in kmap:
                        w3 = w3.at[dh + 1, dw + 1, :, a * 2 + b, :].set(
                            w_t[:, :, kmap[(a, dh)], kmap[(b, dw)]])
    return w3.reshape(9, c_in, 4 * c_out)


def _pixel_shuffle_2x(y_rows, n, h, w, wp, c_out):
    """Kernel output (n, h*wp, 4*c_out) -> (n, 2h, 2w, c_out) NHWC.

    Drops the (wp - w) junk columns produced by the flattened-window conv.
    """
    y = y_rows.reshape(n, h, wp, 2, 2, c_out)[:, :, :w]
    return jnp.transpose(y, (0, 1, 3, 2, 4, 5)).reshape(n, 2 * h, 2 * w, c_out)


def init_params(key, nc, input_dim, image_size, class_num):
    """Parameters in PyTorch layouts (Linear stored (in,out); deconv (Cin,Cout,4,4))."""
    s4 = image_size // 4
    feat = 128 * s4 * s4
    ks = jax.random.split(key, 14)
    p = {}
    p["fc1_w"] = 0.05 * jax.random.normal(ks[0], (input_dim + class_num, 1024), jnp.float32)
    p["fc1_b"] = 0.02 * jax.random.normal(ks[1], (1024,), jnp.float32)
    p["bn1_g"] = 1.0 + 0.1 * jax.random.normal(ks[2], (1024,), jnp.float32)
    p["bn1_b"] = 0.1 * jax.random.normal(ks[3], (1024,), jnp.float32)
    p["fc2_w"] = 0.02 * jax.random.normal(ks[4], (1024, feat), jnp.float32)
    p["fc2_b"] = 0.02 * jax.random.normal(ks[5], (feat,), jnp.float32)
    p["bn2_g"] = 1.0 + 0.1 * jax.random.normal(ks[6], (feat,), jnp.float32)
    p["bn2_b"] = 0.1 * jax.random.normal(ks[7], (feat,), jnp.float32)
    p["dc1_w"] = 0.05 * jax.random.normal(ks[8], (128, 64, 4, 4), jnp.float32)
    p["dc1_b"] = 0.02 * jax.random.normal(ks[9], (64,), jnp.float32)
    p["bn3_g"] = 1.0 + 0.1 * jax.random.normal(ks[10], (64,), jnp.float32)
    p["bn3_b"] = 0.1 * jax.random.normal(ks[11], (64,), jnp.float32)
    p["dc2_w"] = 0.05 * jax.random.normal(ks[12], (64, nc, 4, 4), jnp.float32)
    p["dc2_b"] = 0.02 * jax.random.normal(ks[13], (nc,), jnp.float32)
    return p


def prepare_gemm_params(p, image_size):
    """One-time weight re-layout + pad + bf16 cast (never repeated per forward)."""
    s4 = image_size // 4
    g = {}
    # fc1: pad K to a 128 multiple.  (fc1_b / fc2_b cancel exactly under
    # training-mode BatchNorm1d, so the kernels never read them.)
    k1 = p["fc1_w"].shape[0]
    k1p = _round_up(k1, 128)
    g["fc1_w"] = jnp.pad(p["fc1_w"], ((0, k1p - k1), (0, 0))).astype(jnp.bfloat16)
    g["bn1_g"] = p["bn1_g"].reshape(1, -1)
    g["bn1_b"] = p["bn1_b"].reshape(1, -1)
    # fc2: permute columns ONCE into NHWC order so the deconv stack needs no
    # per-forward activation transpose.
    g["fc2_w"] = (p["fc2_w"].reshape(1024, 128, s4, s4)
                  .transpose(0, 2, 3, 1).reshape(1024, -1).astype(jnp.bfloat16))

    def nhwc(v):
        return v.reshape(128, s4, s4).transpose(1, 2, 0).reshape(1, -1)

    g["bn2_g"] = nhwc(p["bn2_g"])
    g["bn2_b"] = nhwc(p["bn2_b"])
    # Transposed convs -> tap-major, phase-major (lane-dense) conv matrices.
    g["dc1_w"] = _deconv_as_phase_conv_weight(p["dc1_w"]).astype(jnp.bfloat16)
    g["dc1_b"] = jnp.tile(p["dc1_b"], 4).reshape(1, -1)
    g["bn3_g"] = p["bn3_g"]
    g["bn3_b"] = p["bn3_b"]
    w2 = _deconv_as_phase_conv_weight(p["dc2_w"])
    n2 = w2.shape[-1]
    n2p = _round_up(n2, 128)
    g["dc2_w"] = jnp.pad(w2, ((0, 0), (0, 0), (0, n2p - n2))).astype(jnp.bfloat16)
    g["dc2_b"] = jnp.pad(jnp.tile(p["dc2_b"], 4), (0, n2p - n2)).reshape(1, -1)
    return g


# ------------------------------- forward pass ------------------------------- #

def generator_forward(noise, label, g, *, nc, image_size):
    """Equivalent of generator.forward (PyTorch training-mode BN semantics)."""
    bsz = noise.shape[0]
    s4 = image_size // 4
    c1 = g["bn3_g"].shape[0]                       # deconv1 output channels

    x = jnp.concatenate([noise, label], axis=1)
    mp = _round_up(bsz, 16)                        # bf16 sublane packing
    k1p = g["fc1_w"].shape[0]
    a0 = jnp.pad(x, ((0, mp - bsz), (0, k1p - x.shape[1]))).astype(jnp.bfloat16)

    # fc: Linear -> BatchNorm1d -> ReLU  (x2), fully fused, bf16 intermediates.
    h1 = fc_bn_relu(a0, g["fc1_w"], g["bn1_g"], g["bn1_b"], m_true=bsz)
    h2 = fc_bn_relu(h1, g["fc2_w"], g["bn2_g"], g["bn2_b"], m_true=bsz)
    feat = h2[:bsz].reshape(bsz, s4, s4, 128)      # NHWC (see prepare_gemm_params)
    feat_p = jnp.pad(feat, ((0, 0), (1, 1), (1, 1), (0, 0)))

    # ConvTranspose2d(128,64,4,2,1): phase conv + per-image partial BN2d stats.
    y1, s1, q1 = deconv_phase_matmul(feat_p, g["dc1_w"], g["dc1_b"],
                                     act="none", with_stats=True,
                                     out_dtype=jnp.bfloat16)
    # Finish BatchNorm2d(64): pool the partial statistics over the images and
    # the 4 output-pixel phases (a tiny (batch, 4*C) reduction, done in XLA).
    cnt = float(bsz * s4 * s4 * 4)
    mean = jnp.sum(s1[:, 0, :], axis=0).reshape(4, c1).sum(axis=0) / cnt
    msq = jnp.sum(q1[:, 0, :], axis=0).reshape(4, c1).sum(axis=0) / cnt
    var = jnp.maximum(msq - mean * mean, 0.0)
    scale = g["bn3_g"] * jax.lax.rsqrt(var + _BN_EPS)
    shift = g["bn3_b"] - mean * scale
    # Pixel shuffle + BN apply + ReLU + halo pad fuse into one XLA elementwise
    # / transpose op; no extra Pallas round trip needed.
    x1 = _pixel_shuffle_2x(y1, bsz, s4, s4, s4 + 2, c1)
    x1 = jnp.maximum(x1.astype(jnp.float32) * scale + shift, 0.0).astype(jnp.bfloat16)
    x1_p = jnp.pad(x1, ((0, 0), (1, 1), (1, 1), (0, 0)))

    # ConvTranspose2d(64, nc, 4, 2, 1) + Sigmoid (f32 final output).
    (y2,) = deconv_phase_matmul(x1_p, g["dc2_w"], g["dc2_b"],
                                act="sigmoid", with_stats=False,
                                out_dtype=jnp.float32)
    y2 = y2[:, :, :4 * nc]
    out = _pixel_shuffle_2x(y2, bsz, 2 * s4, 2 * s4, 2 * s4 + 2, nc)
    return jnp.transpose(out, (0, 3, 1, 2))        # NCHW like PyTorch


# --------------------------- pure-JAX f32 reference ------------------------- #

def generator_reference(noise, label, p, *, image_size):
    """Pure-JAX f32 reference with PyTorch training-mode BN semantics."""
    s4 = image_size // 4
    x = jnp.concatenate([noise, label], axis=1)

    def bn1d(h, gmm, bta):
        mu = jnp.mean(h, axis=0)
        var = jnp.mean((h - mu) ** 2, axis=0)
        return (h - mu) / jnp.sqrt(var + _BN_EPS) * gmm + bta

    h = jax.nn.relu(bn1d(x @ p["fc1_w"] + p["fc1_b"], p["bn1_g"], p["bn1_b"]))
    h = jax.nn.relu(bn1d(h @ p["fc2_w"] + p["fc2_b"], p["bn2_g"], p["bn2_b"]))
    xim = h.reshape(-1, 128, s4, s4)               # NCHW, like torch .view

    def deconv(z, w_t, b_t):                       # ConvTranspose2d(k=4,s=2,p=1)
        w_f = jnp.flip(w_t, axis=(2, 3)).transpose(1, 0, 2, 3)  # (Cout,Cin,4,4)
        y = jax.lax.conv_general_dilated(
            z, w_f, window_strides=(1, 1), padding=((2, 2), (2, 2)),
            lhs_dilation=(2, 2), dimension_numbers=("NCHW", "OIHW", "NCHW"))
        return y + b_t.reshape(1, -1, 1, 1)

    def bn2d(h4, gmm, bta):
        mu = jnp.mean(h4, axis=(0, 2, 3), keepdims=True)
        var = jnp.mean((h4 - mu) ** 2, axis=(0, 2, 3), keepdims=True)
        return ((h4 - mu) / jnp.sqrt(var + _BN_EPS) * gmm.reshape(1, -1, 1, 1)
                + bta.reshape(1, -1, 1, 1))

    y = jax.nn.relu(bn2d(deconv(xim, p["dc1_w"], p["dc1_b"]),
                         p["bn3_g"], p["bn3_b"]))
    return jax.nn.sigmoid(deconv(y, p["dc2_w"], p["dc2_b"]))


if __name__ == "__main__":
    batch, nc, input_dim, image_size, class_num = 8, 4, 32, 16, 3
    key = jax.random.PRNGKey(0)
    k_noise, k_lab, k_par = jax.random.split(key, 3)
    noise = jax.random.normal(k_noise, (batch, input_dim), jnp.float32)
    label = jax.nn.one_hot(
        jax.random.randint(k_lab, (batch,), 0, class_num), class_num,
        dtype=jnp.float32)

    params = init_params(k_par, nc, input_dim, image_size, class_num)
    gparams = prepare_gemm_params(params, image_size)

    fwd = jax.jit(functools.partial(generator_forward, nc=nc,
                                    image_size=image_size))
    out = fwd(noise, label, gparams)
    jax.block_until_ready(out)

    assert out.shape == (batch, nc, image_size, image_size)
    assert bool(jnp.all(jnp.isfinite(out)))
    assert bool(jnp.all((out >= 0.0) & (out <= 1.0)))

    # bf16 MXU operands + fused training-mode BN vs. a pure f32 reference.
    ref = generator_reference(noise, label, params, image_size=image_size)
    err = float(jnp.max(jnp.abs(out - ref)))
    assert err < 5e-2, f"max |pallas - reference| = {err}"
    print("KERNEL_OK")
</pallas_src>

<mosaic_0001>
module attributes {stable_mosaic.version = 11 : i64} {
  func.func @_fc_bn_relu_kernel(%arg0: i32, %arg1: memref<16x128xbf16, #tpu.memory_space<vmem>>, %arg2: memref<128x1024xbf16, #tpu.memory_space<vmem>>, %arg3: memref<1x1024xf32, #tpu.memory_space<vmem>>, %arg4: memref<1x1024xf32, #tpu.memory_space<vmem>>, %arg5: memref<16x1024xbf16, #tpu.memory_space<vmem>>) attributes {dimension_semantics = [#tpu.dimension_semantics<parallel>], iteration_bounds = array<i64: 1>, scalar_prefetch = 0 : i64, scratch_operands = 0 : i64, tpu.core_type = #tpu.core_type<tc>, window_params = [{pipeline_mode = #tpu.pipeline_mode<synchronous>, transform_indices = @transform_0, window_bounds = array<i64: 16, 128>}, {transform_indices = @transform_1, window_bounds = array<i64: 128, 1024>}, {transform_indices = @transform_2, window_bounds = array<i64: 1, 1024>}, {transform_indices = @transform_3, window_bounds = array<i64: 1, 1024>}, {transform_indices = @transform_4, window_bounds = array<i64: 16, 1024>}]} {
    %c0 = arith.constant 0 : index
    %c0_0 = arith.constant 0 : index
    %0 = vector.load %arg1[%c0, %c0_0] : memref<16x128xbf16, #tpu.memory_space<vmem>>, vector<16x128xbf16>
    %c0_1 = arith.constant 0 : index
    %c0_2 = arith.constant 0 : index
    %1 = vector.load %arg2[%c0_1, %c0_2] : memref<128x1024xbf16, #tpu.memory_space<vmem>>, vector<128x1024xbf16>
    %cst = arith.constant dense<0.000000e+00> : vector<16x1024xf32>
    %2 = tpu.matmul %0, %1, %cst {dimension_numbers = #tpu.dot_dimension_numbers<[1], [0], [0], [1], [0, 0, 1, 1], [], []>} : vector<16x128xbf16>, vector<128x1024xbf16>, vector<16x1024xf32> -> vector<16x1024xf32>
    %cst_3 = arith.constant dense<0.000000e+00> : vector<1024xf32>
    %3 = vector.multi_reduction <add>, %2, %cst_3 [0] : vector<16x1024xf32> to vector<1024xf32>
    %4 = vector.shape_cast %3 : vector<1024xf32> to vector<1x1024xf32>
    %5 = arith.mulf %2, %2 : vector<16x1024xf32>
    %cst_4 = arith.constant dense<0.000000e+00> : vector<1024xf32>
    %6 = vector.multi_reduction <add>, %5, %cst_4 [0] : vector<16x1024xf32> to vector<1024xf32>
    %7 = vector.shape_cast %6 : vector<1024xf32> to vector<1x1024xf32>
    %cst_5 = arith.constant 8.000000e+00 : f32
    %8 = vector.broadcast %cst_5 : f32 to vector<1x1024xf32>
    %9 = arith.divf %4, %8 : vector<1x1024xf32>
    %cst_6 = arith.constant 8.000000e+00 : f32
    %10 = vector.broadcast %cst_6 : f32 to vector<1x1024xf32>
    %11 = arith.divf %7, %10 : vector<1x1024xf32>
    %12 = arith.mulf %9, %9 : vector<1x1024xf32>
    %13 = arith.subf %11, %12 : vector<1x1024xf32>
    %cst_7 = arith.constant 0.000000e+00 : f32
    %14 = vector.broadcast %cst_7 : f32 to vector<1x1024xf32>
    %15 = arith.maximumf %13, %14 : vector<1x1024xf32>
    %cst_8 = arith.constant 9.99999974E-6 : f32
    %16 = vector.broadcast %cst_8 : f32 to vector<1x1024xf32>
    %17 = arith.addf %15, %16 : vector<1x1024xf32>
    %18 = math.rsqrt %17 : vector<1x1024xf32>
    %19 = vector.broadcast %9 : vector<1x1024xf32> to vector<16x1024xf32>
    %20 = arith.subf %2, %19 : vector<16x1024xf32>
    %21 = vector.broadcast %18 : vector<1x1024xf32> to vector<16x1024xf32>
    %22 = arith.mulf %20, %21 : vector<16x1024xf32>
    %c0_9 = arith.constant 0 : index
    %c0_10 = arith.constant 0 : index
    %23 = vector.load %arg3[%c0_9, %c0_10] : memref<1x1024xf32, #tpu.memory_space<vmem>>, vector<1x1024xf32>
    %24 = vector.broadcast %23 : vector<1x1024xf32> to vector<16x1024xf32>
    %25 = arith.mulf %22, %24 : vector<16x1024xf32>
    %c0_11 = arith.constant 0 : index
    %c0_12 = arith.constant 0 : index
    %26 = vector.load %arg4[%c0_11, %c0_12] : memref<1x1024xf32, #tpu.memory_space<vmem>>, vector<1x1024xf32>
    %27 = vector.broadcast %26 : vector<1x1024xf32> to vector<16x1024xf32>
    %28 = arith.addf %25, %27 : vector<16x1024xf32>
    %cst_13 = arith.constant 0.000000e+00 : f32
    %29 = vector.broadcast %cst_13 : f32 to vector<16x1024xf32>
    %30 = arith.maximumf %28, %29 : vector<16x1024xf32>
    %31 = tpu.iota {dimensions = array<i32: 0>} : vector<16x1024xi32>
    %c8_i32 = arith.constant 8 : i32
    %32 = vector.broadcast %c8_i32 : i32 to vector<16x1024xi32>
    %33 = arith.cmpi slt, %31, %32 : vector<16x1024xi32>
    %cst_14 = arith.constant 0.000000e+00 : f32
    %34 = vector.broadcast %cst_14 : f32 to vector<16x1024xf32>
    %35 = arith.select %33, %30, %34 : vector<16x1024xi1>, vector<16x1024xf32>
    %36 = arith.truncf %35 : vector<16x1024xf32> to vector<16x1024xbf16>
    %c0_15 = arith.constant 0 : index
    %c0_16 = arith.constant 0 : index
    %37 = vector.load %arg5[%c0_15, %c0_16] : memref<16x1024xbf16, #tpu.memory_space<vmem>>, vector<16x1024xbf16>
    tpu.vector_store %arg5[%c0_15, %c0_16], %36 {strides = array<i32>} : memref<16x1024xbf16, #tpu.memory_space<vmem>>, vector<16x1024xbf16>,
    return
  }
  func.func @transform_0(%arg0: i32) -> (i32, i32) {
    %c0_i32 = arith.constant 0 : i32
    %c0_i32_0 = arith.constant 0 : i32
    %c0_i32_1 = arith.constant 0 : i32
    return %c0_i32, %c0_i32_0 : i32, i32
  }
  func.func @transform_1(%arg0: i32) -> (i32, i32) {
    %c0_i32 = arith.constant 0 : i32
    %c0_i32_0 = arith.constant 0 : i32
    return %c0_i32, %arg0 : i32, i32
  }
  func.func @transform_2(%arg0: i32) -> (i32, i32) {
    %c0_i32 = arith.constant 0 : i32
    %c0_i32_0 = arith.constant 0 : i32
    return %c0_i32, %arg0 : i32, i32
  }
  func.func @transform_3(%arg0: i32) -> (i32, i32) {
    %c0_i32 = arith.constant 0 : i32
    %c0_i32_0 = arith.constant 0 : i32
    return %c0_i32, %arg0 : i32, i32
  }
  func.func @transform_4(%arg0: i32) -> (i32, i32) {
    %c0_i32 = arith.constant 0 : i32
    %c0_i32_0 = arith.constant 0 : i32
    return %c0_i32, %arg0 : i32, i32
  }
}

module attributes {stable_mosaic.version = 11 : i64} {
  func.func @_fc_bn_relu_kernel(%arg0: i32, %arg1: memref<16x1024xbf16, #tpu.memory_space<vmem>>, %arg2: memref<1024x1024xbf16, #tpu.memory_space<vmem>>, %arg3: memref<1x1024xf32, #tpu.memory_space<vmem>>, %arg4: memref<1x1024xf32, #tpu.memory_space<vmem>>, %arg5: memref<16x1024xbf16, #tpu.memory_space<vmem>>) attributes {dimension_semantics = [#tpu.dimension_semantics<parallel>], iteration_bounds = array<i64: 2>, scalar_prefetch = 0 : i64, scratch_operands = 0 : i64, tpu.core_type = #tpu.core_type<tc>, window_params = [{pipeline_mode = #tpu.pipeline_mode<synchronous>, transform_indices = @transform_0, window_bounds = array<i64: 16, 1024>}, {transform_indices = @transform_1, window_bounds = array<i64: 1024, 1024>}, {transform_indices = @transform_2, window_bounds = array<i64: 1, 1024>}, {transform_indices = @transform_3, window_bounds = array<i64: 1, 1024>}, {transform_indices = @transform_4, window_bounds = array<i64: 16, 1024>}]} {
    %c0 = arith.constant 0 : index
    %c0_0 = arith.constant 0 : index
    %0 = vector.load %arg1[%c0, %c0_0] : memref<16x1024xbf16, #tpu.memory_space<vmem>>, vector<16x1024xbf16>
    %c0_1 = arith.constant 0 : index
    %c0_2 = arith.constant 0 : index
    %1 = vector.load %arg2[%c0_1, %c0_2] : memref<1024x1024xbf16, #tpu.memory_space<vmem>>, vector<1024x1024xbf16>
    %cst = arith.constant dense<0.000000e+00> : vector<16x1024xf32>
    %2 = tpu.matmul %0, %1, %cst {dimension_numbers = #tpu.dot_dimension_numbers<[1], [0], [0], [1], [0, 0, 1, 1], [], []>} : vector<16x1024xbf16>, vector<1024x1024xbf16>, vector<16x1024xf32> -> vector<16x1024xf32>
    %cst_3 = arith.constant dense<0.000000e+00> : vector<1024xf32>
    %3 = vector.multi_reduction <add>, %2, %cst_3 [0] : vector<16x1024xf32> to vector<1024xf32>
    %4 = vector.shape_cast %3 : vector<1024xf32> to vector<1x1024xf32>
    %5 = arith.mulf %2, %2 : vector<16x1024xf32>
    %cst_4 = arith.constant dense<0.000000e+00> : vector<1024xf32>
    %6 = vector.multi_reduction <add>, %5, %cst_4 [0] : vector<16x1024xf32> to vector<1024xf32>
    %7 = vector.shape_cast %6 : vector<1024xf32> to vector<1x1024xf32>
    %cst_5 = arith.constant 8.000000e+00 : f32
    %8 = vector.broadcast %cst_5 : f32 to vector<1x1024xf32>
    %9 = arith.divf %4, %8 : vector<1x1024xf32>
    %cst_6 = arith.constant 8.000000e+00 : f32
    %10 = vector.broadcast %cst_6 : f32 to vector<1x1024xf32>
    %11 = arith.divf %7, %10 : vector<1x1024xf32>
    %12 = arith.mulf %9, %9 : vector<1x1024xf32>
    %13 = arith.subf %11, %12 : vector<1x1024xf32>
    %cst_7 = arith.constant 0.000000e+00 : f32
    %14 = vector.broadcast %cst_7 : f32 to vector<1x1024xf32>
    %15 = arith.maximumf %13, %14 : vector<1x1024xf32>
    %cst_8 = arith.constant 9.99999974E-6 : f32
    %16 = vector.broadcast %cst_8 : f32 to vector<1x1024xf32>
    %17 = arith.addf %15, %16 : vector<1x1024xf32>
    %18 = math.rsqrt %17 : vector<1x1024xf32>
    %19 = vector.broadcast %9 : vector<1x1024xf32> to vector<16x1024xf32>
    %20 = arith.subf %2, %19 : vector<16x1024xf32>
    %21 = vector.broadcast %18 : vector<1x1024xf32> to vector<16x1024xf32>
    %22 = arith.mulf %20, %21 : vector<16x1024xf32>
    %c0_9 = arith.constant 0 : index
    %c0_10 = arith.constant 0 : index
    %23 = vector.load %arg3[%c0_9, %c0_10] : memref<1x1024xf32, #tpu.memory_space<vmem>>, vector<1x1024xf32>
    %24 = vector.broadcast %23 : vector<1x1024xf32> to vector<16x1024xf32>
    %25 = arith.mulf %22, %24 : vector<16x1024xf32>
    %c0_11 = arith.constant 0 : index
    %c0_12 = arith.constant 0 : index
    %26 = vector.load %arg4[%c0_11, %c0_12] : memref<1x1024xf32, #tpu.memory_space<vmem>>, vector<1x1024xf32>
    %27 = vector.broadcast %26 : vector<1x1024xf32> to vector<16x1024xf32>
    %28 = arith.addf %25, %27 : vector<16x1024xf32>
    %cst_13 = arith.constant 0.000000e+00 : f32
    %29 = vector.broadcast %cst_13 : f32 to vector<16x1024xf32>
    %30 = arith.maximumf %28, %29 : vector<16x1024xf32>
    %31 = tpu.iota {dimensions = array<i32: 0>} : vector<16x1024xi32>
    %c8_i32 = arith.constant 8 : i32
    %32 = vector.broadcast %c8_i32 : i32 to vector<16x1024xi32>
    %33 = arith.cmpi slt, %31, %32 : vector<16x1024xi32>
    %cst_14 = arith.constant 0.000000e+00 : f32
    %34 = vector.broadcast %cst_14 : f32 to vector<16x1024xf32>
    %35 = arith.select %33, %30, %34 : vector<16x1024xi1>, vector<16x1024xf32>
    %36 = arith.truncf %35 : vector<16x1024xf32> to vector<16x1024xbf16>
    %c0_15 = arith.constant 0 : index
    %c0_16 = arith.constant 0 : index
    %37 = vector.load %arg5[%c0_15, %c0_16] : memref<16x1024xbf16, #tpu.memory_space<vmem>>, vector<16x1024xbf16>
    tpu.vector_store %arg5[%c0_15, %c0_16], %36 {strides = array<i32>} : memref<16x1024xbf16, #tpu.memory_space<vmem>>, vector<16x1024xbf16>,
    return
  }
  func.func @transform_0(%arg0: i32) -> (i32, i32) {
    %c0_i32 = arith.constant 0 : i32
    %c0_i32_0 = arith.constant 0 : i32
    %c0_i32_1 = arith.constant 0 : i32
    return %c0_i32, %c0_i32_0 : i32, i32
  }
  func.func @transform_1(%arg0: i32) -> (i32, i32) {
    %c0_i32 = arith.constant 0 : i32
    %c0_i32_0 = arith.constant 0 : i32
    return %c0_i32, %arg0 : i32, i32
  }
  func.func @transform_2(%arg0: i32) -> (i32, i32) {
    %c0_i32 = arith.constant 0 : i32
    %c0_i32_0 = arith.constant 0 : i32
    return %c0_i32, %arg0 : i32, i32
  }
  func.func @transform_3(%arg0: i32) -> (i32, i32) {
    %c0_i32 = arith.constant 0 : i32
    %c0_i32_0 = arith.constant 0 : i32
    return %c0_i32, %arg0 : i32, i32
  }
  func.func @transform_4(%arg0: i32) -> (i32, i32) {
    %c0_i32 = arith.constant 0 : i32
    %c0_i32_0 = arith.constant 0 : i32
    return %c0_i32, %arg0 : i32, i32
  }
}

module attributes {stable_mosaic.version = 11 : i64} {
  func.func @_deconv_tap_kernel(%arg0: i32, %arg1: memref<1x40x128xbf16, #tpu.memory_space<vmem>>, %arg2: memref<9x128x256xbf16, #tpu.memory_space<vmem>>, %arg3: memref<1x256xf32, #tpu.memory_space<vmem>>, %arg4: memref<1x24x256xbf16, #tpu.memory_space<vmem>>, %arg5: memref<1x1x256xf32, #tpu.memory_space<vmem>>, %arg6: memref<1x1x256xf32, #tpu.memory_space<vmem>>) attributes {dimension_semantics = [#tpu.dimension_semantics<parallel>], iteration_bounds = array<i64: 8>, scalar_prefetch = 0 : i64, scratch_operands = 0 : i64, tpu.core_type = #tpu.core_type<tc>, window_params = [{transform_indices = @transform_0, window_bounds = array<i64: 1, 40, 128>}, {pipeline_mode = #tpu.pipeline_mode<synchronous>, transform_indices = @transform_1, window_bounds = array<i64: 9, 128, 256>}, {pipeline_mode = #tpu.pipeline_mode<synchronous>, transform_indices = @transform_2, window_bounds = array<i64: 1, 256>}, {transform_indices = @transform_3, window_bounds = array<i64: 1, 24, 256>}, {transform_indices = @transform_4, window_bounds = array<i64: 1, 1, 256>}, {transform_indices = @transform_5, window_bounds = array<i64: 1, 1, 256>}]} {
    %c0 = arith.constant 0 : index
    %c0_0 = arith.constant 0 : index
    %c0_1 = arith.constant 0 : index
    %0 = vector.load %arg1[%c0, %c0_0, %c0_1] : memref<1x40x128xbf16, #tpu.memory_space<vmem>>, vector<1x24x128xbf16>
    %1 = vector.shape_cast %0 : vector<1x24x128xbf16> to vector<24x128xbf16>
    %c0_2 = arith.constant 0 : index
    %c0_3 = arith.constant 0 : index
    %c0_4 = arith.constant 0 : index
    %2 = vector.load %arg2[%c0_2, %c0_3, %c0_4] : memref<9x128x256xbf16, #tpu.memory_space<vmem>>, vector<1x128x256xbf16>
    %3 = vector.shape_cast %2 : vector<1x128x256xbf16> to vector<128x256xbf16>
    %cst = arith.constant dense<0.000000e+00> : vector<24x256xf32>
    %4 = tpu.matmul %1, %3, %cst {dimension_numbers = #tpu.dot_dimension_numbers<[1], [0], [0], [1], [0, 0, 1, 1], [], []>} : vector<24x128xbf16>, vector<128x256xbf16>, vector<24x256xf32> -> vector<24x256xf32>
    %c0_5 = arith.constant 0 : index
    %c1 = arith.constant 1 : index
    %c0_6 = arith.constant 0 : index
    %5 = vector.load %arg1[%c0_5, %c1, %c0_6] : memref<1x40x128xbf16, #tpu.memory_space<vmem>>, vector<1x24x128xbf16>
    %6 = vector.shape_cast %5 : vector<1x24x128xbf16> to vector<24x128xbf16>
    %c1_7 = arith.constant 1 : index
    %c0_8 = arith.constant 0 : index
    %c0_9 = arith.constant 0 : index
    %7 = vector.load %arg2[%c1_7, %c0_8, %c0_9] : memref<9x128x256xbf16, #tpu.memory_space<vmem>>, vector<1x128x256xbf16>
    %8 = vector.shape_cast %7 : vector<1x128x256xbf16> to vector<128x256xbf16>
    %cst_10 = arith.constant dense<0.000000e+00> : vector<24x256xf32>
    %9 = tpu.matmul %6, %8, %cst_10 {dimension_numbers = #tpu.dot_dimension_numbers<[1], [0], [0], [1], [0, 0, 1, 1], [], []>} : vector<24x128xbf16>, vector<128x256xbf16>, vector<24x256xf32> -> vector<24x256xf32>
    %10 = arith.addf %4, %9 : vector<24x256xf32>
    %c0_11 = arith.constant 0 : index
    %c2 = arith.constant 2 : index
    %c0_12 = arith.constant 0 : index
    %11 = vector.load %arg1[%c0_11, %c2, %c0_12] : memref<1x40x128xbf16, #tpu.memory_space<vmem>>, vector<1x24x128xbf16>
    %12 = vector.shape_cast %11 : vector<1x24x128xbf16> to vector<24x128xbf16>
    %c2_13 = arith.constant 2 : index
    %c0_14 = arith.constant 0 : index
    %c0_15 = arith.constant 0 : index
    %13 = vector.load %arg2[%c2_13, %c0_14, %c0_15] : memref<9x128x256xbf16, #tpu.memory_space<vmem>>, vector<1x128x256xbf16>
    %14 = vector.shape_cast %13 : vector<1x128x256xbf16> to vector<128x256xbf16>
    %cst_16 = arith.constant dense<0.000000e+00> : vector<24x256xf32>
    %15 = tpu.matmul %12, %14, %cst_16 {dimension_numbers = #tpu.dot_dimension_numbers<[1], [0], [0], [1], [0, 0, 1, 1], [], []>} : vector<24x128xbf16>, vector<128x256xbf16>, vector<24x256xf32> -> vector<24x256xf32>
    %16 = arith.addf %10, %15 : vector<24x256xf32>
    %c0_17 = arith.constant 0 : index
    %c6 = arith.constant 6 : index
    %c0_18 = arith.constant 0 : index
    %17 = vector.load %arg1[%c0_17, %c6, %c0_18] : memref<1x40x128xbf16, #tpu.memory_space<vmem>>, vector<1x24x128xbf16>
    %18 = vector.shape_cast %17 : vector<1x24x128xbf16> to vector<24x128xbf16>
    %c3 = arith.constant 3 : index
    %c0_19 = arith.constant 0 : index
    %c0_20 = arith.constant 0 : index
    %19 = vector.load %arg2[%c3, %c0_19, %c0_20] : memref<9x128x256xbf16, #tpu.memory_space<vmem>>, vector<1x128x256xbf16>
    %20 = vector.shape_cast %19 : vector<1x128x256xbf16> to vector<128x256xbf16>
    %cst_21 = arith.constant dense<0.000000e+00> : vector<24x256xf32>
    %21 = tpu.matmul %18, %20, %cst_21 {dimension_numbers = #tpu.dot_dimension_numbers<[1], [0], [0], [1], [0, 0, 1, 1], [], []>} : vector<24x128xbf16>, vector<128x256xbf16>, vector<24x256xf32> -> vector<24x256xf32>
    %22 = arith.addf %16, %21 : vector<24x256xf32>
    %c0_22 = arith.constant 0 : index
    %c7 = arith.constant 7 : index
    %c0_23 = arith.constant 0 : index
    %23 = vector.load %arg1[%c0_22, %c7, %c0_23] : memref<1x40x128xbf16, #tpu.memory_space<vmem>>, vector<1x24x128xbf16>
    %24 = vector.shape_cast %23 : vector<1x24x128xbf16> to vector<24x128xbf16>
    %c4 = arith.constant 4 : index
    %c0_24 = arith.constant 0 : index
    %c0_25 = arith.constant 0 : index
    %25 = vector.load %arg2[%c4, %c0_24, %c0_25] : memref<9x128x256xbf16, #tpu.memory_space<vmem>>, vector<1x128x256xbf16>
    %26 = vector.shape_cast %25 : vector<1x128x256xbf16> to vector<128x256xbf16>
    %cst_26 = arith.constant dense<0.000000e+00> : vector<24x256xf32>
    %27 = tpu.matmul %24, %26, %cst_26 {dimension_numbers = #tpu.dot_dimension_numbers<[1], [0], [0], [1], [0, 0, 1, 1], [], []>} : vector<24x128xbf16>, vector<128x256xbf16>, vector<24x256xf32> -> vector<24x256xf32>
    %28 = arith.addf %22, %27 : vector<24x256xf32>
    %c0_27 = arith.constant 0 : index
    %c8 = arith.constant 8 : index
    %c0_28 = arith.constant 0 : index
    %29 = vector.load %arg1[%c0_27, %c8, %c0_28] : memref<1x40x128xbf16, #tpu.memory_space<vmem>>, vector<1x24x128xbf16>
    %30 = vector.shape_cast %29 : vector<1x24x128xbf16> to vector<24x128xbf16>
    %c5 = arith.constant 5 : index
    %c0_29 = arith.constant 0 : index
    %c0_30 = arith.constant 0 : index
    %31 = vector.load %arg2[%c5, %c0_29, %c0_30] : memref<9x128x256xbf16, #tpu.memory_space<vmem>>, vector<1x128x256xbf16>
    %32 = vector.shape_cast %31 : vector<1x128x256xbf16> to vector<128x256xbf16>
    %cst_31 = arith.constant dense<0.000000e+00> : vector<24x256xf32>
    %33 = tpu.matmul %30, %32, %cst_31 {dimension_numbers = #tpu.dot_dimension_numbers<[1], [0], [0], [1], [0, 0, 1, 1], [], []>} : vector<24x128xbf16>, vector<128x256xbf16>, vector<24x256xf32> -> vector<24x256xf32>
    %34 = arith.addf %28, %33 : vector<24x256xf32>
    %c0_32 = arith.constant 0 : index
    %c12 = arith.constant 12 : index
    %c0_33 = arith.constant 0 : index
    %35 = vector.load %arg1[%c0_32, %c12, %c0_33] : memref<1x40x128xbf16, #tpu.memory_space<vmem>>, vector<1x24x128xbf16>
    %36 = vector.shape_cast %35 : vector<1x24x128xbf16> to vector<24x128xbf16>
    %c6_34 = arith.constant 6 : index
    %c0_35 = arith.constant 0 : index
    %c0_36 = arith.constant 0 : index
    %37 = vector.load %arg2[%c6_34, %c0_35, %c0_36] : memref<9x128x256xbf16, #tpu.memory_space<vmem>>, vector<1x128x256xbf16>
    %38 = vector.shape_cast %37 : vector<1x128x256xbf16> to vector<128x256xbf16>
    %cst_37 = arith.constant dense<0.000000e+00> : vector<24x256xf32>
    %39 = tpu.matmul %36, %38, %cst_37 {dimension_numbers = #tpu.dot_dimension_numbers<[1], [0], [0], [1], [0, 0, 1, 1], [], []>} : vector<24x128xbf16>, vector<128x256xbf16>, vector<24x256xf32> -> vector<24x256xf32>
    %40 = arith.addf %34, %39 : vector<24x256xf32>
    %c0_38 = arith.constant 0 : index
    %c13 = arith.constant 13 : index
    %c0_39 = arith.constant 0 : index
    %41 = vector.load %arg1[%c0_38, %c13, %c0_39] : memref<1x40x128xbf16, #tpu.memory_space<vmem>>, vector<1x24x128xbf16>
    %42 = vector.shape_cast %41 : vector<1x24x128xbf16> to vector<24x128xbf16>
    %c7_40 = arith.constant 7 : index
    %c0_41 = arith.constant 0 : index
    %c0_42 = arith.constant 0 : index
    %43 = vector.load %arg2[%c7_40, %c0_41, %c0_42] : memref<9x128x256xbf16, #tpu.memory_space<vmem>>, vector<1x128x256xbf16>
    %44 = vector.shape_cast %43 : vector<1x128x256xbf16> to vector<128x256xbf16>
    %cst_43 = arith.constant dense<0.000000e+00> : vector<24x256xf32>
    %45 = tpu.matmul %42, %44, %cst_43 {dimension_numbers = #tpu.dot_dimension_numbers<[1], [0], [0], [1], [0, 0, 1, 1], [], []>} : vector<24x128xbf16>, vector<128x256xbf16>, vector<24x256xf32> -> vector<24x256xf32>
    %46 = arith.addf %40, %45 : vector<24x256xf32>
    %c0_44 = arith.constant 0 : index
    %c14 = arith.constant 14 : index
    %c0_45 = arith.constant 0 : index
    %47 = vector.load %arg1[%c0_44, %c14, %c0_45] : memref<1x40x128xbf16, #tpu.memory_space<vmem>>, vector<1x24x128xbf16>
    %48 = vector.shape_cast %47 : vector<1x24x128xbf16> to vector<24x128xbf16>
    %c8_46 = arith.constant 8 : index
    %c0_47 = arith.constant 0 : index
    %c0_48 = arith.constant 0 : index
    %49 = vector.load %arg2[%c8_46, %c0_47, %c0_48] : memref<9x128x256xbf16, #tpu.memory_space<vmem>>, vector<1x128x256xbf16>
    %50 = vector.shape_cast %49 : vector<1x128x256xbf16> to vector<128x256xbf16>
    %cst_49 = arith.constant dense<0.000000e+00> : vector<24x256xf32>
    %51 = tpu.matmul %48, %50, %cst_49 {dimension_numbers = #tpu.dot_dimension_numbers<[1], [0], [0], [1], [0, 0, 1, 1], [], []>} : vector<24x128xbf16>, vector<128x256xbf16>, vector<24x256xf32> -> vector<24x256xf32>
    %52 = arith.addf %46, %51 : vector<24x256xf32>
    %c0_50 = arith.constant 0 : index
    %c0_51 = arith.constant 0 : index
    %53 = vector.load %arg3[%c0_50, %c0_51] : memref<1x256xf32, #tpu.memory_space<vmem>>, vector<1x256xf32>
    %54 = vector.broadcast %53 : vector<1x256xf32> to vector<24x256xf32>
    %55 = arith.addf %52, %54 : vector<24x256xf32>
    %56 = tpu.iota {dimensions = array<i32: 0>} : vector<24x1xi32>
    %c6_i32 = arith.constant 6 : i32
    %c0_i32 = arith.constant 0 : i32
    %57 = arith.cmpi eq, %c6_i32, %c0_i32 : i32
    %c1_i32 = arith.constant 1 : i32
    %58 = arith.select %57, %c1_i32, %c6_i32 : i32
    %59 = vector.broadcast %58 : i32 to vector<24x1xi32>
    %60 = arith.remsi %56, %59 : vector<24x1xi32>
    %c0_i32_52 = arith.constant 0 : i32
    %61 = vector.broadcast %c0_i32_52 : i32 to vector<24x1xi32>
    %62 = arith.cmpi ne, %60, %61 : vector<24x1xi32>
    %c0_i32_53 = arith.constant 0 : i32
    %63 = vector.broadcast %c0_i32_53 : i32 to vector<24x1xi32>
    %64 = arith.cmpi slt, %60, %63 : vector<24x1xi32>
    %c0_i32_54 = arith.constant 0 : i32
    %65 = arith.cmpi slt, %58, %c0_i32_54 : i32
    %66 = vector.broadcast %65 : i1 to vector<24x1xi1>
    %67 = vector.broadcast %66 : vector<24x1xi1> to vector<24x1xi1>
    %68 = arith.xori %64, %67 : vector<24x1xi1>
    %69 = arith.andi %68, %62 : vector<24x1xi1>
    %70 = vector.broadcast %58 : i32 to vector<24x1xi32>
    %71 = arith.addi %60, %70 : vector<24x1xi32>
    %72 = arith.select %69, %71, %60 : vector<24x1xi1>, vector<24x1xi32>
    %c4_i32 = arith.constant 4 : i32
    %73 = vector.broadcast %c4_i32 : i32 to vector<24x1xi32>
    %74 = arith.cmpi slt, %72, %73 : vector<24x1xi32>
    %cst_55 = arith.constant 0.000000e+00 : f32
    %75 = vector.shape_cast %74 : vector<24x1xi1> to vector<24x1xi1>
    %76 = vector.broadcast %75 : vector<24x1xi1> to vector<24x256xi1>
    %77 = vector.broadcast %cst_55 : f32 to vector<24x256xf32>
    %78 = arith.select %76, %55, %77 : vector<24x256xi1>, vector<24x256xf32>
    %cst_56 = arith.constant dense<0.000000e+00> : vector<256xf32>
    %79 = vector.multi_reduction <add>, %78, %cst_56 [0] : vector<24x256xf32> to vector<256xf32>
    %80 = vector.shape_cast %79 : vector<256xf32> to vector<1x256xf32>
    %c0_57 = arith.constant 0 : index
    %c0_58 = arith.constant 0 : index
    %c0_59 = arith.constant 0 : index
    %81 = vector.load %arg5[%c0_57, %c0_58, %c0_59] : memref<1x1x256xf32, #tpu.memory_space<vmem>>, vector<1x1x256xf32>
    %82 = vector.shape_cast %81 : vector<1x1x256xf32> to vector<1x256xf32>
    %83 = vector.shape_cast %80 : vector<1x256xf32> to vector<1x1x256xf32>
    tpu.vector_store %arg5[%c0_57, %c0_58, %c0_59], %83 {strides = array<i32>} : memref<1x1x256xf32, #tpu.memory_space<vmem>>, vector<1x1x256xf32>,
    %84 = arith.mulf %78, %78 : vector<24x256xf32>
    %cst_60 = arith.constant dense<0.000000e+00> : vector<256xf32>
    %85 = vector.multi_reduction <add>, %84, %cst_60 [0] : vector<24x256xf32> to vector<256xf32>
    %86 = vector.shape_cast %85 : vector<256xf32> to vector<1x256xf32>
    %c0_61 = arith.constant 0 : index
    %c0_62 = arith.constant 0 : index
    %c0_63 = arith.constant 0 : index
    %87 = vector.load %arg6[%c0_61, %c0_62, %c0_63] : memref<1x1x256xf32, #tpu.memory_space<vmem>>, vector<1x1x256xf32>
    %88 = vector.shape_cast %87 : vector<1x1x256xf32> to vector<1x256xf32>
    %89 = vector.shape_cast %86 : vector<1x256xf32> to vector<1x1x256xf32>
    tpu.vector_store %arg6[%c0_61, %c0_62, %c0_63], %89 {strides = array<i32>} : memref<1x1x256xf32, #tpu.memory_space<vmem>>, vector<1x1x256xf32>,
    %90 = arith.truncf %55 : vector<24x256xf32> to vector<24x256xbf16>
    %c0_64 = arith.constant 0 : index
    %c0_65 = arith.constant 0 : index
    %c0_66 = arith.constant 0 : index
    %91 = vector.load %arg4[%c0_64, %c0_65, %c0_66] : memref<1x24x256xbf16, #tpu.memory_space<vmem>>, vector<1x24x256xbf16>
    %92 = vector.shape_cast %91 : vector<1x24x256xbf16> to vector<24x256xbf16>
    %93 = vector.shape_cast %90 : vector<24x256xbf16> to vector<1x24x256xbf16>
    tpu.vector_store %arg4[%c0_64, %c0_65, %c0_66], %93 {strides = array<i32>} : memref<1x24x256xbf16, #tpu.memory_space<vmem>>, vector<1x24x256xbf16>,
    return
  }
  func.func @transform_0(%arg0: i32) -> (i32, i32, i32) {
    %c0_i32 = arith.constant 0 : i32
    %c0_i32_0 = arith.constant 0 : i32
    %c0_i32_1 = arith.constant 0 : i32
    return %arg0, %c0_i32, %c0_i32_0 : i32, i32, i32
  }
  func.func @transform_1(%arg0: i32) -> (i32, i32, i32) {
    %c0_i32 = arith.constant 0 : i32
    %c0_i32_0 = arith.constant 0 : i32
    %c0_i32_1 = arith.constant 0 : i32
    %c0_i32_2 = arith.constant 0 : i32
    return %c0_i32, %c0_i32_0, %c0_i32_1 : i32, i32, i32
  }
  func.func @transform_2(%arg0: i32) -> (i32, i32) {
    %c0_i32 = arith.constant 0 : i32
    %c0_i32_0 = arith.constant 0 : i32
    %c0_i32_1 = arith.constant 0 : i32
    return %c0_i32, %c0_i32_0 : i32, i32
  }
  func.func @transform_3(%arg0: i32) -> (i32, i32, i32) {
    %c0_i32 = arith.constant 0 : i32
    %c0_i32_0 = arith.constant 0 : i32
    %c0_i32_1 = arith.constant 0 : i32
    return %arg0, %c0_i32, %c0_i32_0 : i32, i32, i32
  }
  func.func @transform_4(%arg0: i32) -> (i32, i32, i32) {
    %c0_i32 = arith.constant 0 : i32
    %c0_i32_0 = arith.constant 0 : i32
    %c0_i32_1 = arith.constant 0 : i32
    return %arg0, %c0_i32, %c0_i32_0 : i32, i32, i32
  }
  func.func @transform_5(%arg0: i32) -> (i32, i32, i32) {
    %c0_i32 = arith.constant 0 : i32
    %c0_i32_0 = arith.constant 0 : i32
    %c0_i32_1 = arith.constant 0 : i32
    return %arg0, %c0_i32, %c0_i32_0 : i32, i32, i32
  }
}

module attributes {stable_mosaic.version = 11 : i64} {
  func.func @_deconv_tap_kernel(%arg0: i32, %arg1: memref<1x104x64xbf16, #tpu.memory_space<vmem>>, %arg2: memref<9x64x128xbf16, #tpu.memory_space<vmem>>, %arg3: memref<1x128xf32, #tpu.memory_space<vmem>>, %arg4: memref<1x80x128xf32, #tpu.memory_space<vmem>>) attributes {dimension_semantics = [#tpu.dimension_semantics<parallel>], iteration_bounds = array<i64: 8>, scalar_prefetch = 0 : i64, scratch_operands = 0 : i64, tpu.core_type = #tpu.core_type<tc>, window_params = [{transform_indices = @transform_0, window_bounds = array<i64: 1, 104, 64>}, {pipeline_mode = #tpu.pipeline_mode<synchronous>, transform_indices = @transform_1, window_bounds = array<i64: 9, 64, 128>}, {pipeline_mode = #tpu.pipeline_mode<synchronous>, transform_indices = @transform_2, window_bounds = array<i64: 1, 128>}, {transform_indices = @transform_3, window_bounds = array<i64: 1, 80, 128>}]} {
    %c0 = arith.constant 0 : index
    %c0_0 = arith.constant 0 : index
    %c0_1 = arith.constant 0 : index
    %0 = vector.load %arg1[%c0, %c0_0, %c0_1] : memref<1x104x64xbf16, #tpu.memory_space<vmem>>, vector<1x80x64xbf16>
    %1 = vector.shape_cast %0 : vector<1x80x64xbf16> to vector<80x64xbf16>
    %c0_2 = arith.constant 0 : index
    %c0_3 = arith.constant 0 : index
    %c0_4 = arith.constant 0 : index
    %2 = vector.load %arg2[%c0_2, %c0_3, %c0_4] : memref<9x64x128xbf16, #tpu.memory_space<vmem>>, vector<1x64x128xbf16>
    %3 = vector.shape_cast %2 : vector<1x64x128xbf16> to vector<64x128xbf16>
    %cst = arith.constant dense<0.000000e+00> : vector<80x128xf32>
    %4 = tpu.matmul %1, %3, %cst {dimension_numbers = #tpu.dot_dimension_numbers<[1], [0], [0], [1], [0, 0, 1, 1], [], []>} : vector<80x64xbf16>, vector<64x128xbf16>, vector<80x128xf32> -> vector<80x128xf32>
    %c0_5 = arith.constant 0 : index
    %c1 = arith.constant 1 : index
    %c0_6 = arith.constant 0 : index
    %5 = vector.load %arg1[%c0_5, %c1, %c0_6] : memref<1x104x64xbf16, #tpu.memory_space<vmem>>, vector<1x80x64xbf16>
    %6 = vector.shape_cast %5 : vector<1x80x64xbf16> to vector<80x64xbf16>
    %c1_7 = arith.constant 1 : index
    %c0_8 = arith.constant 0 : index
    %c0_9 = arith.constant 0 : index
    %7 = vector.load %arg2[%c1_7, %c0_8, %c0_9] : memref<9x64x128xbf16, #tpu.memory_space<vmem>>, vector<1x64x128xbf16>
    %8 = vector.shape_cast %7 : vector<1x64x128xbf16> to vector<64x128xbf16>
    %cst_10 = arith.constant dense<0.000000e+00> : vector<80x128xf32>
    %9 = tpu.matmul %6, %8, %cst_10 {dimension_numbers = #tpu.dot_dimension_numbers<[1], [0], [0], [1], [0, 0, 1, 1], [], []>} : vector<80x64xbf16>, vector<64x128xbf16>, vector<80x128xf32> -> vector<80x128xf32>
    %10 = arith.addf %4, %9 : vector<80x128xf32>
    %c0_11 = arith.constant 0 : index
    %c2 = arith.constant 2 : index
    %c0_12 = arith.constant 0 : index
    %11 = vector.load %arg1[%c0_11, %c2, %c0_12] : memref<1x104x64xbf16, #tpu.memory_space<vmem>>, vector<1x80x64xbf16>
    %12 = vector.shape_cast %11 : vector<1x80x64xbf16> to vector<80x64xbf16>
    %c2_13 = arith.constant 2 : index
    %c0_14 = arith.constant 0 : index
    %c0_15 = arith.constant 0 : index
    %13 = vector.load %arg2[%c2_13, %c0_14, %c0_15] : memref<9x64x128xbf16, #tpu.memory_space<vmem>>, vector<1x64x128xbf16>
    %14 = vector.shape_cast %13 : vector<1x64x128xbf16> to vector<64x128xbf16>
    %cst_16 = arith.constant dense<0.000000e+00> : vector<80x128xf32>
    %15 = tpu.matmul %12, %14, %cst_16 {dimension_numbers = #tpu.dot_dimension_numbers<[1], [0], [0], [1], [0, 0, 1, 1], [], []>} : vector<80x64xbf16>, vector<64x128xbf16>, vector<80x128xf32> -> vector<80x128xf32>
    %16 = arith.addf %10, %15 : vector<80x128xf32>
    %c0_17 = arith.constant 0 : index
    %c10 = arith.constant 10 : index
    %c0_18 = arith.constant 0 : index
    %17 = vector.load %arg1[%c0_17, %c10, %c0_18] : memref<1x104x64xbf16, #tpu.memory_space<vmem>>, vector<1x80x64xbf16>
    %18 = vector.shape_cast %17 : vector<1x80x64xbf16> to vector<80x64xbf16>
    %c3 = arith.constant 3 : index
    %c0_19 = arith.constant 0 : index
    %c0_20 = arith.constant 0 : index
    %19 = vector.load %arg2[%c3, %c0_19, %c0_20] : memref<9x64x128xbf16, #tpu.memory_space<vmem>>, vector<1x64x128xbf16>
    %20 = vector.shape_cast %19 : vector<1x64x128xbf16> to vector<64x128xbf16>
    %cst_21 = arith.constant dense<0.000000e+00> : vector<80x128xf32>
    %21 = tpu.matmul %18, %20, %cst_21 {dimension_numbers = #tpu.dot_dimension_numbers<[1], [0], [0], [1], [0, 0, 1, 1], [], []>} : vector<80x64xbf16>, vector<64x128xbf16>, vector<80x128xf32> -> vector<80x128xf32>
    %22 = arith.addf %16, %21 : vector<80x128xf32>
    %c0_22 = arith.constant 0 : index
    %c11 = arith.constant 11 : index
    %c0_23 = arith.constant 0 : index
    %23 = vector.load %arg1[%c0_22, %c11, %c0_23] : memref<1x104x64xbf16, #tpu.memory_space<vmem>>, vector<1x80x64xbf16>
    %24 = vector.shape_cast %23 : vector<1x80x64xbf16> to vector<80x64xbf16>
    %c4 = arith.constant 4 : index
    %c0_24 = arith.constant 0 : index
    %c0_25 = arith.constant 0 : index
    %25 = vector.load %arg2[%c4, %c0_24, %c0_25] : memref<9x64x128xbf16, #tpu.memory_space<vmem>>, vector<1x64x128xbf16>
    %26 = vector.shape_cast %25 : vector<1x64x128xbf16> to vector<64x128xbf16>
    %cst_26 = arith.constant dense<0.000000e+00> : vector<80x128xf32>
    %27 = tpu.matmul %24, %26, %cst_26 {dimension_numbers = #tpu.dot_dimension_numbers<[1], [0], [0], [1], [0, 0, 1, 1], [], []>} : vector<80x64xbf16>, vector<64x128xbf16>, vector<80x128xf32> -> vector<80x128xf32>
    %28 = arith.addf %22, %27 : vector<80x128xf32>
    %c0_27 = arith.constant 0 : index
    %c12 = arith.constant 12 : index
    %c0_28 = arith.constant 0 : index
    %29 = vector.load %arg1[%c0_27, %c12, %c0_28] : memref<1x104x64xbf16, #tpu.memory_space<vmem>>, vector<1x80x64xbf16>
    %30 = vector.shape_cast %29 : vector<1x80x64xbf16> to vector<80x64xbf16>
    %c5 = arith.constant 5 : index
    %c0_29 = arith.constant 0 : index
    %c0_30 = arith.constant 0 : index
    %31 = vector.load %arg2[%c5, %c0_29, %c0_30] : memref<9x64x128xbf16, #tpu.memory_space<vmem>>, vector<1x64x128xbf16>
    %32 = vector.shape_cast %31 : vector<1x64x128xbf16> to vector<64x128xbf16>
    %cst_31 = arith.constant dense<0.000000e+00> : vector<80x128xf32>
    %33 = tpu.matmul %30, %32, %cst_31 {dimension_numbers = #tpu.dot_dimension_numbers<[1], [0], [0], [1], [0, 0, 1, 1], [], []>} : vector<80x64xbf16>, vector<64x128xbf16>, vector<80x128xf32> -> vector<80x128xf32>
    %34 = arith.addf %28, %33 : vector<80x128xf32>
    %c0_32 = arith.constant 0 : index
    %c20 = arith.constant 20 : index
    %c0_33 = arith.constant 0 : index
    %35 = vector.load %arg1[%c0_32, %c20, %c0_33] : memref<1x104x64xbf16, #tpu.memory_space<vmem>>, vector<1x80x64xbf16>
    %36 = vector.shape_cast %35 : vector<1x80x64xbf16> to vector<80x64xbf16>
    %c6 = arith.constant 6 : index
    %c0_34 = arith.constant 0 : index
    %c0_35 = arith.constant 0 : index
    %37 = vector.load %arg2[%c6, %c0_34, %c0_35] : memref<9x64x128xbf16, #tpu.memory_space<vmem>>, vector<1x64x128xbf16>
    %38 = vector.shape_cast %37 : vector<1x64x128xbf16> to vector<64x128xbf16>
    %cst_36 = arith.constant dense<0.000000e+00> : vector<80x128xf32>
    %39 = tpu.matmul %36, %38, %cst_36 {dimension_numbers = #tpu.dot_dimension_numbers<[1], [0], [0], [1], [0, 0, 1, 1], [], []>} : vector<80x64xbf16>, vector<64x128xbf16>, vector<80x128xf32> -> vector<80x128xf32>
    %40 = arith.addf %34, %39 : vector<80x128xf32>
    %c0_37 = arith.constant 0 : index
    %c21 = arith.constant 21 : index
    %c0_38 = arith.constant 0 : index
    %41 = vector.load %arg1[%c0_37, %c21, %c0_38] : memref<1x104x64xbf16, #tpu.memory_space<vmem>>, vector<1x80x64xbf16>
    %42 = vector.shape_cast %41 : vector<1x80x64xbf16> to vector<80x64xbf16>
    %c7 = arith.constant 7 : index
    %c0_39 = arith.constant 0 : index
    %c0_40 = arith.constant 0 : index
    %43 = vector.load %arg2[%c7, %c0_39, %c0_40] : memref<9x64x128xbf16, #tpu.memory_space<vmem>>, vector<1x64x128xbf16>
    %44 = vector.shape_cast %43 : vector<1x64x128xbf16> to vector<64x128xbf16>
    %cst_41 = arith.constant dense<0.000000e+00> : vector<80x128xf32>
    %45 = tpu.matmul %42, %44, %cst_41 {dimension_numbers = #tpu.dot_dimension_numbers<[1], [0], [0], [1], [0, 0, 1, 1], [], []>} : vector<80x64xbf16>, vector<64x128xbf16>, vector<80x128xf32> -> vector<80x128xf32>
    %46 = arith.addf %40, %45 : vector<80x128xf32>
    %c0_42 = arith.constant 0 : index
    %c22 = arith.constant 22 : index
    %c0_43 = arith.constant 0 : index
    %47 = vector.load %arg1[%c0_42, %c22, %c0_43] : memref<1x104x64xbf16, #tpu.memory_space<vmem>>, vector<1x80x64xbf16>
    %48 = vector.shape_cast %47 : vector<1x80x64xbf16> to vector<80x64xbf16>
    %c8 = arith.constant 8 : index
    %c0_44 = arith.constant 0 : index
    %c0_45 = arith.constant 0 : index
    %49 = vector.load %arg2[%c8, %c0_44, %c0_45] : memref<9x64x128xbf16, #tpu.memory_space<vmem>>, vector<1x64x128xbf16>
    %50 = vector.shape_cast %49 : vector<1x64x128xbf16> to vector<64x128xbf16>
    %cst_46 = arith.constant dense<0.000000e+00> : vector<80x128xf32>
    %51 = tpu.matmul %48, %50, %cst_46 {dimension_numbers = #tpu.dot_dimension_numbers<[1], [0], [0], [1], [0, 0, 1, 1], [], []>} : vector<80x64xbf16>, vector<64x128xbf16>, vector<80x128xf32> -> vector<80x128xf32>
    %52 = arith.addf %46, %51 : vector<80x128xf32>
    %c0_47 = arith.constant 0 : index
    %c0_48 = arith.constant 0 : index
    %53 = vector.load %arg3[%c0_47, %c0_48] : memref<1x128xf32, #tpu.memory_space<vmem>>, vector<1x128xf32>
    %54 = vector.broadcast %53 : vector<1x128xf32> to vector<80x128xf32>
    %55 = arith.addf %52, %54 : vector<80x128xf32>
    %56 = arith.negf %55 : vector<80x128xf32>
    %57 = math.exp %56 : vector<80x128xf32>
    %cst_49 = arith.constant 1.000000e+00 : f32
    %58 = vector.broadcast %cst_49 : f32 to vector<80x128xf32>
    %59 = arith.addf %58, %57 : vector<80x128xf32>
    %60 = arith.divf %58, %59 : vector<80x128xf32>
    %c0_50 = arith.constant 0 : index
    %c0_51 = arith.constant 0 : index
    %c0_52 = arith.constant 0 : index
    %61 = vector.load %arg4[%c0_50, %c0_51, %c0_52] : memref<1x80x128xf32, #tpu.memory_space<vmem>>, vector<1x80x128xf32>
    %62 = vector.shape_cast %61 : vector<1x80x128xf32> to vector<80x128xf32>
    %63 = vector.shape_cast %60 : vector<80x128xf32> to vector<1x80x128xf32>
    tpu.vector_store %arg4[%c0_50, %c0_51, %c0_52], %63 {strides = array<i32>} : memref<1x80x128xf32, #tpu.memory_space<vmem>>, vector<1x80x128xf32>,
    return
  }
  func.func @transform_0(%arg0: i32) -> (i32, i32, i32) {
    %c0_i32 = arith.constant 0 : i32
    %c0_i32_0 = arith.constant 0 : i32
    %c0_i32_1 = arith.constant 0 : i32
    return %arg0, %c0_i32, %c0_i32_0 : i32, i32, i32
  }
  func.func @transform_1(%arg0: i32) -> (i32, i32, i32) {
    %c0_i32 = arith.constant 0 : i32
    %c0_i32_0 = arith.constant 0 : i32
    %c0_i32_1 = arith.constant 0 : i32
    %c0_i32_2 = arith.constant 0 : i32
    return %c0_i32, %c0_i32_0, %c0_i32_1 : i32, i32, i32
  }
  func.func @transform_2(%arg0: i32) -> (i32, i32) {
    %c0_i32 = arith.constant 0 : i32
    %c0_i32_0 = arith.constant 0 : i32
    %c0_i32_1 = arith.constant 0 : i32
    return %c0_i32, %c0_i32_0 : i32, i32
  }
  func.func @transform_3(%arg0: i32) -> (i32, i32, i32) {
    %c0_i32 = arith.constant 0 : i32
    %c0_i32_0 = arith.constant 0 : i32
    %c0_i32_1 = arith.constant 0 : i32
    return %arg0, %c0_i32, %c0_i32_0 : i32, i32, i32
  }
}

</mosaic_0001>

<llo_original>
// kernel: generator_forward.4
$region0: #{generator_forward.4}
  #allocation0 [shape = 'u32[]', space=smem, size = 0x4, offset = 0x4, fixed_abs, tag = 'smem constant byte address 0x4 - core index']
  #allocation1 [shape = 'u32[144,128]{1,0:T(1,128)}', space=vmem, size = 0x12000, scoped, tag = 'internal scratch']
  %s0 = inlined_call_operand.vmem [shape: bf16[16,128], index: 0, kind: input, shape index: {}]
  %s1 = inlined_call_operand.hbm [shape: bf16[128,1024], index: 1, kind: input, shape index: {}]
  %s2 = inlined_call_operand.hbm [shape: f32[1,1024], index: 2, kind: input, shape index: {}]
  %s3 = inlined_call_operand.hbm [shape: f32[1,1024], index: 3, kind: input, shape index: {}]
  %s4 = inlined_call_operand.vmem [shape: bf16[16,1024], index: 4, kind: output, shape index: {}]
  %s5 = sld [smem:[#allocation0]]
  $region38: #{generator_forward.4} parent=0
    _
  %s7 = ssub.s32 1, %s5
  %s8 = scalar_select 0, %s7, %s5
  $region1: #{generator_forward.4} parent=0
    #allocation2 [shape = 'u8[262144]{0}', space=vmem, size = 0x40000, scoped, tag = 'input window, operand 1, single buffered']
    #allocation3 [shape = 's32[1]{0}', space=sflag, size = 0x4, scoped, tag = 'scoped memory for generator_forward.4']
    #allocation4 [shape = 'u8[4096]{0}', space=vmem, size = 0x1000, scoped, tag = 'input window, operand 2, single buffered']
    #allocation5 [shape = 's32[1]{0}', space=sflag, size = 0x4, scoped, tag = 'scoped memory for generator_forward.4']
    #allocation6 [shape = 'u8[4096]{0}', space=vmem, size = 0x1000, scoped, tag = 'input window, operand 3, single buffered']
    %9 = vsyncpa [#allocation3], 0
    %10 = vsyncpa [#allocation5], 0
    // Predicated region
    $region2: #{generator_forward.4} parent=1 // pred_check
      _
    $region3: #{generator_forward.4} parent=1 // pred_check_branch
      %12 = sbr.rel (0) target = $region5
    $region4: #{generator_forward.4} parent=1 // pred_region
      _
    $region5: #{generator_forward.4} parent=1 // pred_fallthru
      _
    // Predicated region
    $region6: #{generator_forward.4} parent=1 // pred_check
      _
    $region7: #{generator_forward.4} parent=1 // pred_check_branch
      %14 = sbr.rel (0) target = $region9
    $region8: #{generator_forward.4} parent=1 // pred_region
      %s16 = ssub.s32 8192, 8192
      %17 = vsyncadd [#allocation3], %s16
      %s18 = sshll.u32 [#allocation2], 4
      %s19 = int_to_ptr.vmem [resolvable:$true] %s18
      %24 = dma.hbm_to_vmem [thread:$0]  %s1, 8192, %s19, [#allocation3], 512, 512, 32
    $region9: #{generator_forward.4} parent=1 // pred_fallthru
      _
    // Predicated region
    $region10: #{generator_forward.4} parent=1 // pred_check
      _
    $region11: #{generator_forward.4} parent=1 // pred_check_branch
      %26 = sbr.rel (0) target = $region13
    $region12: #{generator_forward.4} parent=1 // pred_region
      %s28 = ssub.s32 128, 128
      %29 = vsyncadd [#allocation5], %s28
      %s31 = sshll.u32 [#allocation4], 4
      %s32 = int_to_ptr.vmem [resolvable:$true] %s31
      %34 = dma.hbm_to_vmem [thread:$0]  %s2, 128, %s32, [#allocation5]
    $region13: #{generator_forward.4} parent=1 // pred_fallthru
      _
    // Predicated region
    $region14: #{generator_forward.4} parent=1 // pred_check
      _
    $region15: #{generator_forward.4} parent=1 // pred_check_branch
      %36 = sbr.rel (0) target = $region17
    $region16: #{generator_forward.4} parent=1 // pred_region
      %s38 = ssub.s32 128, 128
      %39 = vsyncadd [#allocation5], %s38
      %s41 = sshll.u32 [#allocation6], 4
      %s42 = int_to_ptr.vmem [resolvable:$true] %s41
      %44 = dma.hbm_to_vmem [thread:$0]  %s3, 128, %s42, [#allocation5]
    $region17: #{generator_forward.4} parent=1 // pred_fallthru
      _
    // Predicated region
    $region18: #{generator_forward.4} parent=1 // pred_check
      _
    $region19: #{generator_forward.4} parent=1 // pred_check_branch
      %46 = sbr.rel (0) target = $region21
    $region20: #{generator_forward.4} parent=1 // pred_region
      %47 = dma.done [#allocation3], 8192
    $region21: #{generator_forward.4} parent=1 // pred_fallthru
      _
    // Predicated region
    $region22: #{generator_forward.4} parent=1 // pred_check
      _
    $region23: #{generator_forward.4} parent=1 // pred_check_branch
      %49 = sbr.rel (0) target = $region25
    $region24: #{generator_forward.4} parent=1 // pred_region
      %50 = dma.done [#allocation5], 128
    $region25: #{generator_forward.4} parent=1 // pred_fallthru
      _
    // Predicated region
    $region26: #{generator_forward.4} parent=1 // pred_check
      _
    $region27: #{generator_forward.4} parent=1 // pred_check_branch
      %52 = sbr.rel (0) target = $region29
    $region28: #{generator_forward.4} parent=1 // pred_region
      %53 = dma.done [#allocation5], 128
    $region29: #{generator_forward.4} parent=1 // pred_fallthru
      _
    %v55 = vld [vmem:[%s0] sm:$0xf]
    %v56 = vld [vmem:[%s0 + $0x4] sm:$0xf]
    %v57 = vld [vmem:[#allocation2] sm:$0xff]
    %v58 = vld [vmem:[#allocation2 + $0x8] sm:$0xff]
    %v59 = vld [vmem:[#allocation2 + $0x10] sm:$0xff]
    %v60 = vld [vmem:[#allocation2 + $0x18] sm:$0xff]
    %v61 = vld [vmem:[#allocation2 + $0x20] sm:$0xff]
    %v62 = vld [vmem:[#allocation2 + $0x28] sm:$0xff]
    %v63 = vld [vmem:[#allocation2 + $0x30] sm:$0xff]
    %v64 = vld [vmem:[#allocation2 + $0x38] sm:$0xff]
    %v65 = vld [vmem:[#allocation2 + $0x40] sm:$0xff]
    %v66 = vld [vmem:[#allocation2 + $0x48] sm:$0xff]
    %v67 = vld [vmem:[#allocation2 + $0x50] sm:$0xff]
    %v68 = vld [vmem:[#allocation2 + $0x58] sm:$0xff]
    %v69 = vld [vmem:[#allocation2 + $0x60] sm:$0xff]
    %v70 = vld [vmem:[#allocation2 + $0x68] sm:$0xff]
    %v71 = vld [vmem:[#allocation2 + $0x70] sm:$0xff]
    %v72 = vld [vmem:[#allocation2 + $0x78] sm:$0xff]
    %v73 = vld [vmem:[#allocation2 + $0x80] sm:$0xff]
    %v74 = vld [vmem:[#allocation2 + $0x88] sm:$0xff]
    %v75 = vld [vmem:[#allocation2 + $0x90] sm:$0xff]
    %v76 = vld [vmem:[#allocation2 + $0x98] sm:$0xff]
    %v77 = vld [vmem:[#allocation2 + $0xa0] sm:$0xff]
    %v78 = vld [vmem:[#allocation2 + $0xa8] sm:$0xff]
    %v79 = vld [vmem:[#allocation2 + $0xb0] sm:$0xff]
    %v80 = vld [vmem:[#allocation2 + $0xb8] sm:$0xff]
    %v81 = vld [vmem:[#allocation2 + $0xc0] sm:$0xff]
    %v82 = vld [vmem:[#allocation2 + $0xc8] sm:$0xff]
    %v83 = vld [vmem:[#allocation2 + $0xd0] sm:$0xff]
    %v84 = vld [vmem:[#allocation2 + $0xd8] sm:$0xff]
    %v85 = vld [vmem:[#allocation2 + $0xe0] sm:$0xff]
    %v86 = vld [vmem:[#allocation2 + $0xe8] sm:$0xff]
    %v87 = vld [vmem:[#allocation2 + $0xf0] sm:$0xff]
    %v88 = vld [vmem:[#allocation2 + $0xf8] sm:$0xff]
    %v89 = vld [vmem:[#allocation2 + $0x100] sm:$0xff]
    %v90 = vld [vmem:[#allocation2 + $0x108] sm:$0xff]
    %v91 = vld [vmem:[#allocation2 + $0x110] sm:$0xff]
    %v92 = vld [vmem:[#allocation2 + $0x118] sm:$0xff]
    %v93 = vld [vmem:[#allocation2 + $0x120] sm:$0xff]
    %v94 = vld [vmem:[#allocation2 + $0x128] sm:$0xff]
    %v95 = vld [vmem:[#allocation2 + $0x130] sm:$0xff]
    %v96 = vld [vmem:[#allocation2 + $0x138] sm:$0xff]
    %v97 = vld [vmem:[#allocation2 + $0x140] sm:$0xff]
    %v98 = vld [vmem:[#allocation2 + $0x148] sm:$0xff]
    %v99 = vld [vmem:[#allocation2 + $0x150] sm:$0xff]
    %v100 = vld [vmem:[#allocation2 + $0x158] sm:$0xff]
    %v101 = vld [vmem:[#allocation2 + $0x160] sm:$0xff]
    %v102 = vld [vmem:[#allocation2 + $0x168] sm:$0xff]
    %v103 = vld [vmem:[#allocation2 + $0x170] sm:$0xff]
    %v104 = vld [vmem:[#allocation2 + $0x178] sm:$0xff]
    %v105 = vld [vmem:[#allocation2 + $0x180] sm:$0xff]
    %v106 = vld [vmem:[#allocation2 + $0x188] sm:$0xff]
    %v107 = vld [vmem:[#allocation2 + $0x190] sm:$0xff]
    %v108 = vld [vmem:[#allocation2 + $0x198] sm:$0xff]
    %v109 = vld [vmem:[#allocation2 + $0x1a0] sm:$0xff]
    %v110 = vld [vmem:[#allocation2 + $0x1a8] sm:$0xff]
    %v111 = vld [vmem:[#allocation2 + $0x1b0] sm:$0xff]
    %v112 = vld [vmem:[#allocation2 + $0x1b8] sm:$0xff]
    %v113 = vld [vmem:[#allocation2 + $0x1c0] sm:$0xff]
    %v114 = vld [vmem:[#allocation2 + $0x1c8] sm:$0xff]
    %v115 = vld [vmem:[#allocation2 + $0x1d0] sm:$0xff]
    %v116 = vld [vmem:[#allocation2 + $0x1d8] sm:$0xff]
    %v117 = vld [vmem:[#allocation2 + $0x1e0] sm:$0xff]
    %v118 = vld [vmem:[#allocation2 + $0x1e8] sm:$0xff]
    %v119 = vld [vmem:[#allocation2 + $0x1f0] sm:$0xff]
    %v120 = vld [vmem:[#allocation2 + $0x1f8] sm:$0xff]
    %v123 = vunpack.c.l.b16 %v55
    %v124 = vunpack.c.l.b16 %v56
    %v125 = vpack.c.b16 %v124, %v123
    %v191 = vunpack.c.l.b16 %v57
    %v192 = vunpack.c.h.b16 %v57
    %v193 = vunpack.c.l.b16 %v58
    %v194 = vunpack.c.h.b16 %v58
    %v195 = vunpack.c.l.b16 %v59
    %v196 = vunpack.c.h.b16 %v59
    %v197 = vunpack.c.l.b16 %v60
    %v198 = vunpack.c.h.b16 %v60
    %v199 = vunpack.c.l.b16 %v61
    %v200 = vunpack.c.h.b16 %v61
    %v201 = vunpack.c.l.b16 %v62
    %v202 = vunpack.c.h.b16 %v62
    %v203 = vunpack.c.l.b16 %v63
    %v204 = vunpack.c.h.b16 %v63
    %v205 = vunpack.c.l.b16 %v64
    %v206 = vunpack.c.h.b16 %v64
    %v207 = vunpack.c.l.b16 %v65
    %v208 = vunpack.c.h.b16 %v65
    %v209 = vunpack.c.l.b16 %v66
    %v210 = vunpack.c.h.b16 %v66
    %v211 = vunpack.c.l.b16 %v67
    %v212 = vunpack.c.h.b16 %v67
    %v213 = vunpack.c.l.b16 %v68
    %v214 = vunpack.c.h.b16 %v68
    %v215 = vunpack.c.l.b16 %v69
    %v216 = vunpack.c.h.b16 %v69
    %v217 = vunpack.c.l.b16 %v70
    %v218 = vunpack.c.h.b16 %v70
    %v219 = vunpack.c.l.b16 %v71
    %v220 = vunpack.c.h.b16 %v71
    %v221 = vunpack.c.l.b16 %v72
    %v222 = vunpack.c.h.b16 %v72
    %v223 = vunpack.c.l.b16 %v73
    %v224 = vunpack.c.h.b16 %v73
    %v225 = vunpack.c.l.b16 %v74
    %v226 = vunpack.c.h.b16 %v74
    %v227 = vunpack.c.l.b16 %v75
    %v228 = vunpack.c.h.b16 %v75
    %v229 = vunpack.c.l.b16 %v76
    %v230 = vunpack.c.h.b16 %v76
    %v231 = vunpack.c.l.b16 %v77
    %v232 = vunpack.c.h.b16 %v77
    %v233 = vunpack.c.l.b16 %v78
    %v234 = vunpack.c.h.b16 %v78
    %v235 = vunpack.c.l.b16 %v79
    %v236 = vunpack.c.h.b16 %v79
    %v237 = vunpack.c.l.b16 %v80
    %v238 = vunpack.c.h.b16 %v80
    %v239 = vunpack.c.l.b16 %v81
    %v240 = vunpack.c.h.b16 %v81
    %v241 = vunpack.c.l.b16 %v82
    %v242 = vunpack.c.h.b16 %v82
    %v243 = vunpack.c.l.b16 %v83
    %v244 = vunpack.c.h.b16 %v83
    %v245 = vunpack.c.l.b16 %v84
    %v246 = vunpack.c.h.b16 %v84
    %v247 = vunpack.c.l.b16 %v85
    %v248 = vunpack.c.h.b16 %v85
    %v249 = vunpack.c.l.b16 %v86
    %v250 = vunpack.c.h.b16 %v86
    %v251 = vunpack.c.l.b16 %v87
    %v252 = vunpack.c.h.b16 %v87
    %v253 = vunpack.c.l.b16 %v88
    %v254 = vunpack.c.h.b16 %v88
    %v255 = vunpack.c.l.b16 %v89
    %v256 = vunpack.c.h.b16 %v89
    %v257 = vunpack.c.l.b16 %v90
    %v258 = vunpack.c.h.b16 %v90
    %v259 = vunpack.c.l.b16 %v91
    %v260 = vunpack.c.h.b16 %v91
    %v261 = vunpack.c.l.b16 %v92
    %v262 = vunpack.c.h.b16 %v92
    %v263 = vunpack.c.l.b16 %v93
    %v264 = vunpack.c.h.b16 %v93
    %v265 = vunpack.c.l.b16 %v94
    %v266 = vunpack.c.h.b16 %v94
    %v267 = vunpack.c.l.b16 %v95
    %v268 = vunpack.c.h.b16 %v95
    %v269 = vunpack.c.l.b16 %v96
    %v270 = vunpack.c.h.b16 %v96
    %v271 = vunpack.c.l.b16 %v97
    %v272 = vunpack.c.h.b16 %v97
    %v273 = vunpack.c.l.b16 %v98
    %v274 = vunpack.c.h.b16 %v98
    %v275 = vunpack.c.l.b16 %v99
    %v276 = vunpack.c.h.b16 %v99
    %v277 = vunpack.c.l.b16 %v100
    %v278 = vunpack.c.h.b16 %v100
    %v279 = vunpack.c.l.b16 %v101
    %v280 = vunpack.c.h.b16 %v101
    %v281 = vunpack.c.l.b16 %v102
    %v282 = vunpack.c.h.b16 %v102
    %v283 = vunpack.c.l.b16 %v103
    %v284 = vunpack.c.h.b16 %v103
    %v285 = vunpack.c.l.b16 %v104
    %v286 = vunpack.c.h.b16 %v104
    %v287 = vunpack.c.l.b16 %v105
    %v288 = vunpack.c.h.b16 %v105
    %v289 = vunpack.c.l.b16 %v106
    %v290 = vunpack.c.h.b16 %v106
    %v291 = vunpack.c.l.b16 %v107
    %v292 = vunpack.c.h.b16 %v107
    %v293 = vunpack.c.l.b16 %v108
    %v294 = vunpack.c.h.b16 %v108
    %v295 = vunpack.c.l.b16 %v109
    %v296 = vunpack.c.h.b16 %v109
    %v297 = vunpack.c.l.b16 %v110
    %v298 = vunpack.c.h.b16 %v110
    %v299 = vunpack.c.l.b16 %v111
    %v300 = vunpack.c.h.b16 %v111
    %v301 = vunpack.c.l.b16 %v112
    %v302 = vunpack.c.h.b16 %v112
    %v303 = vunpack.c.l.b16 %v113
    %v304 = vunpack.c.h.b16 %v113
    %v305 = vunpack.c.l.b16 %v114
    %v306 = vunpack.c.h.b16 %v114
    %v307 = vunpack.c.l.b16 %v115
    %v308 = vunpack.c.h.b16 %v115
    %v309 = vunpack.c.l.b16 %v116
    %v310 = vunpack.c.h.b16 %v116
    %v311 = vunpack.c.l.b16 %v117
    %v312 = vunpack.c.h.b16 %v117
    %v313 = vunpack.c.l.b16 %v118
    %v314 = vunpack.c.h.b16 %v118
    %v315 = vunpack.c.l.b16 %v119
    %v316 = vunpack.c.h.b16 %v119
    %v317 = vunpack.c.l.b16 %v120
    %v318 = vunpack.c.h.b16 %v120
    %v319 = vpack.c.b16 %v199, %v191
    %v320 = vpack.c.b16 %v200, %v192
    %v321 = vpack.c.b16 %v201, %v193
    %v322 = vpack.c.b16 %v202, %v194
    %v323 = vpack.c.b16 %v203, %v195
    %v324 = vpack.c.b16 %v204, %v196
    %v325 = vpack.c.b16 %v205, %v197
    %v326 = vpack.c.b16 %v206, %v198
    %v327 = vpack.c.b16 %v215, %v207
    %v328 = vpack.c.b16 %v216, %v208
    %v329 = vpack.c.b16 %v217, %v209
    %v330 = vpack.c.b16 %v218, %v210
    %v331 = vpack.c.b16 %v219, %v211
    %v332 = vpack.c.b16 %v220, %v212
    %v333 = vpack.c.b16 %v221, %v213
    %v334 = vpack.c.b16 %v222, %v214
    %v335 = vpack.c.b16 %v231, %v223
    %v336 = vpack.c.b16 %v232, %v224
    %v337 = vpack.c.b16 %v233, %v225
    %v338 = vpack.c.b16 %v234, %v226
    %v339 = vpack.c.b16 %v235, %v227
    %v340 = vpack.c.b16 %v236, %v228
    %v341 = vpack.c.b16 %v237, %v229
    %v342 = vpack.c.b16 %v238, %v230
    %v343 = vpack.c.b16 %v247, %v239
    %v344 = vpack.c.b16 %v248, %v240
    %v345 = vpack.c.b16 %v249, %v241
    %v346 = vpack.c.b16 %v250, %v242
    %v347 = vpack.c.b16 %v251, %v243
    %v348 = vpack.c.b16 %v252, %v244
    %v349 = vpack.c.b16 %v253, %v245
    %v350 = vpack.c.b16 %v254, %v246
    %v351 = vpack.c.b16 %v263, %v255
    %v352 = vpack.c.b16 %v264, %v256
    %v353 = vpack.c.b16 %v265, %v257
    %v354 = vpack.c.b16 %v266, %v258
    %v355 = vpack.c.b16 %v267, %v259
    %v356 = vpack.c.b16 %v268, %v260
    %v357 = vpack.c.b16 %v269, %v261
    %v358 = vpack.c.b16 %v270, %v262
    %v359 = vpack.c.b16 %v279, %v271
    %v360 = vpack.c.b16 %v280, %v272
    %v361 = vpack.c.b16 %v281, %v273
    %v362 = vpack.c.b16 %v282, %v274
    %v363 = vpack.c.b16 %v283, %v275
    %v364 = vpack.c.b16 %v284, %v276
    %v365 = vpack.c.b16 %v285, %v277
    %v366 = vpack.c.b16 %v286, %v278
    %v367 = vpack.c.b16 %v295, %v287
    %v368 = vpack.c.b16 %v296, %v288
    %v369 = vpack.c.b16 %v297, %v289
    %v370 = vpack.c.b16 %v298, %v290
    %v371 = vpack.c.b16 %v299, %v291
    %v372 = vpack.c.b16 %v300, %v292
    %v373 = vpack.c.b16 %v301, %v293
    %v374 = vpack.c.b16 %v302, %v294
    %v375 = vpack.c.b16 %v311, %v303
    %v376 = vpack.c.b16 %v312, %v304
    %v377 = vpack.c.b16 %v313, %v305
    %v378 = vpack.c.b16 %v314, %v306
    %v379 = vpack.c.b16 %v315, %v307
    %v380 = vpack.c.b16 %v316, %v308
    %v381 = vpack.c.b16 %v317, %v309
    %v382 = vpack.c.b16 %v318, %v310
    %447 = vmatprep.subr.bf16.mxu0 %v320
    %448 = vmatpush1.bf16.msra.mxu0 %v319
    %449 = vmatprep.subr.bf16.mxu0 %v328
    %450 = vmatpush1.bf16.msra.mxu0 %v327
    %451 = vmatprep.subr.bf16.mxu0 %v336
    %452 = vmatpush1.bf16.msra.mxu0 %v335
    %453 = vmatprep.subr.bf16.mxu0 %v344
    %454 = vmatpush1.bf16.msra.mxu0 %v343
    %455 = vmatprep.subr.bf16.mxu0 %v352
    %456 = vmatpush1.bf16.msra.mxu0 %v351
    %457 = vmatprep.subr.bf16.mxu0 %v360
    %458 = vmatpush1.bf16.msra.mxu0 %v359
    %459 = vmatprep.subr.bf16.mxu0 %v368
    %460 = vmatpush1.bf16.msra.mxu0 %v367
    %461 = vmatprep.subr.bf16.mxu0 %v376
    %462 = vmatpush1.bf16.msra.mxu0 %v375
    %463 = vmatprep.subr.bf16.mxu0 0
    %464 = vmatpush1.bf16.msra.mxu0 0
    %465 = vmatprep.subr.bf16.mxu0 0
    %466 = vmatpush1.bf16.msra.mxu0 0
    %467 = vmatprep.subr.bf16.mxu0 0
    %468 = vmatpush1.bf16.msra.mxu0 0
    %469 = vmatprep.subr.bf16.mxu0 0
    %470 = vmatpush1.bf16.msra.mxu0 0
    %471 = vmatprep.subr.bf16.mxu0 0
    %472 = vmatpush1.bf16.msra.mxu0 0
    %473 = vmatprep.subr.bf16.mxu0 0
    %474 = vmatpush1.bf16.msra.mxu0 0
    %475 = vmatprep.subr.bf16.mxu0 0
    %476 = vmatpush1.bf16.msra.mxu0 0
    %477 = vmatprep.subr.bf16.mxu0 0
    %478 = vmatpush1.bf16.msra.mxu0 0
    %479 = vmatprep.mubr.bf16.mxu0 0
    %480 = vmatmul.mubr.bf16.gmra.mrb[0].mxu0 %v125
    %v481 = vpop.f32.mrb[0].mxu0
    %v482 = vadd.f32 0.0, %v481
    %v483 = vpop.f32.mrb[0].mxu0
    %v484 = vadd.f32 0.0, %v483
    %v485 = vpop.f32.mrb[0].mxu0
    %v486 = vadd.f32 0.0, %v485
    %v487 = vpop.f32.mrb[0].mxu0
    %v488 = vadd.f32 0.0, %v487
    %489 = vdwg.mxu0
    %490 = vmatprep.subr.bf16.mxu0 %v322
    %491 = vmatpush1.bf16.msra.mxu0 %v321
    %492 = vmatprep.subr.bf16.mxu0 %v330
    %493 = vmatpush1.bf16.msra.mxu0 %v329
    %494 = vmatprep.subr.bf16.mxu0 %v338
    %495 = vmatpush1.bf16.msra.mxu0 %v337
    %496 = vmatprep.subr.bf16.mxu0 %v346
    %497 = vmatpush1.bf16.msra.mxu0 %v345
    %498 = vmatprep.subr.bf16.mxu0 %v354
    %499 = vmatpush1.bf16.msra.mxu0 %v353
    %500 = vmatprep.subr.bf16.mxu0 %v362
    %501 = vmatpush1.bf16.msra.mxu0 %v361
    %502 = vmatprep.subr.bf16.mxu0 %v370
    %503 = vmatpush1.bf16.msra.mxu0 %v369
    %504 = vmatprep.subr.bf16.mxu0 %v378
    %505 = vmatpush1.bf16.msra.mxu0 %v377
    %506 = vmatprep.subr.bf16.mxu0 0
    %507 = vmatpush1.bf16.msra.mxu0 0
    %508 = vmatprep.subr.bf16.mxu0 0
    %509 = vmatpush1.bf16.msra.mxu0 0
    %510 = vmatprep.subr.bf16.mxu0 0
    %511 = vmatpush1.bf16.msra.mxu0 0
    %512 = vmatprep.subr.bf16.mxu0 0
    %513 = vmatpush1.bf16.msra.mxu0 0
    %514 = vmatprep.subr.bf16.mxu0 0
    %515 = vmatpush1.bf16.msra.mxu0 0
    %516 = vmatprep.subr.bf16.mxu0 0
    %517 = vmatpush1.bf16.msra.mxu0 0
    %518 = vmatprep.subr.bf16.mxu0 0
    %519 = vmatpush1.bf16.msra.mxu0 0
    %520 = vmatprep.subr.bf16.mxu0 0
    %521 = vmatpush1.bf16.msra.mxu0 0
    %522 = vmatprep.mubr.bf16.mxu0 0
    %523 = vmatmul.mubr.bf16.gmra.mrb[0].mxu0 %v125
    %v524 = vpop.f32.mrb[0].mxu0
    %v525 = vadd.f32 0.0, %v524
    %v526 = vpop.f32.mrb[0].mxu0
    %v527 = vadd.f32 0.0, %v526
    %v528 = vpop.f32.mrb[0].mxu0
    %v529 = vadd.f32 0.0, %v528
    %v530 = vpop.f32.mrb[0].mxu0
    %v531 = vadd.f32 0.0, %v530
    %532 = vdwg.mxu0
    %533 = vmatprep.subr.bf16.mxu0 %v324
    %534 = vmatpush1.bf16.msra.mxu0 %v323
    %535 = vmatprep.subr.bf16.mxu0 %v332
    %536 = vmatpush1.bf16.msra.mxu0 %v331
    %537 = vmatprep.subr.bf16.mxu0 %v340
    %538 = vmatpush1.bf16.msra.mxu0 %v339
    %539 = vmatprep.subr.bf16.mxu0 %v348
    %540 = vmatpush1.bf16.msra.mxu0 %v347
    %541 = vmatprep.subr.bf16.mxu0 %v356
    %542 = vmatpush1.bf16.msra.mxu0 %v355
    %543 = vmatprep.subr.bf16.mxu0 %v364
    %544 = vmatpush1.bf16.msra.mxu0 %v363
    %545 = vmatprep.subr.bf16.mxu0 %v372
    %546 = vmatpush1.bf16.msra.mxu0 %v371
    %547 = vmatprep.subr.bf16.mxu0 %v380
    %548 = vmatpush1.bf16.msra.mxu0 %v379
    %549 = vmatprep.subr.bf16.mxu0 0
    %550 = vmatpush1.bf16.msra.mxu0 0
    %551 = vmatprep.subr.bf16.mxu0 0
    %552 = vmatpush1.bf16.msra.mxu0 0
    %553 = vmatprep.subr.bf16.mxu0 0
    %554 = vmatpush1.bf16.msra.mxu0 0
    %555 = vmatprep.subr.bf16.mxu0 0
    %556 = vmatpush1.bf16.msra.mxu0 0
    %557 = vmatprep.subr.bf16.mxu0 0
    %558 = vmatpush1.bf16.msra.mxu0 0
    %559 = vmatprep.subr.bf16.mxu0 0
    %560 = vmatpush1.bf16.msra.mxu0 0
    %561 = vmatprep.subr.bf16.mxu0 0
    %562 = vmatpush1.bf16.msra.mxu0 0
    %563 = vmatprep.subr.bf16.mxu0 0
    %564 = vmatpush1.bf16.msra.mxu0 0
    %565 = vmatprep.mubr.bf16.mxu0 0
    %566 = vmatmul.mubr.bf16.gmra.mrb[0].mxu0 %v125
    %v567 = vpop.f32.mrb[0].mxu0
    %v568 = vadd.f32 0.0, %v567
    %v569 = vpop.f32.mrb[0].mxu0
    %v570 = vadd.f32 0.0, %v569
    %v571 = vpop.f32.mrb[0].mxu0
    %v572 = vadd.f32 0.0, %v571
    %v573 = vpop.f32.mrb[0].mxu0
    %v574 = vadd.f32 0.0, %v573
    %575 = vdwg.mxu0
    %576 = vmatprep.subr.bf16.mxu0 %v326
    %577 = vmatpush1.bf16.msra.mxu0 %v325
    %578 = vmatprep.subr.bf16.mxu0 %v334
    %579 = vmatpush1.bf16.msra.mxu0 %v333
    %580 = vmatprep.subr.bf16.mxu0 %v342
    %581 = vmatpush1.bf16.msra.mxu0 %v341
    %582 = vmatprep.subr.bf16.mxu0 %v350
    %583 = vmatpush1.bf16.msra.mxu0 %v349
    %584 = vmatprep.subr.bf16.mxu0 %v358
    %585 = vmatpush1.bf16.msra.mxu0 %v357
    %586 = vmatprep.subr.bf16.mxu0 %v366
    %587 = vmatpush1.bf16.msra.mxu0 %v365
    %588 = vmatprep.subr.bf16.mxu0 %v374
    %589 = vmatpush1.bf16.msra.mxu0 %v373
    %590 = vmatprep.subr.bf16.mxu0 %v382
    %591 = vmatpush1.bf16.msra.mxu0 %v381
    %592 = vmatprep.subr.bf16.mxu0 0
    %593 = vmatpush1.bf16.msra.mxu0 0
    %594 = vmatprep.subr.bf16.mxu0 0
    %595 = vmatpush1.bf16.msra.mxu0 0
    %596 = vmatprep.subr.bf16.mxu0 0
    %597 = vmatpush1.bf16.msra.mxu0 0
    %598 = vmatprep.subr.bf16.mxu0 0
    %599 = vmatpush1.bf16.msra.mxu0 0
    %600 = vmatprep.subr.bf16.mxu0 0
    %601 = vmatpush1.bf16.msra.mxu0 0
    %602 = vmatprep.subr.bf16.mxu0 0
    %603 = vmatpush1.bf16.msra.mxu0 0
    %604 = vmatprep.subr.bf16.mxu0 0
    %605 = vmatpush1.bf16.msra.mxu0 0
    %606 = vmatprep.subr.bf16.mxu0 0
    %607 = vmatpush1.bf16.msra.mxu0 0
    %608 = vmatprep.mubr.bf16.mxu0 0
    %609 = vmatmul.mubr.bf16.gmra.mrb[0].mxu0 %v125
    %v610 = vpop.f32.mrb[0].mxu0
    %v611 = vadd.f32 0.0, %v610
    %v612 = vpop.f32.mrb[0].mxu0
    %v613 = vadd.f32 0.0, %v612
    %v614 = vpop.f32.mrb[0].mxu0
    %v615 = vadd.f32 0.0, %v614
    %v616 = vpop.f32.mrb[0].mxu0
    %v617 = vadd.f32 0.0, %v616
    %618 = vdwg.mxu0
    %v619 = vadd.f32 %v482, %v486
    %v620 = vrot.slane %v619, 4
    %v621 = vadd.f32 %v619, %v620
    %v622 = vrot.slane %v621, 2
    %v623 = vadd.f32 %v621, %v622
    %v624 = vrot.slane %v623, 1
    %v625 = vadd.f32 %v623, %v624
    %v626 = vadd.f32 %v484, %v488
    %v627 = vrot.slane %v626, 4
    %v628 = vadd.f32 %v626, %v627
    %v629 = vrot.slane %v628, 2
    %v630 = vadd.f32 %v628, %v629
    %v631 = vrot.slane %v630, 1
    %v632 = vadd.f32 %v630, %v631
    %v633 = vadd.f32 %v525, %v529
    %v634 = vrot.slane %v633, 4
    %v635 = vadd.f32 %v633, %v634
    %v636 = vrot.slane %v635, 2
    %v637 = vadd.f32 %v635, %v636
    %v638 = vrot.slane %v637, 1
    %v639 = vadd.f32 %v637, %v638
    %v640 = vadd.f32 %v527, %v531
    %v641 = vrot.slane %v640, 4
    %v642 = vadd.f32 %v640, %v641
    %v643 = vrot.slane %v642, 2
    %v644 = vadd.f32 %v642, %v643
    %v645 = vrot.slane %v644, 1
    %v646 = vadd.f32 %v644, %v645
    %v647 = vadd.f32 %v568, %v572
    %v648 = vrot.slane %v647, 4
    %v649 = vadd.f32 %v647, %v648
    %v650 = vrot.slane %v649, 2
    %v651 = vadd.f32 %v649, %v650
    %v652 = vrot.slane %v651, 1
    %v653 = vadd.f32 %v651, %v652
    %v654 = vadd.f32 %v570, %v574
    %v655 = vrot.slane %v654, 4
    %v656 = vadd.f32 %v654, %v655
    %v657 = vrot.slane %v656, 2
    %v658 = vadd.f32 %v656, %v657
    %v659 = vrot.slane %v658, 1
    %v660 = vadd.f32 %v658, %v659
    %v661 = vadd.f32 %v611, %v615
    %v662 = vrot.slane %v661, 4
    %v663 = vadd.f32 %v661, %v662
    %v664 = vrot.slane %v663, 2
    %v665 = vadd.f32 %v663, %v664
    %v666 = vrot.slane %v665, 1
    %v667 = vadd.f32 %v665, %v666
    %v668 = vadd.f32 %v613, %v617
    %v669 = vrot.slane %v668, 4
    %v670 = vadd.f32 %v668, %v669
    %v671 = vrot.slane %v670, 2
    %v672 = vadd.f32 %v670, %v671
    %v673 = vrot.slane %v672, 1
    %v674 = vadd.f32 %v672, %v673
    %v675 = vmul.f32 %v482, %v482
    %v676 = vmul.f32 %v484, %v484
    %v677 = vmul.f32 %v525, %v525
    %v678 = vmul.f32 %v527, %v527
    %v679 = vmul.f32 %v568, %v568
    %v680 = vmul.f32 %v570, %v570
    %v681 = vmul.f32 %v611, %v611
    %v682 = vmul.f32 %v613, %v613
    %v683 = vmul.f32 %v486, %v486
    %v684 = vmul.f32 %v488, %v488
    %v685 = vmul.f32 %v529, %v529
    %v686 = vmul.f32 %v531, %v531
    %v687 = vmul.f32 %v572, %v572
    %v688 = vmul.f32 %v574, %v574
    %v689 = vmul.f32 %v615, %v615
    %v690 = vmul.f32 %v617, %v617
    %v691 = vadd.f32 %v675, %v683
    %v692 = vrot.slane %v691, 4
    %v693 = vadd.f32 %v691, %v692
    %v694 = vrot.slane %v693, 2
    %v695 = vadd.f32 %v693, %v694
    %v696 = vrot.slane %v695, 1
    %v697 = vadd.f32 %v695, %v696
    %v698 = vadd.f32 %v676, %v684
    %v699 = vrot.slane %v698, 4
    %v700 = vadd.f32 %v698, %v699
    %v701 = vrot.slane %v700, 2
    %v702 = vadd.f32 %v700, %v701
    %v703 = vrot.slane %v702, 1
    %v704 = vadd.f32 %v702, %v703
    %v705 = vadd.f32 %v677, %v685
    %v706 = vrot.slane %v705, 4
    %v707 = vadd.f32 %v705, %v706
    %v708 = vrot.slane %v707, 2
    %v709 = vadd.f32 %v707, %v708
    %v710 = vrot.slane %v709, 1
    %v711 = vadd.f32 %v709, %v710
    %v712 = vadd.f32 %v678, %v686
    %v713 = vrot.slane %v712, 4
    %v714 = vadd.f32 %v712, %v713
    %v715 = vrot.slane %v714, 2
    %v716 = vadd.f32 %v714, %v715
    %v717 = vrot.slane %v716, 1
    %v718 = vadd.f32 %v716, %v717
    %v719 = vadd.f32 %v679, %v687
    %v720 = vrot.slane %v719, 4
    %v721 = vadd.f32 %v719, %v720
    %v722 = vrot.slane %v721, 2
    %v723 = vadd.f32 %v721, %v722
    %v724 = vrot.slane %v723, 1
    %v725 = vadd.f32 %v723, %v724
    %v726 = vadd.f32 %v680, %v688
    %v727 = vrot.slane %v726, 4
    %v728 = vadd.f32 %v726, %v727
    %v729 = vrot.slane %v728, 2
    %v730 = vadd.f32 %v728, %v729
    %v731 = vrot.slane %v730, 1
    %v732 = vadd.f32 %v730, %v731
    %v733 = vadd.f32 %v681, %v689
    %v734 = vrot.slane %v733, 4
    %v735 = vadd.f32 %v733, %v734
    %v736 = vrot.slane %v735, 2
    %v737 = vadd.f32 %v735, %v736
    %v738 = vrot.slane %v737, 1
    %v739 = vadd.f32 %v737, %v738
    %v740 = vadd.f32 %v682, %v690
    %v741 = vrot.slane %v740, 4
    %v742 = vadd.f32 %v740, %v741
    %v743 = vrot.slane %v742, 2
    %v744 = vadd.f32 %v742, %v743
    %v745 = vrot.slane %v744, 1
    %v746 = vadd.f32 %v744, %v745
    %v747 = vrcp.pop 8.0
    %v748 = vmul.f32 %v625, %v747
    %v749 = vmul.f32 %v632, %v747
    %v750 = vmul.f32 %v639, %v747
    %v751 = vmul.f32 %v646, %v747
    %v752 = vmul.f32 %v653, %v747
    %v753 = vmul.f32 %v660, %v747
    %v754 = vmul.f32 %v667, %v747
    %v755 = vmul.f32 %v674, %v747
    %v756 = vmul.f32 %v697, %v747
    %v757 = vmul.f32 %v704, %v747
    %v758 = vmul.f32 %v711, %v747
    %v759 = vmul.f32 %v718, %v747
    %v760 = vmul.f32 %v725, %v747
    %v761 = vmul.f32 %v732, %v747
    %v762 = vmul.f32 %v739, %v747
    %v763 = vmul.f32 %v746, %v747
    %v764 = vmul.f32 %v748, %v748
    %v765 = vmul.f32 %v749, %v749
    %v766 = vmul.f32 %v750, %v750
    %v767 = vmul.f32 %v751, %v751
    %v768 = vmul.f32 %v752, %v752
    %v769 = vmul.f32 %v753, %v753
    %v770 = vmul.f32 %v754, %v754
    %v771 = vmul.f32 %v755, %v755
    %v772 = vsub.f32 %v756, %v764
    %v773 = vsub.f32 %v757, %v765
    %v774 = vsub.f32 %v758, %v766
    %v775 = vsub.f32 %v759, %v767
    %v776 = vsub.f32 %v760, %v768
    %v777 = vsub.f32 %v761, %v769
    %v778 = vsub.f32 %v762, %v770
    %v779 = vsub.f32 %v763, %v771
    %v780 = vmax.f32 %v772, 0.0
    %v781 = vmax.f32 %v773, 0.0
    %v782 = vmax.f32 %v774, 0.0
    %v783 = vmax.f32 %v775, 0.0
    %v784 = vmax.f32 %v776, 0.0
    %v785 = vmax.f32 %v777, 0.0
    %v786 = vmax.f32 %v778, 0.0
    %v787 = vmax.f32 %v779, 0.0
    %v788 = vadd.f32 %v780, 1e-05
    %v789 = vadd.f32 %v781, 1e-05
    %v790 = vadd.f32 %v782, 1e-05
    %v791 = vadd.f32 %v783, 1e-05
    %v792 = vadd.f32 %v784, 1e-05
    %v793 = vadd.f32 %v785, 1e-05
    %v794 = vadd.f32 %v786, 1e-05
    %v795 = vadd.f32 %v787, 1e-05
    %v796 = vrsqrt.pop %v788
    %v797 = vrsqrt.pop %v789
    %v798 = vrsqrt.pop %v790
    %v799 = vrsqrt.pop %v791
    %v800 = vrsqrt.pop %v792
    %v801 = vrsqrt.pop %v793
    %v802 = vrsqrt.pop %v794
    %v803 = vrsqrt.pop %v795
    %v804 = vsub.f32 %v482, %v748
    %v805 = vsub.f32 %v484, %v749
    %v806 = vsub.f32 %v525, %v750
    %v807 = vsub.f32 %v527, %v751
    %v808 = vsub.f32 %v568, %v752
    %v809 = vsub.f32 %v570, %v753
    %v810 = vsub.f32 %v611, %v754
    %v811 = vsub.f32 %v613, %v755
    %v812 = vsub.f32 %v486, %v748
    %v813 = vsub.f32 %v488, %v749
    %v814 = vsub.f32 %v529, %v750
    %v815 = vsub.f32 %v531, %v751
    %v816 = vsub.f32 %v572, %v752
    %v817 = vsub.f32 %v574, %v753
    %v818 = vsub.f32 %v615, %v754
    %v819 = vsub.f32 %v617, %v755
    %v820 = vmul.f32 %v804, %v796
    %v821 = vmul.f32 %v805, %v797
    %v822 = vmul.f32 %v806, %v798
    %v823 = vmul.f32 %v807, %v799
    %v824 = vmul.f32 %v808, %v800
    %v825 = vmul.f32 %v809, %v801
    %v826 = vmul.f32 %v810, %v802
    %v827 = vmul.f32 %v811, %v803
    %v828 = vmul.f32 %v812, %v796
    %v829 = vmul.f32 %v813, %v797
    %v830 = vmul.f32 %v814, %v798
    %v831 = vmul.f32 %v815, %v799
    %v832 = vmul.f32 %v816, %v800
    %v833 = vmul.f32 %v817, %v801
    %v834 = vmul.f32 %v818, %v802
    %v835 = vmul.f32 %v819, %v803
    %v836 = vld [vmem:[#allocation4] sm:$0xff]
    %v838 = vlaneseq
    %v839 = vshrl.u32 %v838, 7
    %v840 = vsub.s32 0, %v839
    %v841 = vrot.slane %v836, %v840
    %v842 = vlaneseq
    %v843 = vshrl.u32 %v842, 7
    %v844 = vsub.s32 1, %v843
    %v845 = vrot.slane %v836, %v844
    %v846 = vlaneseq
    %v847 = vshrl.u32 %v846, 7
    %v848 = vsub.s32 2, %v847
    %v849 = vrot.slane %v836, %v848
    %v850 = vlaneseq
    %v851 = vshrl.u32 %v850, 7
    %v852 = vsub.s32 3, %v851
    %v853 = vrot.slane %v836, %v852
    %v854 = vlaneseq
    %v855 = vshrl.u32 %v854, 7
    %v856 = vsub.s32 4, %v855
    %v857 = vrot.slane %v836, %v856
    %v858 = vlaneseq
    %v859 = vshrl.u32 %v858, 7
    %v860 = vsub.s32 5, %v859
    %v861 = vrot.slane %v836, %v860
    %v862 = vlaneseq
    %v863 = vshrl.u32 %v862, 7
    %v864 = vsub.s32 6, %v863
    %v865 = vrot.slane %v836, %v864
    %v866 = vlaneseq
    %v867 = vshrl.u32 %v866, 7
    %v868 = vsub.s32 7, %v867
    %v869 = vrot.slane %v836, %v868
    %v878 = vmul.f32 %v820, %v841
    %v879 = vmul.f32 %v821, %v845
    %v880 = vmul.f32 %v822, %v849
    %v881 = vmul.f32 %v823, %v853
    %v882 = vmul.f32 %v824, %v857
    %v883 = vmul.f32 %v825, %v861
    %v884 = vmul.f32 %v826, %v865
    %v885 = vmul.f32 %v827, %v869
    %v886 = vmul.f32 %v828, %v841
    %v887 = vmul.f32 %v829, %v845
    %v888 = vmul.f32 %v830, %v849
    %v889 = vmul.f32 %v831, %v853
    %v890 = vmul.f32 %v832, %v857
    %v891 = vmul.f32 %v833, %v861
    %v892 = vmul.f32 %v834, %v865
    %v893 = vmul.f32 %v835, %v869
    %v894 = vld [vmem:[#allocation6] sm:$0xff]
    %v896 = vlaneseq
    %v897 = vshrl.u32 %v896, 7
    %v898 = vsub.s32 0, %v897
    %v899 = vrot.slane %v894, %v898
    %v900 = vlaneseq
    %v901 = vshrl.u32 %v900, 7
    %v902 = vsub.s32 1, %v901
    %v903 = vrot.slane %v894, %v902
    %v904 = vlaneseq
    %v905 = vshrl.u32 %v904, 7
    %v906 = vsub.s32 2, %v905
    %v907 = vrot.slane %v894, %v906
    %v908 = vlaneseq
    %v909 = vshrl.u32 %v908, 7
    %v910 = vsub.s32 3, %v909
    %v911 = vrot.slane %v894, %v910
    %v912 = vlaneseq
    %v913 = vshrl.u32 %v912, 7
    %v914 = vsub.s32 4, %v913
    %v915 = vrot.slane %v894, %v914
    %v916 = vlaneseq
    %v917 = vshrl.u32 %v916, 7
    %v918 = vsub.s32 5, %v917
    %v919 = vrot.slane %v894, %v918
    %v920 = vlaneseq
    %v921 = vshrl.u32 %v920, 7
    %v922 = vsub.s32 6, %v921
    %v923 = vrot.slane %v894, %v922
    %v924 = vlaneseq
    %v925 = vshrl.u32 %v924, 7
    %v926 = vsub.s32 7, %v925
    %v927 = vrot.slane %v894, %v926
    %v936 = vadd.f32 %v878, %v899
    %v937 = vadd.f32 %v879, %v903
    %v938 = vadd.f32 %v880, %v907
    %v939 = vadd.f32 %v881, %v911
    %v940 = vadd.f32 %v882, %v915
    %v941 = vadd.f32 %v883, %v919
    %v942 = vadd.f32 %v884, %v923
    %v943 = vadd.f32 %v885, %v927
    %v944 = vadd.f32 %v886, %v899
    %v945 = vadd.f32 %v887, %v903
    %v946 = vadd.f32 %v888, %v907
    %v947 = vadd.f32 %v889, %v911
    %v948 = vadd.f32 %v890, %v915
    %v949 = vadd.f32 %v891, %v919
    %v950 = vadd.f32 %v892, %v923
    %v951 = vadd.f32 %v893, %v927
    %v952 = vmax.f32 %v936, 0.0
    %v953 = vmax.f32 %v937, 0.0
    %v954 = vmax.f32 %v938, 0.0
    %v955 = vmax.f32 %v939, 0.0
    %v956 = vmax.f32 %v940, 0.0
    %v957 = vmax.f32 %v941, 0.0
    %v958 = vmax.f32 %v942, 0.0
    %v959 = vmax.f32 %v943, 0.0
    %v960 = vmax.f32 %v944, 0.0
    %v961 = vmax.f32 %v945, 0.0
    %v962 = vmax.f32 %v946, 0.0
    %v963 = vmax.f32 %v947, 0.0
    %v964 = vmax.f32 %v948, 0.0
    %v965 = vmax.f32 %v949, 0.0
    %v966 = vmax.f32 %v950, 0.0
    %v967 = vmax.f32 %v951, 0.0
    %v968 = vlaneseq
    %v969 = vshrl.u32 %v968, 7
    %v970 = vadd.s32 %v969, 8
    %vm971 = vcmp.lt.s32.totalorder %v969, 8
    %vm972 = vcmp.lt.s32.totalorder %v970, 8
    %v973 = vsel %vm971, %v952, 0.0
    %v974 = vsel %vm971, %v953, 0.0
    %v975 = vsel %vm971, %v954, 0.0
    %v976 = vsel %vm971, %v955, 0.0
    %v977 = vsel %vm971, %v956, 0.0
    %v978 = vsel %vm971, %v957, 0.0
    %v979 = vsel %vm971, %v958, 0.0
    %v980 = vsel %vm971, %v959, 0.0
    %v981 = vsel %vm972, %v960, 0.0
    %v982 = vsel %vm972, %v961, 0.0
    %v983 = vsel %vm972, %v962, 0.0
    %v984 = vsel %vm972, %v963, 0.0
    %v985 = vsel %vm972, %v964, 0.0
    %v986 = vsel %vm972, %v965, 0.0
    %v987 = vsel %vm972, %v966, 0.0
    %v988 = vsel %vm972, %v967, 0.0
    %v989 = vpack.c.bf16 %v981, %v973
    %v990 = vpack.c.bf16 %v982, %v974
    %v991 = vpack.c.bf16 %v983, %v975
    %v992 = vpack.c.bf16 %v984, %v976
    %v993 = vpack.c.bf16 %v985, %v977
    %v994 = vpack.c.bf16 %v986, %v978
    %v995 = vpack.c.bf16 %v987, %v979
    %v996 = vpack.c.bf16 %v988, %v980
    %v1005 = vunpack.c.l.b16 %v989
    %v1006 = vunpack.c.l.b16 %v990
    %v1007 = vunpack.c.l.b16 %v991
    %v1008 = vunpack.c.l.b16 %v992
    %v1009 = vunpack.c.l.b16 %v993
    %v1010 = vunpack.c.l.b16 %v994
    %v1011 = vunpack.c.l.b16 %v995
    %v1012 = vunpack.c.l.b16 %v996
    %v1013 = vunpack.c.h.b16 %v989
    %v1014 = vunpack.c.h.b16 %v990
    %v1015 = vunpack.c.h.b16 %v991
    %v1016 = vunpack.c.h.b16 %v992
    %v1017 = vunpack.c.h.b16 %v993
    %v1018 = vunpack.c.h.b16 %v994
    %v1019 = vunpack.c.h.b16 %v995
    %v1020 = vunpack.c.h.b16 %v996
    %v1021 = vpack.c.b16 %v1006, %v1005
    %v1022 = vpack.c.b16 %v1008, %v1007
    %v1023 = vpack.c.b16 %v1010, %v1009
    %v1024 = vpack.c.b16 %v1012, %v1011
    %v1025 = vpack.c.b16 %v1014, %v1013
    %v1026 = vpack.c.b16 %v1016, %v1015
    %v1027 = vpack.c.b16 %v1018, %v1017
    %v1028 = vpack.c.b16 %v1020, %v1019
    %1037 = vst [vmem:[%s4] sm:$0xff] %v1021
    %1038 = vst [vmem:[%s4 + $0x8] sm:$0xff] %v1022
    %1039 = vst [vmem:[%s4 + $0x10] sm:$0xff] %v1023
    %1040 = vst [vmem:[%s4 + $0x18] sm:$0xff] %v1024
    %1041 = vst [vmem:[%s4 + $0x20] sm:$0xff] %v1025
    %1042 = vst [vmem:[%s4 + $0x28] sm:$0xff] %v1026
    %1043 = vst [vmem:[%s4 + $0x30] sm:$0xff] %v1027
    %1044 = vst [vmem:[%s4 + $0x38] sm:$0xff] %v1028
    // Predicated region
    $region30: #{generator_forward.4} parent=1 // pred_check
      _
    $region31: #{generator_forward.4} parent=1 // pred_check_branch
      %1046 = sbr.rel (0) target = $region33
    $region32: #{generator_forward.4} parent=1 // pred_region
      _
    $region33: #{generator_forward.4} parent=1 // pred_fallthru
      _
    // Predicated region
    $region34: #{generator_forward.4} parent=1 // pred_check
      _
    $region35: #{generator_forward.4} parent=1 // pred_check_branch
      %1048 = sbr.rel (0) target = $region37
    $region36: #{generator_forward.4} parent=1 // pred_region
      _
    $region37: #{generator_forward.4} parent=1 // pred_fallthru
      _
    %1049 = vsyncpa [#allocation3], 1
    %1050 = vsyncpa [#allocation5], 1

// kernel: generator_forward.6
$region0: #{generator_forward.6}
  #allocation0 [shape = 'u32[]', space=smem, size = 0x4, offset = 0x4, fixed_abs, tag = 'smem constant byte address 0x4 - core index']
  #allocation1 [shape = 'u32[144,128]{1,0:T(1,128)}', space=vmem, size = 0x12000, scoped, tag = 'internal scratch']
  %s0 = inlined_call_operand.vmem [shape: bf16[8,40,128], index: 0, kind: input, shape index: {}]
  %s1 = inlined_call_operand.vmem [shape: bf16[9,128,256], index: 1, kind: input, shape index: {}]
  %s2 = inlined_call_operand.vmem [shape: f32[1,256], index: 2, kind: input, shape index: {}]
  %s3 = inlined_call_operand.vmem [shape: bf16[8,24,256], index: 3, kind: output, shape index: {0}]
  %s4 = inlined_call_operand.vmem [shape: f32[8,1,256], index: 4, kind: output, shape index: {1}]
  %s5 = inlined_call_operand.vmem [shape: f32[8,1,256], index: 5, kind: output, shape index: {2}]
  %6 = xla_tuple %s3, %s4, %s5
  %s7 = sld [smem:[#allocation0]]
  $region61: #{generator_forward.6} parent=0
    _
  %s9 = ssub.s32 1, %s7
  %s10 = scalar_select 0, %s9, %s7
  loop: start=0, step=1, limit=10
  $region2: #{generator_forward.6} parent=0 // loop_pre_header
    _
  $region3: #{generator_forward.6} parent=0 // loop_header
    %s12 = sphi 0, %s16
    %p13 = scmp.ge.s32.totalorder %s12, 10
    %s22 = sphi 0, %s24
    %s25 = sphi 0, %s22
    %s26 = sphi 0, %s25
    %s42 = sphi 0, %s26
    %s46 = sphi 0, %s46
    %s48 = sphi 0, %s46
    %s49 = sphi 0, %s48
    %s63 = sphi 0, %s49
    %s67 = sphi 0, %s67
    %s69 = sphi 0, %s67
    %s70 = sphi 0, %s69
    %s84 = sphi 0, %s70
    %s90 = sphi 0, %s92
    %s93 = sphi 0, %s90
    %s94 = sphi 0, %s93
    %s110 = sphi 0, %s94
    %s116 = sphi 0, %s118
    %s119 = sphi 0, %s116
    %s120 = sphi 0, %s119
    %s136 = sphi 0, %s120
    %s142 = sphi 0, %s144
    %s145 = sphi 0, %s142
    %s146 = sphi 0, %s145
    %s162 = sphi 0, %s146
  $region4: #{generator_forward.6} parent=0 // loop_header_branch
    %15 = sbr.rel (%p13) target = $region8
  $region5: #{generator_forward.6} parent=0 // loop_body
    %s17 = ssub.s32 %s12, 1
    %s18 = ssub.s32 %s12, 2
    %s19 = sadd.s32 %s12, 1
    %s20 = ssub.s32 %s12, %s19
    %p21 = scmp.eq.s32.totalorder %s20, 0
    %s23 = sadd.s32 %s22, 1
    %s24 = scalar_select %p21, %s22, %s23
    %p27 = pneg %p21
    %p28 = scmp.eq.s32.totalorder %s12, 7
    %p29 = por %p27, %p28
    %p30 = scmp.ne.s32.totalorder %s22, %s25
    %p31 = scmp.eq.s32.totalorder %s12, 0
    %p32 = por %p30, %p31
    %p33 = scmp.ne.s32.totalorder %s22, %s25
    %p34 = scmp.eq.s32.totalorder %s17, 7
    %p35 = por %p33, %p34
    %p36 = scmp.ne.s32.totalorder %s25, %s26
    %p37 = scmp.eq.s32.totalorder %s17, 0
    %p38 = por %p36, %p37
    %p39 = scmp.ne.s32.totalorder %s25, %s26
    %p40 = scmp.eq.s32.totalorder %s18, 7
    %p41 = por %p39, %p40
    %p43 = scmp.ne.s32.totalorder %s26, %s42
    %p44 = scmp.eq.s32.totalorder %s18, 0
    %p45 = por %p43, %p44
    %s47 = sadd.s32 %s46, 1
    %p50 = scmp.eq.s32.totalorder %s12, 7
    %p51 = scmp.ne.s32.totalorder %s46, %s48
    %p52 = scmp.eq.s32.totalorder %s12, 0
    %p53 = por %p51, %p52
    %p54 = scmp.ne.s32.totalorder %s46, %s48
    %p55 = scmp.eq.s32.totalorder %s17, 7
    %p56 = por %p54, %p55
    %p57 = scmp.ne.s32.totalorder %s48, %s49
    %p58 = scmp.eq.s32.totalorder %s17, 0
    %p59 = por %p57, %p58
    %p60 = scmp.ne.s32.totalorder %s48, %s49
    %p61 = scmp.eq.s32.totalorder %s18, 7
    %p62 = por %p60, %p61
    %p64 = scmp.ne.s32.totalorder %s49, %s63
    %p65 = scmp.eq.s32.totalorder %s18, 0
    %p66 = por %p64, %p65
    %s68 = sadd.s32 %s67, 1
    %p71 = scmp.eq.s32.totalorder %s12, 7
    %p72 = scmp.ne.s32.totalorder %s67, %s69
    %p73 = scmp.eq.s32.totalorder %s12, 0
    %p74 = por %p72, %p73
    %p75 = scmp.ne.s32.totalorder %s67, %s69
    %p76 = scmp.eq.s32.totalorder %s17, 7
    %p77 = por %p75, %p76
    %p78 = scmp.ne.s32.totalorder %s69, %s70
    %p79 = scmp.eq.s32.totalorder %s17, 0
    %p80 = por %p78, %p79
    %p81 = scmp.ne.s32.totalorder %s69, %s70
    %p82 = scmp.eq.s32.totalorder %s18, 7
    %p83 = por %p81, %p82
    %p85 = scmp.ne.s32.totalorder %s70, %s84
    %p86 = scmp.eq.s32.totalorder %s18, 0
    %p87 = por %p85, %p86
    %s88 = ssub.s32 %s12, %s19
    %p89 = scmp.eq.s32.totalorder %s88, 0
    %s91 = sadd.s32 %s90, 1
    %s92 = scalar_select %p89, %s90, %s91
    %p95 = pneg %p89
    %p96 = scmp.eq.s32.totalorder %s12, 7
    %p97 = por %p95, %p96
    %p98 = scmp.ne.s32.totalorder %s90, %s93
    %p99 = scmp.eq.s32.totalorder %s12, 0
    %p100 = por %p98, %p99
    %p101 = scmp.ne.s32.totalorder %s90, %s93
    %p102 = scmp.eq.s32.totalorder %s17, 7
    %p103 = por %p101, %p102
    %p104 = scmp.ne.s32.totalorder %s93, %s94
    %p105 = scmp.eq.s32.totalorder %s17, 0
    %p106 = por %p104, %p105
    %p107 = scmp.ne.s32.totalorder %s93, %s94
    %p108 = scmp.eq.s32.totalorder %s18, 7
    %p109 = por %p107, %p108
    %p111 = scmp.ne.s32.totalorder %s94, %s110
    %p112 = scmp.eq.s32.totalorder %s18, 0
    %p113 = por %p111, %p112
    %s114 = ssub.s32 %s12, %s19
    %p115 = scmp.eq.s32.totalorder %s114, 0
    %s117 = sadd.s32 %s116, 1
    %s118 = scalar_select %p115, %s116, %s117
    %p121 = pneg %p115
    %p122 = scmp.eq.s32.totalorder %s12, 7
    %p123 = por %p121, %p122
    %p124 = scmp.ne.s32.totalorder %s116, %s119
    %p125 = scmp.eq.s32.totalorder %s12, 0
    %p126 = por %p124, %p125
    %p127 = scmp.ne.s32.totalorder %s116, %s119
    %p128 = scmp.eq.s32.totalorder %s17, 7
    %p129 = por %p127, %p128
    %p130 = scmp.ne.s32.totalorder %s119, %s120
    %p131 = scmp.eq.s32.totalorder %s17, 0
    %p132 = por %p130, %p131
    %p133 = scmp.ne.s32.totalorder %s119, %s120
    %p134 = scmp.eq.s32.totalorder %s18, 7
    %p135 = por %p133, %p134
    %p137 = scmp.ne.s32.totalorder %s120, %s136
    %p138 = scmp.eq.s32.totalorder %s18, 0
    %p139 = por %p137, %p138
    %s140 = ssub.s32 %s12, %s19
    %p141 = scmp.eq.s32.totalorder %s140, 0
    %s143 = sadd.s32 %s142, 1
    %s144 = scalar_select %p141, %s142, %s143
    %p147 = pneg %p141
    %p148 = scmp.eq.s32.totalorder %s12, 7
    %p149 = por %p147, %p148
    %p150 = scmp.ne.s32.totalorder %s142, %s145
    %p151 = scmp.eq.s32.totalorder %s12, 0
    %p152 = por %p150, %p151
    %p153 = scmp.ne.s32.totalorder %s142, %s145
    %p154 = scmp.eq.s32.totalorder %s17, 7
    %p155 = por %p153, %p154
    %p156 = scmp.ne.s32.totalorder %s145, %s146
    %p157 = scmp.eq.s32.totalorder %s17, 0
    %p158 = por %p156, %p157
    %p159 = scmp.ne.s32.totalorder %s145, %s146
    %p160 = scmp.eq.s32.totalorder %s18, 7
    %p161 = por %p159, %p160
    %p163 = scmp.ne.s32.totalorder %s146, %s162
    %p164 = scmp.eq.s32.totalorder %s18, 0
    %p165 = por %p163, %p164
    %p166 = scmp.le.s32.totalorder 1, %s12
    %p167 = scmp.lt.s32.totalorder %s12, 9
    %p168 = pnand %p166, %p167
    %p169 = pneg %p168
    // Predicated region
    $region9: #{generator_forward.6} parent=5 // pred_check
      _
    $region10: #{generator_forward.6} parent=5 // pred_check_branch
      %171 = sbr.rel (%p168) target = $region12
    $region11: #{generator_forward.6} parent=5 // pred_region
      %s172 = ssub.s32 %s12, 1
      // Predicated region
      $region13: #{generator_forward.6} parent=11 // pred_check
        %p173 = pneg %p59
      $region14: #{generator_forward.6} parent=11 // pred_check_branch
        %175 = sbr.rel (%p173) target = $region16
      $region15: #{generator_forward.6} parent=11 // pred_region
        _
      $region16: #{generator_forward.6} parent=11 // pred_fallthru
        _
      // Predicated region
      $region17: #{generator_forward.6} parent=11 // pred_check
        %p176 = pneg %p80
      $region18: #{generator_forward.6} parent=11 // pred_check_branch
        %178 = sbr.rel (%p176) target = $region20
      $region19: #{generator_forward.6} parent=11 // pred_region
        _
      $region20: #{generator_forward.6} parent=11 // pred_fallthru
        _
    $region12: #{generator_forward.6} parent=5 // pred_fallthru
      _
    %p179 = scmp.lt.s32.totalorder %s12, 8
    // Predicated region
    $region21: #{generator_forward.6} parent=5 // pred_check
      %p180 = pneg %p179
    $region22: #{generator_forward.6} parent=5 // pred_check_branch
      %182 = sbr.rel (%p180) target = $region24
    $region23: #{generator_forward.6} parent=5 // pred_region
      // Predicated region
      $region25: #{generator_forward.6} parent=23 // pred_check
        %p183 = pneg %p32
      $region26: #{generator_forward.6} parent=23 // pred_check_branch
        %185 = sbr.rel (%p183) target = $region28
      $region27: #{generator_forward.6} parent=23 // pred_region
        %p186 = scmp.lt.s32.totalorder %s12, 7
        %s187 = scalar_select %p186, %s12, 7
        %s188 = smul.addr %s187, 5
        %s189 = smul.addr %s188, 4
        %s190 = scalar_lea.vmem %s0, %s189
      $region28: #{generator_forward.6} parent=23 // pred_fallthru
        _
    $region24: #{generator_forward.6} parent=5 // pred_fallthru
      _
    %p191 = scmp.le.s32.totalorder 1, %s12
    %p192 = scmp.lt.s32.totalorder %s12, 9
    %p193 = pnand %p191, %p192
    %p194 = pneg %p193
    // Predicated region
    $region29: #{generator_forward.6} parent=5 // pred_check
      _
    $region30: #{generator_forward.6} parent=5 // pred_check_branch
      %196 = sbr.rel (%p193) target = $region32
    $region31: #{generator_forward.6} parent=5 // pred_region
      %s197 = ssub.s32 %s12, 1
      %p198 = scmp.lt.s32.totalorder %s17, 7
      %s199 = scalar_select %p198, %s17, 7
      %s200 = smul.addr %s199, 5
      %s201 = smul.addr %s200, 4
      %s202 = scalar_lea.vmem %s0, %s201
      %p203 = pneg %p38
      %p204 = pneg %p35
      %p205 = pneg %p59
      %p206 = pneg %p56
      %p207 = pneg %p80
      %p208 = pneg %p77
      %p209 = pneg %p106
      %p210 = pneg %p103
      %p211 = scmp.lt.s32.totalorder %s17, 7
      %s212 = scalar_select %p211, %s17, 7
      %s213 = smul.addr %s212, 6
      %s214 = smul.addr %s213, 4
      %s215 = scalar_lea.vmem %s3, %s214
      %p216 = pneg %p132
      %p217 = pneg %p129
      %p218 = scmp.lt.s32.totalorder %s17, 7
      %s219 = scalar_select %p218, %s17, 7
      %s220 = smul.addr %s219, 2
      %s221 = scalar_lea.vmem %s4, %s220
      %p222 = pneg %p158
      %p223 = pneg %p155
      %p224 = scmp.lt.s32.totalorder %s17, 7
      %s225 = scalar_select %p224, %s17, 7
      %s226 = smul.addr %s225, 2
      %s227 = scalar_lea.vmem %s5, %s226
      %p228 = scmp.lt.s32.totalorder %s17, 7
      %s229 = scalar_select %p228, %s17, 7
      %s230 = smul.addr %s229, 5
      %s231 = smul.addr %s230, 4
      %s232 = scalar_lea.vmem %s0, %s231
      %p233 = scmp.lt.s32.totalorder %s17, 7
      %s234 = scalar_select %p233, %s17, 7
      %s235 = smul.addr %s234, 6
      %s236 = smul.addr %s235, 4
      %s237 = scalar_lea.vmem %s3, %s236
      %p238 = scmp.lt.s32.totalorder %s17, 7
      %s239 = scalar_select %p238, %s17, 7
      %s240 = smul.addr %s239, 2
      %s241 = scalar_lea.vmem %s4, %s240
      %p242 = scmp.lt.s32.totalorder %s17, 7
      %s243 = scalar_select %p242, %s17, 7
      %s244 = smul.addr %s243, 2
      %s245 = scalar_lea.vmem %s5, %s244
      %v247 = vld [vmem:[%s232] sm:$0xf]
      %v248 = vld [vmem:[%s232 + $0x4] sm:$0xf]
      %v249 = vld [vmem:[%s232 + $0x8] sm:$0xf]
      %v250 = vld [vmem:[%s1] sm:$0xff]
      %v251 = vld [vmem:[%s1 + $0x8] sm:$0xff]
      %v252 = vld [vmem:[%s1 + $0x10] sm:$0xff]
      %v253 = vld [vmem:[%s1 + $0x18] sm:$0xff]
      %v254 = vld [vmem:[%s1 + $0x20] sm:$0xff]
      %v255 = vld [vmem:[%s1 + $0x28] sm:$0xff]
      %v256 = vld [vmem:[%s1 + $0x30] sm:$0xff]
      %v257 = vld [vmem:[%s1 + $0x38] sm:$0xff]
      %v258 = vld [vmem:[%s1 + $0x40] sm:$0xff]
      %v259 = vld [vmem:[%s1 + $0x48] sm:$0xff]
      %v260 = vld [vmem:[%s1 + $0x50] sm:$0xff]
      %v261 = vld [vmem:[%s1 + $0x58] sm:$0xff]
      %v262 = vld [vmem:[%s1 + $0x60] sm:$0xff]
      %v263 = vld [vmem:[%s1 + $0x68] sm:$0xff]
      %v264 = vld [vmem:[%s1 + $0x70] sm:$0xff]
      %v265 = vld [vmem:[%s1 + $0x78] sm:$0xff]
      %v266 = vld [vmem:[%s232 + $0xc] sm:$0x1]
      %s267 = scalar_lea.vmem %s1, 128
      %v268 = vld [vmem:[%s267] sm:$0xff]
      %v269 = vld [vmem:[%s267 + $0x8] sm:$0xff]
      %v270 = vld [vmem:[%s267 + $0x10] sm:$0xff]
      %v271 = vld [vmem:[%s267 + $0x18] sm:$0xff]
      %v272 = vld [vmem:[%s267 + $0x20] sm:$0xff]
      %v273 = vld [vmem:[%s267 + $0x28] sm:$0xff]
      %v274 = vld [vmem:[%s267 + $0x30] sm:$0xff]
      %v275 = vld [vmem:[%s267 + $0x38] sm:$0xff]
      %v276 = vld [vmem:[%s267 + $0x40] sm:$0xff]
      %v277 = vld [vmem:[%s267 + $0x48] sm:$0xff]
      %v278 = vld [vmem:[%s267 + $0x50] sm:$0xff]
      %v279 = vld [vmem:[%s267 + $0x58] sm:$0xff]
      %v280 = vld [vmem:[%s267 + $0x60] sm:$0xff]
      %v281 = vld [vmem:[%s267 + $0x68] sm:$0xff]
      %v282 = vld [vmem:[%s267 + $0x70] sm:$0xff]
      %v283 = vld [vmem:[%s267 + $0x78] sm:$0xff]
      %v288 = vunpack.c.l.b16 %v247
      %v289 = vunpack.c.l.b16 %v248
      %v290 = vunpack.c.l.b16 %v249
      %v291 = vunpack.c.l.b16 %v266
      %v292 = vpack.c.b16 %v289, %v288
      %v293 = vpack.c.b16 %v291, %v290
      %vm294 = vsmask.f32 7424
      %v296 = vshrl.u32 %v292, 16
      %v298 = vshll.u32 %v292, 16
      %v300 = vrot.slane %v298, 1
      %v301 = vor.u32 %v296, %v300
      %v303 = vshll.u32 %v293, 16
      %v305 = vrot.slane %v303, 1
      %v306 = vsel %vm294, %v301, %v305
      %v307 = vshrl.u32 %v293, 16
      %v309 = vor.u32 %v307, %v305
      %v328 = vunpack.c.l.b16 %v268
      %v329 = vunpack.c.h.b16 %v268
      %v330 = vunpack.c.l.b16 %v269
      %v331 = vunpack.c.h.b16 %v269
      %v332 = vunpack.c.l.b16 %v270
      %v333 = vunpack.c.h.b16 %v270
      %v334 = vunpack.c.l.b16 %v271
      %v335 = vunpack.c.h.b16 %v271
      %v336 = vunpack.c.l.b16 %v272
      %v337 = vunpack.c.h.b16 %v272
      %v338 = vunpack.c.l.b16 %v273
      %v339 = vunpack.c.h.b16 %v273
      %v340 = vunpack.c.l.b16 %v274
      %v341 = vunpack.c.h.b16 %v274
      %v342 = vunpack.c.l.b16 %v275
      %v343 = vunpack.c.h.b16 %v275
      %v344 = vunpack.c.l.b16 %v276
      %v345 = vunpack.c.h.b16 %v276
      %v346 = vunpack.c.l.b16 %v277
      %v347 = vunpack.c.h.b16 %v277
      %v348 = vunpack.c.l.b16 %v278
      %v349 = vunpack.c.h.b16 %v278
      %v350 = vunpack.c.l.b16 %v279
      %v351 = vunpack.c.h.b16 %v279
      %v352 = vunpack.c.l.b16 %v280
      %v353 = vunpack.c.h.b16 %v280
      %v354 = vunpack.c.l.b16 %v281
      %v355 = vunpack.c.h.b16 %v281
      %v356 = vunpack.c.l.b16 %v282
      %v357 = vunpack.c.h.b16 %v282
      %v358 = vunpack.c.l.b16 %v283
      %v359 = vunpack.c.h.b16 %v283
      %v360 = vpack.c.b16 %v330, %v328
      %v361 = vpack.c.b16 %v331, %v329
      %v362 = vpack.c.b16 %v334, %v332
      %v363 = vpack.c.b16 %v335, %v333
      %v364 = vpack.c.b16 %v338, %v336
      %v365 = vpack.c.b16 %v339, %v337
      %v366 = vpack.c.b16 %v342, %v340
      %v367 = vpack.c.b16 %v343, %v341
      %v368 = vpack.c.b16 %v346, %v344
      %v369 = vpack.c.b16 %v347, %v345
      %v370 = vpack.c.b16 %v350, %v348
      %v371 = vpack.c.b16 %v351, %v349
      %v372 = vpack.c.b16 %v354, %v352
      %v373 = vpack.c.b16 %v355, %v353
      %v374 = vpack.c.b16 %v358, %v356
      %v375 = vpack.c.b16 %v359, %v357
      %392 = vmatprep.subr.bf16.mxu0 %v361
      %393 = vmatpush1.bf16.msra.mxu0 %v360
      %394 = vmatprep.subr.bf16.mxu0 %v363
      %395 = vmatpush1.bf16.msra.mxu0 %v362
      %396 = vmatprep.subr.bf16.mxu0 %v365
      %397 = vmatpush1.bf16.msra.mxu0 %v364
      %398 = vmatprep.subr.bf16.mxu0 %v367
      %399 = vmatpush1.bf16.msra.mxu0 %v366
      %400 = vmatprep.subr.bf16.mxu0 %v369
      %401 = vmatpush1.bf16.msra.mxu0 %v368
      %402 = vmatprep.subr.bf16.mxu0 %v371
      %403 = vmatpush1.bf16.msra.mxu0 %v370
      %404 = vmatprep.subr.bf16.mxu0 %v373
      %405 = vmatpush1.bf16.msra.mxu0 %v372
      %406 = vmatprep.subr.bf16.mxu0 %v375
      %407 = vmatpush1.bf16.msra.mxu0 %v374
      %408 = vmatprep.subr.bf16.mxu0 0
      %409 = vmatpush1.bf16.msra.mxu0 0
      %410 = vmatprep.subr.bf16.mxu0 0
      %411 = vmatpush1.bf16.msra.mxu0 0
      %412 = vmatprep.subr.bf16.mxu0 0
      %413 = vmatpush1.bf16.msra.mxu0 0
      %414 = vmatprep.subr.bf16.mxu0 0
      %415 = vmatpush1.bf16.msra.mxu0 0
      %416 = vmatprep.subr.bf16.mxu0 0
      %417 = vmatpush1.bf16.msra.mxu0 0
      %418 = vmatprep.subr.bf16.mxu0 0
      %419 = vmatpush1.bf16.msra.mxu0 0
      %420 = vmatprep.subr.bf16.mxu0 0
      %421 = vmatpush1.bf16.msra.mxu0 0
      %422 = vmatprep.subr.bf16.mxu0 0
      %423 = vmatpush1.bf16.msra.mxu0 0
      %424 = vmatprep.mubr.bf16.mxu0 0
      %425 = vmatmul.mubr.bf16.gmra.mrb[0].mxu0 %v306
      %v426 = vpop.f32.mrb[0].mxu0
      %v427 = vadd.f32 0.0, %v426
      %v428 = vpop.f32.mrb[0].mxu0
      %v429 = vadd.f32 0.0, %v428
      %v430 = vpop.f32.mrb[0].mxu0
      %v431 = vadd.f32 0.0, %v430
      %v432 = vpop.f32.mrb[0].mxu0
      %v433 = vadd.f32 0.0, %v432
      %434 = vmatprep.mubr.bf16.mxu0 0
      %435 = vmatmul.mubr.bf16.gmra.mrb[0].mxu0 %v309
      %v436 = vpop.f32.mrb[0].mxu0
      %v437 = vadd.f32 0.0, %v436
      %v438 = vpop.f32.mrb[0].mxu0
      %v439 = vadd.f32 0.0, %v438
      %v440 = vpop.f32.mrb[0].mxu0
      %v441 = vpop.f32.mrb[0].mxu0
      %442 = vdwg.mxu0
      %v443 = vpack.c.b16 %v290, %v290
      %v462 = vunpack.c.l.b16 %v250
      %v463 = vunpack.c.h.b16 %v250
      %v464 = vunpack.c.l.b16 %v251
      %v465 = vunpack.c.h.b16 %v251
      %v466 = vunpack.c.l.b16 %v252
      %v467 = vunpack.c.h.b16 %v252
      %v468 = vunpack.c.l.b16 %v253
      %v469 = vunpack.c.h.b16 %v253
      %v470 = vunpack.c.l.b16 %v254
      %v471 = vunpack.c.h.b16 %v254
      %v472 = vunpack.c.l.b16 %v255
      %v473 = vunpack.c.h.b16 %v255
      %v474 = vunpack.c.l.b16 %v256
      %v475 = vunpack.c.h.b16 %v256
      %v476 = vunpack.c.l.b16 %v257
      %v477 = vunpack.c.h.b16 %v257
      %v478 = vunpack.c.l.b16 %v258
      %v479 = vunpack.c.h.b16 %v258
      %v480 = vunpack.c.l.b16 %v259
      %v481 = vunpack.c.h.b16 %v259
      %v482 = vunpack.c.l.b16 %v260
      %v483 = vunpack.c.h.b16 %v260
      %v484 = vunpack.c.l.b16 %v261
      %v485 = vunpack.c.h.b16 %v261
      %v486 = vunpack.c.l.b16 %v262
      %v487 = vunpack.c.h.b16 %v262
      %v488 = vunpack.c.l.b16 %v263
      %v489 = vunpack.c.h.b16 %v263
      %v490 = vunpack.c.l.b16 %v264
      %v491 = vunpack.c.h.b16 %v264
      %v492 = vunpack.c.l.b16 %v265
      %v493 = vunpack.c.h.b16 %v265
      %v494 = vpack.c.b16 %v464, %v462
      %v495 = vpack.c.b16 %v465, %v463
      %v496 = vpack.c.b16 %v468, %v466
      %v497 = vpack.c.b16 %v469, %v467
      %v498 = vpack.c.b16 %v472, %v470
      %v499 = vpack.c.b16 %v473, %v471
      %v500 = vpack.c.b16 %v476, %v474
      %v501 = vpack.c.b16 %v477, %v475
      %v502 = vpack.c.b16 %v480, %v478
      %v503 = vpack.c.b16 %v481, %v479
      %v504 = vpack.c.b16 %v484, %v482
      %v505 = vpack.c.b16 %v485, %v483
      %v506 = vpack.c.b16 %v488, %v486
      %v507 = vpack.c.b16 %v489, %v487
      %v508 = vpack.c.b16 %v492, %v490
      %v509 = vpack.c.b16 %v493, %v491
      %526 = vmatprep.subr.bf16.mxu0 %v495
      %527 = vmatpush1.bf16.msra.mxu0 %v494
      %528 = vmatprep.subr.bf16.mxu0 %v497
      %529 = vmatpush1.bf16.msra.mxu0 %v496
      %530 = vmatprep.subr.bf16.mxu0 %v499
      %531 = vmatpush1.bf16.msra.mxu0 %v498
      %532 = vmatprep.subr.bf16.mxu0 %v501
      %533 = vmatpush1.bf16.msra.mxu0 %v500
      %534 = vmatprep.subr.bf16.mxu0 %v503
      %535 = vmatpush1.bf16.msra.mxu0 %v502
      %536 = vmatprep.subr.bf16.mxu0 %v505
      %537 = vmatpush1.bf16.msra.mxu0 %v504
      %538 = vmatprep.subr.bf16.mxu0 %v507
      %539 = vmatpush1.bf16.msra.mxu0 %v506
      %540 = vmatprep.subr.bf16.mxu0 %v509
      %541 = vmatpush1.bf16.msra.mxu0 %v508
      %542 = vmatprep.subr.bf16.mxu0 0
      %543 = vmatpush1.bf16.msra.mxu0 0
      %544 = vmatprep.subr.bf16.mxu0 0
      %545 = vmatpush1.bf16.msra.mxu0 0
      %546 = vmatprep.subr.bf16.mxu0 0
      %547 = vmatpush1.bf16.msra.mxu0 0
      %548 = vmatprep.subr.bf16.mxu0 0
      %549 = vmatpush1.bf16.msra.mxu0 0
      %550 = vmatprep.subr.bf16.mxu0 0
      %551 = vmatpush1.bf16.msra.mxu0 0
      %552 = vmatprep.subr.bf16.mxu0 0
      %553 = vmatpush1.bf16.msra.mxu0 0
      %554 = vmatprep.subr.bf16.mxu0 0
      %555 = vmatpush1.bf16.msra.mxu0 0
      %556 = vmatprep.subr.bf16.mxu0 0
      %557 = vmatpush1.bf16.msra.mxu0 0
      %558 = vmatprep.mubr.bf16.mxu0 0
      %559 = vmatmul.mubr.bf16.gmra.mrb[0].mxu0 %v292
      %v560 = vpop.f32.mrb[0].mxu0
      %v561 = vadd.f32 %v427, %v560
      %v562 = vpop.f32.mrb[0].mxu0
      %v563 = vadd.f32 %v429, %v562
      %v564 = vpop.f32.mrb[0].mxu0
      %v565 = vadd.f32 %v431, %v564
      %v566 = vpop.f32.mrb[0].mxu0
      %v567 = vadd.f32 %v433, %v566
      %568 = vmatprep.mubr.bf16.mxu0 0
      %569 = vmatmul.mubr.bf16.gmra.mrb[0].mxu0 %v443
      %v570 = vpop.f32.mrb[0].mxu0
      %v571 = vadd.f32 %v437, %v570
      %v572 = vpop.f32.mrb[0].mxu0
      %v573 = vadd.f32 %v439, %v572
      %v574 = vpop.f32.mrb[0].mxu0
      %v575 = vpop.f32.mrb[0].mxu0
      %576 = vdwg.mxu0
      %v577 = vld [vmem:[%s232] sm:$0xe]
      %s578 = scalar_lea.vmem %s1, 256
      %v579 = vld [vmem:[%s578] sm:$0xff]
      %v580 = vld [vmem:[%s578 + $0x8] sm:$0xff]
      %v581 = vld [vmem:[%s578 + $0x10] sm:$0xff]
      %v582 = vld [vmem:[%s578 + $0x18] sm:$0xff]
      %v583 = vld [vmem:[%s578 + $0x20] sm:$0xff]
      %v584 = vld [vmem:[%s578 + $0x28] sm:$0xff]
      %v585 = vld [vmem:[%s578 + $0x30] sm:$0xff]
      %v586 = vld [vmem:[%s578 + $0x38] sm:$0xff]
      %v587 = vld [vmem:[%s578 + $0x40] sm:$0xff]
      %v588 = vld [vmem:[%s578 + $0x48] sm:$0xff]
      %v589 = vld [vmem:[%s578 + $0x50] sm:$0xff]
      %v590 = vld [vmem:[%s578 + $0x58] sm:$0xff]
      %v591 = vld [vmem:[%s578 + $0x60] sm:$0xff]
      %v592 = vld [vmem:[%s578 + $0x68] sm:$0xff]
      %v593 = vld [vmem:[%s578 + $0x70] sm:$0xff]
      %v594 = vld [vmem:[%s578 + $0x78] sm:$0xff]
      %v596 = vunpack.c.l.b16 %v577
      %v597 = vpack.c.b16 %v289, %v596
      %vm598 = vcmask 1046528
      %v599 = vrot.slane %v597, 1
      %v600 = vrot.slane %v293, 1
      %v601 = vsel %vm598, %v599, %v600
      %v620 = vunpack.c.l.b16 %v579
      %v621 = vunpack.c.h.b16 %v579
      %v622 = vunpack.c.l.b16 %v580
      %v623 = vunpack.c.h.b16 %v580
      %v624 = vunpack.c.l.b16 %v581
      %v625 = vunpack.c.h.b16 %v581
      %v626 = vunpack.c.l.b16 %v582
      %v627 = vunpack.c.h.b16 %v582
      %v628 = vunpack.c.l.b16 %v583
      %v629 = vunpack.c.h.b16 %v583
      %v630 = vunpack.c.l.b16 %v584
      %v631 = vunpack.c.h.b16 %v584
      %v632 = vunpack.c.l.b16 %v585
      %v633 = vunpack.c.h.b16 %v585
      %v634 = vunpack.c.l.b16 %v586
      %v635 = vunpack.c.h.b16 %v586
      %v636 = vunpack.c.l.b16 %v587
      %v637 = vunpack.c.h.b16 %v587
      %v638 = vunpack.c.l.b16 %v588
      %v639 = vunpack.c.h.b16 %v588
      %v640 = vunpack.c.l.b16 %v589
      %v641 = vunpack.c.h.b16 %v589
      %v642 = vunpack.c.l.b16 %v590
      %v643 = vunpack.c.h.b16 %v590
      %v644 = vunpack.c.l.b16 %v591
      %v645 = vunpack.c.h.b16 %v591
      %v646 = vunpack.c.l.b16 %v592
      %v647 = vunpack.c.h.b16 %v592
      %v648 = vunpack.c.l.b16 %v593
      %v649 = vunpack.c.h.b16 %v593
      %v650 = vunpack.c.l.b16 %v594
      %v651 = vunpack.c.h.b16 %v594
      %v652 = vpack.c.b16 %v622, %v620
      %v653 = vpack.c.b16 %v623, %v621
      %v654 = vpack.c.b16 %v626, %v624
      %v655 = vpack.c.b16 %v627, %v625
      %v656 = vpack.c.b16 %v630, %v628
      %v657 = vpack.c.b16 %v631, %v629
      %v658 = vpack.c.b16 %v634, %v632
      %v659 = vpack.c.b16 %v635, %v633
      %v660 = vpack.c.b16 %v638, %v636
      %v661 = vpack.c.b16 %v639, %v637
      %v662 = vpack.c.b16 %v642, %v640
      %v663 = vpack.c.b16 %v643, %v641
      %v664 = vpack.c.b16 %v646, %v644
      %v665 = vpack.c.b16 %v647, %v645
      %v666 = vpack.c.b16 %v650, %v648
      %v667 = vpack.c.b16 %v651, %v649
      %684 = vmatprep.subr.bf16.mxu0 %v653
      %685 = vmatpush1.bf16.msra.mxu0 %v652
      %686 = vmatprep.subr.bf16.mxu0 %v655
      %687 = vmatpush1.bf16.msra.mxu0 %v654
      %688 = vmatprep.subr.bf16.mxu0 %v657
      %689 = vmatpush1.bf16.msra.mxu0 %v656
      %690 = vmatprep.subr.bf16.mxu0 %v659
      %691 = vmatpush1.bf16.msra.mxu0 %v658
      %692 = vmatprep.subr.bf16.mxu0 %v661
      %693 = vmatpush1.bf16.msra.mxu0 %v660
      %694 = vmatprep.subr.bf16.mxu0 %v663
      %695 = vmatpush1.bf16.msra.mxu0 %v662
      %696 = vmatprep.subr.bf16.mxu0 %v665
      %697 = vmatpush1.bf16.msra.mxu0 %v664
      %698 = vmatprep.subr.bf16.mxu0 %v667
      %699 = vmatpush1.bf16.msra.mxu0 %v666
      %700 = vmatprep.subr.bf16.mxu0 0
      %701 = vmatpush1.bf16.msra.mxu0 0
      %702 = vmatprep.subr.bf16.mxu0 0
      %703 = vmatpush1.bf16.msra.mxu0 0
      %704 = vmatprep.subr.bf16.mxu0 0
      %705 = vmatpush1.bf16.msra.mxu0 0
      %706 = vmatprep.subr.bf16.mxu0 0
      %707 = vmatpush1.bf16.msra.mxu0 0
      %708 = vmatprep.subr.bf16.mxu0 0
      %709 = vmatpush1.bf16.msra.mxu0 0
      %710 = vmatprep.subr.bf16.mxu0 0
      %711 = vmatpush1.bf16.msra.mxu0 0
      %712 = vmatprep.subr.bf16.mxu0 0
      %713 = vmatpush1.bf16.msra.mxu0 0
      %714 = vmatprep.subr.bf16.mxu0 0
      %715 = vmatpush1.bf16.msra.mxu0 0
      %716 = vmatprep.mubr.bf16.mxu0 0
      %717 = vmatmul.mubr.bf16.gmra.mrb[0].mxu0 %v601
      %v718 = vpop.f32.mrb[0].mxu0
      %v719 = vadd.f32 0.0, %v718
      %v720 = vpop.f32.mrb[0].mxu0
      %v721 = vadd.f32 0.0, %v720
      %v722 = vpop.f32.mrb[0].mxu0
      %v723 = vadd.f32 0.0, %v722
      %v724 = vpop.f32.mrb[0].mxu0
      %v725 = vadd.f32 0.0, %v724
      %726 = vmatprep.mubr.bf16.mxu0 0
      %727 = vmatmul.mubr.bf16.gmra.mrb[0].mxu0 %v600
      %v728 = vpop.f32.mrb[0].mxu0
      %v729 = vadd.f32 0.0, %v728
      %v730 = vpop.f32.mrb[0].mxu0
      %v731 = vadd.f32 0.0, %v730
      %v732 = vpop.f32.mrb[0].mxu0
      %v733 = vpop.f32.mrb[0].mxu0
      %734 = vdwg.mxu0
      %v735 = vadd.f32 %v561, %v719
      %v736 = vadd.f32 %v563, %v721
      %v737 = vadd.f32 %v565, %v723
      %v738 = vadd.f32 %v567, %v725
      %v739 = vadd.f32 %v571, %v729
      %v740 = vadd.f32 %v573, %v731
      %v741 = vld [vmem:[%s232] sm:$0x8]
      %v742 = vld [vmem:[%s232 + $0xc] sm:$0x7]
      %s743 = scalar_lea.vmem %s1, 384
      %v744 = vld [vmem:[%s743] sm:$0xff]
      %v745 = vld [vmem:[%s743 + $0x8] sm:$0xff]
      %v746 = vld [vmem:[%s743 + $0x10] sm:$0xff]
      %v747 = vld [vmem:[%s743 + $0x18] sm:$0xff]
      %v748 = vld [vmem:[%s743 + $0x20] sm:$0xff]
      %v749 = vld [vmem:[%s743 + $0x28] sm:$0xff]
      %v750 = vld [vmem:[%s743 + $0x30] sm:$0xff]
      %v751 = vld [vmem:[%s743 + $0x38] sm:$0xff]
      %v752 = vld [vmem:[%s743 + $0x40] sm:$0xff]
      %v753 = vld [vmem:[%s743 + $0x48] sm:$0xff]
      %v754 = vld [vmem:[%s743 + $0x50] sm:$0xff]
      %v755 = vld [vmem:[%s743 + $0x58] sm:$0xff]
      %v756 = vld [vmem:[%s743 + $0x60] sm:$0xff]
      %v757 = vld [vmem:[%s743 + $0x68] sm:$0xff]
      %v758 = vld [vmem:[%s743 + $0x70] sm:$0xff]
      %v759 = vld [vmem:[%s743 + $0x78] sm:$0xff]
      %v762 = vunpack.c.l.b16 %v741
      %v763 = vunpack.c.l.b16 %v742
      %v764 = vpack.c.b16 %v289, %v762
      %v765 = vpack.c.b16 %v763, %v290
      %vm766 = vcmask 1044480
      %v767 = vrot.slane %v764, 3
      %v768 = vrot.slane %v765, 3
      %v769 = vsel %vm766, %v767, %v768
      %v788 = vunpack.c.l.b16 %v744
      %v789 = vunpack.c.h.b16 %v744
      %v790 = vunpack.c.l.b16 %v745
      %v791 = vunpack.c.h.b16 %v745
      %v792 = vunpack.c.l.b16 %v746
      %v793 = vunpack.c.h.b16 %v746
      %v794 = vunpack.c.l.b16 %v747
      %v795 = vunpack.c.h.b16 %v747
      %v796 = vunpack.c.l.b16 %v748
      %v797 = vunpack.c.h.b16 %v748
      %v798 = vunpack.c.l.b16 %v749
      %v799 = vunpack.c.h.b16 %v749
      %v800 = vunpack.c.l.b16 %v750
      %v801 = vunpack.c.h.b16 %v750
      %v802 = vunpack.c.l.b16 %v751
      %v803 = vunpack.c.h.b16 %v751
      %v804 = vunpack.c.l.b16 %v752
      %v805 = vunpack.c.h.b16 %v752
      %v806 = vunpack.c.l.b16 %v753
      %v807 = vunpack.c.h.b16 %v753
      %v808 = vunpack.c.l.b16 %v754
      %v809 = vunpack.c.h.b16 %v754
      %v810 = vunpack.c.l.b16 %v755
      %v811 = vunpack.c.h.b16 %v755
      %v812 = vunpack.c.l.b16 %v756
      %v813 = vunpack.c.h.b16 %v756
      %v814 = vunpack.c.l.b16 %v757
      %v815 = vunpack.c.h.b16 %v757
      %v816 = vunpack.c.l.b16 %v758
      %v817 = vunpack.c.h.b16 %v758
      %v818 = vunpack.c.l.b16 %v759
      %v819 = vunpack.c.h.b16 %v759
      %v820 = vpack.c.b16 %v790, %v788
      %v821 = vpack.c.b16 %v791, %v789
      %v822 = vpack.c.b16 %v794, %v792
      %v823 = vpack.c.b16 %v795, %v793
      %v824 = vpack.c.b16 %v798, %v796
      %v825 = vpack.c.b16 %v799, %v797
      %v826 = vpack.c.b16 %v802, %v800
      %v827 = vpack.c.b16 %v803, %v801
      %v828 = vpack.c.b16 %v806, %v804
      %v829 = vpack.c.b16 %v807, %v805
      %v830 = vpack.c.b16 %v810, %v808
      %v831 = vpack.c.b16 %v811, %v809
      %v832 = vpack.c.b16 %v814, %v812
      %v833 = vpack.c.b16 %v815, %v813
      %v834 = vpack.c.b16 %v818, %v816
      %v835 = vpack.c.b16 %v819, %v817
      %852 = vmatprep.subr.bf16.mxu0 %v821
      %853 = vmatpush1.bf16.msra.mxu0 %v820
      %854 = vmatprep.subr.bf16.mxu0 %v823
      %855 = vmatpush1.bf16.msra.mxu0 %v822
      %856 = vmatprep.subr.bf16.mxu0 %v825
      %857 = vmatpush1.bf16.msra.mxu0 %v824
      %858 = vmatprep.subr.bf16.mxu0 %v827
      %859 = vmatpush1.bf16.msra.mxu0 %v826
      %860 = vmatprep.subr.bf16.mxu0 %v829
      %861 = vmatpush1.bf16.msra.mxu0 %v828
      %862 = vmatprep.subr.bf16.mxu0 %v831
      %863 = vmatpush1.bf16.msra.mxu0 %v830
      %864 = vmatprep.subr.bf16.mxu0 %v833
      %865 = vmatpush1.bf16.msra.mxu0 %v832
      %866 = vmatprep.subr.bf16.mxu0 %v835
      %867 = vmatpush1.bf16.msra.mxu0 %v834
      %868 = vmatprep.subr.bf16.mxu0 0
      %869 = vmatpush1.bf16.msra.mxu0 0
      %870 = vmatprep.subr.bf16.mxu0 0
      %871 = vmatpush1.bf16.msra.mxu0 0
      %872 = vmatprep.subr.bf16.mxu0 0
      %873 = vmatpush1.bf16.msra.mxu0 0
      %874 = vmatprep.subr.bf16.mxu0 0
      %875 = vmatpush1.bf16.msra.mxu0 0
      %876 = vmatprep.subr.bf16.mxu0 0
      %877 = vmatpush1.bf16.msra.mxu0 0
      %878 = vmatprep.subr.bf16.mxu0 0
      %879 = vmatpush1.bf16.msra.mxu0 0
      %880 = vmatprep.subr.bf16.mxu0 0
      %881 = vmatpush1.bf16.msra.mxu0 0
      %882 = vmatprep.subr.bf16.mxu0 0
      %883 = vmatpush1.bf16.msra.mxu0 0
      %884 = vmatprep.mubr.bf16.mxu0 0
      %885 = vmatmul.mubr.bf16.gmra.mrb[0].mxu0 %v769
      %v886 = vpop.f32.mrb[0].mxu0
      %v887 = vadd.f32 0.0, %v886
      %v888 = vpop.f32.mrb[0].mxu0
      %v889 = vadd.f32 0.0, %v888
      %v890 = vpop.f32.mrb[0].mxu0
      %v891 = vadd.f32 0.0, %v890
      %v892 = vpop.f32.mrb[0].mxu0
      %v893 = vadd.f32 0.0, %v892
      %894 = vmatprep.mubr.bf16.mxu0 0
      %895 = vmatmul.mubr.bf16.gmra.mrb[0].mxu0 %v768
      %v896 = vpop.f32.mrb[0].mxu0
      %v897 = vadd.f32 0.0, %v896
      %v898 = vpop.f32.mrb[0].mxu0
      %v899 = vadd.f32 0.0, %v898
      %v900 = vpop.f32.mrb[0].mxu0
      %v901 = vpop.f32.mrb[0].mxu0
      %902 = vdwg.mxu0
      %v903 = vadd.f32 %v735, %v887
      %v904 = vadd.f32 %v736, %v889
      %v905 = vadd.f32 %v737, %v891
      %v906 = vadd.f32 %v738, %v893
      %v907 = vadd.f32 %v739, %v897
      %v908 = vadd.f32 %v740, %v899
      %v909 = vld [vmem:[%s232 + $0xc] sm:$0xf]
      %s910 = scalar_lea.vmem %s1, 512
      %v911 = vld [vmem:[%s910] sm:$0xff]
      %v912 = vld [vmem:[%s910 + $0x8] sm:$0xff]
      %v913 = vld [vmem:[%s910 + $0x10] sm:$0xff]
      %v914 = vld [vmem:[%s910 + $0x18] sm:$0xff]
      %v915 = vld [vmem:[%s910 + $0x20] sm:$0xff]
      %v916 = vld [vmem:[%s910 + $0x28] sm:$0xff]
      %v917 = vld [vmem:[%s910 + $0x30] sm:$0xff]
      %v918 = vld [vmem:[%s910 + $0x38] sm:$0xff]
      %v919 = vld [vmem:[%s910 + $0x40] sm:$0xff]
      %v920 = vld [vmem:[%s910 + $0x48] sm:$0xff]
      %v921 = vld [vmem:[%s910 + $0x50] sm:$0xff]
      %v922 = vld [vmem:[%s910 + $0x58] sm:$0xff]
      %v923 = vld [vmem:[%s910 + $0x60] sm:$0xff]
      %v924 = vld [vmem:[%s910 + $0x68] sm:$0xff]
      %v925 = vld [vmem:[%s910 + $0x70] sm:$0xff]
      %v926 = vld [vmem:[%s910 + $0x78] sm:$0xff]
      %v928 = vunpack.c.l.b16 %v909
      %v929 = vpack.c.b16 %v928, %v290
      %vm930 = vsmask.f32 4352
      %v932 = vshrl.u32 %v764, 16
      %v934 = vrot.slane %v932, 3
      %v935 = vshll.u32 %v764, 16
      %v937 = vrot.slane %v935, 4
      %v938 = vor.u32 %v934, %v937
      %v940 = vshrl.u32 %v929, 16
      %v942 = vrot.slane %v940, 3
      %v943 = vshll.u32 %v929, 16
      %v945 = vrot.slane %v943, 4
      %v946 = vor.u32 %v942, %v945
      %v947 = vsel %vm930, %v938, %v946
      %v966 = vunpack.c.l.b16 %v911
      %v967 = vunpack.c.h.b16 %v911
      %v968 = vunpack.c.l.b16 %v912
      %v969 = vunpack.c.h.b16 %v912
      %v970 = vunpack.c.l.b16 %v913
      %v971 = vunpack.c.h.b16 %v913
      %v972 = vunpack.c.l.b16 %v914
      %v973 = vunpack.c.h.b16 %v914
      %v974 = vunpack.c.l.b16 %v915
      %v975 = vunpack.c.h.b16 %v915
      %v976 = vunpack.c.l.b16 %v916
      %v977 = vunpack.c.h.b16 %v916
      %v978 = vunpack.c.l.b16 %v917
      %v979 = vunpack.c.h.b16 %v917
      %v980 = vunpack.c.l.b16 %v918
      %v981 = vunpack.c.h.b16 %v918
      %v982 = vunpack.c.l.b16 %v919
      %v983 = vunpack.c.h.b16 %v919
      %v984 = vunpack.c.l.b16 %v920
      %v985 = vunpack.c.h.b16 %v920
      %v986 = vunpack.c.l.b16 %v921
      %v987 = vunpack.c.h.b16 %v921
      %v988 = vunpack.c.l.b16 %v922
      %v989 = vunpack.c.h.b16 %v922
      %v990 = vunpack.c.l.b16 %v923
      %v991 = vunpack.c.h.b16 %v923
      %v992 = vunpack.c.l.b16 %v924
      %v993 = vunpack.c.h.b16 %v924
      %v994 = vunpack.c.l.b16 %v925
      %v995 = vunpack.c.h.b16 %v925
      %v996 = vunpack.c.l.b16 %v926
      %v997 = vunpack.c.h.b16 %v926
      %v998 = vpack.c.b16 %v968, %v966
      %v999 = vpack.c.b16 %v969, %v967
      %v1000 = vpack.c.b16 %v972, %v970
      %v1001 = vpack.c.b16 %v973, %v971
      %v1002 = vpack.c.b16 %v976, %v974
      %v1003 = vpack.c.b16 %v977, %v975
      %v1004 = vpack.c.b16 %v980, %v978
      %v1005 = vpack.c.b16 %v981, %v979
      %v1006 = vpack.c.b16 %v984, %v982
      %v1007 = vpack.c.b16 %v985, %v983
      %v1008 = vpack.c.b16 %v988, %v986
      %v1009 = vpack.c.b16 %v989, %v987
      %v1010 = vpack.c.b16 %v992, %v990
      %v1011 = vpack.c.b16 %v993, %v991
      %v1012 = vpack.c.b16 %v996, %v994
      %v1013 = vpack.c.b16 %v997, %v995
      %1030 = vmatprep.subr.bf16.mxu0 %v999
      %1031 = vmatpush1.bf16.msra.mxu0 %v998
      %1032 = vmatprep.subr.bf16.mxu0 %v1001
      %1033 = vmatpush1.bf16.msra.mxu0 %v1000
      %1034 = vmatprep.subr.bf16.mxu0 %v1003
      %1035 = vmatpush1.bf16.msra.mxu0 %v1002
      %1036 = vmatprep.subr.bf16.mxu0 %v1005
      %1037 = vmatpush1.bf16.msra.mxu0 %v1004
      %1038 = vmatprep.subr.bf16.mxu0 %v1007
      %1039 = vmatpush1.bf16.msra.mxu0 %v1006
      %1040 = vmatprep.subr.bf16.mxu0 %v1009
      %1041 = vmatpush1.bf16.msra.mxu0 %v1008
      %1042 = vmatprep.subr.bf16.mxu0 %v1011
      %1043 = vmatpush1.bf16.msra.mxu0 %v1010
      %1044 = vmatprep.subr.bf16.mxu0 %v1013
      %1045 = vmatpush1.bf16.msra.mxu0 %v1012
      %1046 = vmatprep.subr.bf16.mxu0 0
      %1047 = vmatpush1.bf16.msra.mxu0 0
      %1048 = vmatprep.subr.bf16.mxu0 0
      %1049 = vmatpush1.bf16.msra.mxu0 0
      %1050 = vmatprep.subr.bf16.mxu0 0
      %1051 = vmatpush1.bf16.msra.mxu0 0
      %1052 = vmatprep.subr.bf16.mxu0 0
      %1053 = vmatpush1.bf16.msra.mxu0 0
      %1054 = vmatprep.subr.bf16.mxu0 0
      %1055 = vmatpush1.bf16.msra.mxu0 0
      %1056 = vmatprep.subr.bf16.mxu0 0
      %1057 = vmatpush1.bf16.msra.mxu0 0
      %1058 = vmatprep.subr.bf16.mxu0 0
      %1059 = vmatpush1.bf16.msra.mxu0 0
      %1060 = vmatprep.subr.bf16.mxu0 0
      %1061 = vmatpush1.bf16.msra.mxu0 0
      %1062 = vmatprep.mubr.bf16.mxu0 0
      %1063 = vmatmul.mubr.bf16.gmra.mrb[0].mxu0 %v947
      %v1064 = vpop.f32.mrb[0].mxu0
      %v1065 = vadd.f32 0.0, %v1064
      %v1066 = vpop.f32.mrb[0].mxu0
      %v1067 = vadd.f32 0.0, %v1066
      %v1068 = vpop.f32.mrb[0].mxu0
      %v1069 = vadd.f32 0.0, %v1068
      %v1070 = vpop.f32.mrb[0].mxu0
      %v1071 = vadd.f32 0.0, %v1070
      %1072 = vmatprep.mubr.bf16.mxu0 0
      %1073 = vmatmul.mubr.bf16.gmra.mrb[0].mxu0 %v946
      %v1074 = vpop.f32.mrb[0].mxu0
      %v1075 = vadd.f32 0.0, %v1074
      %v1076 = vpop.f32.mrb[0].mxu0
      %v1077 = vadd.f32 0.0, %v1076
      %v1078 = vpop.f32.mrb[0].mxu0
      %v1079 = vpop.f32.mrb[0].mxu0
      %1080 = vdwg.mxu0
      %v1081 = vadd.f32 %v903, %v1065
      %v1082 = vadd.f32 %v904, %v1067
      %v1083 = vadd.f32 %v905, %v1069
      %v1084 = vadd.f32 %v906, %v1071
      %v1085 = vadd.f32 %v907, %v1075
      %v1086 = vadd.f32 %v908, %v1077
      %s1087 = scalar_lea.vmem %s1, 640
      %v1088 = vld [vmem:[%s1087] sm:$0xff]
      %v1089 = vld [vmem:[%s1087 + $0x8] sm:$0xff]
      %v1090 = vld [vmem:[%s1087 + $0x10] sm:$0xff]
      %v1091 = vld [vmem:[%s1087 + $0x18] sm:$0xff]
      %v1092 = vld [vmem:[%s1087 + $0x20] sm:$0xff]
      %v1093 = vld [vmem:[%s1087 + $0x28] sm:$0xff]
      %v1094 = vld [vmem:[%s1087 + $0x30] sm:$0xff]
      %v1095 = vld [vmem:[%s1087 + $0x38] sm:$0xff]
      %v1096 = vld [vmem:[%s1087 + $0x40] sm:$0xff]
      %v1097 = vld [vmem:[%s1087 + $0x48] sm:$0xff]
      %v1098 = vld [vmem:[%s1087 + $0x50] sm:$0xff]
      %v1099 = vld [vmem:[%s1087 + $0x58] sm:$0xff]
      %v1100 = vld [vmem:[%s1087 + $0x60] sm:$0xff]
      %v1101 = vld [vmem:[%s1087 + $0x68] sm:$0xff]
      %v1102 = vld [vmem:[%s1087 + $0x70] sm:$0xff]
      %v1103 = vld [vmem:[%s1087 + $0x78] sm:$0xff]
      %v1104 = vpack.c.b16 %v290, %v289
      %v1105 = vpack.c.b16 %v928, %v928
      %v1124 = vunpack.c.l.b16 %v1088
      %v1125 = vunpack.c.h.b16 %v1088
      %v1126 = vunpack.c.l.b16 %v1089
      %v1127 = vunpack.c.h.b16 %v1089
      %v1128 = vunpack.c.l.b16 %v1090
      %v1129 = vunpack.c.h.b16 %v1090
      %v1130 = vunpack.c.l.b16 %v1091
      %v1131 = vunpack.c.h.b16 %v1091
      %v1132 = vunpack.c.l.b16 %v1092
      %v1133 = vunpack.c.h.b16 %v1092
      %v1134 = vunpack.c.l.b16 %v1093
      %v1135 = vunpack.c.h.b16 %v1093
      %v1136 = vunpack.c.l.b16 %v1094
      %v1137 = vunpack.c.h.b16 %v1094
      %v1138 = vunpack.c.l.b16 %v1095
      %v1139 = vunpack.c.h.b16 %v1095
      %v1140 = vunpack.c.l.b16 %v1096
      %v1141 = vunpack.c.h.b16 %v1096
      %v1142 = vunpack.c.l.b16 %v1097
      %v1143 = vunpack.c.h.b16 %v1097
      %v1144 = vunpack.c.l.b16 %v1098
      %v1145 = vunpack.c.h.b16 %v1098
      %v1146 = vunpack.c.l.b16 %v1099
      %v1147 = vunpack.c.h.b16 %v1099
      %v1148 = vunpack.c.l.b16 %v1100
      %v1149 = vunpack.c.h.b16 %v1100
      %v1150 = vunpack.c.l.b16 %v1101
      %v1151 = vunpack.c.h.b16 %v1101
      %v1152 = vunpack.c.l.b16 %v1102
      %v1153 = vunpack.c.h.b16 %v1102
      %v1154 = vunpack.c.l.b16 %v1103
      %v1155 = vunpack.c.h.b16 %v1103
      %v1156 = vpack.c.b16 %v1126, %v1124
      %v1157 = vpack.c.b16 %v1127, %v1125
      %v1158 = vpack.c.b16 %v1130, %v1128
      %v1159 = vpack.c.b16 %v1131, %v1129
      %v1160 = vpack.c.b16 %v1134, %v1132
      %v1161 = vpack.c.b16 %v1135, %v1133
      %v1162 = vpack.c.b16 %v1138, %v1136
      %v1163 = vpack.c.b16 %v1139, %v1137
      %v1164 = vpack.c.b16 %v1142, %v1140
      %v1165 = vpack.c.b16 %v1143, %v1141
      %v1166 = vpack.c.b16 %v1146, %v1144
      %v1167 = vpack.c.b16 %v1147, %v1145
      %v1168 = vpack.c.b16 %v1150, %v1148
      %v1169 = vpack.c.b16 %v1151, %v1149
      %v1170 = vpack.c.b16 %v1154, %v1152
      %v1171 = vpack.c.b16 %v1155, %v1153
      %1188 = vmatprep.subr.bf16.mxu0 %v1157
      %1189 = vmatpush1.bf16.msra.mxu0 %v1156
      %1190 = vmatprep.subr.bf16.mxu0 %v1159
      %1191 = vmatpush1.bf16.msra.mxu0 %v1158
      %1192 = vmatprep.subr.bf16.mxu0 %v1161
      %1193 = vmatpush1.bf16.msra.mxu0 %v1160
      %1194 = vmatprep.subr.bf16.mxu0 %v1163
      %1195 = vmatpush1.bf16.msra.mxu0 %v1162
      %1196 = vmatprep.subr.bf16.mxu0 %v1165
      %1197 = vmatpush1.bf16.msra.mxu0 %v1164
      %1198 = vmatprep.subr.bf16.mxu0 %v1167
      %1199 = vmatpush1.bf16.msra.mxu0 %v1166
      %1200 = vmatprep.subr.bf16.mxu0 %v1169
      %1201 = vmatpush1.bf16.msra.mxu0 %v1168
      %1202 = vmatprep.subr.bf16.mxu0 %v1171
      %1203 = vmatpush1.bf16.msra.mxu0 %v1170
      %1204 = vmatprep.subr.bf16.mxu0 0
      %1205 = vmatpush1.bf16.msra.mxu0 0
      %1206 = vmatprep.subr.bf16.mxu0 0
      %1207 = vmatpush1.bf16.msra.mxu0 0
      %1208 = vmatprep.subr.bf16.mxu0 0
      %1209 = vmatpush1.bf16.msra.mxu0 0
      %1210 = vmatprep.subr.bf16.mxu0 0
      %1211 = vmatpush1.bf16.msra.mxu0 0
      %1212 = vmatprep.subr.bf16.mxu0 0
      %1213 = vmatpush1.bf16.msra.mxu0 0
      %1214 = vmatprep.subr.bf16.mxu0 0
      %1215 = vmatpush1.bf16.msra.mxu0 0
      %1216 = vmatprep.subr.bf16.mxu0 0
      %1217 = vmatpush1.bf16.msra.mxu0 0
      %1218 = vmatprep.subr.bf16.mxu0 0
      %1219 = vmatpush1.bf16.msra.mxu0 0
      %1220 = vmatprep.mubr.bf16.mxu0 0
      %1221 = vmatmul.mubr.bf16.gmra.mrb[0].mxu0 %v1104
      %v1222 = vpop.f32.mrb[0].mxu0
      %v1223 = vadd.f32 0.0, %v1222
      %v1224 = vpop.f32.mrb[0].mxu0
      %v1225 = vadd.f32 0.0, %v1224
      %v1226 = vpop.f32.mrb[0].mxu0
      %v1227 = vadd.f32 0.0, %v1226
      %v1228 = vpop.f32.mrb[0].mxu0
      %v1229 = vadd.f32 0.0, %v1228
      %1230 = vmatprep.mubr.bf16.mxu0 0
      %1231 = vmatmul.mubr.bf16.gmra.mrb[0].mxu0 %v1105
      %v1232 = vpop.f32.mrb[0].mxu0
      %v1233 = vadd.f32 0.0, %v1232
      %v1234 = vpop.f32.mrb[0].mxu0
      %v1235 = vadd.f32 0.0, %v1234
      %v1236 = vpop.f32.mrb[0].mxu0
      %v1237 = vpop.f32.mrb[0].mxu0
      %1238 = vdwg.mxu0
      %v1239 = vadd.f32 %v1081, %v1223
      %v1240 = vadd.f32 %v1082, %v1225
      %v1241 = vadd.f32 %v1083, %v1227
      %v1242 = vadd.f32 %v1084, %v1229
      %v1243 = vadd.f32 %v1085, %v1233
      %v1244 = vadd.f32 %v1086, %v1235
      %v1245 = vld [vmem:[%s232 + $0x4] sm:$0xc]
      %v1246 = vld [vmem:[%s232 + $0x8] sm:$0xf]
      %v1247 = vld [vmem:[%s232 + $0xc] sm:$0xf]
      %v1248 = vld [vmem:[%s232 + $0x10] sm:$0x3]
      %s1249 = scalar_lea.vmem %s1, 768
      %v1250 = vld [vmem:[%s1249] sm:$0xff]
      %v1251 = vld [vmem:[%s1249 + $0x8] sm:$0xff]
      %v1252 = vld [vmem:[%s1249 + $0x10] sm:$0xff]
      %v1253 = vld [vmem:[%s1249 + $0x18] sm:$0xff]
      %v1254 = vld [vmem:[%s1249 + $0x20] sm:$0xff]
      %v1255 = vld [vmem:[%s1249 + $0x28] sm:$0xff]
      %v1256 = vld [vmem:[%s1249 + $0x30] sm:$0xff]
      %v1257 = vld [vmem:[%s1249 + $0x38] sm:$0xff]
      %v1258 = vld [vmem:[%s1249 + $0x40] sm:$0xff]
      %v1259 = vld [vmem:[%s1249 + $0x48] sm:$0xff]
      %v1260 = vld [vmem:[%s1249 + $0x50] sm:$0xff]
      %v1261 = vld [vmem:[%s1249 + $0x58] sm:$0xff]
      %v1262 = vld [vmem:[%s1249 + $0x60] sm:$0xff]
      %v1263 = vld [vmem:[%s1249 + $0x68] sm:$0xff]
      %v1264 = vld [vmem:[%s1249 + $0x70] sm:$0xff]
      %v1265 = vld [vmem:[%s1249 + $0x78] sm:$0xff]
      %v1270 = vunpack.c.l.b16 %v1245
      %v1271 = vunpack.c.l.b16 %v1246
      %v1272 = vunpack.c.l.b16 %v1247
      %v1273 = vunpack.c.l.b16 %v1248
      %v1274 = vpack.c.b16 %v1271, %v1270
      %v1275 = vpack.c.b16 %v1273, %v1272
      %vm1276 = vcmask 1045504
      %v1277 = vrot.slane %v1274, 2
      %v1278 = vrot.slane %v1275, 2
      %v1279 = vsel %vm1276, %v1277, %v1278
      %v1298 = vunpack.c.l.b16 %v1250
      %v1299 = vunpack.c.h.b16 %v1250
      %v1300 = vunpack.c.l.b16 %v1251
      %v1301 = vunpack.c.h.b16 %v1251
      %v1302 = vunpack.c.l.b16 %v1252
      %v1303 = vunpack.c.h.b16 %v1252
      %v1304 = vunpack.c.l.b16 %v1253
      %v1305 = vunpack.c.h.b16 %v1253
      %v1306 = vunpack.c.l.b16 %v1254
      %v1307 = vunpack.c.h.b16 %v1254
      %v1308 = vunpack.c.l.b16 %v1255
      %v1309 = vunpack.c.h.b16 %v1255
      %v1310 = vunpack.c.l.b16 %v1256
      %v1311 = vunpack.c.h.b16 %v1256
      %v1312 = vunpack.c.l.b16 %v1257
      %v1313 = vunpack.c.h.b16 %v1257
      %v1314 = vunpack.c.l.b16 %v1258
      %v1315 = vunpack.c.h.b16 %v1258
      %v1316 = vunpack.c.l.b16 %v1259
      %v1317 = vunpack.c.h.b16 %v1259
      %v1318 = vunpack.c.l.b16 %v1260
      %v1319 = vunpack.c.h.b16 %v1260
      %v1320 = vunpack.c.l.b16 %v1261
      %v1321 = vunpack.c.h.b16 %v1261
      %v1322 = vunpack.c.l.b16 %v1262
      %v1323 = vunpack.c.h.b16 %v1262
      %v1324 = vunpack.c.l.b16 %v1263
      %v1325 = vunpack.c.h.b16 %v1263
      %v1326 = vunpack.c.l.b16 %v1264
      %v1327 = vunpack.c.h.b16 %v1264
      %v1328 = vunpack.c.l.b16 %v1265
      %v1329 = vunpack.c.h.b16 %v1265
      %v1330 = vpack.c.b16 %v1300, %v1298
      %v1331 = vpack.c.b16 %v1301, %v1299
      %v1332 = vpack.c.b16 %v1304, %v1302
      %v1333 = vpack.c.b16 %v1305, %v1303
      %v1334 = vpack.c.b16 %v1308, %v1306
      %v1335 = vpack.c.b16 %v1309, %v1307
      %v1336 = vpack.c.b16 %v1312, %v1310
      %v1337 = vpack.c.b16 %v1313, %v1311
      %v1338 = vpack.c.b16 %v1316, %v1314
      %v1339 = vpack.c.b16 %v1317, %v1315
      %v1340 = vpack.c.b16 %v1320, %v1318
      %v1341 = vpack.c.b16 %v1321, %v1319
      %v1342 = vpack.c.b16 %v1324, %v1322
      %v1343 = vpack.c.b16 %v1325, %v1323
      %v1344 = vpack.c.b16 %v1328, %v1326
      %v1345 = vpack.c.b16 %v1329, %v1327
      %1362 = vmatprep.subr.bf16.mxu0 %v1331
      %1363 = vmatpush1.bf16.msra.mxu0 %v1330
      %1364 = vmatprep.subr.bf16.mxu0 %v1333
      %1365 = vmatpush1.bf16.msra.mxu0 %v1332
      %1366 = vmatprep.subr.bf16.mxu0 %v1335
      %1367 = vmatpush1.bf16.msra.mxu0 %v1334
      %1368 = vmatprep.subr.bf16.mxu0 %v1337
      %1369 = vmatpush1.bf16.msra.mxu0 %v1336
      %1370 = vmatprep.subr.bf16.mxu0 %v1339
      %1371 = vmatpush1.bf16.msra.mxu0 %v1338
      %1372 = vmatprep.subr.bf16.mxu0 %v1341
      %1373 = vmatpush1.bf16.msra.mxu0 %v1340
      %1374 = vmatprep.subr.bf16.mxu0 %v1343
      %1375 = vmatpush1.bf16.msra.mxu0 %v1342
      %1376 = vmatprep.subr.bf16.mxu0 %v1345
      %1377 = vmatpush1.bf16.msra.mxu0 %v1344
      %1378 = vmatprep.subr.bf16.mxu0 0
      %1379 = vmatpush1.bf16.msra.mxu0 0
      %1380 = vmatprep.subr.bf16.mxu0 0
      %1381 = vmatpush1.bf16.msra.mxu0 0
      %1382 = vmatprep.subr.bf16.mxu0 0
      %1383 = vmatpush1.bf16.msra.mxu0 0
      %1384 = vmatprep.subr.bf16.mxu0 0
      %1385 = vmatpush1.bf16.msra.mxu0 0
      %1386 = vmatprep.subr.bf16.mxu0 0
      %1387 = vmatpush1.bf16.msra.mxu0 0
      %1388 = vmatprep.subr.bf16.mxu0 0
      %1389 = vmatpush1.bf16.msra.mxu0 0
      %1390 = vmatprep.subr.bf16.mxu0 0
      %1391 = vmatpush1.bf16.msra.mxu0 0
      %1392 = vmatprep.subr.bf16.mxu0 0
      %1393 = vmatpush1.bf16.msra.mxu0 0
      %1394 = vmatprep.mubr.bf16.mxu0 0
      %1395 = vmatmul.mubr.bf16.gmra.mrb[0].mxu0 %v1279
      %v1396 = vpop.f32.mrb[0].mxu0
      %v1397 = vadd.f32 0.0, %v1396
      %v1398 = vpop.f32.mrb[0].mxu0
      %v1399 = vadd.f32 0.0, %v1398
      %v1400 = vpop.f32.mrb[0].mxu0
      %v1401 = vadd.f32 0.0, %v1400
      %v1402 = vpop.f32.mrb[0].mxu0
      %v1403 = vadd.f32 0.0, %v1402
      %1404 = vmatprep.mubr.bf16.mxu0 0
      %1405 = vmatmul.mubr.bf16.gmra.mrb[0].mxu0 %v1278
      %v1406 = vpop.f32.mrb[0].mxu0
      %v1407 = vadd.f32 0.0, %v1406
      %v1408 = vpop.f32.mrb[0].mxu0
      %v1409 = vadd.f32 0.0, %v1408
      %v1410 = vpop.f32.mrb[0].mxu0
      %v1411 = vpop.f32.mrb[0].mxu0
      %1412 = vdwg.mxu0
      %v1413 = vadd.f32 %v1239, %v1397
      %v1414 = vadd.f32 %v1240, %v1399
      %v1415 = vadd.f32 %v1241, %v1401
      %v1416 = vadd.f32 %v1242, %v1403
      %v1417 = vadd.f32 %v1243, %v1407
      %v1418 = vadd.f32 %v1244, %v1409
      %v1419 = vld [vmem:[%s232 + $0x10] sm:$0x7]
      %s1420 = scalar_lea.vmem %s1, 896
      %v1421 = vld [vmem:[%s1420] sm:$0xff]
      %v1422 = vld [vmem:[%s1420 + $0x8] sm:$0xff]
      %v1423 = vld [vmem:[%s1420 + $0x10] sm:$0xff]
      %v1424 = vld [vmem:[%s1420 + $0x18] sm:$0xff]
      %v1425 = vld [vmem:[%s1420 + $0x20] sm:$0xff]
      %v1426 = vld [vmem:[%s1420 + $0x28] sm:$0xff]
      %v1427 = vld [vmem:[%s1420 + $0x30] sm:$0xff]
      %v1428 = vld [vmem:[%s1420 + $0x38] sm:$0xff]
      %v1429 = vld [vmem:[%s1420 + $0x40] sm:$0xff]
      %v1430 = vld [vmem:[%s1420 + $0x48] sm:$0xff]
      %v1431 = vld [vmem:[%s1420 + $0x50] sm:$0xff]
      %v1432 = vld [vmem:[%s1420 + $0x58] sm:$0xff]
      %v1433 = vld [vmem:[%s1420 + $0x60] sm:$0xff]
      %v1434 = vld [vmem:[%s1420 + $0x68] sm:$0xff]
      %v1435 = vld [vmem:[%s1420 + $0x70] sm:$0xff]
      %v1436 = vld [vmem:[%s1420 + $0x78] sm:$0xff]
      %v1438 = vunpack.c.l.b16 %v1419
      %v1439 = vpack.c.b16 %v1438, %v1272
      %vm1440 = vsmask.f32 5376
      %v1442 = vshrl.u32 %v1274, 16
      %v1444 = vrot.slane %v1442, 2
      %v1445 = vshll.u32 %v1274, 16
      %v1447 = vrot.slane %v1445, 3
      %v1448 = vor.u32 %v1444, %v1447
      %v1450 = vshrl.u32 %v1439, 16
      %v1452 = vrot.slane %v1450, 2
      %v1453 = vshll.u32 %v1439, 16
      %v1455 = vrot.slane %v1453, 3
      %v1456 = vor.u32 %v1452, %v1455
      %v1457 = vsel %vm1440, %v1448, %v1456
      %v1476 = vunpack.c.l.b16 %v1421
      %v1477 = vunpack.c.h.b16 %v1421
      %v1478 = vunpack.c.l.b16 %v1422
      %v1479 = vunpack.c.h.b16 %v1422
      %v1480 = vunpack.c.l.b16 %v1423
      %v1481 = vunpack.c.h.b16 %v1423
      %v1482 = vunpack.c.l.b16 %v1424
      %v1483 = vunpack.c.h.b16 %v1424
      %v1484 = vunpack.c.l.b16 %v1425
      %v1485 = vunpack.c.h.b16 %v1425
      %v1486 = vunpack.c.l.b16 %v1426
      %v1487 = vunpack.c.h.b16 %v1426
      %v1488 = vunpack.c.l.b16 %v1427
      %v1489 = vunpack.c.h.b16 %v1427
      %v1490 = vunpack.c.l.b16 %v1428
      %v1491 = vunpack.c.h.b16 %v1428
      %v1492 = vunpack.c.l.b16 %v1429
      %v1493 = vunpack.c.h.b16 %v1429
      %v1494 = vunpack.c.l.b16 %v1430
      %v1495 = vunpack.c.h.b16 %v1430
      %v1496 = vunpack.c.l.b16 %v1431
      %v1497 = vunpack.c.h.b16 %v1431
      %v1498 = vunpack.c.l.b16 %v1432
      %v1499 = vunpack.c.h.b16 %v1432
      %v1500 = vunpack.c.l.b16 %v1433
      %v1501 = vunpack.c.h.b16 %v1433
      %v1502 = vunpack.c.l.b16 %v1434
      %v1503 = vunpack.c.h.b16 %v1434
      %v1504 = vunpack.c.l.b16 %v1435
      %v1505 = vunpack.c.h.b16 %v1435
      %v1506 = vunpack.c.l.b16 %v1436
      %v1507 = vunpack.c.h.b16 %v1436
      %v1508 = vpack.c.b16 %v1478, %v1476
      %v1509 = vpack.c.b16 %v1479, %v1477
      %v1510 = vpack.c.b16 %v1482, %v1480
      %v1511 = vpack.c.b16 %v1483, %v1481
      %v1512 = vpack.c.b16 %v1486, %v1484
      %v1513 = vpack.c.b16 %v1487, %v1485
      %v1514 = vpack.c.b16 %v1490, %v1488
      %v1515 = vpack.c.b16 %v1491, %v1489
      %v1516 = vpack.c.b16 %v1494, %v1492
      %v1517 = vpack.c.b16 %v1495, %v1493
      %v1518 = vpack.c.b16 %v1498, %v1496
      %v1519 = vpack.c.b16 %v1499, %v1497
      %v1520 = vpack.c.b16 %v1502, %v1500
      %v1521 = vpack.c.b16 %v1503, %v1501
      %v1522 = vpack.c.b16 %v1506, %v1504
      %v1523 = vpack.c.b16 %v1507, %v1505
      %1540 = vmatprep.subr.bf16.mxu0 %v1509
      %1541 = vmatpush1.bf16.msra.mxu0 %v1508
      %1542 = vmatprep.subr.bf16.mxu0 %v1511
      %1543 = vmatpush1.bf16.msra.mxu0 %v1510
      %1544 = vmatprep.subr.bf16.mxu0 %v1513
      %1545 = vmatpush1.bf16.msra.mxu0 %v1512
      %1546 = vmatprep.subr.bf16.mxu0 %v1515
      %1547 = vmatpush1.bf16.msra.mxu0 %v1514
      %1548 = vmatprep.subr.bf16.mxu0 %v1517
      %1549 = vmatpush1.bf16.msra.mxu0 %v1516
      %1550 = vmatprep.subr.bf16.mxu0 %v1519
      %1551 = vmatpush1.bf16.msra.mxu0 %v1518
      %1552 = vmatprep.subr.bf16.mxu0 %v1521
      %1553 = vmatpush1.bf16.msra.mxu0 %v1520
      %1554 = vmatprep.subr.bf16.mxu0 %v1523
      %1555 = vmatpush1.bf16.msra.mxu0 %v1522
      %1556 = vmatprep.subr.bf16.mxu0 0
      %1557 = vmatpush1.bf16.msra.mxu0 0
      %1558 = vmatprep.subr.bf16.mxu0 0
      %1559 = vmatpush1.bf16.msra.mxu0 0
      %1560 = vmatprep.subr.bf16.mxu0 0
      %1561 = vmatpush1.bf16.msra.mxu0 0
      %1562 = vmatprep.subr.bf16.mxu0 0
      %1563 = vmatpush1.bf16.msra.mxu0 0
      %1564 = vmatprep.subr.bf16.mxu0 0
      %1565 = vmatpush1.bf16.msra.mxu0 0
      %1566 = vmatprep.subr.bf16.mxu0 0
      %1567 = vmatpush1.bf16.msra.mxu0 0
      %1568 = vmatprep.subr.bf16.mxu0 0
      %1569 = vmatpush1.bf16.msra.mxu0 0
      %1570 = vmatprep.subr.bf16.mxu0 0
      %1571 = vmatpush1.bf16.msra.mxu0 0
      %1572 = vmatprep.mubr.bf16.mxu0 0
      %1573 = vmatmul.mubr.bf16.gmra.mrb[0].mxu0 %v1457
      %v1574 = vpop.f32.mrb[0].mxu0
      %v1575 = vadd.f32 0.0, %v1574
      %v1576 = vpop.f32.mrb[0].mxu0
      %v1577 = vadd.f32 0.0, %v1576
      %v1578 = vpop.f32.mrb[0].mxu0
      %v1579 = vadd.f32 0.0, %v1578
      %v1580 = vpop.f32.mrb[0].mxu0
      %v1581 = vadd.f32 0.0, %v1580
      %1582 = vmatprep.mubr.bf16.mxu0 0
      %1583 = vmatmul.mubr.bf16.gmra.mrb[0].mxu0 %v1456
      %v1584 = vpop.f32.mrb[0].mxu0
      %v1585 = vadd.f32 0.0, %v1584
      %v1586 = vpop.f32.mrb[0].mxu0
      %v1587 = vadd.f32 0.0, %v1586
      %v1588 = vpop.f32.mrb[0].mxu0
      %v1589 = vpop.f32.mrb[0].mxu0
      %1590 = vdwg.mxu0
      %v1591 = vadd.f32 %v1413, %v1575
      %v1592 = vadd.f32 %v1414, %v1577
      %v1593 = vadd.f32 %v1415, %v1579
      %v1594 = vadd.f32 %v1416, %v1581
      %v1595 = vadd.f32 %v1417, %v1585
      %v1596 = vadd.f32 %v1418, %v1587
      %v1597 = vld [vmem:[%s232 + $0x4] sm:$0x8]
      %s1598 = scalar_lea.vmem %s1, 1024
      %v1599 = vld [vmem:[%s1598] sm:$0xff]
      %v1600 = vld [vmem:[%s1598 + $0x8] sm:$0xff]
      %v1601 = vld [vmem:[%s1598 + $0x10] sm:$0xff]
      %v1602 = vld [vmem:[%s1598 + $0x18] sm:$0xff]
      %v1603 = vld [vmem:[%s1598 + $0x20] sm:$0xff]
      %v1604 = vld [vmem:[%s1598 + $0x28] sm:$0xff]
      %v1605 = vld [vmem:[%s1598 + $0x30] sm:$0xff]
      %v1606 = vld [vmem:[%s1598 + $0x38] sm:$0xff]
      %v1607 = vld [vmem:[%s1598 + $0x40] sm:$0xff]
      %v1608 = vld [vmem:[%s1598 + $0x48] sm:$0xff]
      %v1609 = vld [vmem:[%s1598 + $0x50] sm:$0xff]
      %v1610 = vld [vmem:[%s1598 + $0x58] sm:$0xff]
      %v1611 = vld [vmem:[%s1598 + $0x60] sm:$0xff]
      %v1612 = vld [vmem:[%s1598 + $0x68] sm:$0xff]
      %v1613 = vld [vmem:[%s1598 + $0x70] sm:$0xff]
      %v1614 = vld [vmem:[%s1598 + $0x78] sm:$0xff]
      %v1616 = vunpack.c.l.b16 %v1597
      %v1617 = vpack.c.b16 %v1271, %v1616
      %v1618 = vrot.slane %v1617, 3
      %v1619 = vrot.slane %v1439, 3
      %v1620 = vsel %vm766, %v1618, %v1619
      %v1639 = vunpack.c.l.b16 %v1599
      %v1640 = vunpack.c.h.b16 %v1599
      %v1641 = vunpack.c.l.b16 %v1600
      %v1642 = vunpack.c.h.b16 %v1600
      %v1643 = vunpack.c.l.b16 %v1601
      %v1644 = vunpack.c.h.b16 %v1601
      %v1645 = vunpack.c.l.b16 %v1602
      %v1646 = vunpack.c.h.b16 %v1602
      %v1647 = vunpack.c.l.b16 %v1603
      %v1648 = vunpack.c.h.b16 %v1603
      %v1649 = vunpack.c.l.b16 %v1604
      %v1650 = vunpack.c.h.b16 %v1604
      %v1651 = vunpack.c.l.b16 %v1605
      %v1652 = vunpack.c.h.b16 %v1605
      %v1653 = vunpack.c.l.b16 %v1606
      %v1654 = vunpack.c.h.b16 %v1606
      %v1655 = vunpack.c.l.b16 %v1607
      %v1656 = vunpack.c.h.b16 %v1607
      %v1657 = vunpack.c.l.b16 %v1608
      %v1658 = vunpack.c.h.b16 %v1608
      %v1659 = vunpack.c.l.b16 %v1609
      %v1660 = vunpack.c.h.b16 %v1609
      %v1661 = vunpack.c.l.b16 %v1610
      %v1662 = vunpack.c.h.b16 %v1610
      %v1663 = vunpack.c.l.b16 %v1611
      %v1664 = vunpack.c.h.b16 %v1611
      %v1665 = vunpack.c.l.b16 %v1612
      %v1666 = vunpack.c.h.b16 %v1612
      %v1667 = vunpack.c.l.b16 %v1613
      %v1668 = vunpack.c.h.b16 %v1613
      %v1669 = vunpack.c.l.b16 %v1614
      %v1670 = vunpack.c.h.b16 %v1614
      %v1671 = vpack.c.b16 %v1641, %v1639
      %v1672 = vpack.c.b16 %v1642, %v1640
      %v1673 = vpack.c.b16 %v1645, %v1643
      %v1674 = vpack.c.b16 %v1646, %v1644
      %v1675 = vpack.c.b16 %v1649, %v1647
      %v1676 = vpack.c.b16 %v1650, %v1648
      %v1677 = vpack.c.b16 %v1653, %v1651
      %v1678 = vpack.c.b16 %v1654, %v1652
      %v1679 = vpack.c.b16 %v1657, %v1655
      %v1680 = vpack.c.b16 %v1658, %v1656
      %v1681 = vpack.c.b16 %v1661, %v1659
      %v1682 = vpack.c.b16 %v1662, %v1660
      %v1683 = vpack.c.b16 %v1665, %v1663
      %v1684 = vpack.c.b16 %v1666, %v1664
      %v1685 = vpack.c.b16 %v1669, %v1667
      %v1686 = vpack.c.b16 %v1670, %v1668
      %1703 = vmatprep.subr.bf16.mxu0 %v1672
      %1704 = vmatpush1.bf16.msra.mxu0 %v1671
      %1705 = vmatprep.subr.bf16.mxu0 %v1674
      %1706 = vmatpush1.bf16.msra.mxu0 %v1673
      %1707 = vmatprep.subr.bf16.mxu0 %v1676
      %1708 = vmatpush1.bf16.msra.mxu0 %v1675
      %1709 = vmatprep.subr.bf16.mxu0 %v1678
      %1710 = vmatpush1.bf16.msra.mxu0 %v1677
      %1711 = vmatprep.subr.bf16.mxu0 %v1680
      %1712 = vmatpush1.bf16.msra.mxu0 %v1679
      %1713 = vmatprep.subr.bf16.mxu0 %v1682
      %1714 = vmatpush1.bf16.msra.mxu0 %v1681
      %1715 = vmatprep.subr.bf16.mxu0 %v1684
      %1716 = vmatpush1.bf16.msra.mxu0 %v1683
      %1717 = vmatprep.subr.bf16.mxu0 %v1686
      %1718 = vmatpush1.bf16.msra.mxu0 %v1685
      %1719 = vmatprep.subr.bf16.mxu0 0
      %1720 = vmatpush1.bf16.msra.mxu0 0
      %1721 = vmatprep.subr.bf16.mxu0 0
      %1722 = vmatpush1.bf16.msra.mxu0 0
      %1723 = vmatprep.subr.bf16.mxu0 0
      %1724 = vmatpush1.bf16.msra.mxu0 0
      %1725 = vmatprep.subr.bf16.mxu0 0
      %1726 = vmatpush1.bf16.msra.mxu0 0
      %1727 = vmatprep.subr.bf16.mxu0 0
      %1728 = vmatpush1.bf16.msra.mxu0 0
      %1729 = vmatprep.subr.bf16.mxu0 0
      %1730 = vmatpush1.bf16.msra.mxu0 0
      %1731 = vmatprep.subr.bf16.mxu0 0
      %1732 = vmatpush1.bf16.msra.mxu0 0
      %1733 = vmatprep.subr.bf16.mxu0 0
      %1734 = vmatpush1.bf16.msra.mxu0 0
      %1735 = vmatprep.mubr.bf16.mxu0 0
      %1736 = vmatmul.mubr.bf16.gmra.mrb[0].mxu0 %v1620
      %v1737 = vpop.f32.mrb[0].mxu0
      %v1738 = vadd.f32 0.0, %v1737
      %v1739 = vpop.f32.mrb[0].mxu0
      %v1740 = vadd.f32 0.0, %v1739
      %v1741 = vpop.f32.mrb[0].mxu0
      %v1742 = vadd.f32 0.0, %v1741
      %v1743 = vpop.f32.mrb[0].mxu0
      %v1744 = vadd.f32 0.0, %v1743
      %1745 = vmatprep.mubr.bf16.mxu0 0
      %1746 = vmatmul.mubr.bf16.gmra.mrb[0].mxu0 %v1619
      %v1747 = vpop.f32.mrb[0].mxu0
      %v1748 = vadd.f32 0.0, %v1747
      %v1749 = vpop.f32.mrb[0].mxu0
      %v1750 = vadd.f32 0.0, %v1749
      %v1751 = vpop.f32.mrb[0].mxu0
      %v1752 = vpop.f32.mrb[0].mxu0
      %1753 = vdwg.mxu0
      %v1754 = vadd.f32 %v1591, %v1738
      %v1755 = vadd.f32 %v1592, %v1740
      %v1756 = vadd.f32 %v1593, %v1742
      %v1757 = vadd.f32 %v1594, %v1744
      %v1758 = vadd.f32 %v1595, %v1748
      %v1759 = vadd.f32 %v1596, %v1750
      %v1760 = vld [vmem:[%s2] sm:$0x3]
      %v1762 = vlaneseq
      %v1763 = vshrl.u32 %v1762, 7
      %v1764 = vsub.s32 0, %v1763
      %v1765 = vrot.slane %v1760, %v1764
      %v1766 = vlaneseq
      %v1767 = vshrl.u32 %v1766, 7
      %v1768 = vsub.s32 1, %v1767
      %v1769 = vrot.slane %v1760, %v1768
      %v1772 = vadd.f32 %v1754, %v1765
      %v1773 = vadd.f32 %v1755, %v1769
      %v1774 = vadd.f32 %v1756, %v1765
      %v1775 = vadd.f32 %v1757, %v1769
      %v1776 = vadd.f32 %v1758, %v1765
      %v1777 = vadd.f32 %v1759, %v1769
      %v1778 = vlaneseq
      %v1779 = vshrl.u32 %v1778, 7
      %v1780 = vadd.s32 %v1779, 8
      %v1781 = vadd.s32 %v1779, 16
      %vm1782 = vcmp.lt.s32.totalorder %v1779, 0
      %v1783 = vsub.s32 0, %v1779
      %v1784 = vsel %vm1782, %v1783, %v1779
      %v1785 = vmul.u32.u64.compose %v1784, 2863311531
      %v1786 = vextract.low.u32 %v1785
      %v1787 = vextract.high.u32 %v1785
      %v1788 = vshrl.u32 %v1787, 2
      %v1789 = vmul.u32 %v1788, 6
      %v1790 = vsub.s32 %v1784, %v1789
      %v1791 = vsub.s32 0, %v1790
      %v1792 = vsel %vm1782, %v1791, %v1790
      %vm1793 = vcmp.lt.s32.totalorder %v1780, 0
      %v1794 = vsub.s32 0, %v1780
      %v1795 = vsel %vm1793, %v1794, %v1780
      %v1796 = vmul.u32.u64.compose %v1795, 2863311531
      %v1797 = vextract.low.u32 %v1796
      %v1798 = vextract.high.u32 %v1796
      %v1799 = vshrl.u32 %v1798, 2
      %v1800 = vmul.u32 %v1799, 6
      %v1801 = vsub.s32 %v1795, %v1800
      %v1802 = vsub.s32 0, %v1801
      %v1803 = vsel %vm1793, %v1802, %v1801
      %vm1804 = vcmp.lt.s32.totalorder %v1781, 0
      %v1805 = vsub.s32 0, %v1781
      %v1806 = vsel %vm1804, %v1805, %v1781
      %v1807 = vmul.u32.u64.compose %v1806, 2863311531
      %v1808 = vextract.low.u32 %v1807
      %v1809 = vextract.high.u32 %v1807
      %v1810 = vshrl.u32 %v1809, 2
      %v1811 = vmul.u32 %v1810, 6
      %v1812 = vsub.s32 %v1806, %v1811
      %v1813 = vsub.s32 0, %v1812
      %v1814 = vsel %vm1804, %v1813, %v1812
      %vm1815 = vcmp.ne.s32.totalorder %v1792, 0
      %vm1816 = vcmp.ne.s32.totalorder %v1803, 0
      %vm1817 = vcmp.ne.s32.totalorder %v1814, 0
      %vm1818 = vcmp.lt.s32.totalorder %v1792, 0
      %vm1819 = vcmp.lt.s32.totalorder %v1803, 0
      %vm1820 = vcmp.lt.s32.totalorder %v1814, 0
      %vm1821 = vmand %vm1818, %vm1815
      %vm1822 = vmand %vm1819, %vm1816
      %vm1823 = vmand %vm1820, %vm1817
      %v1824 = vadd.s32 %v1792, 6
      %v1825 = vadd.s32 %v1803, 6
      %v1826 = vadd.s32 %v1814, 6
      %v1827 = vsel %vm1821, %v1824, %v1792
      %v1828 = vsel %vm1822, %v1825, %v1803
      %v1829 = vsel %vm1823, %v1826, %v1814
      %vm1830 = vcmp.lt.s32.totalorder %v1827, 4
      %vm1831 = vcmp.lt.s32.totalorder %v1828, 4
      %vm1832 = vcmp.lt.s32.totalorder %v1829, 4
      %v1833 = vsel %vm1830, 1, 0
      %v1834 = vsel %vm1831, 1, 0
      %v1835 = vsel %vm1832, 1, 0
      %vm1836 = vcmp.eq.s32.totalorder %v1833, 1
      %vm1837 = vcmp.eq.s32.totalorder %v1834, 1
      %vm1838 = vcmp.eq.s32.totalorder %v1835, 1
      %v1839 = vsel %vm1836, %v1772, 0.0
      %v1840 = vsel %vm1836, %v1773, 0.0
      %v1841 = vsel %vm1837, %v1774, 0.0
      %v1842 = vsel %vm1837, %v1775, 0.0
      %v1843 = vsel %vm1838, %v1776, 0.0
      %v1844 = vsel %vm1838, %v1777, 0.0
      %v1845 = vadd.f32 %v1839, %v1841
      %v1846 = vadd.f32 %v1845, %v1843
      %v1847 = vrot.slane %v1846, 4
      %v1848 = vadd.f32 %v1846, %v1847
      %v1849 = vrot.slane %v1848, 2
      %v1850 = vadd.f32 %v1848, %v1849
      %v1851 = vrot.slane %v1850, 1
      %v1852 = vadd.f32 %v1850, %v1851
      %v1853 = vadd.f32 %v1840, %v1842
      %v1854 = vadd.f32 %v1853, %v1844
      %v1855 = vrot.slane %v1854, 4
      %v1856 = vadd.f32 %v1854, %v1855
      %v1857 = vrot.slane %v1856, 2
      %v1858 = vadd.f32 %v1856, %v1857
      %v1859 = vrot.slane %v1858, 1
      %v1860 = vadd.f32 %v1858, %v1859
      %v1863 = vcombine.low %v1852, %v1860
      %v1865 = vunpack.c.l.s4 1966171168
      %v1866 = vunpack.c.0.s8 %v1865
      %v1867 = vlaneseq
      %v1868 = vshrl.u32 %v1867, 7
      %v1869 = vsub.s32 %v1866, %v1868
      %v1870 = vrot.slane %v1863, %v1869
      %v1872 = vunpack.c.l.s4 1966171168
      %v1873 = vunpack.c.0.s8 %v1872
      %v1874 = vlaneseq
      %v1875 = vshrl.u32 %v1874, 7
      %v1876 = vsub.s32 %v1873, %v1875
      %v1877 = vrot.slane %v1870, %v1876
      %v1879 = vlaneseq
      %vm1880 = vcmp.ge.s32.totalorder %v1879, 0
      %vm1881 = vcmp.lt.s32.totalorder %v1879, 256
      %vm1882 = vmand %vm1880, %vm1881
      %1883 = vst.msk [vmem:[%s241] sm:$0x3] %vm1882, %v1877
      %v1884 = vmul.f32 %v1839, %v1839
      %v1885 = vmul.f32 %v1840, %v1840
      %v1886 = vmul.f32 %v1841, %v1841
      %v1887 = vmul.f32 %v1842, %v1842
      %v1888 = vmul.f32 %v1843, %v1843
      %v1889 = vmul.f32 %v1844, %v1844
      %v1890 = vadd.f32 %v1884, %v1886
      %v1891 = vadd.f32 %v1890, %v1888
      %v1892 = vrot.slane %v1891, 4
      %v1893 = vadd.f32 %v1891, %v1892
      %v1894 = vrot.slane %v1893, 2
      %v1895 = vadd.f32 %v1893, %v1894
      %v1896 = vrot.slane %v1895, 1
      %v1897 = vadd.f32 %v1895, %v1896
      %v1898 = vadd.f32 %v1885, %v1887
      %v1899 = vadd.f32 %v1898, %v1889
      %v1900 = vrot.slane %v1899, 4
      %v1901 = vadd.f32 %v1899, %v1900
      %v1902 = vrot.slane %v1901, 2
      %v1903 = vadd.f32 %v1901, %v1902
      %v1904 = vrot.slane %v1903, 1
      %v1905 = vadd.f32 %v1903, %v1904
      %v1908 = vcombine.low %v1897, %v1905
      %v1910 = vunpack.c.l.s4 1966171168
      %v1911 = vunpack.c.0.s8 %v1910
      %v1912 = vlaneseq
      %v1913 = vshrl.u32 %v1912, 7
      %v1914 = vsub.s32 %v1911, %v1913
      %v1915 = vrot.slane %v1908, %v1914
      %v1917 = vunpack.c.l.s4 1966171168
      %v1918 = vunpack.c.0.s8 %v1917
      %v1919 = vlaneseq
      %v1920 = vshrl.u32 %v1919, 7
      %v1921 = vsub.s32 %v1918, %v1920
      %v1922 = vrot.slane %v1915, %v1921
      %1924 = vst.msk [vmem:[%s245] sm:$0x3] %vm1882, %v1922
      %v1925 = vpack.c.bf16 %v1774, %v1772
      %v1926 = vpack.c.bf16 %v1775, %v1773
      %v1927 = vpack.c.bf16 %v1776, %v1776
      %v1928 = vpack.c.bf16 %v1777, %v1777
      %v1933 = vunpack.c.l.b16 %v1925
      %v1934 = vunpack.c.l.b16 %v1926
      %v1935 = vunpack.c.h.b16 %v1925
      %v1936 = vunpack.c.h.b16 %v1926
      %v1937 = vunpack.c.l.b16 %v1927
      %v1938 = vunpack.c.l.b16 %v1928
      %v1939 = vpack.c.b16 %v1934, %v1933
      %v1940 = vpack.c.b16 %v1936, %v1935
      %v1941 = vpack.c.b16 %v1938, %v1937
      %1945 = vst [vmem:[%s237] sm:$0xff] %v1939
      %1946 = vst [vmem:[%s237 + $0x8] sm:$0xff] %v1940
      %1947 = vst [vmem:[%s237 + $0x10] sm:$0xff] %v1941
      %p1948 = scmp.lt.s32.totalorder %s17, 7
      %s1949 = scalar_select %p1948, %s17, 7
      %s1950 = smul.addr %s1949, 6
      %s1951 = smul.addr %s1950, 4
      %s1952 = scalar_lea.vmem %s3, %s1951
      %p1953 = scmp.lt.s32.totalorder %s17, 7
      %s1954 = scalar_select %p1953, %s17, 7
      %s1955 = smul.addr %s1954, 2
      %s1956 = scalar_lea.vmem %s4, %s1955
      %p1957 = scmp.lt.s32.totalorder %s17, 7
      %s1958 = scalar_select %p1957, %s17, 7
      %s1959 = smul.addr %s1958, 2
      %s1960 = scalar_lea.vmem %s5, %s1959
      // Predicated region
      $region33: #{generator_forward.6} parent=31 // pred_check
        %p1961 = pneg %p103
      $region34: #{generator_forward.6} parent=31 // pred_check_branch
        %1963 = sbr.rel (%p1961) target = $region36
      $region35: #{generator_forward.6} parent=31 // pred_region
        _
      $region36: #{generator_forward.6} parent=31 // pred_fallthru
        _
      // Predicated region
      $region37: #{generator_forward.6} parent=31 // pred_check
        %p1964 = pneg %p129
      $region38: #{generator_forward.6} parent=31 // pred_check_branch
        %1966 = sbr.rel (%p1964) target = $region40
      $region39: #{generator_forward.6} parent=31 // pred_region
        _
      $region40: #{generator_forward.6} parent=31 // pred_fallthru
        _
      // Predicated region
      $region41: #{generator_forward.6} parent=31 // pred_check
        %p1967 = pneg %p155
      $region42: #{generator_forward.6} parent=31 // pred_check_branch
        %1969 = sbr.rel (%p1967) target = $region44
      $region43: #{generator_forward.6} parent=31 // pred_region
        _
      $region44: #{generator_forward.6} parent=31 // pred_fallthru
        _
    $region32: #{generator_forward.6} parent=5 // pred_fallthru
      _
    %p1970 = scmp.le.s32.totalorder 2, %s12
    // Predicated region
    $region45: #{generator_forward.6} parent=5 // pred_check
      %p1971 = pneg %p1970
    $region46: #{generator_forward.6} parent=5 // pred_check_branch
      %1973 = sbr.rel (%p1971) target = $region48
    $region47: #{generator_forward.6} parent=5 // pred_region
      %s1974 = ssub.s32 %s12, 2
      // Predicated region
      $region49: #{generator_forward.6} parent=47 // pred_check
        %p1975 = pneg %p109
      $region50: #{generator_forward.6} parent=47 // pred_check_branch
        %1977 = sbr.rel (%p1975) target = $region52
      $region51: #{generator_forward.6} parent=47 // pred_region
        %p1978 = scmp.lt.s32.totalorder %s18, 7
        %s1979 = scalar_select %p1978, %s18, 7
        %s1980 = smul.addr %s1979, 6
        %s1981 = smul.addr %s1980, 4
        %s1982 = scalar_lea.vmem %s3, %s1981
      $region52: #{generator_forward.6} parent=47 // pred_fallthru
        _
      // Predicated region
      $region53: #{generator_forward.6} parent=47 // pred_check
        %p1983 = pneg %p135
      $region54: #{generator_forward.6} parent=47 // pred_check_branch
        %1985 = sbr.rel (%p1983) target = $region56
      $region55: #{generator_forward.6} parent=47 // pred_region
        %p1986 = scmp.lt.s32.totalorder %s18, 7
        %s1987 = scalar_select %p1986, %s18, 7
        %s1988 = smul.addr %s1987, 2
        %s1989 = scalar_lea.vmem %s4, %s1988
      $region56: #{generator_forward.6} parent=47 // pred_fallthru
        _
      // Predicated region
      $region57: #{generator_forward.6} parent=47 // pred_check
        %p1990 = pneg %p161
      $region58: #{generator_forward.6} parent=47 // pred_check_branch
        %1992 = sbr.rel (%p1990) target = $region60
      $region59: #{generator_forward.6} parent=47 // pred_region
        %p1993 = scmp.lt.s32.totalorder %s18, 7
        %s1994 = scalar_select %p1993, %s18, 7
        %s1995 = smul.addr %s1994, 2
        %s1996 = scalar_lea.vmem %s5, %s1995
      $region60: #{generator_forward.6} parent=47 // pred_fallthru
        _
    $region48: #{generator_forward.6} parent=5 // pred_fallthru
      _
  $region6: #{generator_forward.6} parent=0 // loop_footer
    %s16 = sadd.s32 1, %s12
  $region7: #{generator_forward.6} parent=0 // loop_footer_branch
    %11 = sbr.rel target = $region3
  $region8: #{generator_forward.6} parent=0 // loop_exit
    _

// kernel: generator_forward.5
$region0: #{generator_forward.5}
  #allocation0 [shape = 'u32[]', space=smem, size = 0x4, offset = 0x4, fixed_abs, tag = 'smem constant byte address 0x4 - core index']
  #allocation1 [shape = 'u32[144,128]{1,0:T(1,128)}', space=vmem, size = 0x12000, scoped, tag = 'internal scratch']
  %s0 = inlined_call_operand.vmem [shape: bf16[16,1024], index: 0, kind: input, shape index: {}]
  %s1 = inlined_call_operand.hbm [shape: bf16[1024,2048], index: 1, kind: input, shape index: {}]
  %s2 = inlined_call_operand.hbm [shape: f32[1,2048], index: 2, kind: input, shape index: {}]
  %s3 = inlined_call_operand.hbm [shape: f32[1,2048], index: 3, kind: input, shape index: {}]
  %s4 = inlined_call_operand.vmem [shape: bf16[16,2048], index: 4, kind: output, shape index: {}]
  %s5 = sld [smem:[#allocation0]]
  $region80: #{generator_forward.5} parent=0
    _
  %s7 = ssub.s32 1, %s5
  %s8 = scalar_select 0, %s7, %s5
  $region1: #{generator_forward.5} parent=0
    #allocation2 [shape = 'u8[4194304]{0}', space=vmem, size = 0x400000, scoped, tag = 'input window, operand 1']
    #allocation3 [shape = 's32[2]{0}', space=sflag, size = 0x8, scoped, tag = 'scoped memory for generator_forward.5']
    #allocation4 [shape = 'u8[8192]{0}', space=vmem, size = 0x2000, scoped, tag = 'input window, operand 2']
    #allocation5 [shape = 's32[2]{0}', space=sflag, size = 0x8, scoped, tag = 'scoped memory for generator_forward.5']
    #allocation6 [shape = 'u8[8192]{0}', space=vmem, size = 0x2000, scoped, tag = 'input window, operand 3']
    #allocation7 [shape = 'u8[65536]{0}', space=vmem, size = 0x10000, scoped, tag = 'output window, operand 0']
    %9 = vsyncpa [#allocation3], 0
    %s10 = scalar_lea.sflag [#allocation3], 1
    %11 = vsyncpa %s10, 0
    %12 = vsyncpa [#allocation5], 0
    %s13 = scalar_lea.sflag [#allocation5], 1
    %14 = vsyncpa %s13, 0
    loop: start=0, step=1, limit=4
    $region2: #{generator_forward.5} parent=1 // loop_pre_header
      _
    $region3: #{generator_forward.5} parent=1 // loop_header
      %s16 = sphi 0, %s20
      %p17 = scmp.ge.s32.totalorder %s16, 4
      %s24 = sphi 0, %s24
      %s26 = sphi 0, %s24
      %s27 = sphi 0, %s26
      %s41 = sphi 0, %s27
      %s47 = sphi 0, %s49
      %s50 = sphi 0, %s47
      %s51 = sphi 0, %s50
      %s67 = sphi 0, %s51
      %s73 = sphi 0, %s75
      %s76 = sphi 0, %s73
      %s77 = sphi 0, %s76
      %s93 = sphi 0, %s77
      %s99 = sphi 0, %s101
      %s102 = sphi 0, %s99
      %s103 = sphi 0, %s102
      %s119 = sphi 0, %s103
      %s125 = sphi 0, %s127
      %s128 = sphi 0, %s125
      %s129 = sphi 0, %s128
      %s145 = sphi 0, %s129
    $region4: #{generator_forward.5} parent=1 // loop_header_branch
      %19 = sbr.rel (%p17) target = $region8
    $region5: #{generator_forward.5} parent=1 // loop_body
      %s21 = ssub.s32 %s16, 1
      %s22 = ssub.s32 %s16, 2
      %s23 = sadd.s32 %s16, 1
      %s25 = sadd.s32 %s24, 1
      %p28 = scmp.eq.s32.totalorder %s16, 1
      %p29 = scmp.ne.s32.totalorder %s24, %s26
      %p30 = scmp.eq.s32.totalorder %s16, 0
      %p31 = por %p29, %p30
      %p32 = scmp.ne.s32.totalorder %s24, %s26
      %p33 = scmp.eq.s32.totalorder %s21, 1
      %p34 = por %p32, %p33
      %p35 = scmp.ne.s32.totalorder %s26, %s27
      %p36 = scmp.eq.s32.totalorder %s21, 0
      %p37 = por %p35, %p36
      %p38 = scmp.ne.s32.totalorder %s26, %s27
      %p39 = scmp.eq.s32.totalorder %s22, 1
      %p40 = por %p38, %p39
      %p42 = scmp.ne.s32.totalorder %s27, %s41
      %p43 = scmp.eq.s32.totalorder %s22, 0
      %p44 = por %p42, %p43
      %s45 = ssub.s32 %s16, %s23
      %p46 = scmp.eq.s32.totalorder %s45, 0
      %s48 = sadd.s32 %s47, 1
      %s49 = scalar_select %p46, %s47, %s48
      %p52 = pneg %p46
      %p53 = scmp.eq.s32.totalorder %s16, 1
      %p54 = por %p52, %p53
      %p55 = scmp.ne.s32.totalorder %s47, %s50
      %p56 = scmp.eq.s32.totalorder %s16, 0
      %p57 = por %p55, %p56
      %p58 = scmp.ne.s32.totalorder %s47, %s50
      %p59 = scmp.eq.s32.totalorder %s21, 1
      %p60 = por %p58, %p59
      %p61 = scmp.ne.s32.totalorder %s50, %s51
      %p62 = scmp.eq.s32.totalorder %s21, 0
      %p63 = por %p61, %p62
      %p64 = scmp.ne.s32.totalorder %s50, %s51
      %p65 = scmp.eq.s32.totalorder %s22, 1
      %p66 = por %p64, %p65
      %p68 = scmp.ne.s32.totalorder %s51, %s67
      %p69 = scmp.eq.s32.totalorder %s22, 0
      %p70 = por %p68, %p69
      %s71 = ssub.s32 %s16, %s23
      %p72 = scmp.eq.s32.totalorder %s71, 0
      %s74 = sadd.s32 %s73, 1
      %s75 = scalar_select %p72, %s73, %s74
      %p78 = pneg %p72
      %p79 = scmp.eq.s32.totalorder %s16, 1
      %p80 = por %p78, %p79
      %p81 = scmp.ne.s32.totalorder %s73, %s76
      %p82 = scmp.eq.s32.totalorder %s16, 0
      %p83 = por %p81, %p82
      %p84 = scmp.ne.s32.totalorder %s73, %s76
      %p85 = scmp.eq.s32.totalorder %s21, 1
      %p86 = por %p84, %p85
      %p87 = scmp.ne.s32.totalorder %s76, %s77
      %p88 = scmp.eq.s32.totalorder %s21, 0
      %p89 = por %p87, %p88
      %p90 = scmp.ne.s32.totalorder %s76, %s77
      %p91 = scmp.eq.s32.totalorder %s22, 1
      %p92 = por %p90, %p91
      %p94 = scmp.ne.s32.totalorder %s77, %s93
      %p95 = scmp.eq.s32.totalorder %s22, 0
      %p96 = por %p94, %p95
      %s97 = ssub.s32 %s16, %s23
      %p98 = scmp.eq.s32.totalorder %s97, 0
      %s100 = sadd.s32 %s99, 1
      %s101 = scalar_select %p98, %s99, %s100
      %p104 = pneg %p98
      %p105 = scmp.eq.s32.totalorder %s16, 1
      %p106 = por %p104, %p105
      %p107 = scmp.ne.s32.totalorder %s99, %s102
      %p108 = scmp.eq.s32.totalorder %s16, 0
      %p109 = por %p107, %p108
      %p110 = scmp.ne.s32.totalorder %s99, %s102
      %p111 = scmp.eq.s32.totalorder %s21, 1
      %p112 = por %p110, %p111
      %p113 = scmp.ne.s32.totalorder %s102, %s103
      %p114 = scmp.eq.s32.totalorder %s21, 0
      %p115 = por %p113, %p114
      %p116 = scmp.ne.s32.totalorder %s102, %s103
      %p117 = scmp.eq.s32.totalorder %s22, 1
      %p118 = por %p116, %p117
      %p120 = scmp.ne.s32.totalorder %s103, %s119
      %p121 = scmp.eq.s32.totalorder %s22, 0
      %p122 = por %p120, %p121
      %s123 = ssub.s32 %s16, %s23
      %p124 = scmp.eq.s32.totalorder %s123, 0
      %s126 = sadd.s32 %s125, 1
      %s127 = scalar_select %p124, %s125, %s126
      %p130 = pneg %p124
      %p131 = scmp.eq.s32.totalorder %s16, 1
      %p132 = por %p130, %p131
      %p133 = scmp.ne.s32.totalorder %s125, %s128
      %p134 = scmp.eq.s32.totalorder %s16, 0
      %p135 = por %p133, %p134
      %p136 = scmp.ne.s32.totalorder %s125, %s128
      %p137 = scmp.eq.s32.totalorder %s21, 1
      %p138 = por %p136, %p137
      %p139 = scmp.ne.s32.totalorder %s128, %s129
      %p140 = scmp.eq.s32.totalorder %s21, 0
      %p141 = por %p139, %p140
      %p142 = scmp.ne.s32.totalorder %s128, %s129
      %p143 = scmp.eq.s32.totalorder %s22, 1
      %p144 = por %p142, %p143
      %p146 = scmp.ne.s32.totalorder %s129, %s145
      %p147 = scmp.eq.s32.totalorder %s22, 0
      %p148 = por %p146, %p147
      %p149 = scmp.le.s32.totalorder 1, %s16
      %p150 = scmp.lt.s32.totalorder %s16, 3
      %p151 = pnand %p149, %p150
      %p152 = pneg %p151
      // Predicated region
      $region9: #{generator_forward.5} parent=5 // pred_check
        _
      $region10: #{generator_forward.5} parent=5 // pred_check_branch
        %154 = sbr.rel (%p151) target = $region12
      $region11: #{generator_forward.5} parent=5 // pred_region
        %s155 = ssub.s32 %s16, 1
        // Predicated region
        $region13: #{generator_forward.5} parent=11 // pred_check
          %p156 = pneg %p37
        $region14: #{generator_forward.5} parent=11 // pred_check_branch
          %158 = sbr.rel (%p156) target = $region16
        $region15: #{generator_forward.5} parent=11 // pred_region
          _
        $region16: #{generator_forward.5} parent=11 // pred_fallthru
          _
      $region12: #{generator_forward.5} parent=5 // pred_fallthru
        _
      %p159 = scmp.lt.s32.totalorder %s16, 2
      // Predicated region
      $region17: #{generator_forward.5} parent=5 // pred_check
        %p160 = pneg %p159
      $region18: #{generator_forward.5} parent=5 // pred_check_branch
        %162 = sbr.rel (%p160) target = $region20
      $region19: #{generator_forward.5} parent=5 // pred_region
        // Predicated region
        $region21: #{generator_forward.5} parent=19 // pred_check
          %p163 = pneg %p57
        $region22: #{generator_forward.5} parent=19 // pred_check_branch
          %165 = sbr.rel (%p163) target = $region24
        $region23: #{generator_forward.5} parent=19 // pred_region
          %s166 = sand.u32 %s47, 1
          %s167 = scalar_lea.sflag [#allocation3], %s166
          %s168 = sand.u32 %s47, 1
          %s169 = smul.addr %s168, 4096
          %s170 = scalar_lea.vmem [#allocation2], %s169
          %s171 = smul.u32 8, %s16
          %s173 = ssub.s32 65536, 65536
          %174 = vsyncadd %s167, %s173
          %s175 = smul.addr %s171, 64
          %s176 = scalar_lea.hbm %s1, %s175
          %s177 = sshll.u32 %s170, 4
          %s178 = int_to_ptr.vmem [resolvable:$true] %s177
          %183 = dma.hbm_to_vmem [thread:$0]  %s176, 65536, %s178, %s167, 1024, 512, 32
        $region24: #{generator_forward.5} parent=19 // pred_fallthru
          _
        // Predicated region
        $region25: #{generator_forward.5} parent=19 // pred_check
          %p184 = pneg %p83
        $region26: #{generator_forward.5} parent=19 // pred_check_branch
          %186 = sbr.rel (%p184) target = $region28
        $region27: #{generator_forward.5} parent=19 // pred_region
          %s187 = sand.u32 %s16, 1
          %s188 = scalar_lea.sflag [#allocation5], %s187
          %s189 = sand.u32 %s73, 1
          %s190 = smul.addr %s189, 8
          %s191 = scalar_lea.vmem [#allocation4], %s190
          %s192 = smul.u32 8, %s16
          %s194 = ssub.s32 128, 128
          %195 = vsyncadd %s188, %s194
          %s196 = smul.addr %s192, 16
          %s197 = scalar_lea.hbm %s2, %s196
          %s199 = sshll.u32 %s191, 4
          %s200 = int_to_ptr.vmem [resolvable:$true] %s199
          %202 = dma.hbm_to_vmem [thread:$0]  %s197, 128, %s200, %s188
        $region28: #{generator_forward.5} parent=19 // pred_fallthru
          _
        // Predicated region
        $region29: #{generator_forward.5} parent=19 // pred_check
          %p203 = pneg %p109
        $region30: #{generator_forward.5} parent=19 // pred_check_branch
          %205 = sbr.rel (%p203) target = $region32
        $region31: #{generator_forward.5} parent=19 // pred_region
          %s206 = sand.u32 %s16, 1
          %s207 = scalar_lea.sflag [#allocation5], %s206
          %s208 = sand.u32 %s99, 1
          %s209 = smul.addr %s208, 8
          %s210 = scalar_lea.vmem [#allocation6], %s209
          %s211 = smul.u32 8, %s16
          %s213 = ssub.s32 128, 128
          %214 = vsyncadd %s207, %s213
          %s215 = smul.addr %s211, 16
          %s216 = scalar_lea.hbm %s3, %s215
          %s218 = sshll.u32 %s210, 4
          %s219 = int_to_ptr.vmem [resolvable:$true] %s218
          %221 = dma.hbm_to_vmem [thread:$0]  %s216, 128, %s219, %s207
        $region32: #{generator_forward.5} parent=19 // pred_fallthru
          _
      $region20: #{generator_forward.5} parent=5 // pred_fallthru
        _
      %p222 = scmp.le.s32.totalorder 1, %s16
      %p223 = scmp.lt.s32.totalorder %s16, 3
      %p224 = pnand %p222, %p223
      %p225 = pneg %p224
      // Predicated region
      $region33: #{generator_forward.5} parent=5 // pred_check
        _
      $region34: #{generator_forward.5} parent=5 // pred_check_branch
        %227 = sbr.rel (%p224) target = $region36
      $region35: #{generator_forward.5} parent=5 // pred_region
        %s228 = ssub.s32 %s16, 1
        %s229 = sand.u32 %s50, 1
        %s230 = scalar_lea.sflag [#allocation3], %s229
        %s231 = sand.u32 %s50, 1
        %s232 = smul.addr %s231, 4096
        %s233 = scalar_lea.vmem [#allocation2], %s232
        // Predicated region
        $region37: #{generator_forward.5} parent=35 // pred_check
          %p234 = pneg %p63
        $region38: #{generator_forward.5} parent=35 // pred_check_branch
          %236 = sbr.rel (%p234) target = $region40
        $region39: #{generator_forward.5} parent=35 // pred_region
          %237 = dma.done %s230, 65536
        $region40: #{generator_forward.5} parent=35 // pred_fallthru
          _
        %s238 = sand.u32 %s21, 1
        %s239 = scalar_lea.sflag [#allocation5], %s238
        %s240 = sand.u32 %s76, 1
        %s241 = smul.addr %s240, 8
        %s242 = scalar_lea.vmem [#allocation4], %s241
        // Predicated region
        $region41: #{generator_forward.5} parent=35 // pred_check
          %p243 = pneg %p89
        $region42: #{generator_forward.5} parent=35 // pred_check_branch
          %245 = sbr.rel (%p243) target = $region44
        $region43: #{generator_forward.5} parent=35 // pred_region
          %246 = dma.done %s239, 128
        $region44: #{generator_forward.5} parent=35 // pred_fallthru
          _
        %s247 = sand.u32 %s21, 1
        %s248 = scalar_lea.sflag [#allocation5], %s247
        %s249 = sand.u32 %s102, 1
        %s250 = smul.addr %s249, 8
        %s251 = scalar_lea.vmem [#allocation6], %s250
        // Predicated region
        $region45: #{generator_forward.5} parent=35 // pred_check
          %p252 = pneg %p115
        $region46: #{generator_forward.5} parent=35 // pred_check_branch
          %254 = sbr.rel (%p252) target = $region48
        $region47: #{generator_forward.5} parent=35 // pred_region
          %255 = dma.done %s248, 128
        $region48: #{generator_forward.5} parent=35 // pred_fallthru
          _
        %p256 = pneg %p37
        %p257 = pneg %p34
        %s258 = sand.u32 %s50, 1
        %s259 = scalar_lea.sflag [#allocation3], %s258
        %s260 = sand.u32 %s50, 1
        %s261 = smul.addr %s260, 4096
        %s262 = scalar_lea.vmem [#allocation2], %s261
        %p263 = pneg %p63
        %p264 = pneg %p60
        %s265 = sand.u32 %s21, 1
        %s266 = scalar_lea.sflag [#allocation5], %s265
        %s267 = sand.u32 %s76, 1
        %s268 = smul.addr %s267, 8
        %s269 = scalar_lea.vmem [#allocation4], %s268
        %p270 = pneg %p89
        %p271 = pneg %p86
        %s272 = sand.u32 %s21, 1
        %s273 = scalar_lea.sflag [#allocation5], %s272
        %s274 = sand.u32 %s102, 1
        %s275 = smul.addr %s274, 8
        %s276 = scalar_lea.vmem [#allocation6], %s275
        %p277 = pneg %p115
        %p278 = pneg %p112
        %p279 = pneg %p141
        %p280 = pneg %p138
        %s281 = sand.u32 %s128, 1
        %s282 = sand.u32 %s128, 1
        %s283 = smul.addr %s282, 64
        %s284 = scalar_lea.vmem [#allocation7], %s283
        %s285 = smul.u32 8, %s21
        %s286 = smul.u32 8, %s21
        %s287 = smul.u32 8, %s21
        %s288 = smul.u32 8, %s21
        %v289 = vld [vmem:[%s0] sm:$0xff]
        %v290 = vld [vmem:[%s0 + $0x8] sm:$0xff]
        %v291 = vld [vmem:[%s0 + $0x10] sm:$0xff]
        %v292 = vld [vmem:[%s0 + $0x18] sm:$0xff]
        %v293 = vld [vmem:[%s0 + $0x20] sm:$0xff]
        %v294 = vld [vmem:[%s0 + $0x28] sm:$0xff]
        %v295 = vld [vmem:[%s0 + $0x30] sm:$0xff]
        %v296 = vld [vmem:[%s0 + $0x38] sm:$0xff]
        %v297 = vld [vmem:[%s233] sm:$0xff]
        %v298 = vld [vmem:[%s233 + $0x8] sm:$0xff]
        %v299 = vld [vmem:[%s233 + $0x10] sm:$0xff]
        %v300 = vld [vmem:[%s233 + $0x18] sm:$0xff]
        %v301 = vld [vmem:[%s233 + $0x20] sm:$0xff]
        %v302 = vld [vmem:[%s233 + $0x28] sm:$0xff]
        %v303 = vld [vmem:[%s233 + $0x30] sm:$0xff]
        %v304 = vld [vmem:[%s233 + $0x38] sm:$0xff]
        %v305 = vld [vmem:[%s233 + $0x40] sm:$0xff]
        %v306 = vld [vmem:[%s233 + $0x48] sm:$0xff]
        %v307 = vld [vmem:[%s233 + $0x50] sm:$0xff]
        %v308 = vld [vmem:[%s233 + $0x58] sm:$0xff]
        %v309 = vld [vmem:[%s233 + $0x60] sm:$0xff]
        %v310 = vld [vmem:[%s233 + $0x68] sm:$0xff]
        %v311 = vld [vmem:[%s233 + $0x70] sm:$0xff]
        %v312 = vld [vmem:[%s233 + $0x78] sm:$0xff]
        %v313 = vld [vmem:[%s233 + $0x80] sm:$0xff]
        %v314 = vld [vmem:[%s233 + $0x88] sm:$0xff]
        %v315 = vld [vmem:[%s233 + $0x90] sm:$0xff]
        %v316 = vld [vmem:[%s233 + $0x98] sm:$0xff]
        %v317 = vld [vmem:[%s233 + $0xa0] sm:$0xff]
        %v318 = vld [vmem:[%s233 + $0xa8] sm:$0xff]
        %v319 = vld [vmem:[%s233 + $0xb0] sm:$0xff]
        %v320 = vld [vmem:[%s233 + $0xb8] sm:$0xff]
        %v321 = vld [vmem:[%s233 + $0xc0] sm:$0xff]
        %v322 = vld [vmem:[%s233 + $0xc8] sm:$0xff]
        %v323 = vld [vmem:[%s233 + $0xd0] sm:$0xff]
        %v324 = vld [vmem:[%s233 + $0xd8] sm:$0xff]
        %v325 = vld [vmem:[%s233 + $0xe0] sm:$0xff]
        %v326 = vld [vmem:[%s233 + $0xe8] sm:$0xff]
        %v327 = vld [vmem:[%s233 + $0xf0] sm:$0xff]
        %v328 = vld [vmem:[%s233 + $0xf8] sm:$0xff]
        %v329 = vld [vmem:[%s233 + $0x100] sm:$0xff]
        %v330 = vld [vmem:[%s233 + $0x108] sm:$0xff]
        %v331 = vld [vmem:[%s233 + $0x110] sm:$0xff]
        %v332 = vld [vmem:[%s233 + $0x118] sm:$0xff]
        %v333 = vld [vmem:[%s233 + $0x120] sm:$0xff]
        %v334 = vld [vmem:[%s233 + $0x128] sm:$0xff]
        %v335 = vld [vmem:[%s233 + $0x130] sm:$0xff]
        %v336 = vld [vmem:[%s233 + $0x138] sm:$0xff]
        %v337 = vld [vmem:[%s233 + $0x140] sm:$0xff]
        %v338 = vld [vmem:[%s233 + $0x148] sm:$0xff]
        %v339 = vld [vmem:[%s233 + $0x150] sm:$0xff]
        %v340 = vld [vmem:[%s233 + $0x158] sm:$0xff]
        %v341 = vld [vmem:[%s233 + $0x160] sm:$0xff]
        %v342 = vld [vmem:[%s233 + $0x168] sm:$0xff]
        %v343 = vld [vmem:[%s233 + $0x170] sm:$0xff]
        %v344 = vld [vmem:[%s233 + $0x178] sm:$0xff]
        %v345 = vld [vmem:[%s233 + $0x180] sm:$0xff]
        %v346 = vld [vmem:[%s233 + $0x188] sm:$0xff]
        %v347 = vld [vmem:[%s233 + $0x190] sm:$0xff]
        %v348 = vld [vmem:[%s233 + $0x198] sm:$0xff]
        %v349 = vld [vmem:[%s233 + $0x1a0] sm:$0xff]
        %v350 = vld [vmem:[%s233 + $0x1a8] sm:$0xff]
        %v351 = vld [vmem:[%s233 + $0x1b0] sm:$0xff]
        %v352 = vld [vmem:[%s233 + $0x1b8] sm:$0xff]
        %v353 = vld [vmem:[%s233 + $0x1c0] sm:$0xff]
        %v354 = vld [vmem:[%s233 + $0x1c8] sm:$0xff]
        %v355 = vld [vmem:[%s233 + $0x1d0] sm:$0xff]
        %v356 = vld [vmem:[%s233 + $0x1d8] sm:$0xff]
        %v357 = vld [vmem:[%s233 + $0x1e0] sm:$0xff]
        %v358 = vld [vmem:[%s233 + $0x1e8] sm:$0xff]
        %v359 = vld [vmem:[%s233 + $0x1f0] sm:$0xff]
        %v360 = vld [vmem:[%s233 + $0x1f8] sm:$0xff]
        %v361 = vld [vmem:[%s233 + $0x200] sm:$0xff]
        %v362 = vld [vmem:[%s233 + $0x208] sm:$0xff]
        %v363 = vld [vmem:[%s233 + $0x210] sm:$0xff]
        %v364 = vld [vmem:[%s233 + $0x218] sm:$0xff]
        %v365 = vld [vmem:[%s233 + $0x220] sm:$0xff]
        %v366 = vld [vmem:[%s233 + $0x228] sm:$0xff]
        %v367 = vld [vmem:[%s233 + $0x230] sm:$0xff]
        %v368 = vld [vmem:[%s233 + $0x238] sm:$0xff]
        %v369 = vld [vmem:[%s233 + $0x240] sm:$0xff]
        %v370 = vld [vmem:[%s233 + $0x248] sm:$0xff]
        %v371 = vld [vmem:[%s233 + $0x250] sm:$0xff]
        %v372 = vld [vmem:[%s233 + $0x258] sm:$0xff]
        %v373 = vld [vmem:[%s233 + $0x260] sm:$0xff]
        %v374 = vld [vmem:[%s233 + $0x268] sm:$0xff]
        %v375 = vld [vmem:[%s233 + $0x270] sm:$0xff]
        %v376 = vld [vmem:[%s233 + $0x278] sm:$0xff]
        %v377 = vld [vmem:[%s233 + $0x280] sm:$0xff]
        %v378 = vld [vmem:[%s233 + $0x288] sm:$0xff]
        %v379 = vld [vmem:[%s233 + $0x290] sm:$0xff]
        %v380 = vld [vmem:[%s233 + $0x298] sm:$0xff]
        %v381 = vld [vmem:[%s233 + $0x2a0] sm:$0xff]
        %v382 = vld [vmem:[%s233 + $0x2a8] sm:$0xff]
        %v383 = vld [vmem:[%s233 + $0x2b0] sm:$0xff]
        %v384 = vld [vmem:[%s233 + $0x2b8] sm:$0xff]
        %v385 = vld [vmem:[%s233 + $0x2c0] sm:$0xff]
        %v386 = vld [vmem:[%s233 + $0x2c8] sm:$0xff]
        %v387 = vld [vmem:[%s233 + $0x2d0] sm:$0xff]
        %v388 = vld [vmem:[%s233 + $0x2d8] sm:$0xff]
        %v389 = vld [vmem:[%s233 + $0x2e0] sm:$0xff]
        %v390 = vld [vmem:[%s233 + $0x2e8] sm:$0xff]
        %v391 = vld [vmem:[%s233 + $0x2f0] sm:$0xff]
        %v392 = vld [vmem:[%s233 + $0x2f8] sm:$0xff]
        %v393 = vld [vmem:[%s233 + $0x300] sm:$0xff]
        %v394 = vld [vmem:[%s233 + $0x308] sm:$0xff]
        %v395 = vld [vmem:[%s233 + $0x310] sm:$0xff]
        %v396 = vld [vmem:[%s233 + $0x318] sm:$0xff]
        %v397 = vld [vmem:[%s233 + $0x320] sm:$0xff]
        %v398 = vld [vmem:[%s233 + $0x328] sm:$0xff]
        %v399 = vld [vmem:[%s233 + $0x330] sm:$0xff]
        %v400 = vld [vmem:[%s233 + $0x338] sm:$0xff]
        %v401 = vld [vmem:[%s233 + $0x340] sm:$0xff]
        %v402 = vld [vmem:[%s233 + $0x348] sm:$0xff]
        %v403 = vld [vmem:[%s233 + $0x350] sm:$0xff]
        %v404 = vld [vmem:[%s233 + $0x358] sm:$0xff]
        %v405 = vld [vmem:[%s233 + $0x360] sm:$0xff]
        %v406 = vld [vmem:[%s233 + $0x368] sm:$0xff]
        %v407 = vld [vmem:[%s233 + $0x370] sm:$0xff]
        %v408 = vld [vmem:[%s233 + $0x378] sm:$0xff]
        %v409 = vld [vmem:[%s233 + $0x380] sm:$0xff]
        %v410 = vld [vmem:[%s233 + $0x388] sm:$0xff]
        %v411 = vld [vmem:[%s233 + $0x390] sm:$0xff]
        %v412 = vld [vmem:[%s233 + $0x398] sm:$0xff]
        %v413 = vld [vmem:[%s233 + $0x3a0] sm:$0xff]
        %v414 = vld [vmem:[%s233 + $0x3a8] sm:$0xff]
        %v415 = vld [vmem:[%s233 + $0x3b0] sm:$0xff]
        %v416 = vld [vmem:[%s233 + $0x3b8] sm:$0xff]
        %v417 = vld [vmem:[%s233 + $0x3c0] sm:$0xff]
        %v418 = vld [vmem:[%s233 + $0x3c8] sm:$0xff]
        %v419 = vld [vmem:[%s233 + $0x3d0] sm:$0xff]
        %v420 = vld [vmem:[%s233 + $0x3d8] sm:$0xff]
        %v421 = vld [vmem:[%s233 + $0x3e0] sm:$0xff]
        %v422 = vld [vmem:[%s233 + $0x3e8] sm:$0xff]
        %v423 = vld [vmem:[%s233 + $0x3f0] sm:$0xff]
        %v424 = vld [vmem:[%s233 + $0x3f8] sm:$0xff]
        %v425 = vld [vmem:[%s233 + $0x400] sm:$0xff]
        %v426 = vld [vmem:[%s233 + $0x408] sm:$0xff]
        %v427 = vld [vmem:[%s233 + $0x410] sm:$0xff]
        %v428 = vld [vmem:[%s233 + $0x418] sm:$0xff]
        %v429 = vld [vmem:[%s233 + $0x420] sm:$0xff]
        %v430 = vld [vmem:[%s233 + $0x428] sm:$0xff]
        %v431 = vld [vmem:[%s233 + $0x430] sm:$0xff]
        %v432 = vld [vmem:[%s233 + $0x438] sm:$0xff]
        %v433 = vld [vmem:[%s233 + $0x440] sm:$0xff]
        %v434 = vld [vmem:[%s233 + $0x448] sm:$0xff]
        %v435 = vld [vmem:[%s233 + $0x450] sm:$0xff]
        %v436 = vld [vmem:[%s233 + $0x458] sm:$0xff]
        %v437 = vld [vmem:[%s233 + $0x460] sm:$0xff]
        %v438 = vld [vmem:[%s233 + $0x468] sm:$0xff]
        %v439 = vld [vmem:[%s233 + $0x470] sm:$0xff]
        %v440 = vld [vmem:[%s233 + $0x478] sm:$0xff]
        %v441 = vld [vmem:[%s233 + $0x480] sm:$0xff]
        %v442 = vld [vmem:[%s233 + $0x488] sm:$0xff]
        %v443 = vld [vmem:[%s233 + $0x490] sm:$0xff]
        %v444 = vld [vmem:[%s233 + $0x498] sm:$0xff]
        %v445 = vld [vmem:[%s233 + $0x4a0] sm:$0xff]
        %v446 = vld [vmem:[%s233 + $0x4a8] sm:$0xff]
        %v447 = vld [vmem:[%s233 + $0x4b0] sm:$0xff]
        %v448 = vld [vmem:[%s233 + $0x4b8] sm:$0xff]
        %v449 = vld [vmem:[%s233 + $0x4c0] sm:$0xff]
        %v450 = vld [vmem:[%s233 + $0x4c8] sm:$0xff]
        %v451 = vld [vmem:[%s233 + $0x4d0] sm:$0xff]
        %v452 = vld [vmem:[%s233 + $0x4d8] sm:$0xff]
        %v453 = vld [vmem:[%s233 + $0x4e0] sm:$0xff]
        %v454 = vld [vmem:[%s233 + $0x4e8] sm:$0xff]
        %v455 = vld [vmem:[%s233 + $0x4f0] sm:$0xff]
        %v456 = vld [vmem:[%s233 + $0x4f8] sm:$0xff]
        %v457 = vld [vmem:[%s233 + $0x500] sm:$0xff]
        %v458 = vld [vmem:[%s233 + $0x508] sm:$0xff]
        %v459 = vld [vmem:[%s233 + $0x510] sm:$0xff]
        %v460 = vld [vmem:[%s233 + $0x518] sm:$0xff]
        %v461 = vld [vmem:[%s233 + $0x520] sm:$0xff]
        %v462 = vld [vmem:[%s233 + $0x528] sm:$0xff]
        %v463 = vld [vmem:[%s233 + $0x530] sm:$0xff]
        %v464 = vld [vmem:[%s233 + $0x538] sm:$0xff]
        %v465 = vld [vmem:[%s233 + $0x540] sm:$0xff]
        %v466 = vld [vmem:[%s233 + $0x548] sm:$0xff]
        %v467 = vld [vmem:[%s233 + $0x550] sm:$0xff]
        %v468 = vld [vmem:[%s233 + $0x558] sm:$0xff]
        %v469 = vld [vmem:[%s233 + $0x560] sm:$0xff]
        %v470 = vld [vmem:[%s233 + $0x568] sm:$0xff]
        %v471 = vld [vmem:[%s233 + $0x570] sm:$0xff]
        %v472 = vld [vmem:[%s233 + $0x578] sm:$0xff]
        %v473 = vld [vmem:[%s233 + $0x580] sm:$0xff]
        %v474 = vld [vmem:[%s233 + $0x588] sm:$0xff]
        %v475 = vld [vmem:[%s233 + $0x590] sm:$0xff]
        %v476 = vld [vmem:[%s233 + $0x598] sm:$0xff]
        %v477 = vld [vmem:[%s233 + $0x5a0] sm:$0xff]
        %v478 = vld [vmem:[%s233 + $0x5a8] sm:$0xff]
        %v479 = vld [vmem:[%s233 + $0x5b0] sm:$0xff]
        %v480 = vld [vmem:[%s233 + $0x5b8] sm:$0xff]
        %v481 = vld [vmem:[%s233 + $0x5c0] sm:$0xff]
        %v482 = vld [vmem:[%s233 + $0x5c8] sm:$0xff]
        %v483 = vld [vmem:[%s233 + $0x5d0] sm:$0xff]
        %v484 = vld [vmem:[%s233 + $0x5d8] sm:$0xff]
        %v485 = vld [vmem:[%s233 + $0x5e0] sm:$0xff]
        %v486 = vld [vmem:[%s233 + $0x5e8] sm:$0xff]
        %v487 = vld [vmem:[%s233 + $0x5f0] sm:$0xff]
        %v488 = vld [vmem:[%s233 + $0x5f8] sm:$0xff]
        %v489 = vld [vmem:[%s233 + $0x600] sm:$0xff]
        %v490 = vld [vmem:[%s233 + $0x608] sm:$0xff]
        %v491 = vld [vmem:[%s233 + $0x610] sm:$0xff]
        %v492 = vld [vmem:[%s233 + $0x618] sm:$0xff]
        %v493 = vld [vmem:[%s233 + $0x620] sm:$0xff]
        %v494 = vld [vmem:[%s233 + $0x628] sm:$0xff]
        %v495 = vld [vmem:[%s233 + $0x630] sm:$0xff]
        %v496 = vld [vmem:[%s233 + $0x638] sm:$0xff]
        %v497 = vld [vmem:[%s233 + $0x640] sm:$0xff]
        %v498 = vld [vmem:[%s233 + $0x648] sm:$0xff]
        %v499 = vld [vmem:[%s233 + $0x650] sm:$0xff]
        %v500 = vld [vmem:[%s233 + $0x658] sm:$0xff]
        %v501 = vld [vmem:[%s233 + $0x660] sm:$0xff]
        %v502 = vld [vmem:[%s233 + $0x668] sm:$0xff]
        %v503 = vld [vmem:[%s233 + $0x670] sm:$0xff]
        %v504 = vld [vmem:[%s233 + $0x678] sm:$0xff]
        %v505 = vld [vmem:[%s233 + $0x680] sm:$0xff]
        %v506 = vld [vmem:[%s233 + $0x688] sm:$0xff]
        %v507 = vld [vmem:[%s233 + $0x690] sm:$0xff]
        %v508 = vld [vmem:[%s233 + $0x698] sm:$0xff]
        %v509 = vld [vmem:[%s233 + $0x6a0] sm:$0xff]
        %v510 = vld [vmem:[%s233 + $0x6a8] sm:$0xff]
        %v511 = vld [vmem:[%s233 + $0x6b0] sm:$0xff]
        %v512 = vld [vmem:[%s233 + $0x6b8] sm:$0xff]
        %v513 = vld [vmem:[%s233 + $0x6c0] sm:$0xff]
        %v514 = vld [vmem:[%s233 + $0x6c8] sm:$0xff]
        %v515 = vld [vmem:[%s233 + $0x6d0] sm:$0xff]
        %v516 = vld [vmem:[%s233 + $0x6d8] sm:$0xff]
        %v517 = vld [vmem:[%s233 + $0x6e0] sm:$0xff]
        %v518 = vld [vmem:[%s233 + $0x6e8] sm:$0xff]
        %v519 = vld [vmem:[%s233 + $0x6f0] sm:$0xff]
        %v520 = vld [vmem:[%s233 + $0x6f8] sm:$0xff]
        %v521 = vld [vmem:[%s233 + $0x700] sm:$0xff]
        %v522 = vld [vmem:[%s233 + $0x708] sm:$0xff]
        %v523 = vld [vmem:[%s233 + $0x710] sm:$0xff]
        %v524 = vld [vmem:[%s233 + $0x718] sm:$0xff]
        %v525 = vld [vmem:[%s233 + $0x720] sm:$0xff]
        %v526 = vld [vmem:[%s233 + $0x728] sm:$0xff]
        %v527 = vld [vmem:[%s233 + $0x730] sm:$0xff]
        %v528 = vld [vmem:[%s233 + $0x738] sm:$0xff]
        %v529 = vld [vmem:[%s233 + $0x740] sm:$0xff]
        %v530 = vld [vmem:[%s233 + $0x748] sm:$0xff]
        %v531 = vld [vmem:[%s233 + $0x750] sm:$0xff]
        %v532 = vld [vmem:[%s233 + $0x758] sm:$0xff]
        %v533 = vld [vmem:[%s233 + $0x760] sm:$0xff]
        %v534 = vld [vmem:[%s233 + $0x768] sm:$0xff]
        %v535 = vld [vmem:[%s233 + $0x770] sm:$0xff]
        %v536 = vld [vmem:[%s233 + $0x778] sm:$0xff]
        %v537 = vld [vmem:[%s233 + $0x780] sm:$0xff]
        %v538 = vld [vmem:[%s233 + $0x788] sm:$0xff]
        %v539 = vld [vmem:[%s233 + $0x790] sm:$0xff]
        %v540 = vld [vmem:[%s233 + $0x798] sm:$0xff]
        %v541 = vld [vmem:[%s233 + $0x7a0] sm:$0xff]
        %v542 = vld [vmem:[%s233 + $0x7a8] sm:$0xff]
        %v543 = vld [vmem:[%s233 + $0x7b0] sm:$0xff]
        %v544 = vld [vmem:[%s233 + $0x7b8] sm:$0xff]
        %v545 = vld [vmem:[%s233 + $0x7c0] sm:$0xff]
        %v546 = vld [vmem:[%s233 + $0x7c8] sm:$0xff]
        %v547 = vld [vmem:[%s233 + $0x7d0] sm:$0xff]
        %v548 = vld [vmem:[%s233 + $0x7d8] sm:$0xff]
        %v549 = vld [vmem:[%s233 + $0x7e0] sm:$0xff]
        %v550 = vld [vmem:[%s233 + $0x7e8] sm:$0xff]
        %v551 = vld [vmem:[%s233 + $0x7f0] sm:$0xff]
        %v552 = vld [vmem:[%s233 + $0x7f8] sm:$0xff]
        %v553 = vld [vmem:[%s233 + $0x800] sm:$0xff]
        %v554 = vld [vmem:[%s233 + $0x808] sm:$0xff]
        %v555 = vld [vmem:[%s233 + $0x810] sm:$0xff]
        %v556 = vld [vmem:[%s233 + $0x818] sm:$0xff]
        %v557 = vld [vmem:[%s233 + $0x820] sm:$0xff]
        %v558 = vld [vmem:[%s233 + $0x828] sm:$0xff]
        %v559 = vld [vmem:[%s233 + $0x830] sm:$0xff]
        %v560 = vld [vmem:[%s233 + $0x838] sm:$0xff]
        %v561 = vld [vmem:[%s233 + $0x840] sm:$0xff]
        %v562 = vld [vmem:[%s233 + $0x848] sm:$0xff]
        %v563 = vld [vmem:[%s233 + $0x850] sm:$0xff]
        %v564 = vld [vmem:[%s233 + $0x858] sm:$0xff]
        %v565 = vld [vmem:[%s233 + $0x860] sm:$0xff]
        %v566 = vld [vmem:[%s233 + $0x868] sm:$0xff]
        %v567 = vld [vmem:[%s233 + $0x870] sm:$0xff]
        %v568 = vld [vmem:[%s233 + $0x878] sm:$0xff]
        %v569 = vld [vmem:[%s233 + $0x880] sm:$0xff]
        %v570 = vld [vmem:[%s233 + $0x888] sm:$0xff]
        %v571 = vld [vmem:[%s233 + $0x890] sm:$0xff]
        %v572 = vld [vmem:[%s233 + $0x898] sm:$0xff]
        %v573 = vld [vmem:[%s233 + $0x8a0] sm:$0xff]
        %v574 = vld [vmem:[%s233 + $0x8a8] sm:$0xff]
        %v575 = vld [vmem:[%s233 + $0x8b0] sm:$0xff]
        %v576 = vld [vmem:[%s233 + $0x8b8] sm:$0xff]
        %v577 = vld [vmem:[%s233 + $0x8c0] sm:$0xff]
        %v578 = vld [vmem:[%s233 + $0x8c8] sm:$0xff]
        %v579 = vld [vmem:[%s233 + $0x8d0] sm:$0xff]
        %v580 = vld [vmem:[%s233 + $0x8d8] sm:$0xff]
        %v581 = vld [vmem:[%s233 + $0x8e0] sm:$0xff]
        %v582 = vld [vmem:[%s233 + $0x8e8] sm:$0xff]
        %v583 = vld [vmem:[%s233 + $0x8f0] sm:$0xff]
        %v584 = vld [vmem:[%s233 + $0x8f8] sm:$0xff]
        %v585 = vld [vmem:[%s233 + $0x900] sm:$0xff]
        %v586 = vld [vmem:[%s233 + $0x908] sm:$0xff]
        %v587 = vld [vmem:[%s233 + $0x910] sm:$0xff]
        %v588 = vld [vmem:[%s233 + $0x918] sm:$0xff]
        %v589 = vld [vmem:[%s233 + $0x920] sm:$0xff]
        %v590 = vld [vmem:[%s233 + $0x928] sm:$0xff]
        %v591 = vld [vmem:[%s233 + $0x930] sm:$0xff]
        %v592 = vld [vmem:[%s233 + $0x938] sm:$0xff]
        %v593 = vld [vmem:[%s233 + $0x940] sm:$0xff]
        %v594 = vld [vmem:[%s233 + $0x948] sm:$0xff]
        %v595 = vld [vmem:[%s233 + $0x950] sm:$0xff]
        %v596 = vld [vmem:[%s233 + $0x958] sm:$0xff]
        %v597 = vld [vmem:[%s233 + $0x960] sm:$0xff]
        %v598 = vld [vmem:[%s233 + $0x968] sm:$0xff]
        %v599 = vld [vmem:[%s233 + $0x970] sm:$0xff]
        %v600 = vld [vmem:[%s233 + $0x978] sm:$0xff]
        %v601 = vld [vmem:[%s233 + $0x980] sm:$0xff]
        %v602 = vld [vmem:[%s233 + $0x988] sm:$0xff]
        %v603 = vld [vmem:[%s233 + $0x990] sm:$0xff]
        %v604 = vld [vmem:[%s233 + $0x998] sm:$0xff]
        %v605 = vld [vmem:[%s233 + $0x9a0] sm:$0xff]
        %v606 = vld [vmem:[%s233 + $0x9a8] sm:$0xff]
        %v607 = vld [vmem:[%s233 + $0x9b0] sm:$0xff]
        %v608 = vld [vmem:[%s233 + $0x9b8] sm:$0xff]
        %v609 = vld [vmem:[%s233 + $0x9c0] sm:$0xff]
        %v610 = vld [vmem:[%s233 + $0x9c8] sm:$0xff]
        %v611 = vld [vmem:[%s233 + $0x9d0] sm:$0xff]
        %v612 = vld [vmem:[%s233 + $0x9d8] sm:$0xff]
        %v613 = vld [vmem:[%s233 + $0x9e0] sm:$0xff]
        %v614 = vld [vmem:[%s233 + $0x9e8] sm:$0xff]
        %v615 = vld [vmem:[%s233 + $0x9f0] sm:$0xff]
        %v616 = vld [vmem:[%s233 + $0x9f8] sm:$0xff]
        %v617 = vld [vmem:[%s233 + $0xa00] sm:$0xff]
        %v618 = vld [vmem:[%s233 + $0xa08] sm:$0xff]
        %v619 = vld [vmem:[%s233 + $0xa10] sm:$0xff]
        %v620 = vld [vmem:[%s233 + $0xa18] sm:$0xff]
        %v621 = vld [vmem:[%s233 + $0xa20] sm:$0xff]
        %v622 = vld [vmem:[%s233 + $0xa28] sm:$0xff]
        %v623 = vld [vmem:[%s233 + $0xa30] sm:$0xff]
        %v624 = vld [vmem:[%s233 + $0xa38] sm:$0xff]
        %v625 = vld [vmem:[%s233 + $0xa40] sm:$0xff]
        %v626 = vld [vmem:[%s233 + $0xa48] sm:$0xff]
        %v627 = vld [vmem:[%s233 + $0xa50] sm:$0xff]
        %v628 = vld [vmem:[%s233 + $0xa58] sm:$0xff]
        %v629 = vld [vmem:[%s233 + $0xa60] sm:$0xff]
        %v630 = vld [vmem:[%s233 + $0xa68] sm:$0xff]
        %v631 = vld [vmem:[%s233 + $0xa70] sm:$0xff]
        %v632 = vld [vmem:[%s233 + $0xa78] sm:$0xff]
        %v633 = vld [vmem:[%s233 + $0xa80] sm:$0xff]
        %v634 = vld [vmem:[%s233 + $0xa88] sm:$0xff]
        %v635 = vld [vmem:[%s233 + $0xa90] sm:$0xff]
        %v636 = vld [vmem:[%s233 + $0xa98] sm:$0xff]
        %v637 = vld [vmem:[%s233 + $0xaa0] sm:$0xff]
        %v638 = vld [vmem:[%s233 + $0xaa8] sm:$0xff]
        %v639 = vld [vmem:[%s233 + $0xab0] sm:$0xff]
        %v640 = vld [vmem:[%s233 + $0xab8] sm:$0xff]
        %v641 = vld [vmem:[%s233 + $0xac0] sm:$0xff]
        %v642 = vld [vmem:[%s233 + $0xac8] sm:$0xff]
        %v643 = vld [vmem:[%s233 + $0xad0] sm:$0xff]
        %v644 = vld [vmem:[%s233 + $0xad8] sm:$0xff]
        %v645 = vld [vmem:[%s233 + $0xae0] sm:$0xff]
        %v646 = vld [vmem:[%s233 + $0xae8] sm:$0xff]
        %v647 = vld [vmem:[%s233 + $0xaf0] sm:$0xff]
        %v648 = vld [vmem:[%s233 + $0xaf8] sm:$0xff]
        %v649 = vld [vmem:[%s233 + $0xb00] sm:$0xff]
        %v650 = vld [vmem:[%s233 + $0xb08] sm:$0xff]
        %v651 = vld [vmem:[%s233 + $0xb10] sm:$0xff]
        %v652 = vld [vmem:[%s233 + $0xb18] sm:$0xff]
        %v653 = vld [vmem:[%s233 + $0xb20] sm:$0xff]
        %v654 = vld [vmem:[%s233 + $0xb28] sm:$0xff]
        %v655 = vld [vmem:[%s233 + $0xb30] sm:$0xff]
        %v656 = vld [vmem:[%s233 + $0xb38] sm:$0xff]
        %v657 = vld [vmem:[%s233 + $0xb40] sm:$0xff]
        %v658 = vld [vmem:[%s233 + $0xb48] sm:$0xff]
        %v659 = vld [vmem:[%s233 + $0xb50] sm:$0xff]
        %v660 = vld [vmem:[%s233 + $0xb58] sm:$0xff]
        %v661 = vld [vmem:[%s233 + $0xb60] sm:$0xff]
        %v662 = vld [vmem:[%s233 + $0xb68] sm:$0xff]
        %v663 = vld [vmem:[%s233 + $0xb70] sm:$0xff]
        %v664 = vld [vmem:[%s233 + $0xb78] sm:$0xff]
        %v665 = vld [vmem:[%s233 + $0xb80] sm:$0xff]
        %v666 = vld [vmem:[%s233 + $0xb88] sm:$0xff]
        %v667 = vld [vmem:[%s233 + $0xb90] sm:$0xff]
        %v668 = vld [vmem:[%s233 + $0xb98] sm:$0xff]
        %v669 = vld [vmem:[%s233 + $0xba0] sm:$0xff]
        %v670 = vld [vmem:[%s233 + $0xba8] sm:$0xff]
        %v671 = vld [vmem:[%s233 + $0xbb0] sm:$0xff]
        %v672 = vld [vmem:[%s233 + $0xbb8] sm:$0xff]
        %v673 = vld [vmem:[%s233 + $0xbc0] sm:$0xff]
        %v674 = vld [vmem:[%s233 + $0xbc8] sm:$0xff]
        %v675 = vld [vmem:[%s233 + $0xbd0] sm:$0xff]
        %v676 = vld [vmem:[%s233 + $0xbd8] sm:$0xff]
        %v677 = vld [vmem:[%s233 + $0xbe0] sm:$0xff]
        %v678 = vld [vmem:[%s233 + $0xbe8] sm:$0xff]
        %v679 = vld [vmem:[%s233 + $0xbf0] sm:$0xff]
        %v680 = vld [vmem:[%s233 + $0xbf8] sm:$0xff]
        %v681 = vld [vmem:[%s233 + $0xc00] sm:$0xff]
        %v682 = vld [vmem:[%s233 + $0xc08] sm:$0xff]
        %v683 = vld [vmem:[%s233 + $0xc10] sm:$0xff]
        %v684 = vld [vmem:[%s233 + $0xc18] sm:$0xff]
        %v685 = vld [vmem:[%s233 + $0xc20] sm:$0xff]
        %v686 = vld [vmem:[%s233 + $0xc28] sm:$0xff]
        %v687 = vld [vmem:[%s233 + $0xc30] sm:$0xff]
        %v688 = vld [vmem:[%s233 + $0xc38] sm:$0xff]
        %v689 = vld [vmem:[%s233 + $0xc40] sm:$0xff]
        %v690 = vld [vmem:[%s233 + $0xc48] sm:$0xff]
        %v691 = vld [vmem:[%s233 + $0xc50] sm:$0xff]
        %v692 = vld [vmem:[%s233 + $0xc58] sm:$0xff]
        %v693 = vld [vmem:[%s233 + $0xc60] sm:$0xff]
        %v694 = vld [vmem:[%s233 + $0xc68] sm:$0xff]
        %v695 = vld [vmem:[%s233 + $0xc70] sm:$0xff]
        %v696 = vld [vmem:[%s233 + $0xc78] sm:$0xff]
        %v697 = vld [vmem:[%s233 + $0xc80] sm:$0xff]
        %v698 = vld [vmem:[%s233 + $0xc88] sm:$0xff]
        %v699 = vld [vmem:[%s233 + $0xc90] sm:$0xff]
        %v700 = vld [vmem:[%s233 + $0xc98] sm:$0xff]
        %v701 = vld [vmem:[%s233 + $0xca0] sm:$0xff]
        %v702 = vld [vmem:[%s233 + $0xca8] sm:$0xff]
        %v703 = vld [vmem:[%s233 + $0xcb0] sm:$0xff]
        %v704 = vld [vmem:[%s233 + $0xcb8] sm:$0xff]
        %v705 = vld [vmem:[%s233 + $0xcc0] sm:$0xff]
        %v706 = vld [vmem:[%s233 + $0xcc8] sm:$0xff]
        %v707 = vld [vmem:[%s233 + $0xcd0] sm:$0xff]
        %v708 = vld [vmem:[%s233 + $0xcd8] sm:$0xff]
        %v709 = vld [vmem:[%s233 + $0xce0] sm:$0xff]
        %v710 = vld [vmem:[%s233 + $0xce8] sm:$0xff]
        %v711 = vld [vmem:[%s233 + $0xcf0] sm:$0xff]
        %v712 = vld [vmem:[%s233 + $0xcf8] sm:$0xff]
        %v713 = vld [vmem:[%s233 + $0xd00] sm:$0xff]
        %v714 = vld [vmem:[%s233 + $0xd08] sm:$0xff]
        %v715 = vld [vmem:[%s233 + $0xd10] sm:$0xff]
        %v716 = vld [vmem:[%s233 + $0xd18] sm:$0xff]
        %v717 = vld [vmem:[%s233 + $0xd20] sm:$0xff]
        %v718 = vld [vmem:[%s233 + $0xd28] sm:$0xff]
        %v719 = vld [vmem:[%s233 + $0xd30] sm:$0xff]
        %v720 = vld [vmem:[%s233 + $0xd38] sm:$0xff]
        %v721 = vld [vmem:[%s233 + $0xd40] sm:$0xff]
        %v722 = vld [vmem:[%s233 + $0xd48] sm:$0xff]
        %v723 = vld [vmem:[%s233 + $0xd50] sm:$0xff]
        %v724 = vld [vmem:[%s233 + $0xd58] sm:$0xff]
        %v725 = vld [vmem:[%s233 + $0xd60] sm:$0xff]
        %v726 = vld [vmem:[%s233 + $0xd68] sm:$0xff]
        %v727 = vld [vmem:[%s233 + $0xd70] sm:$0xff]
        %v728 = vld [vmem:[%s233 + $0xd78] sm:$0xff]
        %v729 = vld [vmem:[%s233 + $0xd80] sm:$0xff]
        %v730 = vld [vmem:[%s233 + $0xd88] sm:$0xff]
        %v731 = vld [vmem:[%s233 + $0xd90] sm:$0xff]
        %v732 = vld [vmem:[%s233 + $0xd98] sm:$0xff]
        %v733 = vld [vmem:[%s233 + $0xda0] sm:$0xff]
        %v734 = vld [vmem:[%s233 + $0xda8] sm:$0xff]
        %v735 = vld [vmem:[%s233 + $0xdb0] sm:$0xff]
        %v736 = vld [vmem:[%s233 + $0xdb8] sm:$0xff]
        %v737 = vld [vmem:[%s233 + $0xdc0] sm:$0xff]
        %v738 = vld [vmem:[%s233 + $0xdc8] sm:$0xff]
        %v739 = vld [vmem:[%s233 + $0xdd0] sm:$0xff]
        %v740 = vld [vmem:[%s233 + $0xdd8] sm:$0xff]
        %v741 = vld [vmem:[%s233 + $0xde0] sm:$0xff]
        %v742 = vld [vmem:[%s233 + $0xde8] sm:$0xff]
        %v743 = vld [vmem:[%s233 + $0xdf0] sm:$0xff]
        %v744 = vld [vmem:[%s233 + $0xdf8] sm:$0xff]
        %v745 = vld [vmem:[%s233 + $0xe00] sm:$0xff]
        %v746 = vld [vmem:[%s233 + $0xe08] sm:$0xff]
        %v747 = vld [vmem:[%s233 + $0xe10] sm:$0xff]
        %v748 = vld [vmem:[%s233 + $0xe18] sm:$0xff]
        %v749 = vld [vmem:[%s233 + $0xe20] sm:$0xff]
        %v750 = vld [vmem:[%s233 + $0xe28] sm:$0xff]
        %v751 = vld [vmem:[%s233 + $0xe30] sm:$0xff]
        %v752 = vld [vmem:[%s233 + $0xe38] sm:$0xff]
        %v753 = vld [vmem:[%s233 + $0xe40] sm:$0xff]
        %v754 = vld [vmem:[%s233 + $0xe48] sm:$0xff]
        %v755 = vld [vmem:[%s233 + $0xe50] sm:$0xff]
        %v756 = vld [vmem:[%s233 + $0xe58] sm:$0xff]
        %v757 = vld [vmem:[%s233 + $0xe60] sm:$0xff]
        %v758 = vld [vmem:[%s233 + $0xe68] sm:$0xff]
        %v759 = vld [vmem:[%s233 + $0xe70] sm:$0xff]
        %v760 = vld [vmem:[%s233 + $0xe78] sm:$0xff]
        %v761 = vld [vmem:[%s233 + $0xe80] sm:$0xff]
        %v762 = vld [vmem:[%s233 + $0xe88] sm:$0xff]
        %v763 = vld [vmem:[%s233 + $0xe90] sm:$0xff]
        %v764 = vld [vmem:[%s233 + $0xe98] sm:$0xff]
        %v765 = vld [vmem:[%s233 + $0xea0] sm:$0xff]
        %v766 = vld [vmem:[%s233 + $0xea8] sm:$0xff]
        %v767 = vld [vmem:[%s233 + $0xeb0] sm:$0xff]
        %v768 = vld [vmem:[%s233 + $0xeb8] sm:$0xff]
        %v769 = vld [vmem:[%s233 + $0xec0] sm:$0xff]
        %v770 = vld [vmem:[%s233 + $0xec8] sm:$0xff]
        %v771 = vld [vmem:[%s233 + $0xed0] sm:$0xff]
        %v772 = vld [vmem:[%s233 + $0xed8] sm:$0xff]
        %v773 = vld [vmem:[%s233 + $0xee0] sm:$0xff]
        %v774 = vld [vmem:[%s233 + $0xee8] sm:$0xff]
        %v775 = vld [vmem:[%s233 + $0xef0] sm:$0xff]
        %v776 = vld [vmem:[%s233 + $0xef8] sm:$0xff]
        %v777 = vld [vmem:[%s233 + $0xf00] sm:$0xff]
        %v778 = vld [vmem:[%s233 + $0xf08] sm:$0xff]
        %v779 = vld [vmem:[%s233 + $0xf10] sm:$0xff]
        %v780 = vld [vmem:[%s233 + $0xf18] sm:$0xff]
        %v781 = vld [vmem:[%s233 + $0xf20] sm:$0xff]
        %v782 = vld [vmem:[%s233 + $0xf28] sm:$0xff]
        %v783 = vld [vmem:[%s233 + $0xf30] sm:$0xff]
        %v784 = vld [vmem:[%s233 + $0xf38] sm:$0xff]
        %v785 = vld [vmem:[%s233 + $0xf40] sm:$0xff]
        %v786 = vld [vmem:[%s233 + $0xf48] sm:$0xff]
        %v787 = vld [vmem:[%s233 + $0xf50] sm:$0xff]
        %v788 = vld [vmem:[%s233 + $0xf58] sm:$0xff]
        %v789 = vld [vmem:[%s233 + $0xf60] sm:$0xff]
        %v790 = vld [vmem:[%s233 + $0xf68] sm:$0xff]
        %v791 = vld [vmem:[%s233 + $0xf70] sm:$0xff]
        %v792 = vld [vmem:[%s233 + $0xf78] sm:$0xff]
        %v793 = vld [vmem:[%s233 + $0xf80] sm:$0xff]
        %v794 = vld [vmem:[%s233 + $0xf88] sm:$0xff]
        %v795 = vld [vmem:[%s233 + $0xf90] sm:$0xff]
        %v796 = vld [vmem:[%s233 + $0xf98] sm:$0xff]
        %v797 = vld [vmem:[%s233 + $0xfa0] sm:$0xff]
        %v798 = vld [vmem:[%s233 + $0xfa8] sm:$0xff]
        %v799 = vld [vmem:[%s233 + $0xfb0] sm:$0xff]
        %v800 = vld [vmem:[%s233 + $0xfb8] sm:$0xff]
        %v801 = vld [vmem:[%s233 + $0xfc0] sm:$0xff]
        %v802 = vld [vmem:[%s233 + $0xfc8] sm:$0xff]
        %v803 = vld [vmem:[%s233 + $0xfd0] sm:$0xff]
        %v804 = vld [vmem:[%s233 + $0xfd8] sm:$0xff]
        %v805 = vld [vmem:[%s233 + $0xfe0] sm:$0xff]
        %v806 = vld [vmem:[%s233 + $0xfe8] sm:$0xff]
        %v807 = vld [vmem:[%s233 + $0xff0] sm:$0xff]
        %v808 = vld [vmem:[%s233 + $0xff8] sm:$0xff]
        %v817 = vunpack.c.l.b16 %v289
        %v818 = vunpack.c.h.b16 %v289
        %v819 = vunpack.c.l.b16 %v290
        %v820 = vunpack.c.h.b16 %v290
        %v821 = vunpack.c.l.b16 %v291
        %v822 = vunpack.c.h.b16 %v291
        %v823 = vunpack.c.l.b16 %v292
        %v824 = vunpack.c.h.b16 %v292
        %v825 = vunpack.c.l.b16 %v293
        %v826 = vunpack.c.h.b16 %v293
        %v827 = vunpack.c.l.b16 %v294
        %v828 = vunpack.c.h.b16 %v294
        %v829 = vunpack.c.l.b16 %v295
        %v830 = vunpack.c.h.b16 %v295
        %v831 = vunpack.c.l.b16 %v296
        %v832 = vunpack.c.h.b16 %v296
        %v833 = vpack.c.b16 %v825, %v817
        %v834 = vpack.c.b16 %v826, %v818
        %v835 = vpack.c.b16 %v827, %v819
        %v836 = vpack.c.b16 %v828, %v820
        %v837 = vpack.c.b16 %v829, %v821
        %v838 = vpack.c.b16 %v830, %v822
        %v839 = vpack.c.b16 %v831, %v823
        %v840 = vpack.c.b16 %v832, %v824
        %v1361 = vunpack.c.l.b16 %v297
        %v1362 = vunpack.c.h.b16 %v297
        %v1363 = vunpack.c.l.b16 %v298
        %v1364 = vunpack.c.h.b16 %v298
        %v1365 = vunpack.c.l.b16 %v299
        %v1366 = vunpack.c.h.b16 %v299
        %v1367 = vunpack.c.l.b16 %v300
        %v1368 = vunpack.c.h.b16 %v300
        %v1369 = vunpack.c.l.b16 %v301
        %v1370 = vunpack.c.h.b16 %v301
        %v1371 = vunpack.c.l.b16 %v302
        %v1372 = vunpack.c.h.b16 %v302
        %v1373 = vunpack.c.l.b16 %v303
        %v1374 = vunpack.c.h.b16 %v303
        %v1375 = vunpack.c.l.b16 %v304
        %v1376 = vunpack.c.h.b16 %v304
        %v1377 = vunpack.c.l.b16 %v305
        %v1378 = vunpack.c.h.b16 %v305
        %v1379 = vunpack.c.l.b16 %v306
        %v1380 = vunpack.c.h.b16 %v306
        %v1381 = vunpack.c.l.b16 %v307
        %v1382 = vunpack.c.h.b16 %v307
        %v1383 = vunpack.c.l.b16 %v308
        %v1384 = vunpack.c.h.b16 %v308
        %v1385 = vunpack.c.l.b16 %v309
        %v1386 = vunpack.c.h.b16 %v309
        %v1387 = vunpack.c.l.b16 %v310
        %v1388 = vunpack.c.h.b16 %v310
        %v1389 = vunpack.c.l.b16 %v311
        %v1390 = vunpack.c.h.b16 %v311
        %v1391 = vunpack.c.l.b16 %v312
        %v1392 = vunpack.c.h.b16 %v312
        %v1393 = vunpack.c.l.b16 %v313
        %v1394 = vunpack.c.h.b16 %v313
        %v1395 = vunpack.c.l.b16 %v314
        %v1396 = vunpack.c.h.b16 %v314
        %v1397 = vunpack.c.l.b16 %v315
        %v1398 = vunpack.c.h.b16 %v315
        %v1399 = vunpack.c.l.b16 %v316
        %v1400 = vunpack.c.h.b16 %v316
        %v1401 = vunpack.c.l.b16 %v317
        %v1402 = vunpack.c.h.b16 %v317
        %v1403 = vunpack.c.l.b16 %v318
        %v1404 = vunpack.c.h.b16 %v318
        %v1405 = vunpack.c.l.b16 %v319
        %v1406 = vunpack.c.h.b16 %v319
        %v1407 = vunpack.c.l.b16 %v320
        %v1408 = vunpack.c.h.b16 %v320
        %v1409 = vunpack.c.l.b16 %v321
        %v1410 = vunpack.c.h.b16 %v321
        %v1411 = vunpack.c.l.b16 %v322
        %v1412 = vunpack.c.h.b16 %v322
        %v1413 = vunpack.c.l.b16 %v323
        %v1414 = vunpack.c.h.b16 %v323
        %v1415 = vunpack.c.l.b16 %v324
        %v1416 = vunpack.c.h.b16 %v324
        %v1417 = vunpack.c.l.b16 %v325
        %v1418 = vunpack.c.h.b16 %v325
        %v1419 = vunpack.c.l.b16 %v326
        %v1420 = vunpack.c.h.b16 %v326
        %v1421 = vunpack.c.l.b16 %v327
        %v1422 = vunpack.c.h.b16 %v327
        %v1423 = vunpack.c.l.b16 %v328
        %v1424 = vunpack.c.h.b16 %v328
        %v1425 = vunpack.c.l.b16 %v329
        %v1426 = vunpack.c.h.b16 %v329
        %v1427 = vunpack.c.l.b16 %v330
        %v1428 = vunpack.c.h.b16 %v330
        %v1429 = vunpack.c.l.b16 %v331
        %v1430 = vunpack.c.h.b16 %v331
        %v1431 = vunpack.c.l.b16 %v332
        %v1432 = vunpack.c.h.b16 %v332
        %v1433 = vunpack.c.l.b16 %v333
        %v1434 = vunpack.c.h.b16 %v333
        %v1435 = vunpack.c.l.b16 %v334
        %v1436 = vunpack.c.h.b16 %v334
        %v1437 = vunpack.c.l.b16 %v335
        %v1438 = vunpack.c.h.b16 %v335
        %v1439 = vunpack.c.l.b16 %v336
        %v1440 = vunpack.c.h.b16 %v336
        %v1441 = vunpack.c.l.b16 %v337
        %v1442 = vunpack.c.h.b16 %v337
        %v1443 = vunpack.c.l.b16 %v338
        %v1444 = vunpack.c.h.b16 %v338
        %v1445 = vunpack.c.l.b16 %v339
        %v1446 = vunpack.c.h.b16 %v339
        %v1447 = vunpack.c.l.b16 %v340
        %v1448 = vunpack.c.h.b16 %v340
        %v1449 = vunpack.c.l.b16 %v341
        %v1450 = vunpack.c.h.b16 %v341
        %v1451 = vunpack.c.l.b16 %v342
        %v1452 = vunpack.c.h.b16 %v342
        %v1453 = vunpack.c.l.b16 %v343
        %v1454 = vunpack.c.h.b16 %v343
        %v1455 = vunpack.c.l.b16 %v344
        %v1456 = vunpack.c.h.b16 %v344
        %v1457 = vunpack.c.l.b16 %v345
        %v1458 = vunpack.c.h.b16 %v345
        %v1459 = vunpack.c.l.b16 %v346
        %v1460 = vunpack.c.h.b16 %v346
        %v1461 = vunpack.c.l.b16 %v347
        %v1462 = vunpack.c.h.b16 %v347
        %v1463 = vunpack.c.l.b16 %v348
        %v1464 = vunpack.c.h.b16 %v348
        %v1465 = vunpack.c.l.b16 %v349
        %v1466 = vunpack.c.h.b16 %v349
        %v1467 = vunpack.c.l.b16 %v350
        %v1468 = vunpack.c.h.b16 %v350
        %v1469 = vunpack.c.l.b16 %v351
        %v1470 = vunpack.c.h.b16 %v351
        %v1471 = vunpack.c.l.b16 %v352
        %v1472 = vunpack.c.h.b16 %v352
        %v1473 = vunpack.c.l.b16 %v353
        %v1474 = vunpack.c.h.b16 %v353
        %v1475 = vunpack.c.l.b16 %v354
        %v1476 = vunpack.c.h.b16 %v354
        %v1477 = vunpack.c.l.b16 %v355
        %v1478 = vunpack.c.h.b16 %v355
        %v1479 = vunpack.c.l.b16 %v356
        %v1480 = vunpack.c.h.b16 %v356
        %v1481 = vunpack.c.l.b16 %v357
        %v1482 = vunpack.c.h.b16 %v357
        %v1483 = vunpack.c.l.b16 %v358
        %v1484 = vunpack.c.h.b16 %v358
        %v1485 = vunpack.c.l.b16 %v359
        %v1486 = vunpack.c.h.b16 %v359
        %v1487 = vunpack.c.l.b16 %v360
        %v1488 = vunpack.c.h.b16 %v360
        %v1489 = vunpack.c.l.b16 %v361
        %v1490 = vunpack.c.h.b16 %v361
        %v1491 = vunpack.c.l.b16 %v362
        %v1492 = vunpack.c.h.b16 %v362
        %v1493 = vunpack.c.l.b16 %v363
        %v1494 = vunpack.c.h.b16 %v363
        %v1495 = vunpack.c.l.b16 %v364
        %v1496 = vunpack.c.h.b16 %v364
        %v1497 = vunpack.c.l.b16 %v365
        %v1498 = vunpack.c.h.b16 %v365
        %v1499 = vunpack.c.l.b16 %v366
        %v1500 = vunpack.c.h.b16 %v366
        %v1501 = vunpack.c.l.b16 %v367
        %v1502 = vunpack.c.h.b16 %v367
        %v1503 = vunpack.c.l.b16 %v368
        %v1504 = vunpack.c.h.b16 %v368
        %v1505 = vunpack.c.l.b16 %v369
        %v1506 = vunpack.c.h.b16 %v369
        %v1507 = vunpack.c.l.b16 %v370
        %v1508 = vunpack.c.h.b16 %v370
        %v1509 = vunpack.c.l.b16 %v371
        %v1510 = vunpack.c.h.b16 %v371
        %v1511 = vunpack.c.l.b16 %v372
        %v1512 = vunpack.c.h.b16 %v372
        %v1513 = vunpack.c.l.b16 %v373
        %v1514 = vunpack.c.h.b16 %v373
        %v1515 = vunpack.c.l.b16 %v374
        %v1516 = vunpack.c.h.b16 %v374
        %v1517 = vunpack.c.l.b16 %v375
        %v1518 = vunpack.c.h.b16 %v375
        %v1519 = vunpack.c.l.b16 %v376
        %v1520 = vunpack.c.h.b16 %v376
        %v1521 = vunpack.c.l.b16 %v377
        %v1522 = vunpack.c.h.b16 %v377
        %v1523 = vunpack.c.l.b16 %v378
        %v1524 = vunpack.c.h.b16 %v378
        %v1525 = vunpack.c.l.b16 %v379
        %v1526 = vunpack.c.h.b16 %v379
        %v1527 = vunpack.c.l.b16 %v380
        %v1528 = vunpack.c.h.b16 %v380
        %v1529 = vunpack.c.l.b16 %v381
        %v1530 = vunpack.c.h.b16 %v381
        %v1531 = vunpack.c.l.b16 %v382
        %v1532 = vunpack.c.h.b16 %v382
        %v1533 = vunpack.c.l.b16 %v383
        %v1534 = vunpack.c.h.b16 %v383
        %v1535 = vunpack.c.l.b16 %v384
        %v1536 = vunpack.c.h.b16 %v384
        %v1537 = vunpack.c.l.b16 %v385
        %v1538 = vunpack.c.h.b16 %v385
        %v1539 = vunpack.c.l.b16 %v386
        %v1540 = vunpack.c.h.b16 %v386
        %v1541 = vunpack.c.l.b16 %v387
        %v1542 = vunpack.c.h.b16 %v387
        %v1543 = vunpack.c.l.b16 %v388
        %v1544 = vunpack.c.h.b16 %v388
        %v1545 = vunpack.c.l.b16 %v389
        %v1546 = vunpack.c.h.b16 %v389
        %v1547 = vunpack.c.l.b16 %v390
        %v1548 = vunpack.c.h.b16 %v390
        %v1549 = vunpack.c.l.b16 %v391
        %v1550 = vunpack.c.h.b16 %v391
        %v1551 = vunpack.c.l.b16 %v392
        %v1552 = vunpack.c.h.b16 %v392
        %v1553 = vunpack.c.l.b16 %v393
        %v1554 = vunpack.c.h.b16 %v393
        %v1555 = vunpack.c.l.b16 %v394
        %v1556 = vunpack.c.h.b16 %v394
        %v1557 = vunpack.c.l.b16 %v395
        %v1558 = vunpack.c.h.b16 %v395
        %v1559 = vunpack.c.l.b16 %v396
        %v1560 = vunpack.c.h.b16 %v396
        %v1561 = vunpack.c.l.b16 %v397
        %v1562 = vunpack.c.h.b16 %v397
        %v1563 = vunpack.c.l.b16 %v398
        %v1564 = vunpack.c.h.b16 %v398
        %v1565 = vunpack.c.l.b16 %v399
        %v1566 = vunpack.c.h.b16 %v399
        %v1567 = vunpack.c.l.b16 %v400
        %v1568 = vunpack.c.h.b16 %v400
        %v1569 = vunpack.c.l.b16 %v401
        %v1570 = vunpack.c.h.b16 %v401
        %v1571 = vunpack.c.l.b16 %v402
        %v1572 = vunpack.c.h.b16 %v402
        %v1573 = vunpack.c.l.b16 %v403
        %v1574 = vunpack.c.h.b16 %v403
        %v1575 = vunpack.c.l.b16 %v404
        %v1576 = vunpack.c.h.b16 %v404
        %v1577 = vunpack.c.l.b16 %v405
        %v1578 = vunpack.c.h.b16 %v405
        %v1579 = vunpack.c.l.b16 %v406
        %v1580 = vunpack.c.h.b16 %v406
        %v1581 = vunpack.c.l.b16 %v407
        %v1582 = vunpack.c.h.b16 %v407
        %v1583 = vunpack.c.l.b16 %v408
        %v1584 = vunpack.c.h.b16 %v408
        %v1585 = vunpack.c.l.b16 %v409
        %v1586 = vunpack.c.h.b16 %v409
        %v1587 = vunpack.c.l.b16 %v410
        %v1588 = vunpack.c.h.b16 %v410
        %v1589 = vunpack.c.l.b16 %v411
        %v1590 = vunpack.c.h.b16 %v411
        %v1591 = vunpack.c.l.b16 %v412
        %v1592 = vunpack.c.h.b16 %v412
        %v1593 = vunpack.c.l.b16 %v413
        %v1594 = vunpack.c.h.b16 %v413
        %v1595 = vunpack.c.l.b16 %v414
        %v1596 = vunpack.c.h.b16 %v414
        %v1597 = vunpack.c.l.b16 %v415
        %v1598 = vunpack.c.h.b16 %v415
        %v1599 = vunpack.c.l.b16 %v416
        %v1600 = vunpack.c.h.b16 %v416
        %v1601 = vunpack.c.l.b16 %v417
        %v1602 = vunpack.c.h.b16 %v417
        %v1603 = vunpack.c.l.b16 %v418
        %v1604 = vunpack.c.h.b16 %v418
        %v1605 = vunpack.c.l.b16 %v419
        %v1606 = vunpack.c.h.b16 %v419
        %v1607 = vunpack.c.l.b16 %v420
        %v1608 = vunpack.c.h.b16 %v420
        %v1609 = vunpack.c.l.b16 %v421
        %v1610 = vunpack.c.h.b16 %v421
        %v1611 = vunpack.c.l.b16 %v422
        %v1612 = vunpack.c.h.b16 %v422
        %v1613 = vunpack.c.l.b16 %v423
        %v1614 = vunpack.c.h.b16 %v423
        %v1615 = vunpack.c.l.b16 %v424
        %v1616 = vunpack.c.h.b16 %v424
        %v1617 = vunpack.c.l.b16 %v425
        %v1618 = vunpack.c.h.b16 %v425
        %v1619 = vunpack.c.l.b16 %v426
        %v1620 = vunpack.c.h.b16 %v426
        %v1621 = vunpack.c.l.b16 %v427
        %v1622 = vunpack.c.h.b16 %v427
        %v1623 = vunpack.c.l.b16 %v428
        %v1624 = vunpack.c.h.b16 %v428
        %v1625 = vunpack.c.l.b16 %v429
        %v1626 = vunpack.c.h.b16 %v429
        %v1627 = vunpack.c.l.b16 %v430
        %v1628 = vunpack.c.h.b16 %v430
        %v1629 = vunpack.c.l.b16 %v431
        %v1630 = vunpack.c.h.b16 %v431
        %v1631 = vunpack.c.l.b16 %v432
        %v1632 = vunpack.c.h.b16 %v432
        %v1633 = vunpack.c.l.b16 %v433
        %v1634 = vunpack.c.h.b16 %v433
        %v1635 = vunpack.c.l.b16 %v434
        %v1636 = vunpack.c.h.b16 %v434
        %v1637 = vunpack.c.l.b16 %v435
        %v1638 = vunpack.c.h.b16 %v435
        %v1639 = vunpack.c.l.b16 %v436
        %v1640 = vunpack.c.h.b16 %v436
        %v1641 = vunpack.c.l.b16 %v437
        %v1642 = vunpack.c.h.b16 %v437
        %v1643 = vunpack.c.l.b16 %v438
        %v1644 = vunpack.c.h.b16 %v438
        %v1645 = vunpack.c.l.b16 %v439
        %v1646 = vunpack.c.h.b16 %v439
        %v1647 = vunpack.c.l.b16 %v440
        %v1648 = vunpack.c.h.b16 %v440
        %v1649 = vunpack.c.l.b16 %v441
        %v1650 = vunpack.c.h.b16 %v441
        %v1651 = vunpack.c.l.b16 %v442
        %v1652 = vunpack.c.h.b16 %v442
        %v1653 = vunpack.c.l.b16 %v443
        %v1654 = vunpack.c.h.b16 %v443
        %v1655 = vunpack.c.l.b16 %v444
        %v1656 = vunpack.c.h.b16 %v444
        %v1657 = vunpack.c.l.b16 %v445
        %v1658 = vunpack.c.h.b16 %v445
        %v1659 = vunpack.c.l.b16 %v446
        %v1660 = vunpack.c.h.b16 %v446
        %v1661 = vunpack.c.l.b16 %v447
        %v1662 = vunpack.c.h.b16 %v447
        %v1663 = vunpack.c.l.b16 %v448
        %v1664 = vunpack.c.h.b16 %v448
        %v1665 = vunpack.c.l.b16 %v449
        %v1666 = vunpack.c.h.b16 %v449
        %v1667 = vunpack.c.l.b16 %v450
        %v1668 = vunpack.c.h.b16 %v450
        %v1669 = vunpack.c.l.b16 %v451
        %v1670 = vunpack.c.h.b16 %v451
        %v1671 = vunpack.c.l.b16 %v452
        %v1672 = vunpack.c.h.b16 %v452
        %v1673 = vunpack.c.l.b16 %v453
        %v1674 = vunpack.c.h.b16 %v453
        %v1675 = vunpack.c.l.b16 %v454
        %v1676 = vunpack.c.h.b16 %v454
        %v1677 = vunpack.c.l.b16 %v455
        %v1678 = vunpack.c.h.b16 %v455
        %v1679 = vunpack.c.l.b16 %v456
        %v1680 = vunpack.c.h.b16 %v456
        %v1681 = vunpack.c.l.b16 %v457
        %v1682 = vunpack.c.h.b16 %v457
        %v1683 = vunpack.c.l.b16 %v458
        %v1684 = vunpack.c.h.b16 %v458
        %v1685 = vunpack.c.l.b16 %v459
        %v1686 = vunpack.c.h.b16 %v459
        %v1687 = vunpack.c.l.b16 %v460
        %v1688 = vunpack.c.h.b16 %v460
        %v1689 = vunpack.c.l.b16 %v461
        %v1690 = vunpack.c.h.b16 %v461
        %v1691 = vunpack.c.l.b16 %v462
        %v1692 = vunpack.c.h.b16 %v462
        %v1693 = vunpack.c.l.b16 %v463
        %v1694 = vunpack.c.h.b16 %v463
        %v1695 = vunpack.c.l.b16 %v464
        %v1696 = vunpack.c.h.b16 %v464
        %v1697 = vunpack.c.l.b16 %v465
        %v1698 = vunpack.c.h.b16 %v465
        %v1699 = vunpack.c.l.b16 %v466
        %v1700 = vunpack.c.h.b16 %v466
        %v1701 = vunpack.c.l.b16 %v467
        %v1702 = vunpack.c.h.b16 %v467
        %v1703 = vunpack.c.l.b16 %v468
        %v1704 = vunpack.c.h.b16 %v468
        %v1705 = vunpack.c.l.b16 %v469
        %v1706 = vunpack.c.h.b16 %v469
        %v1707 = vunpack.c.l.b16 %v470
        %v1708 = vunpack.c.h.b16 %v470
        %v1709 = vunpack.c.l.b16 %v471
        %v1710 = vunpack.c.h.b16 %v471
        %v1711 = vunpack.c.l.b16 %v472
        %v1712 = vunpack.c.h.b16 %v472
        %v1713 = vunpack.c.l.b16 %v473
        %v1714 = vunpack.c.h.b16 %v473
        %v1715 = vunpack.c.l.b16 %v474
        %v1716 = vunpack.c.h.b16 %v474
        %v1717 = vunpack.c.l.b16 %v475
        %v1718 = vunpack.c.h.b16 %v475
        %v1719 = vunpack.c.l.b16 %v476
        %v1720 = vunpack.c.h.b16 %v476
        %v1721 = vunpack.c.l.b16 %v477
        %v1722 = vunpack.c.h.b16 %v477
        %v1723 = vunpack.c.l.b16 %v478
        %v1724 = vunpack.c.h.b16 %v478
        %v1725 = vunpack.c.l.b16 %v479
        %v1726 = vunpack.c.h.b16 %v479
        %v1727 = vunpack.c.l.b16 %v480
        %v1728 = vunpack.c.h.b16 %v480
        %v1729 = vunpack.c.l.b16 %v481
        %v1730 = vunpack.c.h.b16 %v481
        %v1731 = vunpack.c.l.b16 %v482
        %v1732 = vunpack.c.h.b16 %v482
        %v1733 = vunpack.c.l.b16 %v483
        %v1734 = vunpack.c.h.b16 %v483
        %v1735 = vunpack.c.l.b16 %v484
        %v1736 = vunpack.c.h.b16 %v484
        %v1737 = vunpack.c.l.b16 %v485
        %v1738 = vunpack.c.h.b16 %v485
        %v1739 = vunpack.c.l.b16 %v486
        %v1740 = vunpack.c.h.b16 %v486
        %v1741 = vunpack.c.l.b16 %v487
        %v1742 = vunpack.c.h.b16 %v487
        %v1743 = vunpack.c.l.b16 %v488
        %v1744 = vunpack.c.h.b16 %v488
        %v1745 = vunpack.c.l.b16 %v489
        %v1746 = vunpack.c.h.b16 %v489
        %v1747 = vunpack.c.l.b16 %v490
        %v1748 = vunpack.c.h.b16 %v490
        %v1749 = vunpack.c.l.b16 %v491
        %v1750 = vunpack.c.h.b16 %v491
        %v1751 = vunpack.c.l.b16 %v492
        %v1752 = vunpack.c.h.b16 %v492
        %v1753 = vunpack.c.l.b16 %v493
        %v1754 = vunpack.c.h.b16 %v493
        %v1755 = vunpack.c.l.b16 %v494
        %v1756 = vunpack.c.h.b16 %v494
        %v1757 = vunpack.c.l.b16 %v495
        %v1758 = vunpack.c.h.b16 %v495
        %v1759 = vunpack.c.l.b16 %v496
        %v1760 = vunpack.c.h.b16 %v496
        %v1761 = vunpack.c.l.b16 %v497
        %v1762 = vunpack.c.h.b16 %v497
        %v1763 = vunpack.c.l.b16 %v498
        %v1764 = vunpack.c.h.b16 %v498
        %v1765 = vunpack.c.l.b16 %v499
        %v1766 = vunpack.c.h.b16 %v499
        %v1767 = vunpack.c.l.b16 %v500
        %v1768 = vunpack.c.h.b16 %v500
        %v1769 = vunpack.c.l.b16 %v501
        %v1770 = vunpack.c.h.b16 %v501
        %v1771 = vunpack.c.l.b16 %v502
        %v1772 = vunpack.c.h.b16 %v502
        %v1773 = vunpack.c.l.b16 %v503
        %v1774 = vunpack.c.h.b16 %v503
        %v1775 = vunpack.c.l.b16 %v504
        %v1776 = vunpack.c.h.b16 %v504
        %v1777 = vunpack.c.l.b16 %v505
        %v1778 = vunpack.c.h.b16 %v505
        %v1779 = vunpack.c.l.b16 %v506
        %v1780 = vunpack.c.h.b16 %v506
        %v1781 = vunpack.c.l.b16 %v507
        %v1782 = vunpack.c.h.b16 %v507
        %v1783 = vunpack.c.l.b16 %v508
        %v1784 = vunpack.c.h.b16 %v508
        %v1785 = vunpack.c.l.b16 %v509
        %v1786 = vunpack.c.h.b16 %v509
        %v1787 = vunpack.c.l.b16 %v510
        %v1788 = vunpack.c.h.b16 %v510
        %v1789 = vunpack.c.l.b16 %v511
        %v1790 = vunpack.c.h.b16 %v511
        %v1791 = vunpack.c.l.b16 %v512
        %v1792 = vunpack.c.h.b16 %v512
        %v1793 = vunpack.c.l.b16 %v513
        %v1794 = vunpack.c.h.b16 %v513
        %v1795 = vunpack.c.l.b16 %v514
        %v1796 = vunpack.c.h.b16 %v514
        %v1797 = vunpack.c.l.b16 %v515
        %v1798 = vunpack.c.h.b16 %v515
        %v1799 = vunpack.c.l.b16 %v516
        %v1800 = vunpack.c.h.b16 %v516
        %v1801 = vunpack.c.l.b16 %v517
        %v1802 = vunpack.c.h.b16 %v517
        %v1803 = vunpack.c.l.b16 %v518
        %v1804 = vunpack.c.h.b16 %v518
        %v1805 = vunpack.c.l.b16 %v519
        %v1806 = vunpack.c.h.b16 %v519
        %v1807 = vunpack.c.l.b16 %v520
        %v1808 = vunpack.c.h.b16 %v520
        %v1809 = vunpack.c.l.b16 %v521
        %v1810 = vunpack.c.h.b16 %v521
        %v1811 = vunpack.c.l.b16 %v522
        %v1812 = vunpack.c.h.b16 %v522
        %v1813 = vunpack.c.l.b16 %v523
        %v1814 = vunpack.c.h.b16 %v523
        %v1815 = vunpack.c.l.b16 %v524
        %v1816 = vunpack.c.h.b16 %v524
        %v1817 = vunpack.c.l.b16 %v525
        %v1818 = vunpack.c.h.b16 %v525
        %v1819 = vunpack.c.l.b16 %v526
        %v1820 = vunpack.c.h.b16 %v526
        %v1821 = vunpack.c.l.b16 %v527
        %v1822 = vunpack.c.h.b16 %v527
        %v1823 = vunpack.c.l.b16 %v528
        %v1824 = vunpack.c.h.b16 %v528
        %v1825 = vunpack.c.l.b16 %v529
        %v1826 = vunpack.c.h.b16 %v529
        %v1827 = vunpack.c.l.b16 %v530
        %v1828 = vunpack.c.h.b16 %v530
        %v1829 = vunpack.c.l.b16 %v531
        %v1830 = vunpack.c.h.b16 %v531
        %v1831 = vunpack.c.l.b16 %v532
        %v1832 = vunpack.c.h.b16 %v532
        %v1833 = vunpack.c.l.b16 %v533
        %v1834 = vunpack.c.h.b16 %v533
        %v1835 = vunpack.c.l.b16 %v534
        %v1836 = vunpack.c.h.b16 %v534
        %v1837 = vunpack.c.l.b16 %v535
        %v1838 = vunpack.c.h.b16 %v535
        %v1839 = vunpack.c.l.b16 %v536
        %v1840 = vunpack.c.h.b16 %v536
        %v1841 = vunpack.c.l.b16 %v537
        %v1842 = vunpack.c.h.b16 %v537
        %v1843 = vunpack.c.l.b16 %v538
        %v1844 = vunpack.c.h.b16 %v538
        %v1845 = vunpack.c.l.b16 %v539
        %v1846 = vunpack.c.h.b16 %v539
        %v1847 = vunpack.c.l.b16 %v540
        %v1848 = vunpack.c.h.b16 %v540
        %v1849 = vunpack.c.l.b16 %v541
        %v1850 = vunpack.c.h.b16 %v541
        %v1851 = vunpack.c.l.b16 %v542
        %v1852 = vunpack.c.h.b16 %v542
        %v1853 = vunpack.c.l.b16 %v543
        %v1854 = vunpack.c.h.b16 %v543
        %v1855 = vunpack.c.l.b16 %v544
        %v1856 = vunpack.c.h.b16 %v544
        %v1857 = vunpack.c.l.b16 %v545
        %v1858 = vunpack.c.h.b16 %v545
        %v1859 = vunpack.c.l.b16 %v546
        %v1860 = vunpack.c.h.b16 %v546
        %v1861 = vunpack.c.l.b16 %v547
        %v1862 = vunpack.c.h.b16 %v547
        %v1863 = vunpack.c.l.b16 %v548
        %v1864 = vunpack.c.h.b16 %v548
        %v1865 = vunpack.c.l.b16 %v549
        %v1866 = vunpack.c.h.b16 %v549
        %v1867 = vunpack.c.l.b16 %v550
        %v1868 = vunpack.c.h.b16 %v550
        %v1869 = vunpack.c.l.b16 %v551
        %v1870 = vunpack.c.h.b16 %v551
        %v1871 = vunpack.c.l.b16 %v552
        %v1872 = vunpack.c.h.b16 %v552
        %v1873 = vunpack.c.l.b16 %v553
        %v1874 = vunpack.c.h.b16 %v553
        %v1875 = vunpack.c.l.b16 %v554
        %v1876 = vunpack.c.h.b16 %v554
        %v1877 = vunpack.c.l.b16 %v555
        %v1878 = vunpack.c.h.b16 %v555
        %v1879 = vunpack.c.l.b16 %v556
        %v1880 = vunpack.c.h.b16 %v556
        %v1881 = vunpack.c.l.b16 %v557
        %v1882 = vunpack.c.h.b16 %v557
        %v1883 = vunpack.c.l.b16 %v558
        %v1884 = vunpack.c.h.b16 %v558
        %v1885 = vunpack.c.l.b16 %v559
        %v1886 = vunpack.c.h.b16 %v559
        %v1887 = vunpack.c.l.b16 %v560
        %v1888 = vunpack.c.h.b16 %v560
        %v1889 = vunpack.c.l.b16 %v561
        %v1890 = vunpack.c.h.b16 %v561
        %v1891 = vunpack.c.l.b16 %v562
        %v1892 = vunpack.c.h.b16 %v562
        %v1893 = vunpack.c.l.b16 %v563
        %v1894 = vunpack.c.h.b16 %v563
        %v1895 = vunpack.c.l.b16 %v564
        %v1896 = vunpack.c.h.b16 %v564
        %v1897 = vunpack.c.l.b16 %v565
        %v1898 = vunpack.c.h.b16 %v565
        %v1899 = vunpack.c.l.b16 %v566
        %v1900 = vunpack.c.h.b16 %v566
        %v1901 = vunpack.c.l.b16 %v567
        %v1902 = vunpack.c.h.b16 %v567
        %v1903 = vunpack.c.l.b16 %v568
        %v1904 = vunpack.c.h.b16 %v568
        %v1905 = vunpack.c.l.b16 %v569
        %v1906 = vunpack.c.h.b16 %v569
        %v1907 = vunpack.c.l.b16 %v570
        %v1908 = vunpack.c.h.b16 %v570
        %v1909 = vunpack.c.l.b16 %v571
        %v1910 = vunpack.c.h.b16 %v571
        %v1911 = vunpack.c.l.b16 %v572
        %v1912 = vunpack.c.h.b16 %v572
        %v1913 = vunpack.c.l.b16 %v573
        %v1914 = vunpack.c.h.b16 %v573
        %v1915 = vunpack.c.l.b16 %v574
        %v1916 = vunpack.c.h.b16 %v574
        %v1917 = vunpack.c.l.b16 %v575
        %v1918 = vunpack.c.h.b16 %v575
        %v1919 = vunpack.c.l.b16 %v576
        %v1920 = vunpack.c.h.b16 %v576
        %v1921 = vunpack.c.l.b16 %v577
        %v1922 = vunpack.c.h.b16 %v577
        %v1923 = vunpack.c.l.b16 %v578
        %v1924 = vunpack.c.h.b16 %v578
        %v1925 = vunpack.c.l.b16 %v579
        %v1926 = vunpack.c.h.b16 %v579
        %v1927 = vunpack.c.l.b16 %v580
        %v1928 = vunpack.c.h.b16 %v580
        %v1929 = vunpack.c.l.b16 %v581
        %v1930 = vunpack.c.h.b16 %v581
        %v1931 = vunpack.c.l.b16 %v582
        %v1932 = vunpack.c.h.b16 %v582
        %v1933 = vunpack.c.l.b16 %v583
        %v1934 = vunpack.c.h.b16 %v583
        %v1935 = vunpack.c.l.b16 %v584
        %v1936 = vunpack.c.h.b16 %v584
        %v1937 = vunpack.c.l.b16 %v585
        %v1938 = vunpack.c.h.b16 %v585
        %v1939 = vunpack.c.l.b16 %v586
        %v1940 = vunpack.c.h.b16 %v586
        %v1941 = vunpack.c.l.b16 %v587
        %v1942 = vunpack.c.h.b16 %v587
        %v1943 = vunpack.c.l.b16 %v588
        %v1944 = vunpack.c.h.b16 %v588
        %v1945 = vunpack.c.l.b16 %v589
        %v1946 = vunpack.c.h.b16 %v589
        %v1947 = vunpack.c.l.b16 %v590
        %v1948 = vunpack.c.h.b16 %v590
        %v1949 = vunpack.c.l.b16 %v591
        %v1950 = vunpack.c.h.b16 %v591
        %v1951 = vunpack.c.l.b16 %v592
        %v1952 = vunpack.c.h.b16 %v592
        %v1953 = vunpack.c.l.b16 %v593
        %v1954 = vunpack.c.h.b16 %v593
        %v1955 = vunpack.c.l.b16 %v594
        %v1956 = vunpack.c.h.b16 %v594
        %v1957 = vunpack.c.l.b16 %v595
        %v1958 = vunpack.c.h.b16 %v595
        %v1959 = vunpack.c.l.b16 %v596
        %v1960 = vunpack.c.h.b16 %v596
        %v1961 = vunpack.c.l.b16 %v597
        %v1962 = vunpack.c.h.b16 %v597
        %v1963 = vunpack.c.l.b16 %v598
        %v1964 = vunpack.c.h.b16 %v598
        %v1965 = vunpack.c.l.b16 %v599
        %v1966 = vunpack.c.h.b16 %v599
        %v1967 = vunpack.c.l.b16 %v600
        %v1968 = vunpack.c.h.b16 %v600
        %v1969 = vunpack.c.l.b16 %v601
        %v1970 = vunpack.c.h.b16 %v601
        %v1971 = vunpack.c.l.b16 %v602
        %v1972 = vunpack.c.h.b16 %v602
        %v1973 = vunpack.c.l.b16 %v603
        %v1974 = vunpack.c.h.b16 %v603
        %v1975 = vunpack.c.l.b16 %v604
        %v1976 = vunpack.c.h.b16 %v604
        %v1977 = vunpack.c.l.b16 %v605
        %v1978 = vunpack.c.h.b16 %v605
        %v1979 = vunpack.c.l.b16 %v606
        %v1980 = vunpack.c.h.b16 %v606
        %v1981 = vunpack.c.l.b16 %v607
        %v1982 = vunpack.c.h.b16 %v607
        %v1983 = vunpack.c.l.b16 %v608
        %v1984 = vunpack.c.h.b16 %v608
        %v1985 = vunpack.c.l.b16 %v609
        %v1986 = vunpack.c.h.b16 %v609
        %v1987 = vunpack.c.l.b16 %v610
        %v1988 = vunpack.c.h.b16 %v610
        %v1989 = vunpack.c.l.b16 %v611
        %v1990 = vunpack.c.h.b16 %v611
        %v1991 = vunpack.c.l.b16 %v612
        %v1992 = vunpack.c.h.b16 %v612
        %v1993 = vunpack.c.l.b16 %v613
        %v1994 = vunpack.c.h.b16 %v613
        %v1995 = vunpack.c.l.b16 %v614
        %v1996 = vunpack.c.h.b16 %v614
        %v1997 = vunpack.c.l.b16 %v615
        %v1998 = vunpack.c.h.b16 %v615
        %v1999 = vunpack.c.l.b16 %v616
        %v2000 = vunpack.c.h.b16 %v616
        %v2001 = vunpack.c.l.b16 %v617
        %v2002 = vunpack.c.h.b16 %v617
        %v2003 = vunpack.c.l.b16 %v618
        %v2004 = vunpack.c.h.b16 %v618
        %v2005 = vunpack.c.l.b16 %v619
        %v2006 = vunpack.c.h.b16 %v619
        %v2007 = vunpack.c.l.b16 %v620
        %v2008 = vunpack.c.h.b16 %v620
        %v2009 = vunpack.c.l.b16 %v621
        %v2010 = vunpack.c.h.b16 %v621
        %v2011 = vunpack.c.l.b16 %v622
        %v2012 = vunpack.c.h.b16 %v622
        %v2013 = vunpack.c.l.b16 %v623
        %v2014 = vunpack.c.h.b16 %v623
        %v2015 = vunpack.c.l.b16 %v624
        %v2016 = vunpack.c.h.b16 %v624
        %v2017 = vunpack.c.l.b16 %v625
        %v2018 = vunpack.c.h.b16 %v625
        %v2019 = vunpack.c.l.b16 %v626
        %v2020 = vunpack.c.h.b16 %v626
        %v2021 = vunpack.c.l.b16 %v627
        %v2022 = vunpack.c.h.b16 %v627
        %v2023 = vunpack.c.l.b16 %v628
        %v2024 = vunpack.c.h.b16 %v628
        %v2025 = vunpack.c.l.b16 %v629
        %v2026 = vunpack.c.h.b16 %v629
        %v2027 = vunpack.c.l.b16 %v630
        %v2028 = vunpack.c.h.b16 %v630
        %v2029 = vunpack.c.l.b16 %v631
        %v2030 = vunpack.c.h.b16 %v631
        %v2031 = vunpack.c.l.b16 %v632
        %v2032 = vunpack.c.h.b16 %v632
        %v2033 = vunpack.c.l.b16 %v633
        %v2034 = vunpack.c.h.b16 %v633
        %v2035 = vunpack.c.l.b16 %v634
        %v2036 = vunpack.c.h.b16 %v634
        %v2037 = vunpack.c.l.b16 %v635
        %v2038 = vunpack.c.h.b16 %v635
        %v2039 = vunpack.c.l.b16 %v636
        %v2040 = vunpack.c.h.b16 %v636
        %v2041 = vunpack.c.l.b16 %v637
        %v2042 = vunpack.c.h.b16 %v637
        %v2043 = vunpack.c.l.b16 %v638
        %v2044 = vunpack.c.h.b16 %v638
        %v2045 = vunpack.c.l.b16 %v639
        %v2046 = vunpack.c.h.b16 %v639
        %v2047 = vunpack.c.l.b16 %v640
        %v2048 = vunpack.c.h.b16 %v640
        %v2049 = vunpack.c.l.b16 %v641
        %v2050 = vunpack.c.h.b16 %v641
        %v2051 = vunpack.c.l.b16 %v642
        %v2052 = vunpack.c.h.b16 %v642
        %v2053 = vunpack.c.l.b16 %v643
        %v2054 = vunpack.c.h.b16 %v643
        %v2055 = vunpack.c.l.b16 %v644
        %v2056 = vunpack.c.h.b16 %v644
        %v2057 = vunpack.c.l.b16 %v645
        %v2058 = vunpack.c.h.b16 %v645
        %v2059 = vunpack.c.l.b16 %v646
        %v2060 = vunpack.c.h.b16 %v646
        %v2061 = vunpack.c.l.b16 %v647
        %v2062 = vunpack.c.h.b16 %v647
        %v2063 = vunpack.c.l.b16 %v648
        %v2064 = vunpack.c.h.b16 %v648
        %v2065 = vunpack.c.l.b16 %v649
        %v2066 = vunpack.c.h.b16 %v649
        %v2067 = vunpack.c.l.b16 %v650
        %v2068 = vunpack.c.h.b16 %v650
        %v2069 = vunpack.c.l.b16 %v651
        %v2070 = vunpack.c.h.b16 %v651
        %v2071 = vunpack.c.l.b16 %v652
        %v2072 = vunpack.c.h.b16 %v652
        %v2073 = vunpack.c.l.b16 %v653
        %v2074 = vunpack.c.h.b16 %v653
        %v2075 = vunpack.c.l.b16 %v654
        %v2076 = vunpack.c.h.b16 %v654
        %v2077 = vunpack.c.l.b16 %v655
        %v2078 = vunpack.c.h.b16 %v655
        %v2079 = vunpack.c.l.b16 %v656
        %v2080 = vunpack.c.h.b16 %v656
        %v2081 = vunpack.c.l.b16 %v657
        %v2082 = vunpack.c.h.b16 %v657
        %v2083 = vunpack.c.l.b16 %v658
        %v2084 = vunpack.c.h.b16 %v658
        %v2085 = vunpack.c.l.b16 %v659
        %v2086 = vunpack.c.h.b16 %v659
        %v2087 = vunpack.c.l.b16 %v660
        %v2088 = vunpack.c.h.b16 %v660
        %v2089 = vunpack.c.l.b16 %v661
        %v2090 = vunpack.c.h.b16 %v661
        %v2091 = vunpack.c.l.b16 %v662
        %v2092 = vunpack.c.h.b16 %v662
        %v2093 = vunpack.c.l.b16 %v663
        %v2094 = vunpack.c.h.b16 %v663
        %v2095 = vunpack.c.l.b16 %v664
        %v2096 = vunpack.c.h.b16 %v664
        %v2097 = vunpack.c.l.b16 %v665
        %v2098 = vunpack.c.h.b16 %v665
        %v2099 = vunpack.c.l.b16 %v666
        %v2100 = vunpack.c.h.b16 %v666
        %v2101 = vunpack.c.l.b16 %v667
        %v2102 = vunpack.c.h.b16 %v667
        %v2103 = vunpack.c.l.b16 %v668
        %v2104 = vunpack.c.h.b16 %v668
        %v2105 = vunpack.c.l.b16 %v669
        %v2106 = vunpack.c.h.b16 %v669
        %v2107 = vunpack.c.l.b16 %v670
        %v2108 = vunpack.c.h.b16 %v670
        %v2109 = vunpack.c.l.b16 %v671
        %v2110 = vunpack.c.h.b16 %v671
        %v2111 = vunpack.c.l.b16 %v672
        %v2112 = vunpack.c.h.b16 %v672
        %v2113 = vunpack.c.l.b16 %v673
        %v2114 = vunpack.c.h.b16 %v673
        %v2115 = vunpack.c.l.b16 %v674
        %v2116 = vunpack.c.h.b16 %v674
        %v2117 = vunpack.c.l.b16 %v675
        %v2118 = vunpack.c.h.b16 %v675
        %v2119 = vunpack.c.l.b16 %v676
        %v2120 = vunpack.c.h.b16 %v676
        %v2121 = vunpack.c.l.b16 %v677
        %v2122 = vunpack.c.h.b16 %v677
        %v2123 = vunpack.c.l.b16 %v678
        %v2124 = vunpack.c.h.b16 %v678
        %v2125 = vunpack.c.l.b16 %v679
        %v2126 = vunpack.c.h.b16 %v679
        %v2127 = vunpack.c.l.b16 %v680
        %v2128 = vunpack.c.h.b16 %v680
        %v2129 = vunpack.c.l.b16 %v681
        %v2130 = vunpack.c.h.b16 %v681
        %v2131 = vunpack.c.l.b16 %v682
        %v2132 = vunpack.c.h.b16 %v682
        %v2133 = vunpack.c.l.b16 %v683
        %v2134 = vunpack.c.h.b16 %v683
        %v2135 = vunpack.c.l.b16 %v684
        %v2136 = vunpack.c.h.b16 %v684
        %v2137 = vunpack.c.l.b16 %v685
        %v2138 = vunpack.c.h.b16 %v685
        %v2139 = vunpack.c.l.b16 %v686
        %v2140 = vunpack.c.h.b16 %v686
        %v2141 = vunpack.c.l.b16 %v687
        %v2142 = vunpack.c.h.b16 %v687
        %v2143 = vunpack.c.l.b16 %v688
        %v2144 = vunpack.c.h.b16 %v688
        %v2145 = vunpack.c.l.b16 %v689
        %v2146 = vunpack.c.h.b16 %v689
        %v2147 = vunpack.c.l.b16 %v690
        %v2148 = vunpack.c.h.b16 %v690
        %v2149 = vunpack.c.l.b16 %v691
        %v2150 = vunpack.c.h.b16 %v691
        %v2151 = vunpack.c.l.b16 %v692
        %v2152 = vunpack.c.h.b16 %v692
        %v2153 = vunpack.c.l.b16 %v693
        %v2154 = vunpack.c.h.b16 %v693
        %v2155 = vunpack.c.l.b16 %v694
        %v2156 = vunpack.c.h.b16 %v694
        %v2157 = vunpack.c.l.b16 %v695
        %v2158 = vunpack.c.h.b16 %v695
        %v2159 = vunpack.c.l.b16 %v696
        %v2160 = vunpack.c.h.b16 %v696
        %v2161 = vunpack.c.l.b16 %v697
        %v2162 = vunpack.c.h.b16 %v697
        %v2163 = vunpack.c.l.b16 %v698
        %v2164 = vunpack.c.h.b16 %v698
        %v2165 = vunpack.c.l.b16 %v699
        %v2166 = vunpack.c.h.b16 %v699
        %v2167 = vunpack.c.l.b16 %v700
        %v2168 = vunpack.c.h.b16 %v700
        %v2169 = vunpack.c.l.b16 %v701
        %v2170 = vunpack.c.h.b16 %v701
        %v2171 = vunpack.c.l.b16 %v702
        %v2172 = vunpack.c.h.b16 %v702
        %v2173 = vunpack.c.l.b16 %v703
        %v2174 = vunpack.c.h.b16 %v703
        %v2175 = vunpack.c.l.b16 %v704
        %v2176 = vunpack.c.h.b16 %v704
        %v2177 = vunpack.c.l.b16 %v705
        %v2178 = vunpack.c.h.b16 %v705
        %v2179 = vunpack.c.l.b16 %v706
        %v2180 = vunpack.c.h.b16 %v706
        %v2181 = vunpack.c.l.b16 %v707
        %v2182 = vunpack.c.h.b16 %v707
        %v2183 = vunpack.c.l.b16 %v708
        %v2184 = vunpack.c.h.b16 %v708
        %v2185 = vunpack.c.l.b16 %v709
        %v2186 = vunpack.c.h.b16 %v709
        %v2187 = vunpack.c.l.b16 %v710
        %v2188 = vunpack.c.h.b16 %v710
        %v2189 = vunpack.c.l.b16 %v711
        %v2190 = vunpack.c.h.b16 %v711
        %v2191 = vunpack.c.l.b16 %v712
        %v2192 = vunpack.c.h.b16 %v712
        %v2193 = vunpack.c.l.b16 %v713
        %v2194 = vunpack.c.h.b16 %v713
        %v2195 = vunpack.c.l.b16 %v714
        %v2196 = vunpack.c.h.b16 %v714
        %v2197 = vunpack.c.l.b16 %v715
        %v2198 = vunpack.c.h.b16 %v715
        %v2199 = vunpack.c.l.b16 %v716
        %v2200 = vunpack.c.h.b16 %v716
        %v2201 = vunpack.c.l.b16 %v717
        %v2202 = vunpack.c.h.b16 %v717
        %v2203 = vunpack.c.l.b16 %v718
        %v2204 = vunpack.c.h.b16 %v718
        %v2205 = vunpack.c.l.b16 %v719
        %v2206 = vunpack.c.h.b16 %v719
        %v2207 = vunpack.c.l.b16 %v720
        %v2208 = vunpack.c.h.b16 %v720
        %v2209 = vunpack.c.l.b16 %v721
        %v2210 = vunpack.c.h.b16 %v721
        %v2211 = vunpack.c.l.b16 %v722
        %v2212 = vunpack.c.h.b16 %v722
        %v2213 = vunpack.c.l.b16 %v723
        %v2214 = vunpack.c.h.b16 %v723
        %v2215 = vunpack.c.l.b16 %v724
        %v2216 = vunpack.c.h.b16 %v724
        %v2217 = vunpack.c.l.b16 %v725
        %v2218 = vunpack.c.h.b16 %v725
        %v2219 = vunpack.c.l.b16 %v726
        %v2220 = vunpack.c.h.b16 %v726
        %v2221 = vunpack.c.l.b16 %v727
        %v2222 = vunpack.c.h.b16 %v727
        %v2223 = vunpack.c.l.b16 %v728
        %v2224 = vunpack.c.h.b16 %v728
        %v2225 = vunpack.c.l.b16 %v729
        %v2226 = vunpack.c.h.b16 %v729
        %v2227 = vunpack.c.l.b16 %v730
        %v2228 = vunpack.c.h.b16 %v730
        %v2229 = vunpack.c.l.b16 %v731
        %v2230 = vunpack.c.h.b16 %v731
        %v2231 = vunpack.c.l.b16 %v732
        %v2232 = vunpack.c.h.b16 %v732
        %v2233 = vunpack.c.l.b16 %v733
        %v2234 = vunpack.c.h.b16 %v733
        %v2235 = vunpack.c.l.b16 %v734
        %v2236 = vunpack.c.h.b16 %v734
        %v2237 = vunpack.c.l.b16 %v735
        %v2238 = vunpack.c.h.b16 %v735
        %v2239 = vunpack.c.l.b16 %v736
        %v2240 = vunpack.c.h.b16 %v736
        %v2241 = vunpack.c.l.b16 %v737
        %v2242 = vunpack.c.h.b16 %v737
        %v2243 = vunpack.c.l.b16 %v738
        %v2244 = vunpack.c.h.b16 %v738
        %v2245 = vunpack.c.l.b16 %v739
        %v2246 = vunpack.c.h.b16 %v739
        %v2247 = vunpack.c.l.b16 %v740
        %v2248 = vunpack.c.h.b16 %v740
        %v2249 = vunpack.c.l.b16 %v741
        %v2250 = vunpack.c.h.b16 %v741
        %v2251 = vunpack.c.l.b16 %v742
        %v2252 = vunpack.c.h.b16 %v742
        %v2253 = vunpack.c.l.b16 %v743
        %v2254 = vunpack.c.h.b16 %v743
        %v2255 = vunpack.c.l.b16 %v744
        %v2256 = vunpack.c.h.b16 %v744
        %v2257 = vunpack.c.l.b16 %v745
        %v2258 = vunpack.c.h.b16 %v745
        %v2259 = vunpack.c.l.b16 %v746
        %v2260 = vunpack.c.h.b16 %v746
        %v2261 = vunpack.c.l.b16 %v747
        %v2262 = vunpack.c.h.b16 %v747
        %v2263 = vunpack.c.l.b16 %v748
        %v2264 = vunpack.c.h.b16 %v748
        %v2265 = vunpack.c.l.b16 %v749
        %v2266 = vunpack.c.h.b16 %v749
        %v2267 = vunpack.c.l.b16 %v750
        %v2268 = vunpack.c.h.b16 %v750
        %v2269 = vunpack.c.l.b16 %v751
        %v2270 = vunpack.c.h.b16 %v751
        %v2271 = vunpack.c.l.b16 %v752
        %v2272 = vunpack.c.h.b16 %v752
        %v2273 = vunpack.c.l.b16 %v753
        %v2274 = vunpack.c.h.b16 %v753
        %v2275 = vunpack.c.l.b16 %v754
        %v2276 = vunpack.c.h.b16 %v754
        %v2277 = vunpack.c.l.b16 %v755
        %v2278 = vunpack.c.h.b16 %v755
        %v2279 = vunpack.c.l.b16 %v756
        %v2280 = vunpack.c.h.b16 %v756
        %v2281 = vunpack.c.l.b16 %v757
        %v2282 = vunpack.c.h.b16 %v757
        %v2283 = vunpack.c.l.b16 %v758
        %v2284 = vunpack.c.h.b16 %v758
        %v2285 = vunpack.c.l.b16 %v759
        %v2286 = vunpack.c.h.b16 %v759
        %v2287 = vunpack.c.l.b16 %v760
        %v2288 = vunpack.c.h.b16 %v760
        %v2289 = vunpack.c.l.b16 %v761
        %v2290 = vunpack.c.h.b16 %v761
        %v2291 = vunpack.c.l.b16 %v762
        %v2292 = vunpack.c.h.b16 %v762
        %v2293 = vunpack.c.l.b16 %v763
        %v2294 = vunpack.c.h.b16 %v763
        %v2295 = vunpack.c.l.b16 %v764
        %v2296 = vunpack.c.h.b16 %v764
        %v2297 = vunpack.c.l.b16 %v765
        %v2298 = vunpack.c.h.b16 %v765
        %v2299 = vunpack.c.l.b16 %v766
        %v2300 = vunpack.c.h.b16 %v766
        %v2301 = vunpack.c.l.b16 %v767
        %v2302 = vunpack.c.h.b16 %v767
        %v2303 = vunpack.c.l.b16 %v768
        %v2304 = vunpack.c.h.b16 %v768
        %v2305 = vunpack.c.l.b16 %v769
        %v2306 = vunpack.c.h.b16 %v769
        %v2307 = vunpack.c.l.b16 %v770
        %v2308 = vunpack.c.h.b16 %v770
        %v2309 = vunpack.c.l.b16 %v771
        %v2310 = vunpack.c.h.b16 %v771
        %v2311 = vunpack.c.l.b16 %v772
        %v2312 = vunpack.c.h.b16 %v772
        %v2313 = vunpack.c.l.b16 %v773
        %v2314 = vunpack.c.h.b16 %v773
        %v2315 = vunpack.c.l.b16 %v774
        %v2316 = vunpack.c.h.b16 %v774
        %v2317 = vunpack.c.l.b16 %v775
        %v2318 = vunpack.c.h.b16 %v775
        %v2319 = vunpack.c.l.b16 %v776
        %v2320 = vunpack.c.h.b16 %v776
        %v2321 = vunpack.c.l.b16 %v777
        %v2322 = vunpack.c.h.b16 %v777
        %v2323 = vunpack.c.l.b16 %v778
        %v2324 = vunpack.c.h.b16 %v778
        %v2325 = vunpack.c.l.b16 %v779
        %v2326 = vunpack.c.h.b16 %v779
        %v2327 = vunpack.c.l.b16 %v780
        %v2328 = vunpack.c.h.b16 %v780
        %v2329 = vunpack.c.l.b16 %v781
        %v2330 = vunpack.c.h.b16 %v781
        %v2331 = vunpack.c.l.b16 %v782
        %v2332 = vunpack.c.h.b16 %v782
        %v2333 = vunpack.c.l.b16 %v783
        %v2334 = vunpack.c.h.b16 %v783
        %v2335 = vunpack.c.l.b16 %v784
        %v2336 = vunpack.c.h.b16 %v784
        %v2337 = vunpack.c.l.b16 %v785
        %v2338 = vunpack.c.h.b16 %v785
        %v2339 = vunpack.c.l.b16 %v786
        %v2340 = vunpack.c.h.b16 %v786
        %v2341 = vunpack.c.l.b16 %v787
        %v2342 = vunpack.c.h.b16 %v787
        %v2343 = vunpack.c.l.b16 %v788
        %v2344 = vunpack.c.h.b16 %v788
        %v2345 = vunpack.c.l.b16 %v789
        %v2346 = vunpack.c.h.b16 %v789
        %v2347 = vunpack.c.l.b16 %v790
        %v2348 = vunpack.c.h.b16 %v790
        %v2349 = vunpack.c.l.b16 %v791
        %v2350 = vunpack.c.h.b16 %v791
        %v2351 = vunpack.c.l.b16 %v792
        %v2352 = vunpack.c.h.b16 %v792
        %v2353 = vunpack.c.l.b16 %v793
        %v2354 = vunpack.c.h.b16 %v793
        %v2355 = vunpack.c.l.b16 %v794
        %v2356 = vunpack.c.h.b16 %v794
        %v2357 = vunpack.c.l.b16 %v795
        %v2358 = vunpack.c.h.b16 %v795
        %v2359 = vunpack.c.l.b16 %v796
        %v2360 = vunpack.c.h.b16 %v796
        %v2361 = vunpack.c.l.b16 %v797
        %v2362 = vunpack.c.h.b16 %v797
        %v2363 = vunpack.c.l.b16 %v798
        %v2364 = vunpack.c.h.b16 %v798
        %v2365 = vunpack.c.l.b16 %v799
        %v2366 = vunpack.c.h.b16 %v799
        %v2367 = vunpack.c.l.b16 %v800
        %v2368 = vunpack.c.h.b16 %v800
        %v2369 = vunpack.c.l.b16 %v801
        %v2370 = vunpack.c.h.b16 %v801
        %v2371 = vunpack.c.l.b16 %v802
        %v2372 = vunpack.c.h.b16 %v802
        %v2373 = vunpack.c.l.b16 %v803
        %v2374 = vunpack.c.h.b16 %v803
        %v2375 = vunpack.c.l.b16 %v804
        %v2376 = vunpack.c.h.b16 %v804
        %v2377 = vunpack.c.l.b16 %v805
        %v2378 = vunpack.c.h.b16 %v805
        %v2379 = vunpack.c.l.b16 %v806
        %v2380 = vunpack.c.h.b16 %v806
        %v2381 = vunpack.c.l.b16 %v807
        %v2382 = vunpack.c.h.b16 %v807
        %v2383 = vunpack.c.l.b16 %v808
        %v2384 = vunpack.c.h.b16 %v808
        %v2385 = vpack.c.b16 %v1369, %v1361
        %v2386 = vpack.c.b16 %v1370, %v1362
        %v2387 = vpack.c.b16 %v1371, %v1363
        %v2388 = vpack.c.b16 %v1372, %v1364
        %v2389 = vpack.c.b16 %v1373, %v1365
        %v2390 = vpack.c.b16 %v1374, %v1366
        %v2391 = vpack.c.b16 %v1375, %v1367
        %v2392 = vpack.c.b16 %v1376, %v1368
        %v2393 = vpack.c.b16 %v1385, %v1377
        %v2394 = vpack.c.b16 %v1386, %v1378
        %v2395 = vpack.c.b16 %v1387, %v1379
        %v2396 = vpack.c.b16 %v1388, %v1380
        %v2397 = vpack.c.b16 %v1389, %v1381
        %v2398 = vpack.c.b16 %v1390, %v1382
        %v2399 = vpack.c.b16 %v1391, %v1383
        %v2400 = vpack.c.b16 %v1392, %v1384
        %v2401 = vpack.c.b16 %v1401, %v1393
        %v2402 = vpack.c.b16 %v1402, %v1394
        %v2403 = vpack.c.b16 %v1403, %v1395
        %v2404 = vpack.c.b16 %v1404, %v1396
        %v2405 = vpack.c.b16 %v1405, %v1397
        %v2406 = vpack.c.b16 %v1406, %v1398
        %v2407 = vpack.c.b16 %v1407, %v1399
        %v2408 = vpack.c.b16 %v1408, %v1400
        %v2409 = vpack.c.b16 %v1417, %v1409
        %v2410 = vpack.c.b16 %v1418, %v1410
        %v2411 = vpack.c.b16 %v1419, %v1411
        %v2412 = vpack.c.b16 %v1420, %v1412
        %v2413 = vpack.c.b16 %v1421, %v1413
        %v2414 = vpack.c.b16 %v1422, %v1414
        %v2415 = vpack.c.b16 %v1423, %v1415
        %v2416 = vpack.c.b16 %v1424, %v1416
        %v2417 = vpack.c.b16 %v1433, %v1425
        %v2418 = vpack.c.b16 %v1434, %v1426
        %v2419 = vpack.c.b16 %v1435, %v1427
        %v2420 = vpack.c.b16 %v1436, %v1428
        %v2421 = vpack.c.b16 %v1437, %v1429
        %v2422 = vpack.c.b16 %v1438, %v1430
        %v2423 = vpack.c.b16 %v1439, %v1431
        %v2424 = vpack.c.b16 %v1440, %v1432
        %v2425 = vpack.c.b16 %v1449, %v1441
        %v2426 = vpack.c.b16 %v1450, %v1442
        %v2427 = vpack.c.b16 %v1451, %v1443
        %v2428 = vpack.c.b16 %v1452, %v1444
        %v2429 = vpack.c.b16 %v1453, %v1445
        %v2430 = vpack.c.b16 %v1454, %v1446
        %v2431 = vpack.c.b16 %v1455, %v1447
        %v2432 = vpack.c.b16 %v1456, %v1448
        %v2433 = vpack.c.b16 %v1465, %v1457
        %v2434 = vpack.c.b16 %v1466, %v1458
        %v2435 = vpack.c.b16 %v1467, %v1459
        %v2436 = vpack.c.b16 %v1468, %v1460
        %v2437 = vpack.c.b16 %v1469, %v1461
        %v2438 = vpack.c.b16 %v1470, %v1462
        %v2439 = vpack.c.b16 %v1471, %v1463
        %v2440 = vpack.c.b16 %v1472, %v1464
        %v2441 = vpack.c.b16 %v1481, %v1473
        %v2442 = vpack.c.b16 %v1482, %v1474
        %v2443 = vpack.c.b16 %v1483, %v1475
        %v2444 = vpack.c.b16 %v1484, %v1476
        %v2445 = vpack.c.b16 %v1485, %v1477
        %v2446 = vpack.c.b16 %v1486, %v1478
        %v2447 = vpack.c.b16 %v1487, %v1479
        %v2448 = vpack.c.b16 %v1488, %v1480
        %v2449 = vpack.c.b16 %v1497, %v1489
        %v2450 = vpack.c.b16 %v1498, %v1490
        %v2451 = vpack.c.b16 %v1499, %v1491
        %v2452 = vpack.c.b16 %v1500, %v1492
        %v2453 = vpack.c.b16 %v1501, %v1493
        %v2454 = vpack.c.b16 %v1502, %v1494
        %v2455 = vpack.c.b16 %v1503, %v1495
        %v2456 = vpack.c.b16 %v1504, %v1496
        %v2457 = vpack.c.b16 %v1513, %v1505
        %v2458 = vpack.c.b16 %v1514, %v1506
        %v2459 = vpack.c.b16 %v1515, %v1507
        %v2460 = vpack.c.b16 %v1516, %v1508
        %v2461 = vpack.c.b16 %v1517, %v1509
        %v2462 = vpack.c.b16 %v1518, %v1510
        %v2463 = vpack.c.b16 %v1519, %v1511
        %v2464 = vpack.c.b16 %v1520, %v1512
        %v2465 = vpack.c.b16 %v1529, %v1521
        %v2466 = vpack.c.b16 %v1530, %v1522
        %v2467 = vpack.c.b16 %v1531, %v1523
        %v2468 = vpack.c.b16 %v1532, %v1524
        %v2469 = vpack.c.b16 %v1533, %v1525
        %v2470 = vpack.c.b16 %v1534, %v1526
        %v2471 = vpack.c.b16 %v1535, %v1527
        %v2472 = vpack.c.b16 %v1536, %v1528
        %v2473 = vpack.c.b16 %v1545, %v1537
        %v2474 = vpack.c.b16 %v1546, %v1538
        %v2475 = vpack.c.b16 %v1547, %v1539
        %v2476 = vpack.c.b16 %v1548, %v1540
        %v2477 = vpack.c.b16 %v1549, %v1541
        %v2478 = vpack.c.b16 %v1550, %v1542
        %v2479 = vpack.c.b16 %v1551, %v1543
        %v2480 = vpack.c.b16 %v1552, %v1544
        %v2481 = vpack.c.b16 %v1561, %v1553
        %v2482 = vpack.c.b16 %v1562, %v1554
        %v2483 = vpack.c.b16 %v1563, %v1555
        %v2484 = vpack.c.b16 %v1564, %v1556
        %v2485 = vpack.c.b16 %v1565, %v1557
        %v2486 = vpack.c.b16 %v1566, %v1558
        %v2487 = vpack.c.b16 %v1567, %v1559
        %v2488 = vpack.c.b16 %v1568, %v1560
        %v2489 = vpack.c.b16 %v1577, %v1569
        %v2490 = vpack.c.b16 %v1578, %v1570
        %v2491 = vpack.c.b16 %v1579, %v1571
        %v2492 = vpack.c.b16 %v1580, %v1572
        %v2493 = vpack.c.b16 %v1581, %v1573
        %v2494 = vpack.c.b16 %v1582, %v1574
        %v2495 = vpack.c.b16 %v1583, %v1575
        %v2496 = vpack.c.b16 %v1584, %v1576
        %v2497 = vpack.c.b16 %v1593, %v1585
        %v2498 = vpack.c.b16 %v1594, %v1586
        %v2499 = vpack.c.b16 %v1595, %v1587
        %v2500 = vpack.c.b16 %v1596, %v1588
        %v2501 = vpack.c.b16 %v1597, %v1589
        %v2502 = vpack.c.b16 %v1598, %v1590
        %v2503 = vpack.c.b16 %v1599, %v1591
        %v2504 = vpack.c.b16 %v1600, %v1592
        %v2505 = vpack.c.b16 %v1609, %v1601
        %v2506 = vpack.c.b16 %v1610, %v1602
        %v2507 = vpack.c.b16 %v1611, %v1603
        %v2508 = vpack.c.b16 %v1612, %v1604
        %v2509 = vpack.c.b16 %v1613, %v1605
        %v2510 = vpack.c.b16 %v1614, %v1606
        %v2511 = vpack.c.b16 %v1615, %v1607
        %v2512 = vpack.c.b16 %v1616, %v1608
        %v2513 = vpack.c.b16 %v1625, %v1617
        %v2514 = vpack.c.b16 %v1626, %v1618
        %v2515 = vpack.c.b16 %v1627, %v1619
        %v2516 = vpack.c.b16 %v1628, %v1620
        %v2517 = vpack.c.b16 %v1629, %v1621
        %v2518 = vpack.c.b16 %v1630, %v1622
        %v2519 = vpack.c.b16 %v1631, %v1623
        %v2520 = vpack.c.b16 %v1632, %v1624
        %v2521 = vpack.c.b16 %v1641, %v1633
        %v2522 = vpack.c.b16 %v1642, %v1634
        %v2523 = vpack.c.b16 %v1643, %v1635
        %v2524 = vpack.c.b16 %v1644, %v1636
        %v2525 = vpack.c.b16 %v1645, %v1637
        %v2526 = vpack.c.b16 %v1646, %v1638
        %v2527 = vpack.c.b16 %v1647, %v1639
        %v2528 = vpack.c.b16 %v1648, %v1640
        %v2529 = vpack.c.b16 %v1657, %v1649
        %v2530 = vpack.c.b16 %v1658, %v1650
        %v2531 = vpack.c.b16 %v1659, %v1651
        %v2532 = vpack.c.b16 %v1660, %v1652
        %v2533 = vpack.c.b16 %v1661, %v1653
        %v2534 = vpack.c.b16 %v1662, %v1654
        %v2535 = vpack.c.b16 %v1663, %v1655
        %v2536 = vpack.c.b16 %v1664, %v1656
        %v2537 = vpack.c.b16 %v1673, %v1665
        %v2538 = vpack.c.b16 %v1674, %v1666
        %v2539 = vpack.c.b16 %v1675, %v1667
        %v2540 = vpack.c.b16 %v1676, %v1668
        %v2541 = vpack.c.b16 %v1677, %v1669
        %v2542 = vpack.c.b16 %v1678, %v1670
        %v2543 = vpack.c.b16 %v1679, %v1671
        %v2544 = vpack.c.b16 %v1680, %v1672
        %v2545 = vpack.c.b16 %v1689, %v1681
        %v2546 = vpack.c.b16 %v1690, %v1682
        %v2547 = vpack.c.b16 %v1691, %v1683
        %v2548 = vpack.c.b16 %v1692, %v1684
        %v2549 = vpack.c.b16 %v1693, %v1685
        %v2550 = vpack.c.b16 %v1694, %v1686
        %v2551 = vpack.c.b16 %v1695, %v1687
        %v2552 = vpack.c.b16 %v1696, %v1688
        %v2553 = vpack.c.b16 %v1705, %v1697
        %v2554 = vpack.c.b16 %v1706, %v1698
        %v2555 = vpack.c.b16 %v1707, %v1699
        %v2556 = vpack.c.b16 %v1708, %v1700
        %v2557 = vpack.c.b16 %v1709, %v1701
        %v2558 = vpack.c.b16 %v1710, %v1702
        %v2559 = vpack.c.b16 %v1711, %v1703
        %v2560 = vpack.c.b16 %v1712, %v1704
        %v2561 = vpack.c.b16 %v1721, %v1713
        %v2562 = vpack.c.b16 %v1722, %v1714
        %v2563 = vpack.c.b16 %v1723, %v1715
        %v2564 = vpack.c.b16 %v1724, %v1716
        %v2565 = vpack.c.b16 %v1725, %v1717
        %v2566 = vpack.c.b16 %v1726, %v1718
        %v2567 = vpack.c.b16 %v1727, %v1719
        %v2568 = vpack.c.b16 %v1728, %v1720
        %v2569 = vpack.c.b16 %v1737, %v1729
        %v2570 = vpack.c.b16 %v1738, %v1730
        %v2571 = vpack.c.b16 %v1739, %v1731
        %v2572 = vpack.c.b16 %v1740, %v1732
        %v2573 = vpack.c.b16 %v1741, %v1733
        %v2574 = vpack.c.b16 %v1742, %v1734
        %v2575 = vpack.c.b16 %v1743, %v1735
        %v2576 = vpack.c.b16 %v1744, %v1736
        %v2577 = vpack.c.b16 %v1753, %v1745
        %v2578 = vpack.c.b16 %v1754, %v1746
        %v2579 = vpack.c.b16 %v1755, %v1747
        %v2580 = vpack.c.b16 %v1756, %v1748
        %v2581 = vpack.c.b16 %v1757, %v1749
        %v2582 = vpack.c.b16 %v1758, %v1750
        %v2583 = vpack.c.b16 %v1759, %v1751
        %v2584 = vpack.c.b16 %v1760, %v1752
        %v2585 = vpack.c.b16 %v1769, %v1761
        %v2586 = vpack.c.b16 %v1770, %v1762
        %v2587 = vpack.c.b16 %v1771, %v1763
        %v2588 = vpack.c.b16 %v1772, %v1764
        %v2589 = vpack.c.b16 %v1773, %v1765
        %v2590 = vpack.c.b16 %v1774, %v1766
        %v2591 = vpack.c.b16 %v1775, %v1767
        %v2592 = vpack.c.b16 %v1776, %v1768
        %v2593 = vpack.c.b16 %v1785, %v1777
        %v2594 = vpack.c.b16 %v1786, %v1778
        %v2595 = vpack.c.b16 %v1787, %v1779
        %v2596 = vpack.c.b16 %v1788, %v1780
        %v2597 = vpack.c.b16 %v1789, %v1781
        %v2598 = vpack.c.b16 %v1790, %v1782
        %v2599 = vpack.c.b16 %v1791, %v1783
        %v2600 = vpack.c.b16 %v1792, %v1784
        %v2601 = vpack.c.b16 %v1801, %v1793
        %v2602 = vpack.c.b16 %v1802, %v1794
        %v2603 = vpack.c.b16 %v1803, %v1795
        %v2604 = vpack.c.b16 %v1804, %v1796
        %v2605 = vpack.c.b16 %v1805, %v1797
        %v2606 = vpack.c.b16 %v1806, %v1798
        %v2607 = vpack.c.b16 %v1807, %v1799
        %v2608 = vpack.c.b16 %v1808, %v1800
        %v2609 = vpack.c.b16 %v1817, %v1809
        %v2610 = vpack.c.b16 %v1818, %v1810
        %v2611 = vpack.c.b16 %v1819, %v1811
        %v2612 = vpack.c.b16 %v1820, %v1812
        %v2613 = vpack.c.b16 %v1821, %v1813
        %v2614 = vpack.c.b16 %v1822, %v1814
        %v2615 = vpack.c.b16 %v1823, %v1815
        %v2616 = vpack.c.b16 %v1824, %v1816
        %v2617 = vpack.c.b16 %v1833, %v1825
        %v2618 = vpack.c.b16 %v1834, %v1826
        %v2619 = vpack.c.b16 %v1835, %v1827
        %v2620 = vpack.c.b16 %v1836, %v1828
        %v2621 = vpack.c.b16 %v1837, %v1829
        %v2622 = vpack.c.b16 %v1838, %v1830
        %v2623 = vpack.c.b16 %v1839, %v1831
        %v2624 = vpack.c.b16 %v1840, %v1832
        %v2625 = vpack.c.b16 %v1849, %v1841
        %v2626 = vpack.c.b16 %v1850, %v1842
        %v2627 = vpack.c.b16 %v1851, %v1843
        %v2628 = vpack.c.b16 %v1852, %v1844
        %v2629 = vpack.c.b16 %v1853, %v1845
        %v2630 = vpack.c.b16 %v1854, %v1846
        %v2631 = vpack.c.b16 %v1855, %v1847
        %v2632 = vpack.c.b16 %v1856, %v1848
        %v2633 = vpack.c.b16 %v1865, %v1857
        %v2634 = vpack.c.b16 %v1866, %v1858
        %v2635 = vpack.c.b16 %v1867, %v1859
        %v2636 = vpack.c.b16 %v1868, %v1860
        %v2637 = vpack.c.b16 %v1869, %v1861
        %v2638 = vpack.c.b16 %v1870, %v1862
        %v2639 = vpack.c.b16 %v1871, %v1863
        %v2640 = vpack.c.b16 %v1872, %v1864
        %v2641 = vpack.c.b16 %v1881, %v1873
        %v2642 = vpack.c.b16 %v1882, %v1874
        %v2643 = vpack.c.b16 %v1883, %v1875
        %v2644 = vpack.c.b16 %v1884, %v1876
        %v2645 = vpack.c.b16 %v1885, %v1877
        %v2646 = vpack.c.b16 %v1886, %v1878
        %v2647 = vpack.c.b16 %v1887, %v1879
        %v2648 = vpack.c.b16 %v1888, %v1880
        %v2649 = vpack.c.b16 %v1897, %v1889
        %v2650 = vpack.c.b16 %v1898, %v1890
        %v2651 = vpack.c.b16 %v1899, %v1891
        %v2652 = vpack.c.b16 %v1900, %v1892
        %v2653 = vpack.c.b16 %v1901, %v1893
        %v2654 = vpack.c.b16 %v1902, %v1894
        %v2655 = vpack.c.b16 %v1903, %v1895
        %v2656 = vpack.c.b16 %v1904, %v1896
        %v2657 = vpack.c.b16 %v1913, %v1905
        %v2658 = vpack.c.b16 %v1914, %v1906
        %v2659 = vpack.c.b16 %v1915, %v1907
        %v2660 = vpack.c.b16 %v1916, %v1908
        %v2661 = vpack.c.b16 %v1917, %v1909
        %v2662 = vpack.c.b16 %v1918, %v1910
        %v2663 = vpack.c.b16 %v1919, %v1911
        %v2664 = vpack.c.b16 %v1920, %v1912
        %v2665 = vpack.c.b16 %v1929, %v1921
        %v2666 = vpack.c.b16 %v1930, %v1922
        %v2667 = vpack.c.b16 %v1931, %v1923
        %v2668 = vpack.c.b16 %v1932, %v1924
        %v2669 = vpack.c.b16 %v1933, %v1925
        %v2670 = vpack.c.b16 %v1934, %v1926
        %v2671 = vpack.c.b16 %v1935, %v1927
        %v2672 = vpack.c.b16 %v1936, %v1928
        %v2673 = vpack.c.b16 %v1945, %v1937
        %v2674 = vpack.c.b16 %v1946, %v1938
        %v2675 = vpack.c.b16 %v1947, %v1939
        %v2676 = vpack.c.b16 %v1948, %v1940
        %v2677 = vpack.c.b16 %v1949, %v1941
        %v2678 = vpack.c.b16 %v1950, %v1942
        %v2679 = vpack.c.b16 %v1951, %v1943
        %v2680 = vpack.c.b16 %v1952, %v1944
        %v2681 = vpack.c.b16 %v1961, %v1953
        %v2682 = vpack.c.b16 %v1962, %v1954
        %v2683 = vpack.c.b16 %v1963, %v1955
        %v2684 = vpack.c.b16 %v1964, %v1956
        %v2685 = vpack.c.b16 %v1965, %v1957
        %v2686 = vpack.c.b16 %v1966, %v1958
        %v2687 = vpack.c.b16 %v1967, %v1959
        %v2688 = vpack.c.b16 %v1968, %v1960
        %v2689 = vpack.c.b16 %v1977, %v1969
        %v2690 = vpack.c.b16 %v1978, %v1970
        %v2691 = vpack.c.b16 %v1979, %v1971
        %v2692 = vpack.c.b16 %v1980, %v1972
        %v2693 = vpack.c.b16 %v1981, %v1973
        %v2694 = vpack.c.b16 %v1982, %v1974
        %v2695 = vpack.c.b16 %v1983, %v1975
        %v2696 = vpack.c.b16 %v1984, %v1976
        %v2697 = vpack.c.b16 %v1993, %v1985
        %v2698 = vpack.c.b16 %v1994, %v1986
        %v2699 = vpack.c.b16 %v1995, %v1987
        %v2700 = vpack.c.b16 %v1996, %v1988
        %v2701 = vpack.c.b16 %v1997, %v1989
        %v2702 = vpack.c.b16 %v1998, %v1990
        %v2703 = vpack.c.b16 %v1999, %v1991
        %v2704 = vpack.c.b16 %v2000, %v1992
        %v2705 = vpack.c.b16 %v2009, %v2001
        %v2706 = vpack.c.b16 %v2010, %v2002
        %v2707 = vpack.c.b16 %v2011, %v2003
        %v2708 = vpack.c.b16 %v2012, %v2004
        %v2709 = vpack.c.b16 %v2013, %v2005
        %v2710 = vpack.c.b16 %v2014, %v2006
        %v2711 = vpack.c.b16 %v2015, %v2007
        %v2712 = vpack.c.b16 %v2016, %v2008
        %v2713 = vpack.c.b16 %v2025, %v2017
        %v2714 = vpack.c.b16 %v2026, %v2018
        %v2715 = vpack.c.b16 %v2027, %v2019
        %v2716 = vpack.c.b16 %v2028, %v2020
        %v2717 = vpack.c.b16 %v2029, %v2021
        %v2718 = vpack.c.b16 %v2030, %v2022
        %v2719 = vpack.c.b16 %v2031, %v2023
        %v2720 = vpack.c.b16 %v2032, %v2024
        %v2721 = vpack.c.b16 %v2041, %v2033
        %v2722 = vpack.c.b16 %v2042, %v2034
        %v2723 = vpack.c.b16 %v2043, %v2035
        %v2724 = vpack.c.b16 %v2044, %v2036
        %v2725 = vpack.c.b16 %v2045, %v2037
        %v2726 = vpack.c.b16 %v2046, %v2038
        %v2727 = vpack.c.b16 %v2047, %v2039
        %v2728 = vpack.c.b16 %v2048, %v2040
        %v2729 = vpack.c.b16 %v2057, %v2049
        %v2730 = vpack.c.b16 %v2058, %v2050
        %v2731 = vpack.c.b16 %v2059, %v2051
        %v2732 = vpack.c.b16 %v2060, %v2052
        %v2733 = vpack.c.b16 %v2061, %v2053
        %v2734 = vpack.c.b16 %v2062, %v2054
        %v2735 = vpack.c.b16 %v2063, %v2055
        %v2736 = vpack.c.b16 %v2064, %v2056
        %v2737 = vpack.c.b16 %v2073, %v2065
        %v2738 = vpack.c.b16 %v2074, %v2066
        %v2739 = vpack.c.b16 %v2075, %v2067
        %v2740 = vpack.c.b16 %v2076, %v2068
        %v2741 = vpack.c.b16 %v2077, %v2069
        %v2742 = vpack.c.b16 %v2078, %v2070
        %v2743 = vpack.c.b16 %v2079, %v2071
        %v2744 = vpack.c.b16 %v2080, %v2072
        %v2745 = vpack.c.b16 %v2089, %v2081
        %v2746 = vpack.c.b16 %v2090, %v2082
        %v2747 = vpack.c.b16 %v2091, %v2083
        %v2748 = vpack.c.b16 %v2092, %v2084
        %v2749 = vpack.c.b16 %v2093, %v2085
        %v2750 = vpack.c.b16 %v2094, %v2086
        %v2751 = vpack.c.b16 %v2095, %v2087
        %v2752 = vpack.c.b16 %v2096, %v2088
        %v2753 = vpack.c.b16 %v2105, %v2097
        %v2754 = vpack.c.b16 %v2106, %v2098
        %v2755 = vpack.c.b16 %v2107, %v2099
        %v2756 = vpack.c.b16 %v2108, %v2100
        %v2757 = vpack.c.b16 %v2109, %v2101
        %v2758 = vpack.c.b16 %v2110, %v2102
        %v2759 = vpack.c.b16 %v2111, %v2103
        %v2760 = vpack.c.b16 %v2112, %v2104
        %v2761 = vpack.c.b16 %v2121, %v2113
        %v2762 = vpack.c.b16 %v2122, %v2114
        %v2763 = vpack.c.b16 %v2123, %v2115
        %v2764 = vpack.c.b16 %v2124, %v2116
        %v2765 = vpack.c.b16 %v2125, %v2117
        %v2766 = vpack.c.b16 %v2126, %v2118
        %v2767 = vpack.c.b16 %v2127, %v2119
        %v2768 = vpack.c.b16 %v2128, %v2120
        %v2769 = vpack.c.b16 %v2137, %v2129
        %v2770 = vpack.c.b16 %v2138, %v2130
        %v2771 = vpack.c.b16 %v2139, %v2131
        %v2772 = vpack.c.b16 %v2140, %v2132
        %v2773 = vpack.c.b16 %v2141, %v2133
        %v2774 = vpack.c.b16 %v2142, %v2134
        %v2775 = vpack.c.b16 %v2143, %v2135
        %v2776 = vpack.c.b16 %v2144, %v2136
        %v2777 = vpack.c.b16 %v2153, %v2145
        %v2778 = vpack.c.b16 %v2154, %v2146
        %v2779 = vpack.c.b16 %v2155, %v2147
        %v2780 = vpack.c.b16 %v2156, %v2148
        %v2781 = vpack.c.b16 %v2157, %v2149
        %v2782 = vpack.c.b16 %v2158, %v2150
        %v2783 = vpack.c.b16 %v2159, %v2151
        %v2784 = vpack.c.b16 %v2160, %v2152
        %v2785 = vpack.c.b16 %v2169, %v2161
        %v2786 = vpack.c.b16 %v2170, %v2162
        %v2787 = vpack.c.b16 %v2171, %v2163
        %v2788 = vpack.c.b16 %v2172, %v2164
        %v2789 = vpack.c.b16 %v2173, %v2165
        %v2790 = vpack.c.b16 %v2174, %v2166
        %v2791 = vpack.c.b16 %v2175, %v2167
        %v2792 = vpack.c.b16 %v2176, %v2168
        %v2793 = vpack.c.b16 %v2185, %v2177
        %v2794 = vpack.c.b16 %v2186, %v2178
        %v2795 = vpack.c.b16 %v2187, %v2179
        %v2796 = vpack.c.b16 %v2188, %v2180
        %v2797 = vpack.c.b16 %v2189, %v2181
        %v2798 = vpack.c.b16 %v2190, %v2182
        %v2799 = vpack.c.b16 %v2191, %v2183
        %v2800 = vpack.c.b16 %v2192, %v2184
        %v2801 = vpack.c.b16 %v2201, %v2193
        %v2802 = vpack.c.b16 %v2202, %v2194
        %v2803 = vpack.c.b16 %v2203, %v2195
        %v2804 = vpack.c.b16 %v2204, %v2196
        %v2805 = vpack.c.b16 %v2205, %v2197
        %v2806 = vpack.c.b16 %v2206, %v2198
        %v2807 = vpack.c.b16 %v2207, %v2199
        %v2808 = vpack.c.b16 %v2208, %v2200
        %v2809 = vpack.c.b16 %v2217, %v2209
        %v2810 = vpack.c.b16 %v2218, %v2210
        %v2811 = vpack.c.b16 %v2219, %v2211
        %v2812 = vpack.c.b16 %v2220, %v2212
        %v2813 = vpack.c.b16 %v2221, %v2213
        %v2814 = vpack.c.b16 %v2222, %v2214
        %v2815 = vpack.c.b16 %v2223, %v2215
        %v2816 = vpack.c.b16 %v2224, %v2216
        %v2817 = vpack.c.b16 %v2233, %v2225
        %v2818 = vpack.c.b16 %v2234, %v2226
        %v2819 = vpack.c.b16 %v2235, %v2227
        %v2820 = vpack.c.b16 %v2236, %v2228
        %v2821 = vpack.c.b16 %v2237, %v2229
        %v2822 = vpack.c.b16 %v2238, %v2230
        %v2823 = vpack.c.b16 %v2239, %v2231
        %v2824 = vpack.c.b16 %v2240, %v2232
        %v2825 = vpack.c.b16 %v2249, %v2241
        %v2826 = vpack.c.b16 %v2250, %v2242
        %v2827 = vpack.c.b16 %v2251, %v2243
        %v2828 = vpack.c.b16 %v2252, %v2244
        %v2829 = vpack.c.b16 %v2253, %v2245
        %v2830 = vpack.c.b16 %v2254, %v2246
        %v2831 = vpack.c.b16 %v2255, %v2247
        %v2832 = vpack.c.b16 %v2256, %v2248
        %v2833 = vpack.c.b16 %v2265, %v2257
        %v2834 = vpack.c.b16 %v2266, %v2258
        %v2835 = vpack.c.b16 %v2267, %v2259
        %v2836 = vpack.c.b16 %v2268, %v2260
        %v2837 = vpack.c.b16 %v2269, %v2261
        %v2838 = vpack.c.b16 %v2270, %v2262
        %v2839 = vpack.c.b16 %v2271, %v2263
        %v2840 = vpack.c.b16 %v2272, %v2264
        %v2841 = vpack.c.b16 %v2281, %v2273
        %v2842 = vpack.c.b16 %v2282, %v2274
        %v2843 = vpack.c.b16 %v2283, %v2275
        %v2844 = vpack.c.b16 %v2284, %v2276
        %v2845 = vpack.c.b16 %v2285, %v2277
        %v2846 = vpack.c.b16 %v2286, %v2278
        %v2847 = vpack.c.b16 %v2287, %v2279
        %v2848 = vpack.c.b16 %v2288, %v2280
        %v2849 = vpack.c.b16 %v2297, %v2289
        %v2850 = vpack.c.b16 %v2298, %v2290
        %v2851 = vpack.c.b16 %v2299, %v2291
        %v2852 = vpack.c.b16 %v2300, %v2292
        %v2853 = vpack.c.b16 %v2301, %v2293
        %v2854 = vpack.c.b16 %v2302, %v2294
        %v2855 = vpack.c.b16 %v2303, %v2295
        %v2856 = vpack.c.b16 %v2304, %v2296
        %v2857 = vpack.c.b16 %v2313, %v2305
        %v2858 = vpack.c.b16 %v2314, %v2306
        %v2859 = vpack.c.b16 %v2315, %v2307
        %v2860 = vpack.c.b16 %v2316, %v2308
        %v2861 = vpack.c.b16 %v2317, %v2309
        %v2862 = vpack.c.b16 %v2318, %v2310
        %v2863 = vpack.c.b16 %v2319, %v2311
        %v2864 = vpack.c.b16 %v2320, %v2312
        %v2865 = vpack.c.b16 %v2329, %v2321
        %v2866 = vpack.c.b16 %v2330, %v2322
        %v2867 = vpack.c.b16 %v2331, %v2323
        %v2868 = vpack.c.b16 %v2332, %v2324
        %v2869 = vpack.c.b16 %v2333, %v2325
        %v2870 = vpack.c.b16 %v2334, %v2326
        %v2871 = vpack.c.b16 %v2335, %v2327
        %v2872 = vpack.c.b16 %v2336, %v2328
        %v2873 = vpack.c.b16 %v2345, %v2337
        %v2874 = vpack.c.b16 %v2346, %v2338
        %v2875 = vpack.c.b16 %v2347, %v2339
        %v2876 = vpack.c.b16 %v2348, %v2340
        %v2877 = vpack.c.b16 %v2349, %v2341
        %v2878 = vpack.c.b16 %v2350, %v2342
        %v2879 = vpack.c.b16 %v2351, %v2343
        %v2880 = vpack.c.b16 %v2352, %v2344
        %v2881 = vpack.c.b16 %v2361, %v2353
        %v2882 = vpack.c.b16 %v2362, %v2354
        %v2883 = vpack.c.b16 %v2363, %v2355
        %v2884 = vpack.c.b16 %v2364, %v2356
        %v2885 = vpack.c.b16 %v2365, %v2357
        %v2886 = vpack.c.b16 %v2366, %v2358
        %v2887 = vpack.c.b16 %v2367, %v2359
        %v2888 = vpack.c.b16 %v2368, %v2360
        %v2889 = vpack.c.b16 %v2377, %v2369
        %v2890 = vpack.c.b16 %v2378, %v2370
        %v2891 = vpack.c.b16 %v2379, %v2371
        %v2892 = vpack.c.b16 %v2380, %v2372
        %v2893 = vpack.c.b16 %v2381, %v2373
        %v2894 = vpack.c.b16 %v2382, %v2374
        %v2895 = vpack.c.b16 %v2383, %v2375
        %v2896 = vpack.c.b16 %v2384, %v2376
        %3409 = vmatprep.subr.bf16.mxu0 %v2386
        %3410 = vmatpush1.bf16.msra.mxu0 %v2385
        %3411 = vmatprep.subr.bf16.mxu0 %v2394
        %3412 = vmatpush1.bf16.msra.mxu0 %v2393
        %3413 = vmatprep.subr.bf16.mxu0 %v2402
        %3414 = vmatpush1.bf16.msra.mxu0 %v2401
        %3415 = vmatprep.subr.bf16.mxu0 %v2410
        %3416 = vmatpush1.bf16.msra.mxu0 %v2409
        %3417 = vmatprep.subr.bf16.mxu0 %v2418
        %3418 = vmatpush1.bf16.msra.mxu0 %v2417
        %3419 = vmatprep.subr.bf16.mxu0 %v2426
        %3420 = vmatpush1.bf16.msra.mxu0 %v2425
        %3421 = vmatprep.subr.bf16.mxu0 %v2434
        %3422 = vmatpush1.bf16.msra.mxu0 %v2433
        %3423 = vmatprep.subr.bf16.mxu0 %v2442
        %3424 = vmatpush1.bf16.msra.mxu0 %v2441
        %3425 = vmatprep.subr.bf16.mxu0 %v2450
        %3426 = vmatpush1.bf16.msra.mxu0 %v2449
        %3427 = vmatprep.subr.bf16.mxu0 %v2458
        %3428 = vmatpush1.bf16.msra.mxu0 %v2457
        %3429 = vmatprep.subr.bf16.mxu0 %v2466
        %3430 = vmatpush1.bf16.msra.mxu0 %v2465
        %3431 = vmatprep.subr.bf16.mxu0 %v2474
        %3432 = vmatpush1.bf16.msra.mxu0 %v2473
        %3433 = vmatprep.subr.bf16.mxu0 %v2482
        %3434 = vmatpush1.bf16.msra.mxu0 %v2481
        %3435 = vmatprep.subr.bf16.mxu0 %v2490
        %3436 = vmatpush1.bf16.msra.mxu0 %v2489
        %3437 = vmatprep.subr.bf16.mxu0 %v2498
        %3438 = vmatpush1.bf16.msra.mxu0 %v2497
        %3439 = vmatprep.subr.bf16.mxu0 %v2506
        %3440 = vmatpush1.bf16.msra.mxu0 %v2505
        %3441 = vmatprep.mubr.bf16.mxu0 %v834
        %3442 = vmatmul.mubr.bf16.gmra.mrb[0].mxu0 %v833
        %v3443 = vpop.f32.mrb[0].mxu0
        %v3444 = vadd.f32 0.0, %v3443
        %v3445 = vpop.f32.mrb[0].mxu0
        %v3446 = vadd.f32 0.0, %v3445
        %v3447 = vpop.f32.mrb[0].mxu0
        %v3448 = vadd.f32 0.0, %v3447
        %v3449 = vpop.f32.mrb[0].mxu0
        %v3450 = vadd.f32 0.0, %v3449
        %3451 = vdwg.mxu0
        %3452 = vmatprep.subr.bf16.mxu0 %v2514
        %3453 = vmatpush1.bf16.msra.mxu0 %v2513
        %3454 = vmatprep.subr.bf16.mxu0 %v2522
        %3455 = vmatpush1.bf16.msra.mxu0 %v2521
        %3456 = vmatprep.subr.bf16.mxu0 %v2530
        %3457 = vmatpush1.bf16.msra.mxu0 %v2529
        %3458 = vmatprep.subr.bf16.mxu0 %v2538
        %3459 = vmatpush1.bf16.msra.mxu0 %v2537
        %3460 = vmatprep.subr.bf16.mxu0 %v2546
        %3461 = vmatpush1.bf16.msra.mxu0 %v2545
        %3462 = vmatprep.subr.bf16.mxu0 %v2554
        %3463 = vmatpush1.bf16.msra.mxu0 %v2553
        %3464 = vmatprep.subr.bf16.mxu0 %v2562
        %3465 = vmatpush1.bf16.msra.mxu0 %v2561
        %3466 = vmatprep.subr.bf16.mxu0 %v2570
        %3467 = vmatpush1.bf16.msra.mxu0 %v2569
        %3468 = vmatprep.subr.bf16.mxu0 %v2578
        %3469 = vmatpush1.bf16.msra.mxu0 %v2577
        %3470 = vmatprep.subr.bf16.mxu0 %v2586
        %3471 = vmatpush1.bf16.msra.mxu0 %v2585
        %3472 = vmatprep.subr.bf16.mxu0 %v2594
        %3473 = vmatpush1.bf16.msra.mxu0 %v2593
        %3474 = vmatprep.subr.bf16.mxu0 %v2602
        %3475 = vmatpush1.bf16.msra.mxu0 %v2601
        %3476 = vmatprep.subr.bf16.mxu0 %v2610
        %3477 = vmatpush1.bf16.msra.mxu0 %v2609
        %3478 = vmatprep.subr.bf16.mxu0 %v2618
        %3479 = vmatpush1.bf16.msra.mxu0 %v2617
        %3480 = vmatprep.subr.bf16.mxu0 %v2626
        %3481 = vmatpush1.bf16.msra.mxu0 %v2625
        %3482 = vmatprep.subr.bf16.mxu0 %v2634
        %3483 = vmatpush1.bf16.msra.mxu0 %v2633
        %3484 = vmatprep.mubr.bf16.mxu0 %v836
        %3485 = vmatmul.mubr.bf16.gmra.mrb[0].mxu0 %v835
        %v3486 = vpop.f32.mrb[0].mxu0
        %v3487 = vadd.f32 %v3444, %v3486
        %v3488 = vpop.f32.mrb[0].mxu0
        %v3489 = vadd.f32 %v3446, %v3488
        %v3490 = vpop.f32.mrb[0].mxu0
        %v3491 = vadd.f32 %v3448, %v3490
        %v3492 = vpop.f32.mrb[0].mxu0
        %v3493 = vadd.f32 %v3450, %v3492
        %3494 = vdwg.mxu0
        %3495 = vmatprep.subr.bf16.mxu0 %v2642
        %3496 = vmatpush1.bf16.msra.mxu0 %v2641
        %3497 = vmatprep.subr.bf16.mxu0 %v2650
        %3498 = vmatpush1.bf16.msra.mxu0 %v2649
        %3499 = vmatprep.subr.bf16.mxu0 %v2658
        %3500 = vmatpush1.bf16.msra.mxu0 %v2657
        %3501 = vmatprep.subr.bf16.mxu0 %v2666
        %3502 = vmatpush1.bf16.msra.mxu0 %v2665
        %3503 = vmatprep.subr.bf16.mxu0 %v2674
        %3504 = vmatpush1.bf16.msra.mxu0 %v2673
        %3505 = vmatprep.subr.bf16.mxu0 %v2682
        %3506 = vmatpush1.bf16.msra.mxu0 %v2681
        %3507 = vmatprep.subr.bf16.mxu0 %v2690
        %3508 = vmatpush1.bf16.msra.mxu0 %v2689
        %3509 = vmatprep.subr.bf16.mxu0 %v2698
        %3510 = vmatpush1.bf16.msra.mxu0 %v2697
        %3511 = vmatprep.subr.bf16.mxu0 %v2706
        %3512 = vmatpush1.bf16.msra.mxu0 %v2705
        %3513 = vmatprep.subr.bf16.mxu0 %v2714
        %3514 = vmatpush1.bf16.msra.mxu0 %v2713
        %3515 = vmatprep.subr.bf16.mxu0 %v2722
        %3516 = vmatpush1.bf16.msra.mxu0 %v2721
        %3517 = vmatprep.subr.bf16.mxu0 %v2730
        %3518 = vmatpush1.bf16.msra.mxu0 %v2729
        %3519 = vmatprep.subr.bf16.mxu0 %v2738
        %3520 = vmatpush1.bf16.msra.mxu0 %v2737
        %3521 = vmatprep.subr.bf16.mxu0 %v2746
        %3522 = vmatpush1.bf16.msra.mxu0 %v2745
        %3523 = vmatprep.subr.bf16.mxu0 %v2754
        %3524 = vmatpush1.bf16.msra.mxu0 %v2753
        %3525 = vmatprep.subr.bf16.mxu0 %v2762
        %3526 = vmatpush1.bf16.msra.mxu0 %v2761
        %3527 = vmatprep.mubr.bf16.mxu0 %v838
        %3528 = vmatmul.mubr.bf16.gmra.mrb[0].mxu0 %v837
        %v3529 = vpop.f32.mrb[0].mxu0
        %v3530 = vadd.f32 %v3487, %v3529
        %v3531 = vpop.f32.mrb[0].mxu0
        %v3532 = vadd.f32 %v3489, %v3531
        %v3533 = vpop.f32.mrb[0].mxu0
        %v3534 = vadd.f32 %v3491, %v3533
        %v3535 = vpop.f32.mrb[0].mxu0
        %v3536 = vadd.f32 %v3493, %v3535
        %3537 = vdwg.mxu0
        %3538 = vmatprep.subr.bf16.mxu0 %v2770
        %3539 = vmatpush1.bf16.msra.mxu0 %v2769
        %3540 = vmatprep.subr.bf16.mxu0 %v2778
        %3541 = vmatpush1.bf16.msra.mxu0 %v2777
        %3542 = vmatprep.subr.bf16.mxu0 %v2786
        %3543 = vmatpush1.bf16.msra.mxu0 %v2785
        %3544 = vmatprep.subr.bf16.mxu0 %v2794
        %3545 = vmatpush1.bf16.msra.mxu0 %v2793
        %3546 = vmatprep.subr.bf16.mxu0 %v2802
        %3547 = vmatpush1.bf16.msra.mxu0 %v2801
        %3548 = vmatprep.subr.bf16.mxu0 %v2810
        %3549 = vmatpush1.bf16.msra.mxu0 %v2809
        %3550 = vmatprep.subr.bf16.mxu0 %v2818
        %3551 = vmatpush1.bf16.msra.mxu0 %v2817
        %3552 = vmatprep.subr.bf16.mxu0 %v2826
        %3553 = vmatpush1.bf16.msra.mxu0 %v2825
        %3554 = vmatprep.subr.bf16.mxu0 %v2834
        %3555 = vmatpush1.bf16.msra.mxu0 %v2833
        %3556 = vmatprep.subr.bf16.mxu0 %v2842
        %3557 = vmatpush1.bf16.msra.mxu0 %v2841
        %3558 = vmatprep.subr.bf16.mxu0 %v2850
        %3559 = vmatpush1.bf16.msra.mxu0 %v2849
        %3560 = vmatprep.subr.bf16.mxu0 %v2858
        %3561 = vmatpush1.bf16.msra.mxu0 %v2857
        %3562 = vmatprep.subr.bf16.mxu0 %v2866
        %3563 = vmatpush1.bf16.msra.mxu0 %v2865
        %3564 = vmatprep.subr.bf16.mxu0 %v2874
        %3565 = vmatpush1.bf16.msra.mxu0 %v2873
        %3566 = vmatprep.subr.bf16.mxu0 %v2882
        %3567 = vmatpush1.bf16.msra.mxu0 %v2881
        %3568 = vmatprep.subr.bf16.mxu0 %v2890
        %3569 = vmatpush1.bf16.msra.mxu0 %v2889
        %3570 = vmatprep.mubr.bf16.mxu0 %v840
        %3571 = vmatmul.mubr.bf16.gmra.mrb[0].mxu0 %v839
        %v3572 = vpop.f32.mrb[0].mxu0
        %v3573 = vadd.f32 %v3530, %v3572
        %v3574 = vpop.f32.mrb[0].mxu0
        %v3575 = vadd.f32 %v3532, %v3574
        %v3576 = vpop.f32.mrb[0].mxu0
        %v3577 = vadd.f32 %v3534, %v3576
        %v3578 = vpop.f32.mrb[0].mxu0
        %v3579 = vadd.f32 %v3536, %v3578
        %3580 = vdwg.mxu0
        %3581 = vmatprep.subr.bf16.mxu0 %v2388
        %3582 = vmatpush1.bf16.msra.mxu0 %v2387
        %3583 = vmatprep.subr.bf16.mxu0 %v2396
        %3584 = vmatpush1.bf16.msra.mxu0 %v2395
        %3585 = vmatprep.subr.bf16.mxu0 %v2404
        %3586 = vmatpush1.bf16.msra.mxu0 %v2403
        %3587 = vmatprep.subr.bf16.mxu0 %v2412
        %3588 = vmatpush1.bf16.msra.mxu0 %v2411
        %3589 = vmatprep.subr.bf16.mxu0 %v2420
        %3590 = vmatpush1.bf16.msra.mxu0 %v2419
        %3591 = vmatprep.subr.bf16.mxu0 %v2428
        %3592 = vmatpush1.bf16.msra.mxu0 %v2427
        %3593 = vmatprep.subr.bf16.mxu0 %v2436
        %3594 = vmatpush1.bf16.msra.mxu0 %v2435
        %3595 = vmatprep.subr.bf16.mxu0 %v2444
        %3596 = vmatpush1.bf16.msra.mxu0 %v2443
        %3597 = vmatprep.subr.bf16.mxu0 %v2452
        %3598 = vmatpush1.bf16.msra.mxu0 %v2451
        %3599 = vmatprep.subr.bf16.mxu0 %v2460
        %3600 = vmatpush1.bf16.msra.mxu0 %v2459
        %3601 = vmatprep.subr.bf16.mxu0 %v2468
        %3602 = vmatpush1.bf16.msra.mxu0 %v2467
        %3603 = vmatprep.subr.bf16.mxu0 %v2476
        %3604 = vmatpush1.bf16.msra.mxu0 %v2475
        %3605 = vmatprep.subr.bf16.mxu0 %v2484
        %3606 = vmatpush1.bf16.msra.mxu0 %v2483
        %3607 = vmatprep.subr.bf16.mxu0 %v2492
        %3608 = vmatpush1.bf16.msra.mxu0 %v2491
        %3609 = vmatprep.subr.bf16.mxu0 %v2500
        %3610 = vmatpush1.bf16.msra.mxu0 %v2499
        %3611 = vmatprep.subr.bf16.mxu0 %v2508
        %3612 = vmatpush1.bf16.msra.mxu0 %v2507
        %3613 = vmatprep.mubr.bf16.mxu0 %v834
        %3614 = vmatmul.mubr.bf16.gmra.mrb[0].mxu0 %v833
        %v3615 = vpop.f32.mrb[0].mxu0
        %v3616 = vadd.f32 0.0, %v3615
        %v3617 = vpop.f32.mrb[0].mxu0
        %v3618 = vadd.f32 0.0, %v3617
        %v3619 = vpop.f32.mrb[0].mxu0
        %v3620 = vadd.f32 0.0, %v3619
        %v3621 = vpop.f32.mrb[0].mxu0
        %v3622 = vadd.f32 0.0, %v3621
        %3623 = vdwg.mxu0
        %3624 = vmatprep.subr.bf16.mxu0 %v2516
        %3625 = vmatpush1.bf16.msra.mxu0 %v2515
        %3626 = vmatprep.subr.bf16.mxu0 %v2524
        %3627 = vmatpush1.bf16.msra.mxu0 %v2523
        %3628 = vmatprep.subr.bf16.mxu0 %v2532
        %3629 = vmatpush1.bf16.msra.mxu0 %v2531
        %3630 = vmatprep.subr.bf16.mxu0 %v2540
        %3631 = vmatpush1.bf16.msra.mxu0 %v2539
        %3632 = vmatprep.subr.bf16.mxu0 %v2548
        %3633 = vmatpush1.bf16.msra.mxu0 %v2547
        %3634 = vmatprep.subr.bf16.mxu0 %v2556
        %3635 = vmatpush1.bf16.msra.mxu0 %v2555
        %3636 = vmatprep.subr.bf16.mxu0 %v2564
        %3637 = vmatpush1.bf16.msra.mxu0 %v2563
        %3638 = vmatprep.subr.bf16.mxu0 %v2572
        %3639 = vmatpush1.bf16.msra.mxu0 %v2571
        %3640 = vmatprep.subr.bf16.mxu0 %v2580
        %3641 = vmatpush1.bf16.msra.mxu0 %v2579
        %3642 = vmatprep.subr.bf16.mxu0 %v2588
        %3643 = vmatpush1.bf16.msra.mxu0 %v2587
        %3644 = vmatprep.subr.bf16.mxu0 %v2596
        %3645 = vmatpush1.bf16.msra.mxu0 %v2595
        %3646 = vmatprep.subr.bf16.mxu0 %v2604
        %3647 = vmatpush1.bf16.msra.mxu0 %v2603
        %3648 = vmatprep.subr.bf16.mxu0 %v2612
        %3649 = vmatpush1.bf16.msra.mxu0 %v2611
        %3650 = vmatprep.subr.bf16.mxu0 %v2620
        %3651 = vmatpush1.bf16.msra.mxu0 %v2619
        %3652 = vmatprep.subr.bf16.mxu0 %v2628
        %3653 = vmatpush1.bf16.msra.mxu0 %v2627
        %3654 = vmatprep.subr.bf16.mxu0 %v2636
        %3655 = vmatpush1.bf16.msra.mxu0 %v2635
        %3656 = vmatprep.mubr.bf16.mxu0 %v836
        %3657 = vmatmul.mubr.bf16.gmra.mrb[0].mxu0 %v835
        %v3658 = vpop.f32.mrb[0].mxu0
        %v3659 = vadd.f32 %v3616, %v3658
        %v3660 = vpop.f32.mrb[0].mxu0
        %v3661 = vadd.f32 %v3618, %v3660
        %v3662 = vpop.f32.mrb[0].mxu0
        %v3663 = vadd.f32 %v3620, %v3662
        %v3664 = vpop.f32.mrb[0].mxu0
        %v3665 = vadd.f32 %v3622, %v3664
        %3666 = vdwg.mxu0
        %3667 = vmatprep.subr.bf16.mxu0 %v2644
        %3668 = vmatpush1.bf16.msra.mxu0 %v2643
        %3669 = vmatprep.subr.bf16.mxu0 %v2652
        %3670 = vmatpush1.bf16.msra.mxu0 %v2651
        %3671 = vmatprep.subr.bf16.mxu0 %v2660
        %3672 = vmatpush1.bf16.msra.mxu0 %v2659
        %3673 = vmatprep.subr.bf16.mxu0 %v2668
        %3674 = vmatpush1.bf16.msra.mxu0 %v2667
        %3675 = vmatprep.subr.bf16.mxu0 %v2676
        %3676 = vmatpush1.bf16.msra.mxu0 %v2675
        %3677 = vmatprep.subr.bf16.mxu0 %v2684
        %3678 = vmatpush1.bf16.msra.mxu0 %v2683
        %3679 = vmatprep.subr.bf16.mxu0 %v2692
        %3680 = vmatpush1.bf16.msra.mxu0 %v2691
        %3681 = vmatprep.subr.bf16.mxu0 %v2700
        %3682 = vmatpush1.bf16.msra.mxu0 %v2699
        %3683 = vmatprep.subr.bf16.mxu0 %v2708
        %3684 = vmatpush1.bf16.msra.mxu0 %v2707
        %3685 = vmatprep.subr.bf16.mxu0 %v2716
        %3686 = vmatpush1.bf16.msra.mxu0 %v2715
        %3687 = vmatprep.subr.bf16.mxu0 %v2724
        %3688 = vmatpush1.bf16.msra.mxu0 %v2723
        %3689 = vmatprep.subr.bf16.mxu0 %v2732
        %3690 = vmatpush1.bf16.msra.mxu0 %v2731
        %3691 = vmatprep.subr.bf16.mxu0 %v2740
        %3692 = vmatpush1.bf16.msra.mxu0 %v2739
        %3693 = vmatprep.subr.bf16.mxu0 %v2748
        %3694 = vmatpush1.bf16.msra.mxu0 %v2747
        %3695 = vmatprep.subr.bf16.mxu0 %v2756
        %3696 = vmatpush1.bf16.msra.mxu0 %v2755
        %3697 = vmatprep.subr.bf16.mxu0 %v2764
        %3698 = vmatpush1.bf16.msra.mxu0 %v2763
        %3699 = vmatprep.mubr.bf16.mxu0 %v838
        %3700 = vmatmul.mubr.bf16.gmra.mrb[0].mxu0 %v837
        %v3701 = vpop.f32.mrb[0].mxu0
        %v3702 = vadd.f32 %v3659, %v3701
        %v3703 = vpop.f32.mrb[0].mxu0
        %v3704 = vadd.f32 %v3661, %v3703
        %v3705 = vpop.f32.mrb[0].mxu0
        %v3706 = vadd.f32 %v3663, %v3705
        %v3707 = vpop.f32.mrb[0].mxu0
        %v3708 = vadd.f32 %v3665, %v3707
        %3709 = vdwg.mxu0
        %3710 = vmatprep.subr.bf16.mxu0 %v2772
        %3711 = vmatpush1.bf16.msra.mxu0 %v2771
        %3712 = vmatprep.subr.bf16.mxu0 %v2780
        %3713 = vmatpush1.bf16.msra.mxu0 %v2779
        %3714 = vmatprep.subr.bf16.mxu0 %v2788
        %3715 = vmatpush1.bf16.msra.mxu0 %v2787
        %3716 = vmatprep.subr.bf16.mxu0 %v2796
        %3717 = vmatpush1.bf16.msra.mxu0 %v2795
        %3718 = vmatprep.subr.bf16.mxu0 %v2804
        %3719 = vmatpush1.bf16.msra.mxu0 %v2803
        %3720 = vmatprep.subr.bf16.mxu0 %v2812
        %3721 = vmatpush1.bf16.msra.mxu0 %v2811
        %3722 = vmatprep.subr.bf16.mxu0 %v2820
        %3723 = vmatpush1.bf16.msra.mxu0 %v2819
        %3724 = vmatprep.subr.bf16.mxu0 %v2828
        %3725 = vmatpush1.bf16.msra.mxu0 %v2827
        %3726 = vmatprep.subr.bf16.mxu0 %v2836
        %3727 = vmatpush1.bf16.msra.mxu0 %v2835
        %3728 = vmatprep.subr.bf16.mxu0 %v2844
        %3729 = vmatpush1.bf16.msra.mxu0 %v2843
        %3730 = vmatprep.subr.bf16.mxu0 %v2852
        %3731 = vmatpush1.bf16.msra.mxu0 %v2851
        %3732 = vmatprep.subr.bf16.mxu0 %v2860
        %3733 = vmatpush1.bf16.msra.mxu0 %v2859
        %3734 = vmatprep.subr.bf16.mxu0 %v2868
        %3735 = vmatpush1.bf16.msra.mxu0 %v2867
        %3736 = vmatprep.subr.bf16.mxu0 %v2876
        %3737 = vmatpush1.bf16.msra.mxu0 %v2875
        %3738 = vmatprep.subr.bf16.mxu0 %v2884
        %3739 = vmatpush1.bf16.msra.mxu0 %v2883
        %3740 = vmatprep.subr.bf16.mxu0 %v2892
        %3741 = vmatpush1.bf16.msra.mxu0 %v2891
        %3742 = vmatprep.mubr.bf16.mxu0 %v840
        %3743 = vmatmul.mubr.bf16.gmra.mrb[0].mxu0 %v839
        %v3744 = vpop.f32.mrb[0].mxu0
        %v3745 = vadd.f32 %v3702, %v3744
        %v3746 = vpop.f32.mrb[0].mxu0
        %v3747 = vadd.f32 %v3704, %v3746
        %v3748 = vpop.f32.mrb[0].mxu0
        %v3749 = vadd.f32 %v3706, %v3748
        %v3750 = vpop.f32.mrb[0].mxu0
        %v3751 = vadd.f32 %v3708, %v3750
        %3752 = vdwg.mxu0
        %3753 = vmatprep.subr.bf16.mxu0 %v2390
        %3754 = vmatpush1.bf16.msra.mxu0 %v2389
        %3755 = vmatprep.subr.bf16.mxu0 %v2398
        %3756 = vmatpush1.bf16.msra.mxu0 %v2397
        %3757 = vmatprep.subr.bf16.mxu0 %v2406
        %3758 = vmatpush1.bf16.msra.mxu0 %v2405
        %3759 = vmatprep.subr.bf16.mxu0 %v2414
        %3760 = vmatpush1.bf16.msra.mxu0 %v2413
        %3761 = vmatprep.subr.bf16.mxu0 %v2422
        %3762 = vmatpush1.bf16.msra.mxu0 %v2421
        %3763 = vmatprep.subr.bf16.mxu0 %v2430
        %3764 = vmatpush1.bf16.msra.mxu0 %v2429
        %3765 = vmatprep.subr.bf16.mxu0 %v2438
        %3766 = vmatpush1.bf16.msra.mxu0 %v2437
        %3767 = vmatprep.subr.bf16.mxu0 %v2446
        %3768 = vmatpush1.bf16.msra.mxu0 %v2445
        %3769 = vmatprep.subr.bf16.mxu0 %v2454
        %3770 = vmatpush1.bf16.msra.mxu0 %v2453
        %3771 = vmatprep.subr.bf16.mxu0 %v2462
        %3772 = vmatpush1.bf16.msra.mxu0 %v2461
        %3773 = vmatprep.subr.bf16.mxu0 %v2470
        %3774 = vmatpush1.bf16.msra.mxu0 %v2469
        %3775 = vmatprep.subr.bf16.mxu0 %v2478
        %3776 = vmatpush1.bf16.msra.mxu0 %v2477
        %3777 = vmatprep.subr.bf16.mxu0 %v2486
        %3778 = vmatpush1.bf16.msra.mxu0 %v2485
        %3779 = vmatprep.subr.bf16.mxu0 %v2494
        %3780 = vmatpush1.bf16.msra.mxu0 %v2493
        %3781 = vmatprep.subr.bf16.mxu0 %v2502
        %3782 = vmatpush1.bf16.msra.mxu0 %v2501
        %3783 = vmatprep.subr.bf16.mxu0 %v2510
        %3784 = vmatpush1.bf16.msra.mxu0 %v2509
        %3785 = vmatprep.mubr.bf16.mxu0 %v834
        %3786 = vmatmul.mubr.bf16.gmra.mrb[0].mxu0 %v833
        %v3787 = vpop.f32.mrb[0].mxu0
        %v3788 = vadd.f32 0.0, %v3787
        %v3789 = vpop.f32.mrb[0].mxu0
        %v3790 = vadd.f32 0.0, %v3789
        %v3791 = vpop.f32.mrb[0].mxu0
        %v3792 = vadd.f32 0.0, %v3791
        %v3793 = vpop.f32.mrb[0].mxu0
        %v3794 = vadd.f32 0.0, %v3793
        %3795 = vdwg.mxu0
        %3796 = vmatprep.subr.bf16.mxu0 %v2518
        %3797 = vmatpush1.bf16.msra.mxu0 %v2517
        %3798 = vmatprep.subr.bf16.mxu0 %v2526
        %3799 = vmatpush1.bf16.msra.mxu0 %v2525
        %3800 = vmatprep.subr.bf16.mxu0 %v2534
        %3801 = vmatpush1.bf16.msra.mxu0 %v2533
        %3802 = vmatprep.subr.bf16.mxu0 %v2542
        %3803 = vmatpush1.bf16.msra.mxu0 %v2541
        %3804 = vmatprep.subr.bf16.mxu0 %v2550
        %3805 = vmatpush1.bf16.msra.mxu0 %v2549
        %3806 = vmatprep.subr.bf16.mxu0 %v2558
        %3807 = vmatpush1.bf16.msra.mxu0 %v2557
        %3808 = vmatprep.subr.bf16.mxu0 %v2566
        %3809 = vmatpush1.bf16.msra.mxu0 %v2565
        %3810 = vmatprep.subr.bf16.mxu0 %v2574
        %3811 = vmatpush1.bf16.msra.mxu0 %v2573
        %3812 = vmatprep.subr.bf16.mxu0 %v2582
        %3813 = vmatpush1.bf16.msra.mxu0 %v2581
        %3814 = vmatprep.subr.bf16.mxu0 %v2590
        %3815 = vmatpush1.bf16.msra.mxu0 %v2589
        %3816 = vmatprep.subr.bf16.mxu0 %v2598
        %3817 = vmatpush1.bf16.msra.mxu0 %v2597
        %3818 = vmatprep.subr.bf16.mxu0 %v2606
        %3819 = vmatpush1.bf16.msra.mxu0 %v2605
        %3820 = vmatprep.subr.bf16.mxu0 %v2614
        %3821 = vmatpush1.bf16.msra.mxu0 %v2613
        %3822 = vmatprep.subr.bf16.mxu0 %v2622
        %3823 = vmatpush1.bf16.msra.mxu0 %v2621
        %3824 = vmatprep.subr.bf16.mxu0 %v2630
        %3825 = vmatpush1.bf16.msra.mxu0 %v2629
        %3826 = vmatprep.subr.bf16.mxu0 %v2638
        %3827 = vmatpush1.bf16.msra.mxu0 %v2637
        %3828 = vmatprep.mubr.bf16.mxu0 %v836
        %3829 = vmatmul.mubr.bf16.gmra.mrb[0].mxu0 %v835
        %v3830 = vpop.f32.mrb[0].mxu0
        %v3831 = vadd.f32 %v3788, %v3830
        %v3832 = vpop.f32.mrb[0].mxu0
        %v3833 = vadd.f32 %v3790, %v3832
        %v3834 = vpop.f32.mrb[0].mxu0
        %v3835 = vadd.f32 %v3792, %v3834
        %v3836 = vpop.f32.mrb[0].mxu0
        %v3837 = vadd.f32 %v3794, %v3836
        %3838 = vdwg.mxu0
        %3839 = vmatprep.subr.bf16.mxu0 %v2646
        %3840 = vmatpush1.bf16.msra.mxu0 %v2645
        %3841 = vmatprep.subr.bf16.mxu0 %v2654
        %3842 = vmatpush1.bf16.msra.mxu0 %v2653
        %3843 = vmatprep.subr.bf16.mxu0 %v2662
        %3844 = vmatpush1.bf16.msra.mxu0 %v2661
        %3845 = vmatprep.subr.bf16.mxu0 %v2670
        %3846 = vmatpush1.bf16.msra.mxu0 %v2669
        %3847 = vmatprep.subr.bf16.mxu0 %v2678
        %3848 = vmatpush1.bf16.msra.mxu0 %v2677
        %3849 = vmatprep.subr.bf16.mxu0 %v2686
        %3850 = vmatpush1.bf16.msra.mxu0 %v2685
        %3851 = vmatprep.subr.bf16.mxu0 %v2694
        %3852 = vmatpush1.bf16.msra.mxu0 %v2693
        %3853 = vmatprep.subr.bf16.mxu0 %v2702
        %3854 = vmatpush1.bf16.msra.mxu0 %v2701
        %3855 = vmatprep.subr.bf16.mxu0 %v2710
        %3856 = vmatpush1.bf16.msra.mxu0 %v2709
        %3857 = vmatprep.subr.bf16.mxu0 %v2718
        %3858 = vmatpush1.bf16.msra.mxu0 %v2717
        %3859 = vmatprep.subr.bf16.mxu0 %v2726
        %3860 = vmatpush1.bf16.msra.mxu0 %v2725
        %3861 = vmatprep.subr.bf16.mxu0 %v2734
        %3862 = vmatpush1.bf16.msra.mxu0 %v2733
        %3863 = vmatprep.subr.bf16.mxu0 %v2742
        %3864 = vmatpush1.bf16.msra.mxu0 %v2741
        %3865 = vmatprep.subr.bf16.mxu0 %v2750
        %3866 = vmatpush1.bf16.msra.mxu0 %v2749
        %3867 = vmatprep.subr.bf16.mxu0 %v2758
        %3868 = vmatpush1.bf16.msra.mxu0 %v2757
        %3869 = vmatprep.subr.bf16.mxu0 %v2766
        %3870 = vmatpush1.bf16.msra.mxu0 %v2765
        %3871 = vmatprep.mubr.bf16.mxu0 %v838
        %3872 = vmatmul.mubr.bf16.gmra.mrb[0].mxu0 %v837
        %v3873 = vpop.f32.mrb[0].mxu0
        %v3874 = vadd.f32 %v3831, %v3873
        %v3875 = vpop.f32.mrb[0].mxu0
        %v3876 = vadd.f32 %v3833, %v3875
        %v3877 = vpop.f32.mrb[0].mxu0
        %v3878 = vadd.f32 %v3835, %v3877
        %v3879 = vpop.f32.mrb[0].mxu0
        %v3880 = vadd.f32 %v3837, %v3879
        %3881 = vdwg.mxu0
        %3882 = vmatprep.subr.bf16.mxu0 %v2774
        %3883 = vmatpush1.bf16.msra.mxu0 %v2773
        %3884 = vmatprep.subr.bf16.mxu0 %v2782
        %3885 = vmatpush1.bf16.msra.mxu0 %v2781
        %3886 = vmatprep.subr.bf16.mxu0 %v2790
        %3887 = vmatpush1.bf16.msra.mxu0 %v2789
        %3888 = vmatprep.subr.bf16.mxu0 %v2798
        %3889 = vmatpush1.bf16.msra.mxu0 %v2797
        %3890 = vmatprep.subr.bf16.mxu0 %v2806
        %3891 = vmatpush1.bf16.msra.mxu0 %v2805
        %3892 = vmatprep.subr.bf16.mxu0 %v2814
        %3893 = vmatpush1.bf16.msra.mxu0 %v2813
        %3894 = vmatprep.subr.bf16.mxu0 %v2822
        %3895 = vmatpush1.bf16.msra.mxu0 %v2821
        %3896 = vmatprep.subr.bf16.mxu0 %v2830
        %3897 = vmatpush1.bf16.msra.mxu0 %v2829
        %3898 = vmatprep.subr.bf16.mxu0 %v2838
        %3899 = vmatpush1.bf16.msra.mxu0 %v2837
        %3900 = vmatprep.subr.bf16.mxu0 %v2846
        %3901 = vmatpush1.bf16.msra.mxu0 %v2845
        %3902 = vmatprep.subr.bf16.mxu0 %v2854
        %3903 = vmatpush1.bf16.msra.mxu0 %v2853
        %3904 = vmatprep.subr.bf16.mxu0 %v2862
        %3905 = vmatpush1.bf16.msra.mxu0 %v2861
        %3906 = vmatprep.subr.bf16.mxu0 %v2870
        %3907 = vmatpush1.bf16.msra.mxu0 %v2869
        %3908 = vmatprep.subr.bf16.mxu0 %v2878
        %3909 = vmatpush1.bf16.msra.mxu0 %v2877
        %3910 = vmatprep.subr.bf16.mxu0 %v2886
        %3911 = vmatpush1.bf16.msra.mxu0 %v2885
        %3912 = vmatprep.subr.bf16.mxu0 %v2894
        %3913 = vmatpush1.bf16.msra.mxu0 %v2893
        %3914 = vmatprep.mubr.bf16.mxu0 %v840
        %3915 = vmatmul.mubr.bf16.gmra.mrb[0].mxu0 %v839
        %v3916 = vpop.f32.mrb[0].mxu0
        %v3917 = vadd.f32 %v3874, %v3916
        %v3918 = vpop.f32.mrb[0].mxu0
        %v3919 = vadd.f32 %v3876, %v3918
        %v3920 = vpop.f32.mrb[0].mxu0
        %v3921 = vadd.f32 %v3878, %v3920
        %v3922 = vpop.f32.mrb[0].mxu0
        %v3923 = vadd.f32 %v3880, %v3922
        %3924 = vdwg.mxu0
        %3925 = vmatprep.subr.bf16.mxu0 %v2392
        %3926 = vmatpush1.bf16.msra.mxu0 %v2391
        %3927 = vmatprep.subr.bf16.mxu0 %v2400
        %3928 = vmatpush1.bf16.msra.mxu0 %v2399
        %3929 = vmatprep.subr.bf16.mxu0 %v2408
        %3930 = vmatpush1.bf16.msra.mxu0 %v2407
        %3931 = vmatprep.subr.bf16.mxu0 %v2416
        %3932 = vmatpush1.bf16.msra.mxu0 %v2415
        %3933 = vmatprep.subr.bf16.mxu0 %v2424
        %3934 = vmatpush1.bf16.msra.mxu0 %v2423
        %3935 = vmatprep.subr.bf16.mxu0 %v2432
        %3936 = vmatpush1.bf16.msra.mxu0 %v2431
        %3937 = vmatprep.subr.bf16.mxu0 %v2440
        %3938 = vmatpush1.bf16.msra.mxu0 %v2439
        %3939 = vmatprep.subr.bf16.mxu0 %v2448
        %3940 = vmatpush1.bf16.msra.mxu0 %v2447
        %3941 = vmatprep.subr.bf16.mxu0 %v2456
        %3942 = vmatpush1.bf16.msra.mxu0 %v2455
        %3943 = vmatprep.subr.bf16.mxu0 %v2464
        %3944 = vmatpush1.bf16.msra.mxu0 %v2463
        %3945 = vmatprep.subr.bf16.mxu0 %v2472
        %3946 = vmatpush1.bf16.msra.mxu0 %v2471
        %3947 = vmatprep.subr.bf16.mxu0 %v2480
        %3948 = vmatpush1.bf16.msra.mxu0 %v2479
        %3949 = vmatprep.subr.bf16.mxu0 %v2488
        %3950 = vmatpush1.bf16.msra.mxu0 %v2487
        %3951 = vmatprep.subr.bf16.mxu0 %v2496
        %3952 = vmatpush1.bf16.msra.mxu0 %v2495
        %3953 = vmatprep.subr.bf16.mxu0 %v2504
        %3954 = vmatpush1.bf16.msra.mxu0 %v2503
        %3955 = vmatprep.subr.bf16.mxu0 %v2512
        %3956 = vmatpush1.bf16.msra.mxu0 %v2511
        %3957 = vmatprep.mubr.bf16.mxu0 %v834
        %3958 = vmatmul.mubr.bf16.gmra.mrb[0].mxu0 %v833
        %v3959 = vpop.f32.mrb[0].mxu0
        %v3960 = vadd.f32 0.0, %v3959
        %v3961 = vpop.f32.mrb[0].mxu0
        %v3962 = vadd.f32 0.0, %v3961
        %v3963 = vpop.f32.mrb[0].mxu0
        %v3964 = vadd.f32 0.0, %v3963
        %v3965 = vpop.f32.mrb[0].mxu0
        %v3966 = vadd.f32 0.0, %v3965
        %3967 = vdwg.mxu0
        %3968 = vmatprep.subr.bf16.mxu0 %v2520
        %3969 = vmatpush1.bf16.msra.mxu0 %v2519
        %3970 = vmatprep.subr.bf16.mxu0 %v2528
        %3971 = vmatpush1.bf16.msra.mxu0 %v2527
        %3972 = vmatprep.subr.bf16.mxu0 %v2536
        %3973 = vmatpush1.bf16.msra.mxu0 %v2535
        %3974 = vmatprep.subr.bf16.mxu0 %v2544
        %3975 = vmatpush1.bf16.msra.mxu0 %v2543
        %3976 = vmatprep.subr.bf16.mxu0 %v2552
        %3977 = vmatpush1.bf16.msra.mxu0 %v2551
        %3978 = vmatprep.subr.bf16.mxu0 %v2560
        %3979 = vmatpush1.bf16.msra.mxu0 %v2559
        %3980 = vmatprep.subr.bf16.mxu0 %v2568
        %3981 = vmatpush1.bf16.msra.mxu0 %v2567
        %3982 = vmatprep.subr.bf16.mxu0 %v2576
        %3983 = vmatpush1.bf16.msra.mxu0 %v2575
        %3984 = vmatprep.subr.bf16.mxu0 %v2584
        %3985 = vmatpush1.bf16.msra.mxu0 %v2583
        %3986 = vmatprep.subr.bf16.mxu0 %v2592
        %3987 = vmatpush1.bf16.msra.mxu0 %v2591
        %3988 = vmatprep.subr.bf16.mxu0 %v2600
        %3989 = vmatpush1.bf16.msra.mxu0 %v2599
        %3990 = vmatprep.subr.bf16.mxu0 %v2608
        %3991 = vmatpush1.bf16.msra.mxu0 %v2607
        %3992 = vmatprep.subr.bf16.mxu0 %v2616
        %3993 = vmatpush1.bf16.msra.mxu0 %v2615
        %3994 = vmatprep.subr.bf16.mxu0 %v2624
        %3995 = vmatpush1.bf16.msra.mxu0 %v2623
        %3996 = vmatprep.subr.bf16.mxu0 %v2632
        %3997 = vmatpush1.bf16.msra.mxu0 %v2631
        %3998 = vmatprep.subr.bf16.mxu0 %v2640
        %3999 = vmatpush1.bf16.msra.mxu0 %v2639
        %4000 = vmatprep.mubr.bf16.mxu0 %v836
        %4001 = vmatmul.mubr.bf16.gmra.mrb[0].mxu0 %v835
        %v4002 = vpop.f32.mrb[0].mxu0
        %v4003 = vadd.f32 %v3960, %v4002
        %v4004 = vpop.f32.mrb[0].mxu0
        %v4005 = vadd.f32 %v3962, %v4004
        %v4006 = vpop.f32.mrb[0].mxu0
        %v4007 = vadd.f32 %v3964, %v4006
        %v4008 = vpop.f32.mrb[0].mxu0
        %v4009 = vadd.f32 %v3966, %v4008
        %4010 = vdwg.mxu0
        %4011 = vmatprep.subr.bf16.mxu0 %v2648
        %4012 = vmatpush1.bf16.msra.mxu0 %v2647
        %4013 = vmatprep.subr.bf16.mxu0 %v2656
        %4014 = vmatpush1.bf16.msra.mxu0 %v2655
        %4015 = vmatprep.subr.bf16.mxu0 %v2664
        %4016 = vmatpush1.bf16.msra.mxu0 %v2663
        %4017 = vmatprep.subr.bf16.mxu0 %v2672
        %4018 = vmatpush1.bf16.msra.mxu0 %v2671
        %4019 = vmatprep.subr.bf16.mxu0 %v2680
        %4020 = vmatpush1.bf16.msra.mxu0 %v2679
        %4021 = vmatprep.subr.bf16.mxu0 %v2688
        %4022 = vmatpush1.bf16.msra.mxu0 %v2687
        %4023 = vmatprep.subr.bf16.mxu0 %v2696
        %4024 = vmatpush1.bf16.msra.mxu0 %v2695
        %4025 = vmatprep.subr.bf16.mxu0 %v2704
        %4026 = vmatpush1.bf16.msra.mxu0 %v2703
        %4027 = vmatprep.subr.bf16.mxu0 %v2712
        %4028 = vmatpush1.bf16.msra.mxu0 %v2711
        %4029 = vmatprep.subr.bf16.mxu0 %v2720
        %4030 = vmatpush1.bf16.msra.mxu0 %v2719
        %4031 = vmatprep.subr.bf16.mxu0 %v2728
        %4032 = vmatpush1.bf16.msra.mxu0 %v2727
        %4033 = vmatprep.subr.bf16.mxu0 %v2736
        %4034 = vmatpush1.bf16.msra.mxu0 %v2735
        %4035 = vmatprep.subr.bf16.mxu0 %v2744
        %4036 = vmatpush1.bf16.msra.mxu0 %v2743
        %4037 = vmatprep.subr.bf16.mxu0 %v2752
        %4038 = vmatpush1.bf16.msra.mxu0 %v2751
        %4039 = vmatprep.subr.bf16.mxu0 %v2760
        %4040 = vmatpush1.bf16.msra.mxu0 %v2759
        %4041 = vmatprep.subr.bf16.mxu0 %v2768
        %4042 = vmatpush1.bf16.msra.mxu0 %v2767
        %4043 = vmatprep.mubr.bf16.mxu0 %v838
        %4044 = vmatmul.mubr.bf16.gmra.mrb[0].mxu0 %v837
        %v4045 = vpop.f32.mrb[0].mxu0
        %v4046 = vadd.f32 %v4003, %v4045
        %v4047 = vpop.f32.mrb[0].mxu0
        %v4048 = vadd.f32 %v4005, %v4047
        %v4049 = vpop.f32.mrb[0].mxu0
        %v4050 = vadd.f32 %v4007, %v4049
        %v4051 = vpop.f32.mrb[0].mxu0
        %v4052 = vadd.f32 %v4009, %v4051
        %4053 = vdwg.mxu0
        %4054 = vmatprep.subr.bf16.mxu0 %v2776
        %4055 = vmatpush1.bf16.msra.mxu0 %v2775
        %4056 = vmatprep.subr.bf16.mxu0 %v2784
        %4057 = vmatpush1.bf16.msra.mxu0 %v2783
        %4058 = vmatprep.subr.bf16.mxu0 %v2792
        %4059 = vmatpush1.bf16.msra.mxu0 %v2791
        %4060 = vmatprep.subr.bf16.mxu0 %v2800
        %4061 = vmatpush1.bf16.msra.mxu0 %v2799
        %4062 = vmatprep.subr.bf16.mxu0 %v2808
        %4063 = vmatpush1.bf16.msra.mxu0 %v2807
        %4064 = vmatprep.subr.bf16.mxu0 %v2816
        %4065 = vmatpush1.bf16.msra.mxu0 %v2815
        %4066 = vmatprep.subr.bf16.mxu0 %v2824
        %4067 = vmatpush1.bf16.msra.mxu0 %v2823
        %4068 = vmatprep.subr.bf16.mxu0 %v2832
        %4069 = vmatpush1.bf16.msra.mxu0 %v2831
        %4070 = vmatprep.subr.bf16.mxu0 %v2840
        %4071 = vmatpush1.bf16.msra.mxu0 %v2839
        %4072 = vmatprep.subr.bf16.mxu0 %v2848
        %4073 = vmatpush1.bf16.msra.mxu0 %v2847
        %4074 = vmatprep.subr.bf16.mxu0 %v2856
        %4075 = vmatpush1.bf16.msra.mxu0 %v2855
        %4076 = vmatprep.subr.bf16.mxu0 %v2864
        %4077 = vmatpush1.bf16.msra.mxu0 %v2863
        %4078 = vmatprep.subr.bf16.mxu0 %v2872
        %4079 = vmatpush1.bf16.msra.mxu0 %v2871
        %4080 = vmatprep.subr.bf16.mxu0 %v2880
        %4081 = vmatpush1.bf16.msra.mxu0 %v2879
        %4082 = vmatprep.subr.bf16.mxu0 %v2888
        %4083 = vmatpush1.bf16.msra.mxu0 %v2887
        %4084 = vmatprep.subr.bf16.mxu0 %v2896
        %4085 = vmatpush1.bf16.msra.mxu0 %v2895
        %4086 = vmatprep.mubr.bf16.mxu0 %v840
        %4087 = vmatmul.mubr.bf16.gmra.mrb[0].mxu0 %v839
        %v4088 = vpop.f32.mrb[0].mxu0
        %v4089 = vadd.f32 %v4046, %v4088
        %v4090 = vpop.f32.mrb[0].mxu0
        %v4091 = vadd.f32 %v4048, %v4090
        %v4092 = vpop.f32.mrb[0].mxu0
        %v4093 = vadd.f32 %v4050, %v4092
        %v4094 = vpop.f32.mrb[0].mxu0
        %v4095 = vadd.f32 %v4052, %v4094
        %4096 = vdwg.mxu0
        %v4097 = vadd.f32 %v3573, %v3577
        %v4098 = vrot.slane %v4097, 4
        %v4099 = vadd.f32 %v4097, %v4098
        %v4100 = vrot.slane %v4099, 2
        %v4101 = vadd.f32 %v4099, %v4100
        %v4102 = vrot.slane %v4101, 1
        %v4103 = vadd.f32 %v4101, %v4102
        %v4104 = vadd.f32 %v3575, %v3579
        %v4105 = vrot.slane %v4104, 4
        %v4106 = vadd.f32 %v4104, %v4105
        %v4107 = vrot.slane %v4106, 2
        %v4108 = vadd.f32 %v4106, %v4107
        %v4109 = vrot.slane %v4108, 1
        %v4110 = vadd.f32 %v4108, %v4109
        %v4111 = vadd.f32 %v3745, %v3749
        %v4112 = vrot.slane %v4111, 4
        %v4113 = vadd.f32 %v4111, %v4112
        %v4114 = vrot.slane %v4113, 2
        %v4115 = vadd.f32 %v4113, %v4114
        %v4116 = vrot.slane %v4115, 1
        %v4117 = vadd.f32 %v4115, %v4116
        %v4118 = vadd.f32 %v3747, %v3751
        %v4119 = vrot.slane %v4118, 4
        %v4120 = vadd.f32 %v4118, %v4119
        %v4121 = vrot.slane %v4120, 2
        %v4122 = vadd.f32 %v4120, %v4121
        %v4123 = vrot.slane %v4122, 1
        %v4124 = vadd.f32 %v4122, %v4123
        %v4125 = vadd.f32 %v3917, %v3921
        %v4126 = vrot.slane %v4125, 4
        %v4127 = vadd.f32 %v4125, %v4126
        %v4128 = vrot.slane %v4127, 2
        %v4129 = vadd.f32 %v4127, %v4128
        %v4130 = vrot.slane %v4129, 1
        %v4131 = vadd.f32 %v4129, %v4130
        %v4132 = vadd.f32 %v3919, %v3923
        %v4133 = vrot.slane %v4132, 4
        %v4134 = vadd.f32 %v4132, %v4133
        %v4135 = vrot.slane %v4134, 2
        %v4136 = vadd.f32 %v4134, %v4135
        %v4137 = vrot.slane %v4136, 1
        %v4138 = vadd.f32 %v4136, %v4137
        %v4139 = vadd.f32 %v4089, %v4093
        %v4140 = vrot.slane %v4139, 4
        %v4141 = vadd.f32 %v4139, %v4140
        %v4142 = vrot.slane %v4141, 2
        %v4143 = vadd.f32 %v4141, %v4142
        %v4144 = vrot.slane %v4143, 1
        %v4145 = vadd.f32 %v4143, %v4144
        %v4146 = vadd.f32 %v4091, %v4095
        %v4147 = vrot.slane %v4146, 4
        %v4148 = vadd.f32 %v4146, %v4147
        %v4149 = vrot.slane %v4148, 2
        %v4150 = vadd.f32 %v4148, %v4149
        %v4151 = vrot.slane %v4150, 1
        %v4152 = vadd.f32 %v4150, %v4151
        %v4153 = vmul.f32 %v3573, %v3573
        %v4154 = vmul.f32 %v3575, %v3575
        %v4155 = vmul.f32 %v3745, %v3745
        %v4156 = vmul.f32 %v3747, %v3747
        %v4157 = vmul.f32 %v3917, %v3917
        %v4158 = vmul.f32 %v3919, %v3919
        %v4159 = vmul.f32 %v4089, %v4089
        %v4160 = vmul.f32 %v4091, %v4091
        %v4161 = vmul.f32 %v3577, %v3577
        %v4162 = vmul.f32 %v3579, %v3579
        %v4163 = vmul.f32 %v3749, %v3749
        %v4164 = vmul.f32 %v3751, %v3751
        %v4165 = vmul.f32 %v3921, %v3921
        %v4166 = vmul.f32 %v3923, %v3923
        %v4167 = vmul.f32 %v4093, %v4093
        %v4168 = vmul.f32 %v4095, %v4095
        %v4169 = vadd.f32 %v4153, %v4161
        %v4170 = vrot.slane %v4169, 4
        %v4171 = vadd.f32 %v4169, %v4170
        %v4172 = vrot.slane %v4171, 2
        %v4173 = vadd.f32 %v4171, %v4172
        %v4174 = vrot.slane %v4173, 1
        %v4175 = vadd.f32 %v4173, %v4174
        %v4176 = vadd.f32 %v4154, %v4162
        %v4177 = vrot.slane %v4176, 4
        %v4178 = vadd.f32 %v4176, %v4177
        %v4179 = vrot.slane %v4178, 2
        %v4180 = vadd.f32 %v4178, %v4179
        %v4181 = vrot.slane %v4180, 1
        %v4182 = vadd.f32 %v4180, %v4181
        %v4183 = vadd.f32 %v4155, %v4163
        %v4184 = vrot.slane %v4183, 4
        %v4185 = vadd.f32 %v4183, %v4184
        %v4186 = vrot.slane %v4185, 2
        %v4187 = vadd.f32 %v4185, %v4186
        %v4188 = vrot.slane %v4187, 1
        %v4189 = vadd.f32 %v4187, %v4188
        %v4190 = vadd.f32 %v4156, %v4164
        %v4191 = vrot.slane %v4190, 4
        %v4192 = vadd.f32 %v4190, %v4191
        %v4193 = vrot.slane %v4192, 2
        %v4194 = vadd.f32 %v4192, %v4193
        %v4195 = vrot.slane %v4194, 1
        %v4196 = vadd.f32 %v4194, %v4195
        %v4197 = vadd.f32 %v4157, %v4165
        %v4198 = vrot.slane %v4197, 4
        %v4199 = vadd.f32 %v4197, %v4198
        %v4200 = vrot.slane %v4199, 2
        %v4201 = vadd.f32 %v4199, %v4200
        %v4202 = vrot.slane %v4201, 1
        %v4203 = vadd.f32 %v4201, %v4202
        %v4204 = vadd.f32 %v4158, %v4166
        %v4205 = vrot.slane %v4204, 4
        %v4206 = vadd.f32 %v4204, %v4205
        %v4207 = vrot.slane %v4206, 2
        %v4208 = vadd.f32 %v4206, %v4207
        %v4209 = vrot.slane %v4208, 1
        %v4210 = vadd.f32 %v4208, %v4209
        %v4211 = vadd.f32 %v4159, %v4167
        %v4212 = vrot.slane %v4211, 4
        %v4213 = vadd.f32 %v4211, %v4212
        %v4214 = vrot.slane %v4213, 2
        %v4215 = vadd.f32 %v4213, %v4214
        %v4216 = vrot.slane %v4215, 1
        %v4217 = vadd.f32 %v4215, %v4216
        %v4218 = vadd.f32 %v4160, %v4168
        %v4219 = vrot.slane %v4218, 4
        %v4220 = vadd.f32 %v4218, %v4219
        %v4221 = vrot.slane %v4220, 2
        %v4222 = vadd.f32 %v4220, %v4221
        %v4223 = vrot.slane %v4222, 1
        %v4224 = vadd.f32 %v4222, %v4223
        %v4225 = vrcp.pop 8.0
        %v4226 = vmul.f32 %v4103, %v4225
        %v4227 = vmul.f32 %v4110, %v4225
        %v4228 = vmul.f32 %v4117, %v4225
        %v4229 = vmul.f32 %v4124, %v4225
        %v4230 = vmul.f32 %v4131, %v4225
        %v4231 = vmul.f32 %v4138, %v4225
        %v4232 = vmul.f32 %v4145, %v4225
        %v4233 = vmul.f32 %v4152, %v4225
        %v4234 = vmul.f32 %v4175, %v4225
        %v4235 = vmul.f32 %v4182, %v4225
        %v4236 = vmul.f32 %v4189, %v4225
        %v4237 = vmul.f32 %v4196, %v4225
        %v4238 = vmul.f32 %v4203, %v4225
        %v4239 = vmul.f32 %v4210, %v4225
        %v4240 = vmul.f32 %v4217, %v4225
        %v4241 = vmul.f32 %v4224, %v4225
        %v4242 = vmul.f32 %v4226, %v4226
        %v4243 = vmul.f32 %v4227, %v4227
        %v4244 = vmul.f32 %v4228, %v4228
        %v4245 = vmul.f32 %v4229, %v4229
        %v4246 = vmul.f32 %v4230, %v4230
        %v4247 = vmul.f32 %v4231, %v4231
        %v4248 = vmul.f32 %v4232, %v4232
        %v4249 = vmul.f32 %v4233, %v4233
        %v4250 = vsub.f32 %v4234, %v4242
        %v4251 = vsub.f32 %v4235, %v4243
        %v4252 = vsub.f32 %v4236, %v4244
        %v4253 = vsub.f32 %v4237, %v4245
        %v4254 = vsub.f32 %v4238, %v4246
        %v4255 = vsub.f32 %v4239, %v4247
        %v4256 = vsub.f32 %v4240, %v4248
        %v4257 = vsub.f32 %v4241, %v4249
        %v4258 = vmax.f32 %v4250, 0.0
        %v4259 = vmax.f32 %v4251, 0.0
        %v4260 = vmax.f32 %v4252, 0.0
        %v4261 = vmax.f32 %v4253, 0.0
        %v4262 = vmax.f32 %v4254, 0.0
        %v4263 = vmax.f32 %v4255, 0.0
        %v4264 = vmax.f32 %v4256, 0.0
        %v4265 = vmax.f32 %v4257, 0.0
        %v4266 = vadd.f32 %v4258, 1e-05
        %v4267 = vadd.f32 %v4259, 1e-05
        %v4268 = vadd.f32 %v4260, 1e-05
        %v4269 = vadd.f32 %v4261, 1e-05
        %v4270 = vadd.f32 %v4262, 1e-05
        %v4271 = vadd.f32 %v4263, 1e-05
        %v4272 = vadd.f32 %v4264, 1e-05
        %v4273 = vadd.f32 %v4265, 1e-05
        %v4274 = vrsqrt.pop %v4266
        %v4275 = vrsqrt.pop %v4267
        %v4276 = vrsqrt.pop %v4268
        %v4277 = vrsqrt.pop %v4269
        %v4278 = vrsqrt.pop %v4270
        %v4279 = vrsqrt.pop %v4271
        %v4280 = vrsqrt.pop %v4272
        %v4281 = vrsqrt.pop %v4273
        %v4282 = vsub.f32 %v3573, %v4226
        %v4283 = vsub.f32 %v3575, %v4227
        %v4284 = vsub.f32 %v3745, %v4228
        %v4285 = vsub.f32 %v3747, %v4229
        %v4286 = vsub.f32 %v3917, %v4230
        %v4287 = vsub.f32 %v3919, %v4231
        %v4288 = vsub.f32 %v4089, %v4232
        %v4289 = vsub.f32 %v4091, %v4233
        %v4290 = vsub.f32 %v3577, %v4226
        %v4291 = vsub.f32 %v3579, %v4227
        %v4292 = vsub.f32 %v3749, %v4228
        %v4293 = vsub.f32 %v3751, %v4229
        %v4294 = vsub.f32 %v3921, %v4230
        %v4295 = vsub.f32 %v3923, %v4231
        %v4296 = vsub.f32 %v4093, %v4232
        %v4297 = vsub.f32 %v4095, %v4233
        %v4298 = vmul.f32 %v4282, %v4274
        %v4299 = vmul.f32 %v4283, %v4275
        %v4300 = vmul.f32 %v4284, %v4276
        %v4301 = vmul.f32 %v4285, %v4277
        %v4302 = vmul.f32 %v4286, %v4278
        %v4303 = vmul.f32 %v4287, %v4279
        %v4304 = vmul.f32 %v4288, %v4280
        %v4305 = vmul.f32 %v4289, %v4281
        %v4306 = vmul.f32 %v4290, %v4274
        %v4307 = vmul.f32 %v4291, %v4275
        %v4308 = vmul.f32 %v4292, %v4276
        %v4309 = vmul.f32 %v4293, %v4277
        %v4310 = vmul.f32 %v4294, %v4278
        %v4311 = vmul.f32 %v4295, %v4279
        %v4312 = vmul.f32 %v4296, %v4280
        %v4313 = vmul.f32 %v4297, %v4281
        %v4314 = vld [vmem:[%s242] sm:$0xff]
        %v4316 = vlaneseq
        %v4317 = vshrl.u32 %v4316, 7
        %v4318 = vsub.s32 0, %v4317
        %v4319 = vrot.slane %v4314, %v4318
        %v4320 = vlaneseq
        %v4321 = vshrl.u32 %v4320, 7
        %v4322 = vsub.s32 1, %v4321
        %v4323 = vrot.slane %v4314, %v4322
        %v4324 = vlaneseq
        %v4325 = vshrl.u32 %v4324, 7
        %v4326 = vsub.s32 2, %v4325
        %v4327 = vrot.slane %v4314, %v4326
        %v4328 = vlaneseq
        %v4329 = vshrl.u32 %v4328, 7
        %v4330 = vsub.s32 3, %v4329
        %v4331 = vrot.slane %v4314, %v4330
        %v4332 = vlaneseq
        %v4333 = vshrl.u32 %v4332, 7
        %v4334 = vsub.s32 4, %v4333
        %v4335 = vrot.slane %v4314, %v4334
        %v4336 = vlaneseq
        %v4337 = vshrl.u32 %v4336, 7
        %v4338 = vsub.s32 5, %v4337
        %v4339 = vrot.slane %v4314, %v4338
        %v4340 = vlaneseq
        %v4341 = vshrl.u32 %v4340, 7
        %v4342 = vsub.s32 6, %v4341
        %v4343 = vrot.slane %v4314, %v4342
        %v4344 = vlaneseq
        %v4345 = vshrl.u32 %v4344, 7
        %v4346 = vsub.s32 7, %v4345
        %v4347 = vrot.slane %v4314, %v4346
        %v4356 = vmul.f32 %v4298, %v4319
        %v4357 = vmul.f32 %v4299, %v4323
        %v4358 = vmul.f32 %v4300, %v4327
        %v4359 = vmul.f32 %v4301, %v4331
        %v4360 = vmul.f32 %v4302, %v4335
        %v4361 = vmul.f32 %v4303, %v4339
        %v4362 = vmul.f32 %v4304, %v4343
        %v4363 = vmul.f32 %v4305, %v4347
        %v4364 = vmul.f32 %v4306, %v4319
        %v4365 = vmul.f32 %v4307, %v4323
        %v4366 = vmul.f32 %v4308, %v4327
        %v4367 = vmul.f32 %v4309, %v4331
        %v4368 = vmul.f32 %v4310, %v4335
        %v4369 = vmul.f32 %v4311, %v4339
        %v4370 = vmul.f32 %v4312, %v4343
        %v4371 = vmul.f32 %v4313, %v4347
        %v4372 = vld [vmem:[%s251] sm:$0xff]
        %v4374 = vlaneseq
        %v4375 = vshrl.u32 %v4374, 7
        %v4376 = vsub.s32 0, %v4375
        %v4377 = vrot.slane %v4372, %v4376
        %v4378 = vlaneseq
        %v4379 = vshrl.u32 %v4378, 7
        %v4380 = vsub.s32 1, %v4379
        %v4381 = vrot.slane %v4372, %v4380
        %v4382 = vlaneseq
        %v4383 = vshrl.u32 %v4382, 7
        %v4384 = vsub.s32 2, %v4383
        %v4385 = vrot.slane %v4372, %v4384
        %v4386 = vlaneseq
        %v4387 = vshrl.u32 %v4386, 7
        %v4388 = vsub.s32 3, %v4387
        %v4389 = vrot.slane %v4372, %v4388
        %v4390 = vlaneseq
        %v4391 = vshrl.u32 %v4390, 7
        %v4392 = vsub.s32 4, %v4391
        %v4393 = vrot.slane %v4372, %v4392
        %v4394 = vlaneseq
        %v4395 = vshrl.u32 %v4394, 7
        %v4396 = vsub.s32 5, %v4395
        %v4397 = vrot.slane %v4372, %v4396
        %v4398 = vlaneseq
        %v4399 = vshrl.u32 %v4398, 7
        %v4400 = vsub.s32 6, %v4399
        %v4401 = vrot.slane %v4372, %v4400
        %v4402 = vlaneseq
        %v4403 = vshrl.u32 %v4402, 7
        %v4404 = vsub.s32 7, %v4403
        %v4405 = vrot.slane %v4372, %v4404
        %v4414 = vadd.f32 %v4356, %v4377
        %v4415 = vadd.f32 %v4357, %v4381
        %v4416 = vadd.f32 %v4358, %v4385
        %v4417 = vadd.f32 %v4359, %v4389
        %v4418 = vadd.f32 %v4360, %v4393
        %v4419 = vadd.f32 %v4361, %v4397
        %v4420 = vadd.f32 %v4362, %v4401
        %v4421 = vadd.f32 %v4363, %v4405
        %v4422 = vadd.f32 %v4364, %v4377
        %v4423 = vadd.f32 %v4365, %v4381
        %v4424 = vadd.f32 %v4366, %v4385
        %v4425 = vadd.f32 %v4367, %v4389
        %v4426 = vadd.f32 %v4368, %v4393
        %v4427 = vadd.f32 %v4369, %v4397
        %v4428 = vadd.f32 %v4370, %v4401
        %v4429 = vadd.f32 %v4371, %v4405
        %v4430 = vmax.f32 %v4414, 0.0
        %v4431 = vmax.f32 %v4415, 0.0
        %v4432 = vmax.f32 %v4416, 0.0
        %v4433 = vmax.f32 %v4417, 0.0
        %v4434 = vmax.f32 %v4418, 0.0
        %v4435 = vmax.f32 %v4419, 0.0
        %v4436 = vmax.f32 %v4420, 0.0
        %v4437 = vmax.f32 %v4421, 0.0
        %v4438 = vmax.f32 %v4422, 0.0
        %v4439 = vmax.f32 %v4423, 0.0
        %v4440 = vmax.f32 %v4424, 0.0
        %v4441 = vmax.f32 %v4425, 0.0
        %v4442 = vmax.f32 %v4426, 0.0
        %v4443 = vmax.f32 %v4427, 0.0
        %v4444 = vmax.f32 %v4428, 0.0
        %v4445 = vmax.f32 %v4429, 0.0
        %v4446 = vlaneseq
        %v4447 = vshrl.u32 %v4446, 7
        %v4448 = vadd.s32 %v4447, 8
        %vm4449 = vcmp.lt.s32.totalorder %v4447, 8
        %vm4450 = vcmp.lt.s32.totalorder %v4448, 8
        %v4451 = vsel %vm4449, %v4430, 0.0
        %v4452 = vsel %vm4449, %v4431, 0.0
        %v4453 = vsel %vm4449, %v4432, 0.0
        %v4454 = vsel %vm4449, %v4433, 0.0
        %v4455 = vsel %vm4449, %v4434, 0.0
        %v4456 = vsel %vm4449, %v4435, 0.0
        %v4457 = vsel %vm4449, %v4436, 0.0
        %v4458 = vsel %vm4449, %v4437, 0.0
        %v4459 = vsel %vm4450, %v4438, 0.0
        %v4460 = vsel %vm4450, %v4439, 0.0
        %v4461 = vsel %vm4450, %v4440, 0.0
        %v4462 = vsel %vm4450, %v4441, 0.0
        %v4463 = vsel %vm4450, %v4442, 0.0
        %v4464 = vsel %vm4450, %v4443, 0.0
        %v4465 = vsel %vm4450, %v4444, 0.0
        %v4466 = vsel %vm4450, %v4445, 0.0
        %v4467 = vpack.c.bf16 %v4459, %v4451
        %v4468 = vpack.c.bf16 %v4460, %v4452
        %v4469 = vpack.c.bf16 %v4461, %v4453
        %v4470 = vpack.c.bf16 %v4462, %v4454
        %v4471 = vpack.c.bf16 %v4463, %v4455
        %v4472 = vpack.c.bf16 %v4464, %v4456
        %v4473 = vpack.c.bf16 %v4465, %v4457
        %v4474 = vpack.c.bf16 %v4466, %v4458
        %v4483 = vunpack.c.l.b16 %v4467
        %v4484 = vunpack.c.l.b16 %v4468
        %v4485 = vunpack.c.l.b16 %v4469
        %v4486 = vunpack.c.l.b16 %v4470
        %v4487 = vunpack.c.l.b16 %v4471
        %v4488 = vunpack.c.l.b16 %v4472
        %v4489 = vunpack.c.l.b16 %v4473
        %v4490 = vunpack.c.l.b16 %v4474
        %v4491 = vunpack.c.h.b16 %v4467
        %v4492 = vunpack.c.h.b16 %v4468
        %v4493 = vunpack.c.h.b16 %v4469
        %v4494 = vunpack.c.h.b16 %v4470
        %v4495 = vunpack.c.h.b16 %v4471
        %v4496 = vunpack.c.h.b16 %v4472
        %v4497 = vunpack.c.h.b16 %v4473
        %v4498 = vunpack.c.h.b16 %v4474
        %v4499 = vpack.c.b16 %v4484, %v4483
        %v4500 = vpack.c.b16 %v4486, %v4485
        %v4501 = vpack.c.b16 %v4488, %v4487
        %v4502 = vpack.c.b16 %v4490, %v4489
        %v4503 = vpack.c.b16 %v4492, %v4491
        %v4504 = vpack.c.b16 %v4494, %v4493
        %v4505 = vpack.c.b16 %v4496, %v4495
        %v4506 = vpack.c.b16 %v4498, %v4497
        %4515 = vst [vmem:[%s284] sm:$0xff] %v4499
        %4516 = vst [vmem:[%s284 + $0x8] sm:$0xff] %v4500
        %4517 = vst [vmem:[%s284 + $0x10] sm:$0xff] %v4501
        %4518 = vst [vmem:[%s284 + $0x18] sm:$0xff] %v4502
        %4519 = vst [vmem:[%s284 + $0x20] sm:$0xff] %v4503
        %4520 = vst [vmem:[%s284 + $0x28] sm:$0xff] %v4504
        %4521 = vst [vmem:[%s284 + $0x30] sm:$0xff] %v4505
        %4522 = vst [vmem:[%s284 + $0x38] sm:$0xff] %v4506
        %s4523 = sand.u32 %s128, 1
        %s4524 = sand.u32 %s128, 1
        %s4525 = smul.addr %s4524, 64
        %s4526 = scalar_lea.vmem [#allocation7], %s4525
        // Predicated region
        $region49: #{generator_forward.5} parent=35 // pred_check
          %p4527 = pneg %p138
        $region50: #{generator_forward.5} parent=35 // pred_check_branch
          %4529 = sbr.rel (%p4527) target = $region52
        $region51: #{generator_forward.5} parent=35 // pred_region
          %s4530 = smul.u32 8, %s21
          %s4531 = smul.addr %s4530, 4
          %s4532 = scalar_lea.vmem %s4, %s4531
          // Predicated region
          $region53: #{generator_forward.5} parent=51 // pred_check
            _
          $region54: #{generator_forward.5} parent=51 // pred_check_branch
            %4534 = sbr.rel (0) target = $region56
          $region55: #{generator_forward.5} parent=51 // pred_region
            // Predicated region
            $region57: #{generator_forward.5} parent=55 // pred_check
              _
            $region58: #{generator_forward.5} parent=55 // pred_check_branch
              %4536 = sbr.rel (0) target = $region60
            $region59: #{generator_forward.5} parent=55 // pred_region
              loop: start=0, step=1, limit=1
              $region61: #{generator_forward.5} parent=59 // loop_pre_header
                _
              $region62: #{generator_forward.5} parent=59 // loop_header
                %s4538 = sphi 0, %s4542
                %p4539 = scmp.ge.s32.totalorder %s4538, 1
                %s4543 = sphi %s4526, %s4526
                %s4544 = sphi %s4532, %s4532
              $region63: #{generator_forward.5} parent=59 // loop_header_branch
                %4541 = sbr.rel (%p4539) target = $region67
              $region64: #{generator_forward.5} parent=59 // loop_body
                %v4545 = vld [vmem:[%s4543] sm:$0xff]
                %4546 = vst [vmem:[%s4544] sm:$0xff] %v4545
                %v4547 = vld [vmem:[%s4543 + $0x8] sm:$0xff]
                %4548 = vst [vmem:[%s4544 + $0x8] sm:$0xff] %v4547
                %v4549 = vld [vmem:[%s4543 + $0x10] sm:$0xff]
                %4550 = vst [vmem:[%s4544 + $0x10] sm:$0xff] %v4549
                %v4551 = vld [vmem:[%s4543 + $0x18] sm:$0xff]
                %4552 = vst [vmem:[%s4544 + $0x18] sm:$0xff] %v4551
                %v4553 = vld [vmem:[%s4543 + $0x20] sm:$0xff]
                %4554 = vst [vmem:[%s4544 + $0x40] sm:$0xff] %v4553
                %v4555 = vld [vmem:[%s4543 + $0x28] sm:$0xff]
                %4556 = vst [vmem:[%s4544 + $0x48] sm:$0xff] %v4555
                %v4557 = vld [vmem:[%s4543 + $0x30] sm:$0xff]
                %4558 = vst [vmem:[%s4544 + $0x50] sm:$0xff] %v4557
                %v4559 = vld [vmem:[%s4543 + $0x38] sm:$0xff]
                %4560 = vst [vmem:[%s4544 + $0x58] sm:$0xff] %v4559
              $region65: #{generator_forward.5} parent=59 // loop_footer
                %s4542 = sadd.s32 1, %s4538
              $region66: #{generator_forward.5} parent=59 // loop_footer_branch
                %4537 = sbr.rel target = $region62
              $region67: #{generator_forward.5} parent=59 // loop_exit
                _
            $region60: #{generator_forward.5} parent=55 // pred_fallthru
              _
            // Predicated region
            $region68: #{generator_forward.5} parent=55 // pred_check
              _
            $region69: #{generator_forward.5} parent=55 // pred_check_branch
              %4562 = sbr.rel target = $region71
            $region70: #{generator_forward.5} parent=55 // pred_region
              _
            $region71: #{generator_forward.5} parent=55 // pred_fallthru
              _
          $region56: #{generator_forward.5} parent=51 // pred_fallthru
            _
          %4563 = vnop
        $region52: #{generator_forward.5} parent=35 // pred_fallthru
          _
      $region36: #{generator_forward.5} parent=5 // pred_fallthru
        _
      %p4564 = scmp.le.s32.totalorder 2, %s16
      // Predicated region
      $region72: #{generator_forward.5} parent=5 // pred_check
        %p4565 = pneg %p4564
      $region73: #{generator_forward.5} parent=5 // pred_check_branch
        %4567 = sbr.rel (%p4565) target = $region75
      $region74: #{generator_forward.5} parent=5 // pred_region
        %s4568 = ssub.s32 %s16, 2
        // Predicated region
        $region76: #{generator_forward.5} parent=74 // pred_check
          %p4569 = pneg %p144
        $region77: #{generator_forward.5} parent=74 // pred_check_branch
          %4571 = sbr.rel (%p4569) target = $region79
        $region78: #{generator_forward.5} parent=74 // pred_region
          %s4572 = sand.u32 %s129, 1
          %s4573 = sand.u32 %s129, 1
          %s4574 = smul.addr %s4573, 64
          %s4575 = scalar_lea.vmem [#allocation7], %s4574
        $region79: #{generator_forward.5} parent=74 // pred_fallthru
          _
      $region75: #{generator_forward.5} parent=5 // pred_fallthru
        _
    $region6: #{generator_forward.5} parent=1 // loop_footer
      %s20 = sadd.s32 1, %s16
    $region7: #{generator_forward.5} parent=1 // loop_footer_branch
      %15 = sbr.rel target = $region3
    $region8: #{generator_forward.5} parent=1 // loop_exit
      _
    %4576 = vsyncpa [#allocation3], 1
    %s4577 = scalar_lea.sflag [#allocation3], 1
    %4578 = vsyncpa %s4577, 1
    %4579 = vsyncpa [#allocation5], 1
    %s4580 = scalar_lea.sflag [#allocation5], 1
    %4581 = vsyncpa %s4580, 1

// kernel: generator_forward.7
$region0: #{generator_forward.7}
  #allocation0 [shape = 'u32[]', space=smem, size = 0x4, offset = 0x4, fixed_abs, tag = 'smem constant byte address 0x4 - core index']
  #allocation1 [shape = 'u32[144,128]{1,0:T(1,128)}', space=vmem, size = 0x12000, scoped, tag = 'internal scratch']
  %s0 = inlined_call_operand.vmem [shape: bf16[8,104,64], index: 0, kind: input, shape index: {}]
  %s1 = inlined_call_operand.vmem [shape: bf16[9,64,128], index: 1, kind: input, shape index: {}]
  %s2 = inlined_call_operand.vmem [shape: f32[1,128], index: 2, kind: input, shape index: {}]
  %s3 = inlined_call_operand.vmem [shape: f32[8,80,128], index: 3, kind: output, shape index: {}]
  %s4 = sld [smem:[#allocation0]]
  $region45: #{generator_forward.7} parent=0
    _
  %s6 = ssub.s32 1, %s4
  %s7 = scalar_select 0, %s6, %s4
  loop: start=0, step=1, limit=10
  $region2: #{generator_forward.7} parent=0 // loop_pre_header
    _
  $region3: #{generator_forward.7} parent=0 // loop_header
    %s9 = sphi 0, %s13
    %p10 = scmp.ge.s32.totalorder %s9, 10
    %s19 = sphi 0, %s21
    %s22 = sphi 0, %s19
    %s23 = sphi 0, %s22
    %s39 = sphi 0, %s23
    %s43 = sphi 0, %s43
    %s45 = sphi 0, %s43
    %s46 = sphi 0, %s45
    %s60 = sphi 0, %s46
    %s64 = sphi 0, %s64
    %s66 = sphi 0, %s64
    %s67 = sphi 0, %s66
    %s81 = sphi 0, %s67
    %s87 = sphi 0, %s89
    %s90 = sphi 0, %s87
    %s91 = sphi 0, %s90
    %s107 = sphi 0, %s91
  $region4: #{generator_forward.7} parent=0 // loop_header_branch
    %12 = sbr.rel (%p10) target = $region8
  $region5: #{generator_forward.7} parent=0 // loop_body
    %s14 = ssub.s32 %s9, 1
    %s15 = ssub.s32 %s9, 2
    %s16 = sadd.s32 %s9, 1
    %s17 = ssub.s32 %s9, %s16
    %p18 = scmp.eq.s32.totalorder %s17, 0
    %s20 = sadd.s32 %s19, 1
    %s21 = scalar_select %p18, %s19, %s20
    %p24 = pneg %p18
    %p25 = scmp.eq.s32.totalorder %s9, 7
    %p26 = por %p24, %p25
    %p27 = scmp.ne.s32.totalorder %s19, %s22
    %p28 = scmp.eq.s32.totalorder %s9, 0
    %p29 = por %p27, %p28
    %p30 = scmp.ne.s32.totalorder %s19, %s22
    %p31 = scmp.eq.s32.totalorder %s14, 7
    %p32 = por %p30, %p31
    %p33 = scmp.ne.s32.totalorder %s22, %s23
    %p34 = scmp.eq.s32.totalorder %s14, 0
    %p35 = por %p33, %p34
    %p36 = scmp.ne.s32.totalorder %s22, %s23
    %p37 = scmp.eq.s32.totalorder %s15, 7
    %p38 = por %p36, %p37
    %p40 = scmp.ne.s32.totalorder %s23, %s39
    %p41 = scmp.eq.s32.totalorder %s15, 0
    %p42 = por %p40, %p41
    %s44 = sadd.s32 %s43, 1
    %p47 = scmp.eq.s32.totalorder %s9, 7
    %p48 = scmp.ne.s32.totalorder %s43, %s45
    %p49 = scmp.eq.s32.totalorder %s9, 0
    %p50 = por %p48, %p49
    %p51 = scmp.ne.s32.totalorder %s43, %s45
    %p52 = scmp.eq.s32.totalorder %s14, 7
    %p53 = por %p51, %p52
    %p54 = scmp.ne.s32.totalorder %s45, %s46
    %p55 = scmp.eq.s32.totalorder %s14, 0
    %p56 = por %p54, %p55
    %p57 = scmp.ne.s32.totalorder %s45, %s46
    %p58 = scmp.eq.s32.totalorder %s15, 7
    %p59 = por %p57, %p58
    %p61 = scmp.ne.s32.totalorder %s46, %s60
    %p62 = scmp.eq.s32.totalorder %s15, 0
    %p63 = por %p61, %p62
    %s65 = sadd.s32 %s64, 1
    %p68 = scmp.eq.s32.totalorder %s9, 7
    %p69 = scmp.ne.s32.totalorder %s64, %s66
    %p70 = scmp.eq.s32.totalorder %s9, 0
    %p71 = por %p69, %p70
    %p72 = scmp.ne.s32.totalorder %s64, %s66
    %p73 = scmp.eq.s32.totalorder %s14, 7
    %p74 = por %p72, %p73
    %p75 = scmp.ne.s32.totalorder %s66, %s67
    %p76 = scmp.eq.s32.totalorder %s14, 0
    %p77 = por %p75, %p76
    %p78 = scmp.ne.s32.totalorder %s66, %s67
    %p79 = scmp.eq.s32.totalorder %s15, 7
    %p80 = por %p78, %p79
    %p82 = scmp.ne.s32.totalorder %s67, %s81
    %p83 = scmp.eq.s32.totalorder %s15, 0
    %p84 = por %p82, %p83
    %s85 = ssub.s32 %s9, %s16
    %p86 = scmp.eq.s32.totalorder %s85, 0
    %s88 = sadd.s32 %s87, 1
    %s89 = scalar_select %p86, %s87, %s88
    %p92 = pneg %p86
    %p93 = scmp.eq.s32.totalorder %s9, 7
    %p94 = por %p92, %p93
    %p95 = scmp.ne.s32.totalorder %s87, %s90
    %p96 = scmp.eq.s32.totalorder %s9, 0
    %p97 = por %p95, %p96
    %p98 = scmp.ne.s32.totalorder %s87, %s90
    %p99 = scmp.eq.s32.totalorder %s14, 7
    %p100 = por %p98, %p99
    %p101 = scmp.ne.s32.totalorder %s90, %s91
    %p102 = scmp.eq.s32.totalorder %s14, 0
    %p103 = por %p101, %p102
    %p104 = scmp.ne.s32.totalorder %s90, %s91
    %p105 = scmp.eq.s32.totalorder %s15, 7
    %p106 = por %p104, %p105
    %p108 = scmp.ne.s32.totalorder %s91, %s107
    %p109 = scmp.eq.s32.totalorder %s15, 0
    %p110 = por %p108, %p109
    %p111 = scmp.le.s32.totalorder 1, %s9
    %p112 = scmp.lt.s32.totalorder %s9, 9
    %p113 = pnand %p111, %p112
    %p114 = pneg %p113
    // Predicated region
    $region9: #{generator_forward.7} parent=5 // pred_check
      _
    $region10: #{generator_forward.7} parent=5 // pred_check_branch
      %116 = sbr.rel (%p113) target = $region12
    $region11: #{generator_forward.7} parent=5 // pred_region
      %s117 = ssub.s32 %s9, 1
      // Predicated region
      $region13: #{generator_forward.7} parent=11 // pred_check
        %p118 = pneg %p56
      $region14: #{generator_forward.7} parent=11 // pred_check_branch
        %120 = sbr.rel (%p118) target = $region16
      $region15: #{generator_forward.7} parent=11 // pred_region
        _
      $region16: #{generator_forward.7} parent=11 // pred_fallthru
        _
      // Predicated region
      $region17: #{generator_forward.7} parent=11 // pred_check
        %p121 = pneg %p77
      $region18: #{generator_forward.7} parent=11 // pred_check_branch
        %123 = sbr.rel (%p121) target = $region20
      $region19: #{generator_forward.7} parent=11 // pred_region
        _
      $region20: #{generator_forward.7} parent=11 // pred_fallthru
        _
    $region12: #{generator_forward.7} parent=5 // pred_fallthru
      _
    %p124 = scmp.lt.s32.totalorder %s9, 8
    // Predicated region
    $region21: #{generator_forward.7} parent=5 // pred_check
      %p125 = pneg %p124
    $region22: #{generator_forward.7} parent=5 // pred_check_branch
      %127 = sbr.rel (%p125) target = $region24
    $region23: #{generator_forward.7} parent=5 // pred_region
      // Predicated region
      $region25: #{generator_forward.7} parent=23 // pred_check
        %p128 = pneg %p29
      $region26: #{generator_forward.7} parent=23 // pred_check_branch
        %130 = sbr.rel (%p128) target = $region28
      $region27: #{generator_forward.7} parent=23 // pred_region
        %p131 = scmp.lt.s32.totalorder %s9, 7
        %s132 = scalar_select %p131, %s9, 7
        %s133 = smul.addr %s132, 13
        %s134 = smul.addr %s133, 4
        %s135 = scalar_lea.vmem %s0, %s134
      $region28: #{generator_forward.7} parent=23 // pred_fallthru
        _
    $region24: #{generator_forward.7} parent=5 // pred_fallthru
      _
    %p136 = scmp.le.s32.totalorder 1, %s9
    %p137 = scmp.lt.s32.totalorder %s9, 9
    %p138 = pnand %p136, %p137
    %p139 = pneg %p138
    // Predicated region
    $region29: #{generator_forward.7} parent=5 // pred_check
      _
    $region30: #{generator_forward.7} parent=5 // pred_check_branch
      %141 = sbr.rel (%p138) target = $region32
    $region31: #{generator_forward.7} parent=5 // pred_region
      %s142 = ssub.s32 %s9, 1
      %p143 = scmp.lt.s32.totalorder %s14, 7
      %s144 = scalar_select %p143, %s14, 7
      %s145 = smul.addr %s144, 13
      %s146 = smul.addr %s145, 4
      %s147 = scalar_lea.vmem %s0, %s146
      %p148 = pneg %p35
      %p149 = pneg %p32
      %p150 = pneg %p56
      %p151 = pneg %p53
      %p152 = pneg %p77
      %p153 = pneg %p74
      %p154 = pneg %p103
      %p155 = pneg %p100
      %p156 = scmp.lt.s32.totalorder %s14, 7
      %s157 = scalar_select %p156, %s14, 7
      %s158 = smul.addr %s157, 10
      %s159 = smul.addr %s158, 8
      %s160 = scalar_lea.vmem %s3, %s159
      %p161 = scmp.lt.s32.totalorder %s14, 7
      %s162 = scalar_select %p161, %s14, 7
      %s163 = smul.addr %s162, 13
      %s164 = smul.addr %s163, 4
      %s165 = scalar_lea.vmem %s0, %s164
      %p166 = scmp.lt.s32.totalorder %s14, 7
      %s167 = scalar_select %p166, %s14, 7
      %s168 = smul.addr %s167, 10
      %s169 = smul.addr %s168, 8
      %s170 = scalar_lea.vmem %s3, %s169
      %v172 = vld [vmem:[%s165] sm:$0xf]
      %v173 = vld [vmem:[%s165 + $0x4] sm:$0xf]
      %v174 = vld [vmem:[%s165 + $0x8] sm:$0xf]
      %v175 = vld [vmem:[%s165 + $0xc] sm:$0xf]
      %v176 = vld [vmem:[%s165 + $0x10] sm:$0xf]
      %v177 = vld [vmem:[%s165 + $0x14] sm:$0xf]
      %v178 = vld [vmem:[%s165 + $0x18] sm:$0xf]
      %v179 = vld [vmem:[%s165 + $0x1c] sm:$0xf]
      %v180 = vld [vmem:[%s165 + $0x20] sm:$0xf]
      %v181 = vld [vmem:[%s165 + $0x24] sm:$0xf]
      %v182 = vld [vmem:[%s1] sm:$0xf]
      %v183 = vld [vmem:[%s1 + $0x4] sm:$0xf]
      %v184 = vld [vmem:[%s1 + $0x8] sm:$0xf]
      %v185 = vld [vmem:[%s1 + $0xc] sm:$0xf]
      %v186 = vld [vmem:[%s1 + $0x10] sm:$0xf]
      %v187 = vld [vmem:[%s1 + $0x14] sm:$0xf]
      %v188 = vld [vmem:[%s1 + $0x18] sm:$0xf]
      %v189 = vld [vmem:[%s1 + $0x1c] sm:$0xf]
      %v190 = vld [vmem:[%s165 + $0x28] sm:$0x1]
      %s191 = scalar_lea.vmem %s1, 32
      %v192 = vld [vmem:[%s191] sm:$0xf]
      %v193 = vld [vmem:[%s191 + $0x4] sm:$0xf]
      %v194 = vld [vmem:[%s191 + $0x8] sm:$0xf]
      %v195 = vld [vmem:[%s191 + $0xc] sm:$0xf]
      %v196 = vld [vmem:[%s191 + $0x10] sm:$0xf]
      %v197 = vld [vmem:[%s191 + $0x14] sm:$0xf]
      %v198 = vld [vmem:[%s191 + $0x18] sm:$0xf]
      %v199 = vld [vmem:[%s191 + $0x1c] sm:$0xf]
      %v211 = vunpack.c.l.b16 %v172
      %v212 = vunpack.c.l.b16 %v173
      %v213 = vunpack.c.l.b16 %v174
      %v214 = vunpack.c.l.b16 %v175
      %v215 = vunpack.c.l.b16 %v176
      %v216 = vunpack.c.l.b16 %v177
      %v217 = vunpack.c.l.b16 %v178
      %v218 = vunpack.c.l.b16 %v179
      %v219 = vunpack.c.l.b16 %v180
      %v220 = vunpack.c.l.b16 %v181
      %v221 = vunpack.c.l.b16 %v190
      %v222 = vpack.c.b16 %v212, %v211
      %v223 = vpack.c.b16 %v214, %v213
      %v224 = vpack.c.b16 %v216, %v215
      %v225 = vpack.c.b16 %v218, %v217
      %v226 = vpack.c.b16 %v220, %v219
      %v227 = vpack.c.b16 %v221, %v221
      %vm228 = vsmask.f32 7424
      %v230 = vshrl.u32 %v222, 16
      %v232 = vshll.u32 %v222, 16
      %v234 = vrot.slane %v232, 1
      %v235 = vor.u32 %v230, %v234
      %v237 = vshll.u32 %v223, 16
      %v239 = vrot.slane %v237, 1
      %v240 = vsel %vm228, %v235, %v239
      %v241 = vshrl.u32 %v223, 16
      %v243 = vor.u32 %v241, %v239
      %v245 = vshll.u32 %v224, 16
      %v247 = vrot.slane %v245, 1
      %v248 = vsel %vm228, %v243, %v247
      %v249 = vshrl.u32 %v224, 16
      %v251 = vor.u32 %v249, %v247
      %v253 = vshll.u32 %v225, 16
      %v255 = vrot.slane %v253, 1
      %v256 = vsel %vm228, %v251, %v255
      %v257 = vshrl.u32 %v225, 16
      %v259 = vor.u32 %v257, %v255
      %v261 = vshll.u32 %v226, 16
      %v263 = vrot.slane %v261, 1
      %v264 = vsel %vm228, %v259, %v263
      %v265 = vshrl.u32 %v226, 16
      %v267 = vor.u32 %v265, %v263
      %v269 = vshll.u32 %v227, 16
      %v271 = vrot.slane %v269, 1
      %v272 = vsel %vm228, %v267, %v271
      %v281 = vunpack.c.l.b16 %v192
      %v282 = vunpack.c.l.b16 %v193
      %v283 = vunpack.c.l.b16 %v194
      %v284 = vunpack.c.l.b16 %v195
      %v285 = vunpack.c.l.b16 %v196
      %v286 = vunpack.c.l.b16 %v197
      %v287 = vunpack.c.l.b16 %v198
      %v288 = vunpack.c.l.b16 %v199
      %v289 = vpack.c.b16 %v282, %v281
      %v290 = vpack.c.b16 %v284, %v283
      %v291 = vpack.c.b16 %v286, %v285
      %v292 = vpack.c.b16 %v288, %v287
      %vm297 = vcmask 523264
      %v299 = vsel %vm297, %v240, 0
      %v302 = vsel %vm297, %v248, 0
      %v305 = vsel %vm297, %v256, 0
      %v308 = vsel %vm297, %v264, 0
      %v311 = vsel %vm297, %v272, 0
      %313 = vmatprep.subr.bf16.mxu0 0
      %314 = vmatpush1.bf16.msra.mxu0 %v289
      %315 = vmatprep.subr.bf16.mxu0 0
      %316 = vmatpush1.bf16.msra.mxu0 %v290
      %317 = vmatprep.subr.bf16.mxu0 0
      %318 = vmatpush1.bf16.msra.mxu0 %v291
      %319 = vmatprep.subr.bf16.mxu0 0
      %320 = vmatpush1.bf16.msra.mxu0 %v292
      %321 = vmatprep.subr.bf16.mxu0 0
      %322 = vmatpush1.bf16.msra.mxu0 0
      %323 = vmatprep.subr.bf16.mxu0 0
      %324 = vmatpush1.bf16.msra.mxu0 0
      %325 = vmatprep.subr.bf16.mxu0 0
      %326 = vmatpush1.bf16.msra.mxu0 0
      %327 = vmatprep.subr.bf16.mxu0 0
      %328 = vmatpush1.bf16.msra.mxu0 0
      %329 = vmatprep.subr.bf16.mxu0 0
      %330 = vmatpush1.bf16.msra.mxu0 0
      %331 = vmatprep.subr.bf16.mxu0 0
      %332 = vmatpush1.bf16.msra.mxu0 0
      %333 = vmatprep.subr.bf16.mxu0 0
      %334 = vmatpush1.bf16.msra.mxu0 0
      %335 = vmatprep.subr.bf16.mxu0 0
      %336 = vmatpush1.bf16.msra.mxu0 0
      %337 = vmatprep.subr.bf16.mxu0 0
      %338 = vmatpush1.bf16.msra.mxu0 0
      %339 = vmatprep.subr.bf16.mxu0 0
      %340 = vmatpush1.bf16.msra.mxu0 0
      %341 = vmatprep.subr.bf16.mxu0 0
      %342 = vmatpush1.bf16.msra.mxu0 0
      %343 = vmatprep.subr.bf16.mxu0 0
      %344 = vmatpush1.bf16.msra.mxu0 0
      %345 = vmatprep.mubr.bf16.mxu0 0
      %346 = vmatmul.mubr.bf16.gmra.mrb[0].mxu0 %v299
      %v347 = vpop.f32.mrb[0].mxu0
      %v348 = vadd.f32 0.0, %v347
      %v349 = vpop.f32.mrb[0].mxu0
      %v350 = vpop.f32.mrb[0].mxu0
      %v351 = vadd.f32 0.0, %v350
      %v352 = vpop.f32.mrb[0].mxu0
      %353 = vmatprep.mubr.bf16.mxu0 0
      %354 = vmatmul.mubr.bf16.gmra.mrb[0].mxu0 %v302
      %v355 = vpop.f32.mrb[0].mxu0
      %v356 = vadd.f32 0.0, %v355
      %v357 = vpop.f32.mrb[0].mxu0
      %v358 = vpop.f32.mrb[0].mxu0
      %v359 = vadd.f32 0.0, %v358
      %v360 = vpop.f32.mrb[0].mxu0
      %361 = vmatprep.mubr.bf16.mxu0 0
      %362 = vmatmul.mubr.bf16.gmra.mrb[0].mxu0 %v305
      %v363 = vpop.f32.mrb[0].mxu0
      %v364 = vadd.f32 0.0, %v363
      %v365 = vpop.f32.mrb[0].mxu0
      %v366 = vpop.f32.mrb[0].mxu0
      %v367 = vadd.f32 0.0, %v366
      %v368 = vpop.f32.mrb[0].mxu0
      %369 = vmatprep.mubr.bf16.mxu0 0
      %370 = vmatmul.mubr.bf16.gmra.mrb[0].mxu0 %v308
      %v371 = vpop.f32.mrb[0].mxu0
      %v372 = vadd.f32 0.0, %v371
      %v373 = vpop.f32.mrb[0].mxu0
      %v374 = vpop.f32.mrb[0].mxu0
      %v375 = vadd.f32 0.0, %v374
      %v376 = vpop.f32.mrb[0].mxu0
      %377 = vmatprep.mubr.bf16.mxu0 0
      %378 = vmatmul.mubr.bf16.gmra.mrb[0].mxu0 %v311
      %v379 = vpop.f32.mrb[0].mxu0
      %v380 = vadd.f32 0.0, %v379
      %v381 = vpop.f32.mrb[0].mxu0
      %v382 = vpop.f32.mrb[0].mxu0
      %v383 = vadd.f32 0.0, %v382
      %v384 = vpop.f32.mrb[0].mxu0
      %385 = vdwg.mxu0
      %v394 = vunpack.c.l.b16 %v182
      %v395 = vunpack.c.l.b16 %v183
      %v396 = vunpack.c.l.b16 %v184
      %v397 = vunpack.c.l.b16 %v185
      %v398 = vunpack.c.l.b16 %v186
      %v399 = vunpack.c.l.b16 %v187
      %v400 = vunpack.c.l.b16 %v188
      %v401 = vunpack.c.l.b16 %v189
      %v402 = vpack.c.b16 %v395, %v394
      %v403 = vpack.c.b16 %v397, %v396
      %v404 = vpack.c.b16 %v399, %v398
      %v405 = vpack.c.b16 %v401, %v400
      %v410 = vsel %vm297, %v222, 0
      %v412 = vsel %vm297, %v223, 0
      %v414 = vsel %vm297, %v224, 0
      %v416 = vsel %vm297, %v225, 0
      %v418 = vsel %vm297, %v226, 0
      %420 = vmatprep.subr.bf16.mxu0 0
      %421 = vmatpush1.bf16.msra.mxu0 %v402
      %422 = vmatprep.subr.bf16.mxu0 0
      %423 = vmatpush1.bf16.msra.mxu0 %v403
      %424 = vmatprep.subr.bf16.mxu0 0
      %425 = vmatpush1.bf16.msra.mxu0 %v404
      %426 = vmatprep.subr.bf16.mxu0 0
      %427 = vmatpush1.bf16.msra.mxu0 %v405
      %428 = vmatprep.subr.bf16.mxu0 0
      %429 = vmatpush1.bf16.msra.mxu0 0
      %430 = vmatprep.subr.bf16.mxu0 0
      %431 = vmatpush1.bf16.msra.mxu0 0
      %432 = vmatprep.subr.bf16.mxu0 0
      %433 = vmatpush1.bf16.msra.mxu0 0
      %434 = vmatprep.subr.bf16.mxu0 0
      %435 = vmatpush1.bf16.msra.mxu0 0
      %436 = vmatprep.subr.bf16.mxu0 0
      %437 = vmatpush1.bf16.msra.mxu0 0
      %438 = vmatprep.subr.bf16.mxu0 0
      %439 = vmatpush1.bf16.msra.mxu0 0
      %440 = vmatprep.subr.bf16.mxu0 0
      %441 = vmatpush1.bf16.msra.mxu0 0
      %442 = vmatprep.subr.bf16.mxu0 0
      %443 = vmatpush1.bf16.msra.mxu0 0
      %444 = vmatprep.subr.bf16.mxu0 0
      %445 = vmatpush1.bf16.msra.mxu0 0
      %446 = vmatprep.subr.bf16.mxu0 0
      %447 = vmatpush1.bf16.msra.mxu0 0
      %448 = vmatprep.subr.bf16.mxu0 0
      %449 = vmatpush1.bf16.msra.mxu0 0
      %450 = vmatprep.subr.bf16.mxu0 0
      %451 = vmatpush1.bf16.msra.mxu0 0
      %452 = vmatprep.mubr.bf16.mxu0 0
      %453 = vmatmul.mubr.bf16.gmra.mrb[0].mxu0 %v410
      %v454 = vpop.f32.mrb[0].mxu0
      %v455 = vadd.f32 %v348, %v454
      %v456 = vpop.f32.mrb[0].mxu0
      %v457 = vpop.f32.mrb[0].mxu0
      %v458 = vadd.f32 %v351, %v457
      %v459 = vpop.f32.mrb[0].mxu0
      %460 = vmatprep.mubr.bf16.mxu0 0
      %461 = vmatmul.mubr.bf16.gmra.mrb[0].mxu0 %v412
      %v462 = vpop.f32.mrb[0].mxu0
      %v463 = vadd.f32 %v356, %v462
      %v464 = vpop.f32.mrb[0].mxu0
      %v465 = vpop.f32.mrb[0].mxu0
      %v466 = vadd.f32 %v359, %v465
      %v467 = vpop.f32.mrb[0].mxu0
      %468 = vmatprep.mubr.bf16.mxu0 0
      %469 = vmatmul.mubr.bf16.gmra.mrb[0].mxu0 %v414
      %v470 = vpop.f32.mrb[0].mxu0
      %v471 = vadd.f32 %v364, %v470
      %v472 = vpop.f32.mrb[0].mxu0
      %v473 = vpop.f32.mrb[0].mxu0
      %v474 = vadd.f32 %v367, %v473
      %v475 = vpop.f32.mrb[0].mxu0
      %476 = vmatprep.mubr.bf16.mxu0 0
      %477 = vmatmul.mubr.bf16.gmra.mrb[0].mxu0 %v416
      %v478 = vpop.f32.mrb[0].mxu0
      %v479 = vadd.f32 %v372, %v478
      %v480 = vpop.f32.mrb[0].mxu0
      %v481 = vpop.f32.mrb[0].mxu0
      %v482 = vadd.f32 %v375, %v481
      %v483 = vpop.f32.mrb[0].mxu0
      %484 = vmatprep.mubr.bf16.mxu0 0
      %485 = vmatmul.mubr.bf16.gmra.mrb[0].mxu0 %v418
      %v486 = vpop.f32.mrb[0].mxu0
      %v487 = vadd.f32 %v380, %v486
      %v488 = vpop.f32.mrb[0].mxu0
      %v489 = vpop.f32.mrb[0].mxu0
      %v490 = vadd.f32 %v383, %v489
      %v491 = vpop.f32.mrb[0].mxu0
      %492 = vdwg.mxu0
      %v493 = vld [vmem:[%s165] sm:$0xe]
      %s494 = scalar_lea.vmem %s1, 64
      %v495 = vld [vmem:[%s494] sm:$0xf]
      %v496 = vld [vmem:[%s494 + $0x4] sm:$0xf]
      %v497 = vld [vmem:[%s494 + $0x8] sm:$0xf]
      %v498 = vld [vmem:[%s494 + $0xc] sm:$0xf]
      %v499 = vld [vmem:[%s494 + $0x10] sm:$0xf]
      %v500 = vld [vmem:[%s494 + $0x14] sm:$0xf]
      %v501 = vld [vmem:[%s494 + $0x18] sm:$0xf]
      %v502 = vld [vmem:[%s494 + $0x1c] sm:$0xf]
      %v504 = vunpack.c.l.b16 %v493
      %v505 = vpack.c.b16 %v212, %v504
      %vm506 = vcmask 1046528
      %v507 = vrot.slane %v505, 1
      %v508 = vrot.slane %v223, 1
      %v509 = vsel %vm506, %v507, %v508
      %v510 = vrot.slane %v224, 1
      %v511 = vsel %vm506, %v508, %v510
      %v512 = vrot.slane %v225, 1
      %v513 = vsel %vm506, %v510, %v512
      %v514 = vrot.slane %v226, 1
      %v515 = vsel %vm506, %v512, %v514
      %v516 = vrot.slane %v227, 1
      %v517 = vsel %vm506, %v514, %v516
      %v526 = vunpack.c.l.b16 %v495
      %v527 = vunpack.c.l.b16 %v496
      %v528 = vunpack.c.l.b16 %v497
      %v529 = vunpack.c.l.b16 %v498
      %v530 = vunpack.c.l.b16 %v499
      %v531 = vunpack.c.l.b16 %v500
      %v532 = vunpack.c.l.b16 %v501
      %v533 = vunpack.c.l.b16 %v502
      %v534 = vpack.c.b16 %v527, %v526
      %v535 = vpack.c.b16 %v529, %v528
      %v536 = vpack.c.b16 %v531, %v530
      %v537 = vpack.c.b16 %v533, %v532
      %v543 = vsel %vm297, %v509, 0
      %v546 = vsel %vm297, %v511, 0
      %v549 = vsel %vm297, %v513, 0
      %v552 = vsel %vm297, %v515, 0
      %v555 = vsel %vm297, %v517, 0
      %557 = vmatprep.subr.bf16.mxu0 0
      %558 = vmatpush1.bf16.msra.mxu0 %v534
      %559 = vmatprep.subr.bf16.mxu0 0
      %560 = vmatpush1.bf16.msra.mxu0 %v535
      %561 = vmatprep.subr.bf16.mxu0 0
      %562 = vmatpush1.bf16.msra.mxu0 %v536
      %563 = vmatprep.subr.bf16.mxu0 0
      %564 = vmatpush1.bf16.msra.mxu0 %v537
      %565 = vmatprep.subr.bf16.mxu0 0
      %566 = vmatpush1.bf16.msra.mxu0 0
      %567 = vmatprep.subr.bf16.mxu0 0
      %568 = vmatpush1.bf16.msra.mxu0 0
      %569 = vmatprep.subr.bf16.mxu0 0
      %570 = vmatpush1.bf16.msra.mxu0 0
      %571 = vmatprep.subr.bf16.mxu0 0
      %572 = vmatpush1.bf16.msra.mxu0 0
      %573 = vmatprep.subr.bf16.mxu0 0
      %574 = vmatpush1.bf16.msra.mxu0 0
      %575 = vmatprep.subr.bf16.mxu0 0
      %576 = vmatpush1.bf16.msra.mxu0 0
      %577 = vmatprep.subr.bf16.mxu0 0
      %578 = vmatpush1.bf16.msra.mxu0 0
      %579 = vmatprep.subr.bf16.mxu0 0
      %580 = vmatpush1.bf16.msra.mxu0 0
      %581 = vmatprep.subr.bf16.mxu0 0
      %582 = vmatpush1.bf16.msra.mxu0 0
      %583 = vmatprep.subr.bf16.mxu0 0
      %584 = vmatpush1.bf16.msra.mxu0 0
      %585 = vmatprep.subr.bf16.mxu0 0
      %586 = vmatpush1.bf16.msra.mxu0 0
      %587 = vmatprep.subr.bf16.mxu0 0
      %588 = vmatpush1.bf16.msra.mxu0 0
      %589 = vmatprep.mubr.bf16.mxu0 0
      %590 = vmatmul.mubr.bf16.gmra.mrb[0].mxu0 %v543
      %v591 = vpop.f32.mrb[0].mxu0
      %v592 = vadd.f32 0.0, %v591
      %v593 = vpop.f32.mrb[0].mxu0
      %v594 = vpop.f32.mrb[0].mxu0
      %v595 = vadd.f32 0.0, %v594
      %v596 = vpop.f32.mrb[0].mxu0
      %597 = vmatprep.mubr.bf16.mxu0 0
      %598 = vmatmul.mubr.bf16.gmra.mrb[0].mxu0 %v546
      %v599 = vpop.f32.mrb[0].mxu0
      %v600 = vadd.f32 0.0, %v599
      %v601 = vpop.f32.mrb[0].mxu0
      %v602 = vpop.f32.mrb[0].mxu0
      %v603 = vadd.f32 0.0, %v602
      %v604 = vpop.f32.mrb[0].mxu0
      %605 = vmatprep.mubr.bf16.mxu0 0
      %606 = vmatmul.mubr.bf16.gmra.mrb[0].mxu0 %v549
      %v607 = vpop.f32.mrb[0].mxu0
      %v608 = vadd.f32 0.0, %v607
      %v609 = vpop.f32.mrb[0].mxu0
      %v610 = vpop.f32.mrb[0].mxu0
      %v611 = vadd.f32 0.0, %v610
      %v612 = vpop.f32.mrb[0].mxu0
      %613 = vmatprep.mubr.bf16.mxu0 0
      %614 = vmatmul.mubr.bf16.gmra.mrb[0].mxu0 %v552
      %v615 = vpop.f32.mrb[0].mxu0
      %v616 = vadd.f32 0.0, %v615
      %v617 = vpop.f32.mrb[0].mxu0
      %v618 = vpop.f32.mrb[0].mxu0
      %v619 = vadd.f32 0.0, %v618
      %v620 = vpop.f32.mrb[0].mxu0
      %621 = vmatprep.mubr.bf16.mxu0 0
      %622 = vmatmul.mubr.bf16.gmra.mrb[0].mxu0 %v555
      %v623 = vpop.f32.mrb[0].mxu0
      %v624 = vadd.f32 0.0, %v623
      %v625 = vpop.f32.mrb[0].mxu0
      %v626 = vpop.f32.mrb[0].mxu0
      %v627 = vadd.f32 0.0, %v626
      %v628 = vpop.f32.mrb[0].mxu0
      %629 = vdwg.mxu0
      %v630 = vadd.f32 %v455, %v592
      %v631 = vadd.f32 %v458, %v595
      %v632 = vadd.f32 %v463, %v600
      %v633 = vadd.f32 %v466, %v603
      %v634 = vadd.f32 %v471, %v608
      %v635 = vadd.f32 %v474, %v611
      %v636 = vadd.f32 %v479, %v616
      %v637 = vadd.f32 %v482, %v619
      %v638 = vadd.f32 %v487, %v624
      %v639 = vadd.f32 %v490, %v627
      %v640 = vld [vmem:[%s165 + $0x4] sm:$0xe]
      %v641 = vld [vmem:[%s165 + $0x8] sm:$0xf]
      %v642 = vld [vmem:[%s165 + $0xc] sm:$0xf]
      %v643 = vld [vmem:[%s165 + $0x10] sm:$0xf]
      %v644 = vld [vmem:[%s165 + $0x14] sm:$0xf]
      %v645 = vld [vmem:[%s165 + $0x18] sm:$0xf]
      %v646 = vld [vmem:[%s165 + $0x1c] sm:$0xf]
      %v647 = vld [vmem:[%s165 + $0x20] sm:$0xf]
      %v648 = vld [vmem:[%s165 + $0x24] sm:$0xf]
      %v649 = vld [vmem:[%s165 + $0x28] sm:$0xf]
      %v650 = vld [vmem:[%s165 + $0x2c] sm:$0x1]
      %s651 = scalar_lea.vmem %s1, 96
      %v652 = vld [vmem:[%s651] sm:$0xf]
      %v653 = vld [vmem:[%s651 + $0x4] sm:$0xf]
      %v654 = vld [vmem:[%s651 + $0x8] sm:$0xf]
      %v655 = vld [vmem:[%s651 + $0xc] sm:$0xf]
      %v656 = vld [vmem:[%s651 + $0x10] sm:$0xf]
      %v657 = vld [vmem:[%s651 + $0x14] sm:$0xf]
      %v658 = vld [vmem:[%s651 + $0x18] sm:$0xf]
      %v659 = vld [vmem:[%s651 + $0x1c] sm:$0xf]
      %v671 = vunpack.c.l.b16 %v640
      %v672 = vunpack.c.l.b16 %v641
      %v673 = vunpack.c.l.b16 %v642
      %v674 = vunpack.c.l.b16 %v643
      %v675 = vunpack.c.l.b16 %v644
      %v676 = vunpack.c.l.b16 %v645
      %v677 = vunpack.c.l.b16 %v646
      %v678 = vunpack.c.l.b16 %v647
      %v679 = vunpack.c.l.b16 %v648
      %v680 = vunpack.c.l.b16 %v649
      %v681 = vunpack.c.l.b16 %v650
      %v682 = vpack.c.b16 %v672, %v671
      %v683 = vpack.c.b16 %v674, %v673
      %v684 = vpack.c.b16 %v676, %v675
      %v685 = vpack.c.b16 %v678, %v677
      %v686 = vpack.c.b16 %v680, %v679
      %v687 = vpack.c.b16 %v681, %v681
      %v688 = vrot.slane %v682, 1
      %v689 = vrot.slane %v683, 1
      %v690 = vsel %vm506, %v688, %v689
      %v691 = vrot.slane %v684, 1
      %v692 = vsel %vm506, %v689, %v691
      %v693 = vrot.slane %v685, 1
      %v694 = vsel %vm506, %v691, %v693
      %v695 = vrot.slane %v686, 1
      %v696 = vsel %vm506, %v693, %v695
      %v697 = vrot.slane %v687, 1
      %v698 = vsel %vm506, %v695, %v697
      %v707 = vunpack.c.l.b16 %v652
      %v708 = vunpack.c.l.b16 %v653
      %v709 = vunpack.c.l.b16 %v654
      %v710 = vunpack.c.l.b16 %v655
      %v711 = vunpack.c.l.b16 %v656
      %v712 = vunpack.c.l.b16 %v657
      %v713 = vunpack.c.l.b16 %v658
      %v714 = vunpack.c.l.b16 %v659
      %v715 = vpack.c.b16 %v708, %v707
      %v716 = vpack.c.b16 %v710, %v709
      %v717 = vpack.c.b16 %v712, %v711
      %v718 = vpack.c.b16 %v714, %v713
      %v724 = vsel %vm297, %v690, 0
      %v727 = vsel %vm297, %v692, 0
      %v730 = vsel %vm297, %v694, 0
      %v733 = vsel %vm297, %v696, 0
      %v736 = vsel %vm297, %v698, 0
      %738 = vmatprep.subr.bf16.mxu0 0
      %739 = vmatpush1.bf16.msra.mxu0 %v715
      %740 = vmatprep.subr.bf16.mxu0 0
      %741 = vmatpush1.bf16.msra.mxu0 %v716
      %742 = vmatprep.subr.bf16.mxu0 0
      %743 = vmatpush1.bf16.msra.mxu0 %v717
      %744 = vmatprep.subr.bf16.mxu0 0
      %745 = vmatpush1.bf16.msra.mxu0 %v718
      %746 = vmatprep.subr.bf16.mxu0 0
      %747 = vmatpush1.bf16.msra.mxu0 0
      %748 = vmatprep.subr.bf16.mxu0 0
      %749 = vmatpush1.bf16.msra.mxu0 0
      %750 = vmatprep.subr.bf16.mxu0 0
      %751 = vmatpush1.bf16.msra.mxu0 0
      %752 = vmatprep.subr.bf16.mxu0 0
      %753 = vmatpush1.bf16.msra.mxu0 0
      %754 = vmatprep.subr.bf16.mxu0 0
      %755 = vmatpush1.bf16.msra.mxu0 0
      %756 = vmatprep.subr.bf16.mxu0 0
      %757 = vmatpush1.bf16.msra.mxu0 0
      %758 = vmatprep.subr.bf16.mxu0 0
      %759 = vmatpush1.bf16.msra.mxu0 0
      %760 = vmatprep.subr.bf16.mxu0 0
      %761 = vmatpush1.bf16.msra.mxu0 0
      %762 = vmatprep.subr.bf16.mxu0 0
      %763 = vmatpush1.bf16.msra.mxu0 0
      %764 = vmatprep.subr.bf16.mxu0 0
      %765 = vmatpush1.bf16.msra.mxu0 0
      %766 = vmatprep.subr.bf16.mxu0 0
      %767 = vmatpush1.bf16.msra.mxu0 0
      %768 = vmatprep.subr.bf16.mxu0 0
      %769 = vmatpush1.bf16.msra.mxu0 0
      %770 = vmatprep.mubr.bf16.mxu0 0
      %771 = vmatmul.mubr.bf16.gmra.mrb[0].mxu0 %v724
      %v772 = vpop.f32.mrb[0].mxu0
      %v773 = vadd.f32 0.0, %v772
      %v774 = vpop.f32.mrb[0].mxu0
      %v775 = vpop.f32.mrb[0].mxu0
      %v776 = vadd.f32 0.0, %v775
      %v777 = vpop.f32.mrb[0].mxu0
      %778 = vmatprep.mubr.bf16.mxu0 0
      %779 = vmatmul.mubr.bf16.gmra.mrb[0].mxu0 %v727
      %v780 = vpop.f32.mrb[0].mxu0
      %v781 = vadd.f32 0.0, %v780
      %v782 = vpop.f32.mrb[0].mxu0
      %v783 = vpop.f32.mrb[0].mxu0
      %v784 = vadd.f32 0.0, %v783
      %v785 = vpop.f32.mrb[0].mxu0
      %786 = vmatprep.mubr.bf16.mxu0 0
      %787 = vmatmul.mubr.bf16.gmra.mrb[0].mxu0 %v730
      %v788 = vpop.f32.mrb[0].mxu0
      %v789 = vadd.f32 0.0, %v788
      %v790 = vpop.f32.mrb[0].mxu0
      %v791 = vpop.f32.mrb[0].mxu0
      %v792 = vadd.f32 0.0, %v791
      %v793 = vpop.f32.mrb[0].mxu0
      %794 = vmatprep.mubr.bf16.mxu0 0
      %795 = vmatmul.mubr.bf16.gmra.mrb[0].mxu0 %v733
      %v796 = vpop.f32.mrb[0].mxu0
      %v797 = vadd.f32 0.0, %v796
      %v798 = vpop.f32.mrb[0].mxu0
      %v799 = vpop.f32.mrb[0].mxu0
      %v800 = vadd.f32 0.0, %v799
      %v801 = vpop.f32.mrb[0].mxu0
      %802 = vmatprep.mubr.bf16.mxu0 0
      %803 = vmatmul.mubr.bf16.gmra.mrb[0].mxu0 %v736
      %v804 = vpop.f32.mrb[0].mxu0
      %v805 = vadd.f32 0.0, %v804
      %v806 = vpop.f32.mrb[0].mxu0
      %v807 = vpop.f32.mrb[0].mxu0
      %v808 = vadd.f32 0.0, %v807
      %v809 = vpop.f32.mrb[0].mxu0
      %810 = vdwg.mxu0
      %v811 = vadd.f32 %v630, %v773
      %v812 = vadd.f32 %v631, %v776
      %v813 = vadd.f32 %v632, %v781
      %v814 = vadd.f32 %v633, %v784
      %v815 = vadd.f32 %v634, %v789
      %v816 = vadd.f32 %v635, %v792
      %v817 = vadd.f32 %v636, %v797
      %v818 = vadd.f32 %v637, %v800
      %v819 = vadd.f32 %v638, %v805
      %v820 = vadd.f32 %v639, %v808
      %v821 = vld [vmem:[%s165 + $0x2c] sm:$0x3]
      %s822 = scalar_lea.vmem %s1, 128
      %v823 = vld [vmem:[%s822] sm:$0xf]
      %v824 = vld [vmem:[%s822 + $0x4] sm:$0xf]
      %v825 = vld [vmem:[%s822 + $0x8] sm:$0xf]
      %v826 = vld [vmem:[%s822 + $0xc] sm:$0xf]
      %v827 = vld [vmem:[%s822 + $0x10] sm:$0xf]
      %v828 = vld [vmem:[%s822 + $0x14] sm:$0xf]
      %v829 = vld [vmem:[%s822 + $0x18] sm:$0xf]
      %v830 = vld [vmem:[%s822 + $0x1c] sm:$0xf]
      %v832 = vunpack.c.l.b16 %v821
      %v833 = vpack.c.b16 %v832, %v832
      %vm834 = vsmask.f32 6400
      %v836 = vshrl.u32 %v682, 16
      %v838 = vrot.slane %v836, 1
      %v839 = vshll.u32 %v682, 16
      %v841 = vrot.slane %v839, 2
      %v842 = vor.u32 %v838, %v841
      %v844 = vshrl.u32 %v683, 16
      %v846 = vrot.slane %v844, 1
      %v847 = vshll.u32 %v683, 16
      %v849 = vrot.slane %v847, 2
      %v850 = vor.u32 %v846, %v849
      %v851 = vsel %vm834, %v842, %v850
      %v853 = vshrl.u32 %v684, 16
      %v855 = vrot.slane %v853, 1
      %v856 = vshll.u32 %v684, 16
      %v858 = vrot.slane %v856, 2
      %v859 = vor.u32 %v855, %v858
      %v860 = vsel %vm834, %v850, %v859
      %v862 = vshrl.u32 %v685, 16
      %v864 = vrot.slane %v862, 1
      %v865 = vshll.u32 %v685, 16
      %v867 = vrot.slane %v865, 2
      %v868 = vor.u32 %v864, %v867
      %v869 = vsel %vm834, %v859, %v868
      %v871 = vshrl.u32 %v686, 16
      %v873 = vrot.slane %v871, 1
      %v874 = vshll.u32 %v686, 16
      %v876 = vrot.slane %v874, 2
      %v877 = vor.u32 %v873, %v876
      %v878 = vsel %vm834, %v868, %v877
      %v880 = vshrl.u32 %v833, 16
      %v882 = vrot.slane %v880, 1
      %v883 = vshll.u32 %v833, 16
      %v885 = vrot.slane %v883, 2
      %v886 = vor.u32 %v882, %v885
      %v887 = vsel %vm834, %v877, %v886
      %v896 = vunpack.c.l.b16 %v823
      %v897 = vunpack.c.l.b16 %v824
      %v898 = vunpack.c.l.b16 %v825
      %v899 = vunpack.c.l.b16 %v826
      %v900 = vunpack.c.l.b16 %v827
      %v901 = vunpack.c.l.b16 %v828
      %v902 = vunpack.c.l.b16 %v829
      %v903 = vunpack.c.l.b16 %v830
      %v904 = vpack.c.b16 %v897, %v896
      %v905 = vpack.c.b16 %v899, %v898
      %v906 = vpack.c.b16 %v901, %v900
      %v907 = vpack.c.b16 %v903, %v902
      %v913 = vsel %vm297, %v851, 0
      %v916 = vsel %vm297, %v860, 0
      %v919 = vsel %vm297, %v869, 0
      %v922 = vsel %vm297, %v878, 0
      %v925 = vsel %vm297, %v887, 0
      %927 = vmatprep.subr.bf16.mxu0 0
      %928 = vmatpush1.bf16.msra.mxu0 %v904
      %929 = vmatprep.subr.bf16.mxu0 0
      %930 = vmatpush1.bf16.msra.mxu0 %v905
      %931 = vmatprep.subr.bf16.mxu0 0
      %932 = vmatpush1.bf16.msra.mxu0 %v906
      %933 = vmatprep.subr.bf16.mxu0 0
      %934 = vmatpush1.bf16.msra.mxu0 %v907
      %935 = vmatprep.subr.bf16.mxu0 0
      %936 = vmatpush1.bf16.msra.mxu0 0
      %937 = vmatprep.subr.bf16.mxu0 0
      %938 = vmatpush1.bf16.msra.mxu0 0
      %939 = vmatprep.subr.bf16.mxu0 0
      %940 = vmatpush1.bf16.msra.mxu0 0
      %941 = vmatprep.subr.bf16.mxu0 0
      %942 = vmatpush1.bf16.msra.mxu0 0
      %943 = vmatprep.subr.bf16.mxu0 0
      %944 = vmatpush1.bf16.msra.mxu0 0
      %945 = vmatprep.subr.bf16.mxu0 0
      %946 = vmatpush1.bf16.msra.mxu0 0
      %947 = vmatprep.subr.bf16.mxu0 0
      %948 = vmatpush1.bf16.msra.mxu0 0
      %949 = vmatprep.subr.bf16.mxu0 0
      %950 = vmatpush1.bf16.msra.mxu0 0
      %951 = vmatprep.subr.bf16.mxu0 0
      %952 = vmatpush1.bf16.msra.mxu0 0
      %953 = vmatprep.subr.bf16.mxu0 0
      %954 = vmatpush1.bf16.msra.mxu0 0
      %955 = vmatprep.subr.bf16.mxu0 0
      %956 = vmatpush1.bf16.msra.mxu0 0
      %957 = vmatprep.subr.bf16.mxu0 0
      %958 = vmatpush1.bf16.msra.mxu0 0
      %959 = vmatprep.mubr.bf16.mxu0 0
      %960 = vmatmul.mubr.bf16.gmra.mrb[0].mxu0 %v913
      %v961 = vpop.f32.mrb[0].mxu0
      %v962 = vadd.f32 0.0, %v961
      %v963 = vpop.f32.mrb[0].mxu0
      %v964 = vpop.f32.mrb[0].mxu0
      %v965 = vadd.f32 0.0, %v964
      %v966 = vpop.f32.mrb[0].mxu0
      %967 = vmatprep.mubr.bf16.mxu0 0
      %968 = vmatmul.mubr.bf16.gmra.mrb[0].mxu0 %v916
      %v969 = vpop.f32.mrb[0].mxu0
      %v970 = vadd.f32 0.0, %v969
      %v971 = vpop.f32.mrb[0].mxu0
      %v972 = vpop.f32.mrb[0].mxu0
      %v973 = vadd.f32 0.0, %v972
      %v974 = vpop.f32.mrb[0].mxu0
      %975 = vmatprep.mubr.bf16.mxu0 0
      %976 = vmatmul.mubr.bf16.gmra.mrb[0].mxu0 %v919
      %v977 = vpop.f32.mrb[0].mxu0
      %v978 = vadd.f32 0.0, %v977
      %v979 = vpop.f32.mrb[0].mxu0
      %v980 = vpop.f32.mrb[0].mxu0
      %v981 = vadd.f32 0.0, %v980
      %v982 = vpop.f32.mrb[0].mxu0
      %983 = vmatprep.mubr.bf16.mxu0 0
      %984 = vmatmul.mubr.bf16.gmra.mrb[0].mxu0 %v922
      %v985 = vpop.f32.mrb[0].mxu0
      %v986 = vadd.f32 0.0, %v985
      %v987 = vpop.f32.mrb[0].mxu0
      %v988 = vpop.f32.mrb[0].mxu0
      %v989 = vadd.f32 0.0, %v988
      %v990 = vpop.f32.mrb[0].mxu0
      %991 = vmatprep.mubr.bf16.mxu0 0
      %992 = vmatmul.mubr.bf16.gmra.mrb[0].mxu0 %v925
      %v993 = vpop.f32.mrb[0].mxu0
      %v994 = vadd.f32 0.0, %v993
      %v995 = vpop.f32.mrb[0].mxu0
      %v996 = vpop.f32.mrb[0].mxu0
      %v997 = vadd.f32 0.0, %v996
      %v998 = vpop.f32.mrb[0].mxu0
      %999 = vdwg.mxu0
      %v1000 = vadd.f32 %v811, %v962
      %v1001 = vadd.f32 %v812, %v965
      %v1002 = vadd.f32 %v813, %v970
      %v1003 = vadd.f32 %v814, %v973
      %v1004 = vadd.f32 %v815, %v978
      %v1005 = vadd.f32 %v816, %v981
      %v1006 = vadd.f32 %v817, %v986
      %v1007 = vadd.f32 %v818, %v989
      %v1008 = vadd.f32 %v819, %v994
      %v1009 = vadd.f32 %v820, %v997
      %v1010 = vld [vmem:[%s165 + $0x4] sm:$0xc]
      %s1011 = scalar_lea.vmem %s1, 160
      %v1012 = vld [vmem:[%s1011] sm:$0xf]
      %v1013 = vld [vmem:[%s1011 + $0x4] sm:$0xf]
      %v1014 = vld [vmem:[%s1011 + $0x8] sm:$0xf]
      %v1015 = vld [vmem:[%s1011 + $0xc] sm:$0xf]
      %v1016 = vld [vmem:[%s1011 + $0x10] sm:$0xf]
      %v1017 = vld [vmem:[%s1011 + $0x14] sm:$0xf]
      %v1018 = vld [vmem:[%s1011 + $0x18] sm:$0xf]
      %v1019 = vld [vmem:[%s1011 + $0x1c] sm:$0xf]
      %v1021 = vunpack.c.l.b16 %v1010
      %v1022 = vpack.c.b16 %v672, %v1021
      %vm1023 = vcmask 1045504
      %v1024 = vrot.slane %v1022, 2
      %v1025 = vrot.slane %v683, 2
      %v1026 = vsel %vm1023, %v1024, %v1025
      %v1027 = vrot.slane %v684, 2
      %v1028 = vsel %vm1023, %v1025, %v1027
      %v1029 = vrot.slane %v685, 2
      %v1030 = vsel %vm1023, %v1027, %v1029
      %v1031 = vrot.slane %v686, 2
      %v1032 = vsel %vm1023, %v1029, %v1031
      %v1033 = vrot.slane %v833, 2
      %v1034 = vsel %vm1023, %v1031, %v1033
      %v1043 = vunpack.c.l.b16 %v1012
      %v1044 = vunpack.c.l.b16 %v1013
      %v1045 = vunpack.c.l.b16 %v1014
      %v1046 = vunpack.c.l.b16 %v1015
      %v1047 = vunpack.c.l.b16 %v1016
      %v1048 = vunpack.c.l.b16 %v1017
      %v1049 = vunpack.c.l.b16 %v1018
      %v1050 = vunpack.c.l.b16 %v1019
      %v1051 = vpack.c.b16 %v1044, %v1043
      %v1052 = vpack.c.b16 %v1046, %v1045
      %v1053 = vpack.c.b16 %v1048, %v1047
      %v1054 = vpack.c.b16 %v1050, %v1049
      %v1060 = vsel %vm297, %v1026, 0
      %v1063 = vsel %vm297, %v1028, 0
      %v1066 = vsel %vm297, %v1030, 0
      %v1069 = vsel %vm297, %v1032, 0
      %v1072 = vsel %vm297, %v1034, 0
      %1074 = vmatprep.subr.bf16.mxu0 0
      %1075 = vmatpush1.bf16.msra.mxu0 %v1051
      %1076 = vmatprep.subr.bf16.mxu0 0
      %1077 = vmatpush1.bf16.msra.mxu0 %v1052
      %1078 = vmatprep.subr.bf16.mxu0 0
      %1079 = vmatpush1.bf16.msra.mxu0 %v1053
      %1080 = vmatprep.subr.bf16.mxu0 0
      %1081 = vmatpush1.bf16.msra.mxu0 %v1054
      %1082 = vmatprep.subr.bf16.mxu0 0
      %1083 = vmatpush1.bf16.msra.mxu0 0
      %1084 = vmatprep.subr.bf16.mxu0 0
      %1085 = vmatpush1.bf16.msra.mxu0 0
      %1086 = vmatprep.subr.bf16.mxu0 0
      %1087 = vmatpush1.bf16.msra.mxu0 0
      %1088 = vmatprep.subr.bf16.mxu0 0
      %1089 = vmatpush1.bf16.msra.mxu0 0
      %1090 = vmatprep.subr.bf16.mxu0 0
      %1091 = vmatpush1.bf16.msra.mxu0 0
      %1092 = vmatprep.subr.bf16.mxu0 0
      %1093 = vmatpush1.bf16.msra.mxu0 0
      %1094 = vmatprep.subr.bf16.mxu0 0
      %1095 = vmatpush1.bf16.msra.mxu0 0
      %1096 = vmatprep.subr.bf16.mxu0 0
      %1097 = vmatpush1.bf16.msra.mxu0 0
      %1098 = vmatprep.subr.bf16.mxu0 0
      %1099 = vmatpush1.bf16.msra.mxu0 0
      %1100 = vmatprep.subr.bf16.mxu0 0
      %1101 = vmatpush1.bf16.msra.mxu0 0
      %1102 = vmatprep.subr.bf16.mxu0 0
      %1103 = vmatpush1.bf16.msra.mxu0 0
      %1104 = vmatprep.subr.bf16.mxu0 0
      %1105 = vmatpush1.bf16.msra.mxu0 0
      %1106 = vmatprep.mubr.bf16.mxu0 0
      %1107 = vmatmul.mubr.bf16.gmra.mrb[0].mxu0 %v1060
      %v1108 = vpop.f32.mrb[0].mxu0
      %v1109 = vadd.f32 0.0, %v1108
      %v1110 = vpop.f32.mrb[0].mxu0
      %v1111 = vpop.f32.mrb[0].mxu0
      %v1112 = vadd.f32 0.0, %v1111
      %v1113 = vpop.f32.mrb[0].mxu0
      %1114 = vmatprep.mubr.bf16.mxu0 0
      %1115 = vmatmul.mubr.bf16.gmra.mrb[0].mxu0 %v1063
      %v1116 = vpop.f32.mrb[0].mxu0
      %v1117 = vadd.f32 0.0, %v1116
      %v1118 = vpop.f32.mrb[0].mxu0
      %v1119 = vpop.f32.mrb[0].mxu0
      %v1120 = vadd.f32 0.0, %v1119
      %v1121 = vpop.f32.mrb[0].mxu0
      %1122 = vmatprep.mubr.bf16.mxu0 0
      %1123 = vmatmul.mubr.bf16.gmra.mrb[0].mxu0 %v1066
      %v1124 = vpop.f32.mrb[0].mxu0
      %v1125 = vadd.f32 0.0, %v1124
      %v1126 = vpop.f32.mrb[0].mxu0
      %v1127 = vpop.f32.mrb[0].mxu0
      %v1128 = vadd.f32 0.0, %v1127
      %v1129 = vpop.f32.mrb[0].mxu0
      %1130 = vmatprep.mubr.bf16.mxu0 0
      %1131 = vmatmul.mubr.bf16.gmra.mrb[0].mxu0 %v1069
      %v1132 = vpop.f32.mrb[0].mxu0
      %v1133 = vadd.f32 0.0, %v1132
      %v1134 = vpop.f32.mrb[0].mxu0
      %v1135 = vpop.f32.mrb[0].mxu0
      %v1136 = vadd.f32 0.0, %v1135
      %v1137 = vpop.f32.mrb[0].mxu0
      %1138 = vmatprep.mubr.bf16.mxu0 0
      %1139 = vmatmul.mubr.bf16.gmra.mrb[0].mxu0 %v1072
      %v1140 = vpop.f32.mrb[0].mxu0
      %v1141 = vadd.f32 0.0, %v1140
      %v1142 = vpop.f32.mrb[0].mxu0
      %v1143 = vpop.f32.mrb[0].mxu0
      %v1144 = vadd.f32 0.0, %v1143
      %v1145 = vpop.f32.mrb[0].mxu0
      %1146 = vdwg.mxu0
      %v1147 = vadd.f32 %v1000, %v1109
      %v1148 = vadd.f32 %v1001, %v1112
      %v1149 = vadd.f32 %v1002, %v1117
      %v1150 = vadd.f32 %v1003, %v1120
      %v1151 = vadd.f32 %v1004, %v1125
      %v1152 = vadd.f32 %v1005, %v1128
      %v1153 = vadd.f32 %v1006, %v1133
      %v1154 = vadd.f32 %v1007, %v1136
      %v1155 = vadd.f32 %v1008, %v1141
      %v1156 = vadd.f32 %v1009, %v1144
      %v1157 = vld [vmem:[%s165 + $0x8] sm:$0xc]
      %v1158 = vld [vmem:[%s165 + $0xc] sm:$0xf]
      %v1159 = vld [vmem:[%s165 + $0x10] sm:$0xf]
      %v1160 = vld [vmem:[%s165 + $0x14] sm:$0xf]
      %v1161 = vld [vmem:[%s165 + $0x18] sm:$0xf]
      %v1162 = vld [vmem:[%s165 + $0x1c] sm:$0xf]
      %v1163 = vld [vmem:[%s165 + $0x20] sm:$0xf]
      %v1164 = vld [vmem:[%s165 + $0x24] sm:$0xf]
      %v1165 = vld [vmem:[%s165 + $0x28] sm:$0xf]
      %v1166 = vld [vmem:[%s165 + $0x2c] sm:$0xf]
      %v1167 = vld [vmem:[%s165 + $0x30] sm:$0x3]
      %s1168 = scalar_lea.vmem %s1, 192
      %v1169 = vld [vmem:[%s1168] sm:$0xf]
      %v1170 = vld [vmem:[%s1168 + $0x4] sm:$0xf]
      %v1171 = vld [vmem:[%s1168 + $0x8] sm:$0xf]
      %v1172 = vld [vmem:[%s1168 + $0xc] sm:$0xf]
      %v1173 = vld [vmem:[%s1168 + $0x10] sm:$0xf]
      %v1174 = vld [vmem:[%s1168 + $0x14] sm:$0xf]
      %v1175 = vld [vmem:[%s1168 + $0x18] sm:$0xf]
      %v1176 = vld [vmem:[%s1168 + $0x1c] sm:$0xf]
      %v1188 = vunpack.c.l.b16 %v1157
      %v1189 = vunpack.c.l.b16 %v1158
      %v1190 = vunpack.c.l.b16 %v1159
      %v1191 = vunpack.c.l.b16 %v1160
      %v1192 = vunpack.c.l.b16 %v1161
      %v1193 = vunpack.c.l.b16 %v1162
      %v1194 = vunpack.c.l.b16 %v1163
      %v1195 = vunpack.c.l.b16 %v1164
      %v1196 = vunpack.c.l.b16 %v1165
      %v1197 = vunpack.c.l.b16 %v1166
      %v1198 = vunpack.c.l.b16 %v1167
      %v1199 = vpack.c.b16 %v1189, %v1188
      %v1200 = vpack.c.b16 %v1191, %v1190
      %v1201 = vpack.c.b16 %v1193, %v1192
      %v1202 = vpack.c.b16 %v1195, %v1194
      %v1203 = vpack.c.b16 %v1197, %v1196
      %v1204 = vpack.c.b16 %v1198, %v1198
      %v1205 = vrot.slane %v1199, 2
      %v1206 = vrot.slane %v1200, 2
      %v1207 = vsel %vm1023, %v1205, %v1206
      %v1208 = vrot.slane %v1201, 2
      %v1209 = vsel %vm1023, %v1206, %v1208
      %v1210 = vrot.slane %v1202, 2
      %v1211 = vsel %vm1023, %v1208, %v1210
      %v1212 = vrot.slane %v1203, 2
      %v1213 = vsel %vm1023, %v1210, %v1212
      %v1214 = vrot.slane %v1204, 2
      %v1215 = vsel %vm1023, %v1212, %v1214
      %v1224 = vunpack.c.l.b16 %v1169
      %v1225 = vunpack.c.l.b16 %v1170
      %v1226 = vunpack.c.l.b16 %v1171
      %v1227 = vunpack.c.l.b16 %v1172
      %v1228 = vunpack.c.l.b16 %v1173
      %v1229 = vunpack.c.l.b16 %v1174
      %v1230 = vunpack.c.l.b16 %v1175
      %v1231 = vunpack.c.l.b16 %v1176
      %v1232 = vpack.c.b16 %v1225, %v1224
      %v1233 = vpack.c.b16 %v1227, %v1226
      %v1234 = vpack.c.b16 %v1229, %v1228
      %v1235 = vpack.c.b16 %v1231, %v1230
      %v1241 = vsel %vm297, %v1207, 0
      %v1244 = vsel %vm297, %v1209, 0
      %v1247 = vsel %vm297, %v1211, 0
      %v1250 = vsel %vm297, %v1213, 0
      %v1253 = vsel %vm297, %v1215, 0
      %1255 = vmatprep.subr.bf16.mxu0 0
      %1256 = vmatpush1.bf16.msra.mxu0 %v1232
      %1257 = vmatprep.subr.bf16.mxu0 0
      %1258 = vmatpush1.bf16.msra.mxu0 %v1233
      %1259 = vmatprep.subr.bf16.mxu0 0
      %1260 = vmatpush1.bf16.msra.mxu0 %v1234
      %1261 = vmatprep.subr.bf16.mxu0 0
      %1262 = vmatpush1.bf16.msra.mxu0 %v1235
      %1263 = vmatprep.subr.bf16.mxu0 0
      %1264 = vmatpush1.bf16.msra.mxu0 0
      %1265 = vmatprep.subr.bf16.mxu0 0
      %1266 = vmatpush1.bf16.msra.mxu0 0
      %1267 = vmatprep.subr.bf16.mxu0 0
      %1268 = vmatpush1.bf16.msra.mxu0 0
      %1269 = vmatprep.subr.bf16.mxu0 0
      %1270 = vmatpush1.bf16.msra.mxu0 0
      %1271 = vmatprep.subr.bf16.mxu0 0
      %1272 = vmatpush1.bf16.msra.mxu0 0
      %1273 = vmatprep.subr.bf16.mxu0 0
      %1274 = vmatpush1.bf16.msra.mxu0 0
      %1275 = vmatprep.subr.bf16.mxu0 0
      %1276 = vmatpush1.bf16.msra.mxu0 0
      %1277 = vmatprep.subr.bf16.mxu0 0
      %1278 = vmatpush1.bf16.msra.mxu0 0
      %1279 = vmatprep.subr.bf16.mxu0 0
      %1280 = vmatpush1.bf16.msra.mxu0 0
      %1281 = vmatprep.subr.bf16.mxu0 0
      %1282 = vmatpush1.bf16.msra.mxu0 0
      %1283 = vmatprep.subr.bf16.mxu0 0
      %1284 = vmatpush1.bf16.msra.mxu0 0
      %1285 = vmatprep.subr.bf16.mxu0 0
      %1286 = vmatpush1.bf16.msra.mxu0 0
      %1287 = vmatprep.mubr.bf16.mxu0 0
      %1288 = vmatmul.mubr.bf16.gmra.mrb[0].mxu0 %v1241
      %v1289 = vpop.f32.mrb[0].mxu0
      %v1290 = vadd.f32 0.0, %v1289
      %v1291 = vpop.f32.mrb[0].mxu0
      %v1292 = vpop.f32.mrb[0].mxu0
      %v1293 = vadd.f32 0.0, %v1292
      %v1294 = vpop.f32.mrb[0].mxu0
      %1295 = vmatprep.mubr.bf16.mxu0 0
      %1296 = vmatmul.mubr.bf16.gmra.mrb[0].mxu0 %v1244
      %v1297 = vpop.f32.mrb[0].mxu0
      %v1298 = vadd.f32 0.0, %v1297
      %v1299 = vpop.f32.mrb[0].mxu0
      %v1300 = vpop.f32.mrb[0].mxu0
      %v1301 = vadd.f32 0.0, %v1300
      %v1302 = vpop.f32.mrb[0].mxu0
      %1303 = vmatprep.mubr.bf16.mxu0 0
      %1304 = vmatmul.mubr.bf16.gmra.mrb[0].mxu0 %v1247
      %v1305 = vpop.f32.mrb[0].mxu0
      %v1306 = vadd.f32 0.0, %v1305
      %v1307 = vpop.f32.mrb[0].mxu0
      %v1308 = vpop.f32.mrb[0].mxu0
      %v1309 = vadd.f32 0.0, %v1308
      %v1310 = vpop.f32.mrb[0].mxu0
      %1311 = vmatprep.mubr.bf16.mxu0 0
      %1312 = vmatmul.mubr.bf16.gmra.mrb[0].mxu0 %v1250
      %v1313 = vpop.f32.mrb[0].mxu0
      %v1314 = vadd.f32 0.0, %v1313
      %v1315 = vpop.f32.mrb[0].mxu0
      %v1316 = vpop.f32.mrb[0].mxu0
      %v1317 = vadd.f32 0.0, %v1316
      %v1318 = vpop.f32.mrb[0].mxu0
      %1319 = vmatprep.mubr.bf16.mxu0 0
      %1320 = vmatmul.mubr.bf16.gmra.mrb[0].mxu0 %v1253
      %v1321 = vpop.f32.mrb[0].mxu0
      %v1322 = vadd.f32 0.0, %v1321
      %v1323 = vpop.f32.mrb[0].mxu0
      %v1324 = vpop.f32.mrb[0].mxu0
      %v1325 = vadd.f32 0.0, %v1324
      %v1326 = vpop.f32.mrb[0].mxu0
      %1327 = vdwg.mxu0
      %v1328 = vadd.f32 %v1147, %v1290
      %v1329 = vadd.f32 %v1148, %v1293
      %v1330 = vadd.f32 %v1149, %v1298
      %v1331 = vadd.f32 %v1150, %v1301
      %v1332 = vadd.f32 %v1151, %v1306
      %v1333 = vadd.f32 %v1152, %v1309
      %v1334 = vadd.f32 %v1153, %v1314
      %v1335 = vadd.f32 %v1154, %v1317
      %v1336 = vadd.f32 %v1155, %v1322
      %v1337 = vadd.f32 %v1156, %v1325
      %v1338 = vld [vmem:[%s165 + $0x30] sm:$0x7]
      %s1339 = scalar_lea.vmem %s1, 224
      %v1340 = vld [vmem:[%s1339] sm:$0xf]
      %v1341 = vld [vmem:[%s1339 + $0x4] sm:$0xf]
      %v1342 = vld [vmem:[%s1339 + $0x8] sm:$0xf]
      %v1343 = vld [vmem:[%s1339 + $0xc] sm:$0xf]
      %v1344 = vld [vmem:[%s1339 + $0x10] sm:$0xf]
      %v1345 = vld [vmem:[%s1339 + $0x14] sm:$0xf]
      %v1346 = vld [vmem:[%s1339 + $0x18] sm:$0xf]
      %v1347 = vld [vmem:[%s1339 + $0x1c] sm:$0xf]
      %v1349 = vunpack.c.l.b16 %v1338
      %v1350 = vpack.c.b16 %v1349, %v1349
      %vm1351 = vsmask.f32 5376
      %v1353 = vshrl.u32 %v1199, 16
      %v1355 = vrot.slane %v1353, 2
      %v1356 = vshll.u32 %v1199, 16
      %v1358 = vrot.slane %v1356, 3
      %v1359 = vor.u32 %v1355, %v1358
      %v1361 = vshrl.u32 %v1200, 16
      %v1363 = vrot.slane %v1361, 2
      %v1364 = vshll.u32 %v1200, 16
      %v1366 = vrot.slane %v1364, 3
      %v1367 = vor.u32 %v1363, %v1366
      %v1368 = vsel %vm1351, %v1359, %v1367
      %v1370 = vshrl.u32 %v1201, 16
      %v1372 = vrot.slane %v1370, 2
      %v1373 = vshll.u32 %v1201, 16
      %v1375 = vrot.slane %v1373, 3
      %v1376 = vor.u32 %v1372, %v1375
      %v1377 = vsel %vm1351, %v1367, %v1376
      %v1379 = vshrl.u32 %v1202, 16
      %v1381 = vrot.slane %v1379, 2
      %v1382 = vshll.u32 %v1202, 16
      %v1384 = vrot.slane %v1382, 3
      %v1385 = vor.u32 %v1381, %v1384
      %v1386 = vsel %vm1351, %v1376, %v1385
      %v1388 = vshrl.u32 %v1203, 16
      %v1390 = vrot.slane %v1388, 2
      %v1391 = vshll.u32 %v1203, 16
      %v1393 = vrot.slane %v1391, 3
      %v1394 = vor.u32 %v1390, %v1393
      %v1395 = vsel %vm1351, %v1385, %v1394
      %v1397 = vshrl.u32 %v1350, 16
      %v1399 = vrot.slane %v1397, 2
      %v1400 = vshll.u32 %v1350, 16
      %v1402 = vrot.slane %v1400, 3
      %v1403 = vor.u32 %v1399, %v1402
      %v1404 = vsel %vm1351, %v1394, %v1403
      %v1413 = vunpack.c.l.b16 %v1340
      %v1414 = vunpack.c.l.b16 %v1341
      %v1415 = vunpack.c.l.b16 %v1342
      %v1416 = vunpack.c.l.b16 %v1343
      %v1417 = vunpack.c.l.b16 %v1344
      %v1418 = vunpack.c.l.b16 %v1345
      %v1419 = vunpack.c.l.b16 %v1346
      %v1420 = vunpack.c.l.b16 %v1347
      %v1421 = vpack.c.b16 %v1414, %v1413
      %v1422 = vpack.c.b16 %v1416, %v1415
      %v1423 = vpack.c.b16 %v1418, %v1417
      %v1424 = vpack.c.b16 %v1420, %v1419
      %v1430 = vsel %vm297, %v1368, 0
      %v1433 = vsel %vm297, %v1377, 0
      %v1436 = vsel %vm297, %v1386, 0
      %v1439 = vsel %vm297, %v1395, 0
      %v1442 = vsel %vm297, %v1404, 0
      %1444 = vmatprep.subr.bf16.mxu0 0
      %1445 = vmatpush1.bf16.msra.mxu0 %v1421
      %1446 = vmatprep.subr.bf16.mxu0 0
      %1447 = vmatpush1.bf16.msra.mxu0 %v1422
      %1448 = vmatprep.subr.bf16.mxu0 0
      %1449 = vmatpush1.bf16.msra.mxu0 %v1423
      %1450 = vmatprep.subr.bf16.mxu0 0
      %1451 = vmatpush1.bf16.msra.mxu0 %v1424
      %1452 = vmatprep.subr.bf16.mxu0 0
      %1453 = vmatpush1.bf16.msra.mxu0 0
      %1454 = vmatprep.subr.bf16.mxu0 0
      %1455 = vmatpush1.bf16.msra.mxu0 0
      %1456 = vmatprep.subr.bf16.mxu0 0
      %1457 = vmatpush1.bf16.msra.mxu0 0
      %1458 = vmatprep.subr.bf16.mxu0 0
      %1459 = vmatpush1.bf16.msra.mxu0 0
      %1460 = vmatprep.subr.bf16.mxu0 0
      %1461 = vmatpush1.bf16.msra.mxu0 0
      %1462 = vmatprep.subr.bf16.mxu0 0
      %1463 = vmatpush1.bf16.msra.mxu0 0
      %1464 = vmatprep.subr.bf16.mxu0 0
      %1465 = vmatpush1.bf16.msra.mxu0 0
      %1466 = vmatprep.subr.bf16.mxu0 0
      %1467 = vmatpush1.bf16.msra.mxu0 0
      %1468 = vmatprep.subr.bf16.mxu0 0
      %1469 = vmatpush1.bf16.msra.mxu0 0
      %1470 = vmatprep.subr.bf16.mxu0 0
      %1471 = vmatpush1.bf16.msra.mxu0 0
      %1472 = vmatprep.subr.bf16.mxu0 0
      %1473 = vmatpush1.bf16.msra.mxu0 0
      %1474 = vmatprep.subr.bf16.mxu0 0
      %1475 = vmatpush1.bf16.msra.mxu0 0
      %1476 = vmatprep.mubr.bf16.mxu0 0
      %1477 = vmatmul.mubr.bf16.gmra.mrb[0].mxu0 %v1430
      %v1478 = vpop.f32.mrb[0].mxu0
      %v1479 = vadd.f32 0.0, %v1478
      %v1480 = vpop.f32.mrb[0].mxu0
      %v1481 = vpop.f32.mrb[0].mxu0
      %v1482 = vadd.f32 0.0, %v1481
      %v1483 = vpop.f32.mrb[0].mxu0
      %1484 = vmatprep.mubr.bf16.mxu0 0
      %1485 = vmatmul.mubr.bf16.gmra.mrb[0].mxu0 %v1433
      %v1486 = vpop.f32.mrb[0].mxu0
      %v1487 = vadd.f32 0.0, %v1486
      %v1488 = vpop.f32.mrb[0].mxu0
      %v1489 = vpop.f32.mrb[0].mxu0
      %v1490 = vadd.f32 0.0, %v1489
      %v1491 = vpop.f32.mrb[0].mxu0
      %1492 = vmatprep.mubr.bf16.mxu0 0
      %1493 = vmatmul.mubr.bf16.gmra.mrb[0].mxu0 %v1436
      %v1494 = vpop.f32.mrb[0].mxu0
      %v1495 = vadd.f32 0.0, %v1494
      %v1496 = vpop.f32.mrb[0].mxu0
      %v1497 = vpop.f32.mrb[0].mxu0
      %v1498 = vadd.f32 0.0, %v1497
      %v1499 = vpop.f32.mrb[0].mxu0
      %1500 = vmatprep.mubr.bf16.mxu0 0
      %1501 = vmatmul.mubr.bf16.gmra.mrb[0].mxu0 %v1439
      %v1502 = vpop.f32.mrb[0].mxu0
      %v1503 = vadd.f32 0.0, %v1502
      %v1504 = vpop.f32.mrb[0].mxu0
      %v1505 = vpop.f32.mrb[0].mxu0
      %v1506 = vadd.f32 0.0, %v1505
      %v1507 = vpop.f32.mrb[0].mxu0
      %1508 = vmatprep.mubr.bf16.mxu0 0
      %1509 = vmatmul.mubr.bf16.gmra.mrb[0].mxu0 %v1442
      %v1510 = vpop.f32.mrb[0].mxu0
      %v1511 = vadd.f32 0.0, %v1510
      %v1512 = vpop.f32.mrb[0].mxu0
      %v1513 = vpop.f32.mrb[0].mxu0
      %v1514 = vadd.f32 0.0, %v1513
      %v1515 = vpop.f32.mrb[0].mxu0
      %1516 = vdwg.mxu0
      %v1517 = vadd.f32 %v1328, %v1479
      %v1518 = vadd.f32 %v1329, %v1482
      %v1519 = vadd.f32 %v1330, %v1487
      %v1520 = vadd.f32 %v1331, %v1490
      %v1521 = vadd.f32 %v1332, %v1495
      %v1522 = vadd.f32 %v1333, %v1498
      %v1523 = vadd.f32 %v1334, %v1503
      %v1524 = vadd.f32 %v1335, %v1506
      %v1525 = vadd.f32 %v1336, %v1511
      %v1526 = vadd.f32 %v1337, %v1514
      %v1527 = vld [vmem:[%s165 + $0x8] sm:$0x8]
      %s1528 = scalar_lea.vmem %s1, 256
      %v1529 = vld [vmem:[%s1528] sm:$0xf]
      %v1530 = vld [vmem:[%s1528 + $0x4] sm:$0xf]
      %v1531 = vld [vmem:[%s1528 + $0x8] sm:$0xf]
      %v1532 = vld [vmem:[%s1528 + $0xc] sm:$0xf]
      %v1533 = vld [vmem:[%s1528 + $0x10] sm:$0xf]
      %v1534 = vld [vmem:[%s1528 + $0x14] sm:$0xf]
      %v1535 = vld [vmem:[%s1528 + $0x18] sm:$0xf]
      %v1536 = vld [vmem:[%s1528 + $0x1c] sm:$0xf]
      %v1538 = vunpack.c.l.b16 %v1527
      %v1539 = vpack.c.b16 %v1189, %v1538
      %vm1540 = vcmask 1044480
      %v1541 = vrot.slane %v1539, 3
      %v1542 = vrot.slane %v1200, 3
      %v1543 = vsel %vm1540, %v1541, %v1542
      %v1544 = vrot.slane %v1201, 3
      %v1545 = vsel %vm1540, %v1542, %v1544
      %v1546 = vrot.slane %v1202, 3
      %v1547 = vsel %vm1540, %v1544, %v1546
      %v1548 = vrot.slane %v1203, 3
      %v1549 = vsel %vm1540, %v1546, %v1548
      %v1550 = vrot.slane %v1350, 3
      %v1551 = vsel %vm1540, %v1548, %v1550
      %v1560 = vunpack.c.l.b16 %v1529
      %v1561 = vunpack.c.l.b16 %v1530
      %v1562 = vunpack.c.l.b16 %v1531
      %v1563 = vunpack.c.l.b16 %v1532
      %v1564 = vunpack.c.l.b16 %v1533
      %v1565 = vunpack.c.l.b16 %v1534
      %v1566 = vunpack.c.l.b16 %v1535
      %v1567 = vunpack.c.l.b16 %v1536
      %v1568 = vpack.c.b16 %v1561, %v1560
      %v1569 = vpack.c.b16 %v1563, %v1562
      %v1570 = vpack.c.b16 %v1565, %v1564
      %v1571 = vpack.c.b16 %v1567, %v1566
      %v1577 = vsel %vm297, %v1543, 0
      %v1580 = vsel %vm297, %v1545, 0
      %v1583 = vsel %vm297, %v1547, 0
      %v1586 = vsel %vm297, %v1549, 0
      %v1589 = vsel %vm297, %v1551, 0
      %1591 = vmatprep.subr.bf16.mxu0 0
      %1592 = vmatpush1.bf16.msra.mxu0 %v1568
      %1593 = vmatprep.subr.bf16.mxu0 0
      %1594 = vmatpush1.bf16.msra.mxu0 %v1569
      %1595 = vmatprep.subr.bf16.mxu0 0
      %1596 = vmatpush1.bf16.msra.mxu0 %v1570
      %1597 = vmatprep.subr.bf16.mxu0 0
      %1598 = vmatpush1.bf16.msra.mxu0 %v1571
      %1599 = vmatprep.subr.bf16.mxu0 0
      %1600 = vmatpush1.bf16.msra.mxu0 0
      %1601 = vmatprep.subr.bf16.mxu0 0
      %1602 = vmatpush1.bf16.msra.mxu0 0
      %1603 = vmatprep.subr.bf16.mxu0 0
      %1604 = vmatpush1.bf16.msra.mxu0 0
      %1605 = vmatprep.subr.bf16.mxu0 0
      %1606 = vmatpush1.bf16.msra.mxu0 0
      %1607 = vmatprep.subr.bf16.mxu0 0
      %1608 = vmatpush1.bf16.msra.mxu0 0
      %1609 = vmatprep.subr.bf16.mxu0 0
      %1610 = vmatpush1.bf16.msra.mxu0 0
      %1611 = vmatprep.subr.bf16.mxu0 0
      %1612 = vmatpush1.bf16.msra.mxu0 0
      %1613 = vmatprep.subr.bf16.mxu0 0
      %1614 = vmatpush1.bf16.msra.mxu0 0
      %1615 = vmatprep.subr.bf16.mxu0 0
      %1616 = vmatpush1.bf16.msra.mxu0 0
      %1617 = vmatprep.subr.bf16.mxu0 0
      %1618 = vmatpush1.bf16.msra.mxu0 0
      %1619 = vmatprep.subr.bf16.mxu0 0
      %1620 = vmatpush1.bf16.msra.mxu0 0
      %1621 = vmatprep.subr.bf16.mxu0 0
      %1622 = vmatpush1.bf16.msra.mxu0 0
      %1623 = vmatprep.mubr.bf16.mxu0 0
      %1624 = vmatmul.mubr.bf16.gmra.mrb[0].mxu0 %v1577
      %v1625 = vpop.f32.mrb[0].mxu0
      %v1626 = vadd.f32 0.0, %v1625
      %v1627 = vpop.f32.mrb[0].mxu0
      %v1628 = vpop.f32.mrb[0].mxu0
      %v1629 = vadd.f32 0.0, %v1628
      %v1630 = vpop.f32.mrb[0].mxu0
      %1631 = vmatprep.mubr.bf16.mxu0 0
      %1632 = vmatmul.mubr.bf16.gmra.mrb[0].mxu0 %v1580
      %v1633 = vpop.f32.mrb[0].mxu0
      %v1634 = vadd.f32 0.0, %v1633
      %v1635 = vpop.f32.mrb[0].mxu0
      %v1636 = vpop.f32.mrb[0].mxu0
      %v1637 = vadd.f32 0.0, %v1636
      %v1638 = vpop.f32.mrb[0].mxu0
      %1639 = vmatprep.mubr.bf16.mxu0 0
      %1640 = vmatmul.mubr.bf16.gmra.mrb[0].mxu0 %v1583
      %v1641 = vpop.f32.mrb[0].mxu0
      %v1642 = vadd.f32 0.0, %v1641
      %v1643 = vpop.f32.mrb[0].mxu0
      %v1644 = vpop.f32.mrb[0].mxu0
      %v1645 = vadd.f32 0.0, %v1644
      %v1646 = vpop.f32.mrb[0].mxu0
      %1647 = vmatprep.mubr.bf16.mxu0 0
      %1648 = vmatmul.mubr.bf16.gmra.mrb[0].mxu0 %v1586
      %v1649 = vpop.f32.mrb[0].mxu0
      %v1650 = vadd.f32 0.0, %v1649
      %v1651 = vpop.f32.mrb[0].mxu0
      %v1652 = vpop.f32.mrb[0].mxu0
      %v1653 = vadd.f32 0.0, %v1652
      %v1654 = vpop.f32.mrb[0].mxu0
      %1655 = vmatprep.mubr.bf16.mxu0 0
      %1656 = vmatmul.mubr.bf16.gmra.mrb[0].mxu0 %v1589
      %v1657 = vpop.f32.mrb[0].mxu0
      %v1658 = vadd.f32 0.0, %v1657
      %v1659 = vpop.f32.mrb[0].mxu0
      %v1660 = vpop.f32.mrb[0].mxu0
      %v1661 = vadd.f32 0.0, %v1660
      %v1662 = vpop.f32.mrb[0].mxu0
      %1663 = vdwg.mxu0
      %v1664 = vadd.f32 %v1517, %v1626
      %v1665 = vadd.f32 %v1518, %v1629
      %v1666 = vadd.f32 %v1519, %v1634
      %v1667 = vadd.f32 %v1520, %v1637
      %v1668 = vadd.f32 %v1521, %v1642
      %v1669 = vadd.f32 %v1522, %v1645
      %v1670 = vadd.f32 %v1523, %v1650
      %v1671 = vadd.f32 %v1524, %v1653
      %v1672 = vadd.f32 %v1525, %v1658
      %v1673 = vadd.f32 %v1526, %v1661
      %v1674 = vld [vmem:[%s2] sm:$0x1]
      %v1676 = vlaneseq
      %v1677 = vshrl.u32 %v1676, 7
      %v1678 = vsub.s32 0, %v1677
      %v1679 = vrot.slane %v1674, %v1678
      %v1681 = vadd.f32 %v1664, %v1679
      %v1682 = vadd.f32 %v1665, %v1679
      %v1683 = vadd.f32 %v1666, %v1679
      %v1684 = vadd.f32 %v1667, %v1679
      %v1685 = vadd.f32 %v1668, %v1679
      %v1686 = vadd.f32 %v1669, %v1679
      %v1687 = vadd.f32 %v1670, %v1679
      %v1688 = vadd.f32 %v1671, %v1679
      %v1689 = vadd.f32 %v1672, %v1679
      %v1690 = vadd.f32 %v1673, %v1679
      %v1691 = vxor.u32 %v1681, 2147483648
      %v1692 = vxor.u32 %v1682, 2147483648
      %v1693 = vxor.u32 %v1683, 2147483648
      %v1694 = vxor.u32 %v1684, 2147483648
      %v1695 = vxor.u32 %v1685, 2147483648
      %v1696 = vxor.u32 %v1686, 2147483648
      %v1697 = vxor.u32 %v1687, 2147483648
      %v1698 = vxor.u32 %v1688, 2147483648
      %v1699 = vxor.u32 %v1689, 2147483648
      %v1700 = vxor.u32 %v1690, 2147483648
      %v1701 = vmul.f32 %v1691, 1.442695
      %v1702 = vpow.pop %v1701
      %v1703 = vmul.f32 %v1692, 1.442695
      %v1704 = vpow.pop %v1703
      %v1705 = vmul.f32 %v1693, 1.442695
      %v1706 = vpow.pop %v1705
      %v1707 = vmul.f32 %v1694, 1.442695
      %v1708 = vpow.pop %v1707
      %v1709 = vmul.f32 %v1695, 1.442695
      %v1710 = vpow.pop %v1709
      %v1711 = vmul.f32 %v1696, 1.442695
      %v1712 = vpow.pop %v1711
      %v1713 = vmul.f32 %v1697, 1.442695
      %v1714 = vpow.pop %v1713
      %v1715 = vmul.f32 %v1698, 1.442695
      %v1716 = vpow.pop %v1715
      %v1717 = vmul.f32 %v1699, 1.442695
      %v1718 = vpow.pop %v1717
      %v1719 = vmul.f32 %v1700, 1.442695
      %v1720 = vpow.pop %v1719
      %v1721 = vadd.f32 %v1702, 1.0
      %v1722 = vadd.f32 %v1704, 1.0
      %v1723 = vadd.f32 %v1706, 1.0
      %v1724 = vadd.f32 %v1708, 1.0
      %v1725 = vadd.f32 %v1710, 1.0
      %v1726 = vadd.f32 %v1712, 1.0
      %v1727 = vadd.f32 %v1714, 1.0
      %v1728 = vadd.f32 %v1716, 1.0
      %v1729 = vadd.f32 %v1718, 1.0
      %v1730 = vadd.f32 %v1720, 1.0
      %v1731 = vrcp.pop %v1721
      %v1732 = vmul.f32 1.0, %v1731
      %v1733 = vrcp.pop %v1722
      %v1734 = vmul.f32 1.0, %v1733
      %v1735 = vrcp.pop %v1723
      %v1736 = vmul.f32 1.0, %v1735
      %v1737 = vrcp.pop %v1724
      %v1738 = vmul.f32 1.0, %v1737
      %v1739 = vrcp.pop %v1725
      %v1740 = vmul.f32 1.0, %v1739
      %v1741 = vrcp.pop %v1726
      %v1742 = vmul.f32 1.0, %v1741
      %v1743 = vrcp.pop %v1727
      %v1744 = vmul.f32 1.0, %v1743
      %v1745 = vrcp.pop %v1728
      %v1746 = vmul.f32 1.0, %v1745
      %v1747 = vrcp.pop %v1729
      %v1748 = vmul.f32 1.0, %v1747
      %v1749 = vrcp.pop %v1730
      %v1750 = vmul.f32 1.0, %v1749
      %1751 = vst [vmem:[%s170] sm:$0xff] %v1732
      %1752 = vst [vmem:[%s170 + $0x8] sm:$0xff] %v1734
      %1753 = vst [vmem:[%s170 + $0x10] sm:$0xff] %v1736
      %1754 = vst [vmem:[%s170 + $0x18] sm:$0xff] %v1738
      %1755 = vst [vmem:[%s170 + $0x20] sm:$0xff] %v1740
      %1756 = vst [vmem:[%s170 + $0x28] sm:$0xff] %v1742
      %1757 = vst [vmem:[%s170 + $0x30] sm:$0xff] %v1744
      %1758 = vst [vmem:[%s170 + $0x38] sm:$0xff] %v1746
      %1759 = vst [vmem:[%s170 + $0x40] sm:$0xff] %v1748
      %1760 = vst [vmem:[%s170 + $0x48] sm:$0xff] %v1750
      %p1761 = scmp.lt.s32.totalorder %s14, 7
      %s1762 = scalar_select %p1761, %s14, 7
      %s1763 = smul.addr %s1762, 10
      %s1764 = smul.addr %s1763, 8
      %s1765 = scalar_lea.vmem %s3, %s1764
      // Predicated region
      $region33: #{generator_forward.7} parent=31 // pred_check
        %p1766 = pneg %p100
      $region34: #{generator_forward.7} parent=31 // pred_check_branch
        %1768 = sbr.rel (%p1766) target = $region36
      $region35: #{generator_forward.7} parent=31 // pred_region
        _
      $region36: #{generator_forward.7} parent=31 // pred_fallthru
        _
    $region32: #{generator_forward.7} parent=5 // pred_fallthru
      _
    %p1769 = scmp.le.s32.totalorder 2, %s9
    // Predicated region
    $region37: #{generator_forward.7} parent=5 // pred_check
      %p1770 = pneg %p1769
    $region38: #{generator_forward.7} parent=5 // pred_check_branch
      %1772 = sbr.rel (%p1770) target = $region40
    $region39: #{generator_forward.7} parent=5 // pred_region
      %s1773 = ssub.s32 %s9, 2
      // Predicated region
      $region41: #{generator_forward.7} parent=39 // pred_check
        %p1774 = pneg %p106
      $region42: #{generator_forward.7} parent=39 // pred_check_branch
        %1776 = sbr.rel (%p1774) target = $region44
      $region43: #{generator_forward.7} parent=39 // pred_region
        %p1777 = scmp.lt.s32.totalorder %s15, 7
        %s1778 = scalar_select %p1777, %s15, 7
        %s1779 = smul.addr %s1778, 10
        %s1780 = smul.addr %s1779, 8
        %s1781 = scalar_lea.vmem %s3, %s1780
      $region44: #{generator_forward.7} parent=39 // pred_fallthru
        _
    $region40: #{generator_forward.7} parent=5 // pred_fallthru
      _
  $region6: #{generator_forward.7} parent=0 // loop_footer
    %s13 = sadd.s32 1, %s9
  $region7: #{generator_forward.7} parent=0 // loop_footer_branch
    %8 = sbr.rel target = $region3
  $region8: #{generator_forward.7} parent=0 // loop_exit
    _

</llo_original>
